<compile_context>
chip_gen: v6e
topology: v6e:2x2x1
jax: 0.10.0
libtpu: 0.0.40
codegen_flags: <defaults>
</compile_context>

<pallas_src>
import functools

import jax
import jax.numpy as jnp
from jax import lax
from jax.experimental import pallas as pl
from jax.experimental.pallas import tpu as pltpu

COMPUTE_DTYPE = jnp.bfloat16   # MXU operand / stored-activation dtype (accumulation stays f32)


def _round_up(x, m):
    return ((x + m - 1) // m) * m


def _tile_rows(M):
    """Pick a row tile: grid of 2 whenever M >= 32 (keeps v7x's second
    TensorCore busy via dimension_semantics=("parallel",)), one tile otherwise."""
    if M >= 32:
        TM = min(1024, _round_up((M + 1) // 2, 8))
    else:
        TM = _round_up(max(M, 1), 8)
    Mp = _round_up(M, TM)
    return TM, Mp


# --------------------------------------------------------------------------
# Pallas kernels
# --------------------------------------------------------------------------
def _mm_kernel(x_ref, w_ref, b_ref, o_ref, *, relu):
    """(TM, K) @ (K, N) + b with optional fused ReLU; f32 accumulation."""
    z = jnp.dot(x_ref[...], w_ref[...],
                preferred_element_type=jnp.float32) + b_ref[...]
    if relu:
        z = jnp.maximum(z, 0.0)
    o_ref[...] = z.astype(o_ref.dtype)


def _tap_max(p_ref):
    """Pairwise-tree max over the leading (tap) axis of a (KK, TM, C) ref."""
    taps = [p_ref[t] for t in range(p_ref.shape[0])]
    while len(taps) > 1:
        nxt = [jnp.maximum(taps[i], taps[i + 1])
               for i in range(0, len(taps) - 1, 2)]
        if len(taps) % 2:
            nxt.append(taps[-1])
        taps = nxt
    return taps[0]


def _pool_kernel(p_ref, o_ref):
    o_ref[...] = _tap_max(p_ref).astype(o_ref.dtype)


def _pool_mm_kernel(p_ref, w_ref, b_ref, o_ref):
    """Fused max pool (over taps) followed by a 1x1 conv (matmul + bias)."""
    m = _tap_max(p_ref)
    z = jnp.dot(m, w_ref[...], preferred_element_type=jnp.float32) + b_ref[...]
    o_ref[...] = z.astype(o_ref.dtype)


# --------------------------------------------------------------------------
# Pallas wrappers
# --------------------------------------------------------------------------
def matmul_bias_act(patches, w, b, relu=False):
    """(M, K) @ (K, N) + b, bf16 operands, f32 accumulation, bf16 output."""
    M, K = patches.shape
    N = w.shape[1]
    Kp = _round_up(K, 128)                 # aligned, unmasked lane loads
    if Kp != K:
        patches = jnp.pad(patches, ((0, 0), (0, Kp - K)))
        w = jnp.pad(w, ((0, Kp - K), (0, 0)))
    TM, Mp = _tile_rows(M)
    if Mp != M:
        patches = jnp.pad(patches, ((0, Mp - M), (0, 0)))

    out = pl.pallas_call(
        functools.partial(_mm_kernel, relu=relu),
        out_shape=jax.ShapeDtypeStruct((Mp, N), COMPUTE_DTYPE),
        grid=(Mp // TM,),
        in_specs=[
            pl.BlockSpec((TM, Kp), lambda i: (i, 0)),   # row tiles (pipelined)
            pl.BlockSpec((Kp, N), lambda i: (0, 0)),    # weights resident
            pl.BlockSpec((1, N), lambda i: (0, 0)),     # bias resident
        ],
        out_specs=pl.BlockSpec((TM, N), lambda i: (i, 0)),
        compiler_params=pltpu.CompilerParams(
            dimension_semantics=("parallel",)),
    )(patches.astype(COMPUTE_DTYPE), w.astype(COMPUTE_DTYPE),
      b.reshape(1, N).astype(jnp.float32))
    return out[:M]


def _window_taps(xp, k, stride, Ho, Wo):
    taps = []
    for ky in range(k):
        for kx in range(k):
            taps.append(xp[:, ky:ky + stride * (Ho - 1) + 1:stride,
                            kx:kx + stride * (Wo - 1) + 1:stride, :])
    return taps


def _im2col(x, k, stride, pad):
    B, H, W, C = x.shape
    Ho = (H + 2 * pad - k) // stride + 1
    Wo = (W + 2 * pad - k) // stride + 1
    xp = jnp.pad(x, ((0, 0), (pad, pad), (pad, pad), (0, 0))) if pad else x
    taps = _window_taps(xp, k, stride, Ho, Wo)
    patches = jnp.stack(taps, axis=3).reshape(B * Ho * Wo, k * k * C)
    return patches, Ho, Wo


def conv2d(x, w, b, stride, pad, act="linear"):
    """NHWC conv via im2col + single Pallas matmul. w is PyTorch OIHW."""
    B, H, W, Cin = x.shape
    Cout, _, kh, kw = w.shape
    if kh == 1 and kw == 1 and stride == 1:
        Ho, Wo = H, W
        patches = x.reshape(B * H * W, Cin)
    else:
        patches, Ho, Wo = _im2col(x, kh, stride, pad)

    wk = jnp.transpose(w, (2, 3, 1, 0)).reshape(kh * kw * Cin, Cout)
    bk = b
    relu = False
    if act == "crelu":
        # CReLU(z) = cat(relu(z), relu(-z)): fold into [W, -W] / [b, -b] so the
        # kernel emits one lane-dense (TM, 2*Cout) tile with a fused ReLU
        # (negation is exact, so numerics match the reference bit-for-bit
        # modulo f32 accumulation order).
        wk = jnp.concatenate([wk, -wk], axis=1)
        bk = jnp.concatenate([b, -b], axis=0)
        Cout = 2 * Cout
        relu = True

    out = matmul_bias_act(patches, wk, bk, relu=relu)
    return out.reshape(B, Ho, Wo, Cout)


def maxpool2d(x, k, stride, pad):
    """NHWC max pool (implicit -inf padding, like nn.MaxPool2d)."""
    B, H, W, C = x.shape
    Ho = (H + 2 * pad - k) // stride + 1
    Wo = (W + 2 * pad - k) // stride + 1
    xp = jnp.pad(x, ((0, 0), (pad, pad), (pad, pad), (0, 0)),
                 constant_values=-jnp.inf)
    taps = _window_taps(xp, k, stride, Ho, Wo)
    p = jnp.stack(taps, axis=0).reshape(k * k, B * Ho * Wo, C)

    M = B * Ho * Wo
    TM, Mp = _tile_rows(M)
    if Mp != M:
        p = jnp.pad(p, ((0, 0), (0, Mp - M), (0, 0)))

    out = pl.pallas_call(
        _pool_kernel,
        out_shape=jax.ShapeDtypeStruct((Mp, C), COMPUTE_DTYPE),
        grid=(Mp // TM,),
        in_specs=[pl.BlockSpec((k * k, TM, C), lambda i: (0, i, 0))],
        out_specs=pl.BlockSpec((TM, C), lambda i: (i, 0)),
        compiler_params=pltpu.CompilerParams(
            dimension_semantics=("parallel",)),
    )(p)
    return out[:M].reshape(B, Ho, Wo, C)


def maxpool3x3_conv1x1(x, w, b):
    """Fused 3x3 / stride-1 / pad-1 max pool followed by a 1x1 conv (one kernel)."""
    B, H, W, C = x.shape
    Cout = w.shape[0]
    xp = jnp.pad(x, ((0, 0), (1, 1), (1, 1), (0, 0)), constant_values=-jnp.inf)
    taps = _window_taps(xp, 3, 1, H, W)
    p = jnp.stack(taps, axis=0).reshape(9, B * H * W, C)

    M = B * H * W
    TM, Mp = _tile_rows(M)
    if Mp != M:
        p = jnp.pad(p, ((0, 0), (0, Mp - M), (0, 0)))
    wk = w.reshape(Cout, C).T                      # (C, Cout), C == 128 here

    out = pl.pallas_call(
        _pool_mm_kernel,
        out_shape=jax.ShapeDtypeStruct((Mp, Cout), COMPUTE_DTYPE),
        grid=(Mp // TM,),
        in_specs=[pl.BlockSpec((9, TM, C), lambda i: (0, i, 0)),
                  pl.BlockSpec((C, Cout), lambda i: (0, 0)),
                  pl.BlockSpec((1, Cout), lambda i: (0, 0))],
        out_specs=pl.BlockSpec((TM, Cout), lambda i: (i, 0)),
        compiler_params=pltpu.CompilerParams(
            dimension_semantics=("parallel",)),
    )(p, wk.astype(COMPUTE_DTYPE), b.reshape(1, Cout).astype(jnp.float32))
    return out[:M].reshape(B, H, W, Cout)


# --------------------------------------------------------------------------
# FaceBoxExtractor forward (Pallas path, NHWC internally)
# --------------------------------------------------------------------------
def _inception(x, p):
    B, H, W, C = x.shape          # C == 128
    M = B * H * W
    flat = x.reshape(M, C)

    # Three shared-input 1x1 convs (conv1->32, conv3->24, conv5->24) fused
    # into one N=80 matmul.
    w_head = jnp.concatenate([p["conv1_w"].reshape(32, C),
                              p["conv3_w"].reshape(24, C),
                              p["conv5_w"].reshape(24, C)], axis=0).T
    b_head = jnp.concatenate([p["conv1_b"], p["conv3_b"], p["conv5_b"]])
    head = matmul_bias_act(flat, w_head, b_head)          # (M, 80)
    x1 = head[:, :32]
    x3 = head[:, 32:56].reshape(B, H, W, 24)
    x4 = head[:, 56:80].reshape(B, H, W, 24)

    # Branch 2: fused max pool (3x3, s1, p1) + 1x1 conv.
    x2 = maxpool3x3_conv1x1(x, p["conv2_w"], p["conv2_b"])

    # conv4(x3) and conv6(x4): two 3x3 convs on different inputs fused into one
    # matmul via K-concatenated patches and a block-diagonal weight (432x64).
    p3, _, _ = _im2col(x3, 3, 1, 1)                       # (M, 216)
    p4, _, _ = _im2col(x4, 3, 1, 1)                       # (M, 216)
    pp = jnp.concatenate([p3, p4], axis=1)                # (M, 432)
    w4 = jnp.transpose(p["conv4_w"], (2, 3, 1, 0)).reshape(216, 32)
    w6 = jnp.transpose(p["conv6_w"], (2, 3, 1, 0)).reshape(216, 32)
    zpad = jnp.zeros((216, 32), w4.dtype)
    wbd = jnp.concatenate([jnp.concatenate([w4, zpad], axis=1),
                           jnp.concatenate([zpad, w6], axis=1)], axis=0)
    bbd = jnp.concatenate([p["conv4_b"], p["conv6_b"]])
    y = matmul_bias_act(pp, wbd, bbd)                     # (M, 64)
    x3o = y[:, :32].reshape(B, H, W, 32)
    x4m = y[:, 32:].reshape(B, H, W, 32)
    x4o = conv2d(x4m, p["conv7_w"], p["conv7_b"], 1, 1)

    # Channel order matches torch.cat((x1, x2, x3, x4), 1).
    return jnp.concatenate([x1.reshape(B, H, W, 32), x2, x3o, x4o], axis=-1)


def facebox_forward(x_nchw, params):
    x = jnp.transpose(x_nchw, (0, 2, 3, 1)).astype(COMPUTE_DTYPE)     # NHWC, bf16
    x = conv2d(x, params["conv1_w"], params["conv1_b"], 4, 3, act="crelu")
    x = maxpool2d(x, 3, 2, 1)
    x = conv2d(x, params["conv2_w"], params["conv2_b"], 2, 2, act="crelu")
    x = maxpool2d(x, 3, 2, 1)
    x = _inception(x, params["inception1"])
    x = _inception(x, params["inception2"])
    x1 = _inception(x, params["inception3"])
    x = conv2d(x1, params["conv3_1_w"], params["conv3_1_b"], 1, 0)
    x2 = conv2d(x, params["conv3_2_w"], params["conv3_2_b"], 2, 1)
    x = conv2d(x2, params["conv4_1_w"], params["conv4_1_b"], 1, 0)
    x3 = conv2d(x, params["conv4_2_w"], params["conv4_2_b"], 2, 1)
    to_nchw = lambda t: jnp.transpose(t, (0, 3, 1, 2)).astype(jnp.float32)
    return [to_nchw(x1), to_nchw(x2), to_nchw(x3)]


# --------------------------------------------------------------------------
# Pure-JAX (XLA) reference mirroring the PyTorch module with the SAME bf16
# operand quantization and f32 accumulation, so the comparison tolerance only
# absorbs accumulation-order noise.
# --------------------------------------------------------------------------
def ref_forward(x, params):
    cd = COMPUTE_DTYPE

    def conv_f32(x, w, b, stride, pad):
        y = lax.conv_general_dilated(
            x.astype(cd), w.astype(cd), (stride, stride),
            ((pad, pad), (pad, pad)),
            dimension_numbers=("NCHW", "OIHW", "NCHW"),
            preferred_element_type=jnp.float32)
        return y + b.reshape(1, -1, 1, 1)

    def conv(x, w, b, s, p):
        return conv_f32(x, w, b, s, p).astype(cd)

    def crelu_conv(x, w, b, s, p):
        z = conv_f32(x, w, b, s, p)
        return jnp.concatenate([jnp.maximum(z, 0.0), jnp.maximum(-z, 0.0)],
                               axis=1).astype(cd)

    def pool(x, k, s, pad):
        return lax.reduce_window(x, jnp.array(-jnp.inf, x.dtype), lax.max,
                                 (1, 1, k, k), (1, 1, s, s),
                                 ((0, 0), (0, 0), (pad, pad), (pad, pad)))

    def inception(x, p):
        x1 = conv(x, p["conv1_w"], p["conv1_b"], 1, 0)
        x2 = conv(pool(x, 3, 1, 1), p["conv2_w"], p["conv2_b"], 1, 0)
        x3 = conv(conv(x, p["conv3_w"], p["conv3_b"], 1, 0),
                  p["conv4_w"], p["conv4_b"], 1, 1)
        x4 = conv(conv(conv(x, p["conv5_w"], p["conv5_b"], 1, 0),
                       p["conv6_w"], p["conv6_b"], 1, 1),
                  p["conv7_w"], p["conv7_b"], 1, 1)
        return jnp.concatenate([x1, x2, x3, x4], axis=1)

    x = x.astype(cd)
    x = crelu_conv(x, params["conv1_w"], params["conv1_b"], 4, 3)
    x = pool(x, 3, 2, 1)
    x = crelu_conv(x, params["conv2_w"], params["conv2_b"], 2, 2)
    x = pool(x, 3, 2, 1)
    x = inception(x, params["inception1"])
    x = inception(x, params["inception2"])
    x1 = inception(x, params["inception3"])
    x = conv(x1, params["conv3_1_w"], params["conv3_1_b"], 1, 0)
    x2 = conv(x, params["conv3_2_w"], params["conv3_2_b"], 2, 1)
    x = conv(x2, params["conv4_1_w"], params["conv4_1_b"], 1, 0)
    x3 = conv(x, params["conv4_2_w"], params["conv4_2_b"], 2, 1)
    return [x1.astype(jnp.float32), x2.astype(jnp.float32),
            x3.astype(jnp.float32)]


# --------------------------------------------------------------------------
# Parameter construction (PyTorch OIHW conventions, f32 master weights)
# --------------------------------------------------------------------------
def _conv_init(key, cout, cin, k):
    k1, k2 = jax.random.split(key)
    scale = float(cin * k * k) ** -0.5
    w = jax.random.normal(k1, (cout, cin, k, k), jnp.float32) * scale
    b = jax.random.normal(k2, (cout,), jnp.float32) * 0.1
    return w, b


def make_params(key):
    top = {"conv1": (24, 3, 7), "conv2": (64, 48, 5),
           "conv3_1": (128, 128, 1), "conv3_2": (256, 128, 3),
           "conv4_1": (128, 256, 1), "conv4_2": (256, 128, 3)}
    inc = {"conv1": (32, 128, 1), "conv2": (32, 128, 1),
           "conv3": (24, 128, 1), "conv4": (32, 24, 3),
           "conv5": (24, 128, 1), "conv6": (32, 24, 3),
           "conv7": (32, 32, 3)}
    params = {}
    for name, (co, ci, k) in top.items():
        key, sub = jax.random.split(key)
        w, b = _conv_init(sub, co, ci, k)
        params[name + "_w"], params[name + "_b"] = w, b
    for i in (1, 2, 3):
        d = {}
        for name, (co, ci, k) in inc.items():
            key, sub = jax.random.split(key)
            w, b = _conv_init(sub, co, ci, k)
            d[name + "_w"], d[name + "_b"] = w, b
        params["inception%d" % i] = d
    return params


if __name__ == "__main__":
    key = jax.random.PRNGKey(0)
    kx, kp = jax.random.split(key)
    B = 2
    x = jax.random.normal(kx, (B, 3, 128, 128), jnp.float32)
    params = make_params(kp)

    fwd = jax.jit(facebox_forward)
    outs = jax.block_until_ready(fwd(x, params))

    refs = ref_forward(x, params)
    expected = [(B, 128, 4, 4), (B, 256, 2, 2), (B, 256, 1, 1)]
    for o, r, s in zip(outs, refs, expected):
        assert o.shape == s, (o.shape, s)
        err = float(jnp.max(jnp.abs(o - r)))
        # Both paths use identical bf16 operand quantization with f32
        # accumulation; tolerance absorbs accumulation-order noise only.
        assert jnp.allclose(o, r, atol=2e-2, rtol=2e-2), err
    print("KERNEL_OK")
</pallas_src>

<mosaic_0001>
module attributes {stable_mosaic.version = 11 : i64} {
  func.func @_mm_kernel(%arg0: i32, %arg1: memref<1024x256xbf16, #tpu.memory_space<vmem>>, %arg2: memref<256x48xbf16, #tpu.memory_space<vmem>>, %arg3: memref<1x48xf32, #tpu.memory_space<vmem>>, %arg4: memref<1024x48xbf16, #tpu.memory_space<vmem>>) attributes {dimension_semantics = [#tpu.dimension_semantics<parallel>], iteration_bounds = array<i64: 2>, scalar_prefetch = 0 : i64, scratch_operands = 0 : i64, tpu.core_type = #tpu.core_type<tc>, window_params = [{transform_indices = @transform_0, window_bounds = array<i64: 1024, 256>}, {pipeline_mode = #tpu.pipeline_mode<synchronous>, transform_indices = @transform_1, window_bounds = array<i64: 256, 48>}, {pipeline_mode = #tpu.pipeline_mode<synchronous>, transform_indices = @transform_2, window_bounds = array<i64: 1, 48>}, {transform_indices = @transform_3, window_bounds = array<i64: 1024, 48>}]} {
    %c0 = arith.constant 0 : index
    %c0_0 = arith.constant 0 : index
    %0 = vector.load %arg1[%c0, %c0_0] : memref<1024x256xbf16, #tpu.memory_space<vmem>>, vector<1024x256xbf16>
    %c0_1 = arith.constant 0 : index
    %c0_2 = arith.constant 0 : index
    %1 = vector.load %arg2[%c0_1, %c0_2] : memref<256x48xbf16, #tpu.memory_space<vmem>>, vector<256x48xbf16>
    %cst = arith.constant dense<0.000000e+00> : vector<1024x48xf32>
    %2 = tpu.matmul %0, %1, %cst {dimension_numbers = #tpu.dot_dimension_numbers<[1], [0], [0], [1], [0, 0, 1, 1], [], []>} : vector<1024x256xbf16>, vector<256x48xbf16>, vector<1024x48xf32> -> vector<1024x48xf32>
    %c0_3 = arith.constant 0 : index
    %c0_4 = arith.constant 0 : index
    %3 = vector.load %arg3[%c0_3, %c0_4] : memref<1x48xf32, #tpu.memory_space<vmem>>, vector<1x48xf32>
    %4 = vector.broadcast %3 : vector<1x48xf32> to vector<1024x48xf32>
    %5 = arith.addf %2, %4 : vector<1024x48xf32>
    %cst_5 = arith.constant 0.000000e+00 : f32
    %6 = vector.broadcast %cst_5 : f32 to vector<1024x48xf32>
    %7 = arith.maximumf %5, %6 : vector<1024x48xf32>
    %8 = arith.truncf %7 : vector<1024x48xf32> to vector<1024x48xbf16>
    %c0_6 = arith.constant 0 : index
    %c0_7 = arith.constant 0 : index
    %9 = vector.load %arg4[%c0_6, %c0_7] : memref<1024x48xbf16, #tpu.memory_space<vmem>>, vector<1024x48xbf16>
    tpu.vector_store %arg4[%c0_6, %c0_7], %8 {strides = array<i32>} : memref<1024x48xbf16, #tpu.memory_space<vmem>>, vector<1024x48xbf16>,
    return
  }
  func.func @transform_0(%arg0: i32) -> (i32, i32) {
    %c0_i32 = arith.constant 0 : i32
    %c0_i32_0 = arith.constant 0 : i32
    return %arg0, %c0_i32 : i32, i32
  }
  func.func @transform_1(%arg0: i32) -> (i32, i32) {
    %c0_i32 = arith.constant 0 : i32
    %c0_i32_0 = arith.constant 0 : i32
    %c0_i32_1 = arith.constant 0 : i32
    return %c0_i32, %c0_i32_0 : i32, i32
  }
  func.func @transform_2(%arg0: i32) -> (i32, i32) {
    %c0_i32 = arith.constant 0 : i32
    %c0_i32_0 = arith.constant 0 : i32
    %c0_i32_1 = arith.constant 0 : i32
    return %c0_i32, %c0_i32_0 : i32, i32
  }
  func.func @transform_3(%arg0: i32) -> (i32, i32) {
    %c0_i32 = arith.constant 0 : i32
    %c0_i32_0 = arith.constant 0 : i32
    return %arg0, %c0_i32 : i32, i32
  }
}

module attributes {stable_mosaic.version = 11 : i64} {
  func.func @_pool_kernel(%arg0: i32, %arg1: memref<9x256x48xbf16, #tpu.memory_space<vmem>>, %arg2: memref<256x48xbf16, #tpu.memory_space<vmem>>) attributes {dimension_semantics = [#tpu.dimension_semantics<parallel>], iteration_bounds = array<i64: 2>, scalar_prefetch = 0 : i64, scratch_operands = 0 : i64, tpu.core_type = #tpu.core_type<tc>, window_params = [{transform_indices = @transform_0, window_bounds = array<i64: 9, 256, 48>}, {transform_indices = @transform_1, window_bounds = array<i64: 256, 48>}]} {
    %c0 = arith.constant 0 : index
    %c0_0 = arith.constant 0 : index
    %c0_1 = arith.constant 0 : index
    %0 = vector.load %arg1[%c0, %c0_0, %c0_1] : memref<9x256x48xbf16, #tpu.memory_space<vmem>>, vector<1x256x48xbf16>
    %1 = vector.shape_cast %0 : vector<1x256x48xbf16> to vector<256x48xbf16>
    %c1 = arith.constant 1 : index
    %c0_2 = arith.constant 0 : index
    %c0_3 = arith.constant 0 : index
    %2 = vector.load %arg1[%c1, %c0_2, %c0_3] : memref<9x256x48xbf16, #tpu.memory_space<vmem>>, vector<1x256x48xbf16>
    %3 = vector.shape_cast %2 : vector<1x256x48xbf16> to vector<256x48xbf16>
    %c2 = arith.constant 2 : index
    %c0_4 = arith.constant 0 : index
    %c0_5 = arith.constant 0 : index
    %4 = vector.load %arg1[%c2, %c0_4, %c0_5] : memref<9x256x48xbf16, #tpu.memory_space<vmem>>, vector<1x256x48xbf16>
    %5 = vector.shape_cast %4 : vector<1x256x48xbf16> to vector<256x48xbf16>
    %c3 = arith.constant 3 : index
    %c0_6 = arith.constant 0 : index
    %c0_7 = arith.constant 0 : index
    %6 = vector.load %arg1[%c3, %c0_6, %c0_7] : memref<9x256x48xbf16, #tpu.memory_space<vmem>>, vector<1x256x48xbf16>
    %7 = vector.shape_cast %6 : vector<1x256x48xbf16> to vector<256x48xbf16>
    %c4 = arith.constant 4 : index
    %c0_8 = arith.constant 0 : index
    %c0_9 = arith.constant 0 : index
    %8 = vector.load %arg1[%c4, %c0_8, %c0_9] : memref<9x256x48xbf16, #tpu.memory_space<vmem>>, vector<1x256x48xbf16>
    %9 = vector.shape_cast %8 : vector<1x256x48xbf16> to vector<256x48xbf16>
    %c5 = arith.constant 5 : index
    %c0_10 = arith.constant 0 : index
    %c0_11 = arith.constant 0 : index
    %10 = vector.load %arg1[%c5, %c0_10, %c0_11] : memref<9x256x48xbf16, #tpu.memory_space<vmem>>, vector<1x256x48xbf16>
    %11 = vector.shape_cast %10 : vector<1x256x48xbf16> to vector<256x48xbf16>
    %c6 = arith.constant 6 : index
    %c0_12 = arith.constant 0 : index
    %c0_13 = arith.constant 0 : index
    %12 = vector.load %arg1[%c6, %c0_12, %c0_13] : memref<9x256x48xbf16, #tpu.memory_space<vmem>>, vector<1x256x48xbf16>
    %13 = vector.shape_cast %12 : vector<1x256x48xbf16> to vector<256x48xbf16>
    %c7 = arith.constant 7 : index
    %c0_14 = arith.constant 0 : index
    %c0_15 = arith.constant 0 : index
    %14 = vector.load %arg1[%c7, %c0_14, %c0_15] : memref<9x256x48xbf16, #tpu.memory_space<vmem>>, vector<1x256x48xbf16>
    %15 = vector.shape_cast %14 : vector<1x256x48xbf16> to vector<256x48xbf16>
    %c8 = arith.constant 8 : index
    %c0_16 = arith.constant 0 : index
    %c0_17 = arith.constant 0 : index
    %16 = vector.load %arg1[%c8, %c0_16, %c0_17] : memref<9x256x48xbf16, #tpu.memory_space<vmem>>, vector<1x256x48xbf16>
    %17 = vector.shape_cast %16 : vector<1x256x48xbf16> to vector<256x48xbf16>
    %18 = arith.maximumf %1, %3 : vector<256x48xbf16>
    %19 = arith.maximumf %5, %7 : vector<256x48xbf16>
    %20 = arith.maximumf %9, %11 : vector<256x48xbf16>
    %21 = arith.maximumf %13, %15 : vector<256x48xbf16>
    %22 = arith.maximumf %18, %19 : vector<256x48xbf16>
    %23 = arith.maximumf %20, %21 : vector<256x48xbf16>
    %24 = arith.maximumf %22, %23 : vector<256x48xbf16>
    %25 = arith.maximumf %24, %17 : vector<256x48xbf16>
    %c0_18 = arith.constant 0 : index
    %c0_19 = arith.constant 0 : index
    %26 = vector.load %arg2[%c0_18, %c0_19] : memref<256x48xbf16, #tpu.memory_space<vmem>>, vector<256x48xbf16>
    tpu.vector_store %arg2[%c0_18, %c0_19], %25 {strides = array<i32>} : memref<256x48xbf16, #tpu.memory_space<vmem>>, vector<256x48xbf16>,
    return
  }
  func.func @transform_0(%arg0: i32) -> (i32, i32, i32) {
    %c0_i32 = arith.constant 0 : i32
    %c0_i32_0 = arith.constant 0 : i32
    %c0_i32_1 = arith.constant 0 : i32
    return %c0_i32, %arg0, %c0_i32_0 : i32, i32, i32
  }
  func.func @transform_1(%arg0: i32) -> (i32, i32) {
    %c0_i32 = arith.constant 0 : i32
    %c0_i32_0 = arith.constant 0 : i32
    return %arg0, %c0_i32 : i32, i32
  }
}

module attributes {stable_mosaic.version = 11 : i64} {
  func.func @_mm_kernel(%arg0: i32, %arg1: memref<64x1280xbf16, #tpu.memory_space<vmem>>, %arg2: memref<1280x128xbf16, #tpu.memory_space<vmem>>, %arg3: memref<1x128xf32, #tpu.memory_space<vmem>>, %arg4: memref<64x128xbf16, #tpu.memory_space<vmem>>) attributes {dimension_semantics = [#tpu.dimension_semantics<parallel>], iteration_bounds = array<i64: 2>, scalar_prefetch = 0 : i64, scratch_operands = 0 : i64, tpu.core_type = #tpu.core_type<tc>, window_params = [{transform_indices = @transform_0, window_bounds = array<i64: 64, 1280>}, {pipeline_mode = #tpu.pipeline_mode<synchronous>, transform_indices = @transform_1, window_bounds = array<i64: 1280, 128>}, {pipeline_mode = #tpu.pipeline_mode<synchronous>, transform_indices = @transform_2, window_bounds = array<i64: 1, 128>}, {transform_indices = @transform_3, window_bounds = array<i64: 64, 128>}]} {
    %c0 = arith.constant 0 : index
    %c0_0 = arith.constant 0 : index
    %0 = vector.load %arg1[%c0, %c0_0] : memref<64x1280xbf16, #tpu.memory_space<vmem>>, vector<64x1280xbf16>
    %c0_1 = arith.constant 0 : index
    %c0_2 = arith.constant 0 : index
    %1 = vector.load %arg2[%c0_1, %c0_2] : memref<1280x128xbf16, #tpu.memory_space<vmem>>, vector<1280x128xbf16>
    %cst = arith.constant dense<0.000000e+00> : vector<64x128xf32>
    %2 = tpu.matmul %0, %1, %cst {dimension_numbers = #tpu.dot_dimension_numbers<[1], [0], [0], [1], [0, 0, 1, 1], [], []>} : vector<64x1280xbf16>, vector<1280x128xbf16>, vector<64x128xf32> -> vector<64x128xf32>
    %c0_3 = arith.constant 0 : index
    %c0_4 = arith.constant 0 : index
    %3 = vector.load %arg3[%c0_3, %c0_4] : memref<1x128xf32, #tpu.memory_space<vmem>>, vector<1x128xf32>
    %4 = vector.broadcast %3 : vector<1x128xf32> to vector<64x128xf32>
    %5 = arith.addf %2, %4 : vector<64x128xf32>
    %cst_5 = arith.constant 0.000000e+00 : f32
    %6 = vector.broadcast %cst_5 : f32 to vector<64x128xf32>
    %7 = arith.maximumf %5, %6 : vector<64x128xf32>
    %8 = arith.truncf %7 : vector<64x128xf32> to vector<64x128xbf16>
    %c0_6 = arith.constant 0 : index
    %c0_7 = arith.constant 0 : index
    %9 = vector.load %arg4[%c0_6, %c0_7] : memref<64x128xbf16, #tpu.memory_space<vmem>>, vector<64x128xbf16>
    tpu.vector_store %arg4[%c0_6, %c0_7], %8 {strides = array<i32>} : memref<64x128xbf16, #tpu.memory_space<vmem>>, vector<64x128xbf16>,
    return
  }
  func.func @transform_0(%arg0: i32) -> (i32, i32) {
    %c0_i32 = arith.constant 0 : i32
    %c0_i32_0 = arith.constant 0 : i32
    return %arg0, %c0_i32 : i32, i32
  }
  func.func @transform_1(%arg0: i32) -> (i32, i32) {
    %c0_i32 = arith.constant 0 : i32
    %c0_i32_0 = arith.constant 0 : i32
    %c0_i32_1 = arith.constant 0 : i32
    return %c0_i32, %c0_i32_0 : i32, i32
  }
  func.func @transform_2(%arg0: i32) -> (i32, i32) {
    %c0_i32 = arith.constant 0 : i32
    %c0_i32_0 = arith.constant 0 : i32
    %c0_i32_1 = arith.constant 0 : i32
    return %c0_i32, %c0_i32_0 : i32, i32
  }
  func.func @transform_3(%arg0: i32) -> (i32, i32) {
    %c0_i32 = arith.constant 0 : i32
    %c0_i32_0 = arith.constant 0 : i32
    return %arg0, %c0_i32 : i32, i32
  }
}

module attributes {stable_mosaic.version = 11 : i64} {
  func.func @_pool_kernel(%arg0: i32, %arg1: memref<9x16x128xbf16, #tpu.memory_space<vmem>>, %arg2: memref<16x128xbf16, #tpu.memory_space<vmem>>) attributes {dimension_semantics = [#tpu.dimension_semantics<parallel>], iteration_bounds = array<i64: 2>, scalar_prefetch = 0 : i64, scratch_operands = 0 : i64, tpu.core_type = #tpu.core_type<tc>, window_params = [{transform_indices = @transform_0, window_bounds = array<i64: 9, 16, 128>}, {transform_indices = @transform_1, window_bounds = array<i64: 16, 128>}]} {
    %c0 = arith.constant 0 : index
    %c0_0 = arith.constant 0 : index
    %c0_1 = arith.constant 0 : index
    %0 = vector.load %arg1[%c0, %c0_0, %c0_1] : memref<9x16x128xbf16, #tpu.memory_space<vmem>>, vector<1x16x128xbf16>
    %1 = vector.shape_cast %0 : vector<1x16x128xbf16> to vector<16x128xbf16>
    %c1 = arith.constant 1 : index
    %c0_2 = arith.constant 0 : index
    %c0_3 = arith.constant 0 : index
    %2 = vector.load %arg1[%c1, %c0_2, %c0_3] : memref<9x16x128xbf16, #tpu.memory_space<vmem>>, vector<1x16x128xbf16>
    %3 = vector.shape_cast %2 : vector<1x16x128xbf16> to vector<16x128xbf16>
    %c2 = arith.constant 2 : index
    %c0_4 = arith.constant 0 : index
    %c0_5 = arith.constant 0 : index
    %4 = vector.load %arg1[%c2, %c0_4, %c0_5] : memref<9x16x128xbf16, #tpu.memory_space<vmem>>, vector<1x16x128xbf16>
    %5 = vector.shape_cast %4 : vector<1x16x128xbf16> to vector<16x128xbf16>
    %c3 = arith.constant 3 : index
    %c0_6 = arith.constant 0 : index
    %c0_7 = arith.constant 0 : index
    %6 = vector.load %arg1[%c3, %c0_6, %c0_7] : memref<9x16x128xbf16, #tpu.memory_space<vmem>>, vector<1x16x128xbf16>
    %7 = vector.shape_cast %6 : vector<1x16x128xbf16> to vector<16x128xbf16>
    %c4 = arith.constant 4 : index
    %c0_8 = arith.constant 0 : index
    %c0_9 = arith.constant 0 : index
    %8 = vector.load %arg1[%c4, %c0_8, %c0_9] : memref<9x16x128xbf16, #tpu.memory_space<vmem>>, vector<1x16x128xbf16>
    %9 = vector.shape_cast %8 : vector<1x16x128xbf16> to vector<16x128xbf16>
    %c5 = arith.constant 5 : index
    %c0_10 = arith.constant 0 : index
    %c0_11 = arith.constant 0 : index
    %10 = vector.load %arg1[%c5, %c0_10, %c0_11] : memref<9x16x128xbf16, #tpu.memory_space<vmem>>, vector<1x16x128xbf16>
    %11 = vector.shape_cast %10 : vector<1x16x128xbf16> to vector<16x128xbf16>
    %c6 = arith.constant 6 : index
    %c0_12 = arith.constant 0 : index
    %c0_13 = arith.constant 0 : index
    %12 = vector.load %arg1[%c6, %c0_12, %c0_13] : memref<9x16x128xbf16, #tpu.memory_space<vmem>>, vector<1x16x128xbf16>
    %13 = vector.shape_cast %12 : vector<1x16x128xbf16> to vector<16x128xbf16>
    %c7 = arith.constant 7 : index
    %c0_14 = arith.constant 0 : index
    %c0_15 = arith.constant 0 : index
    %14 = vector.load %arg1[%c7, %c0_14, %c0_15] : memref<9x16x128xbf16, #tpu.memory_space<vmem>>, vector<1x16x128xbf16>
    %15 = vector.shape_cast %14 : vector<1x16x128xbf16> to vector<16x128xbf16>
    %c8 = arith.constant 8 : index
    %c0_16 = arith.constant 0 : index
    %c0_17 = arith.constant 0 : index
    %16 = vector.load %arg1[%c8, %c0_16, %c0_17] : memref<9x16x128xbf16, #tpu.memory_space<vmem>>, vector<1x16x128xbf16>
    %17 = vector.shape_cast %16 : vector<1x16x128xbf16> to vector<16x128xbf16>
    %18 = arith.maximumf %1, %3 : vector<16x128xbf16>
    %19 = arith.maximumf %5, %7 : vector<16x128xbf16>
    %20 = arith.maximumf %9, %11 : vector<16x128xbf16>
    %21 = arith.maximumf %13, %15 : vector<16x128xbf16>
    %22 = arith.maximumf %18, %19 : vector<16x128xbf16>
    %23 = arith.maximumf %20, %21 : vector<16x128xbf16>
    %24 = arith.maximumf %22, %23 : vector<16x128xbf16>
    %25 = arith.maximumf %24, %17 : vector<16x128xbf16>
    %c0_18 = arith.constant 0 : index
    %c0_19 = arith.constant 0 : index
    %26 = vector.load %arg2[%c0_18, %c0_19] : memref<16x128xbf16, #tpu.memory_space<vmem>>, vector<16x128xbf16>
    tpu.vector_store %arg2[%c0_18, %c0_19], %25 {strides = array<i32>} : memref<16x128xbf16, #tpu.memory_space<vmem>>, vector<16x128xbf16>,
    return
  }
  func.func @transform_0(%arg0: i32) -> (i32, i32, i32) {
    %c0_i32 = arith.constant 0 : i32
    %c0_i32_0 = arith.constant 0 : i32
    %c0_i32_1 = arith.constant 0 : i32
    return %c0_i32, %arg0, %c0_i32_0 : i32, i32, i32
  }
  func.func @transform_1(%arg0: i32) -> (i32, i32) {
    %c0_i32 = arith.constant 0 : i32
    %c0_i32_0 = arith.constant 0 : i32
    return %arg0, %c0_i32 : i32, i32
  }
}

module attributes {stable_mosaic.version = 11 : i64} {
  func.func @_pool_mm_kernel(%arg0: i32, %arg1: memref<9x16x128xbf16, #tpu.memory_space<vmem>>, %arg2: memref<128x32xbf16, #tpu.memory_space<vmem>>, %arg3: memref<1x32xf32, #tpu.memory_space<vmem>>, %arg4: memref<16x32xbf16, #tpu.memory_space<vmem>>) attributes {dimension_semantics = [#tpu.dimension_semantics<parallel>], iteration_bounds = array<i64: 2>, scalar_prefetch = 0 : i64, scratch_operands = 0 : i64, tpu.core_type = #tpu.core_type<tc>, window_params = [{transform_indices = @transform_0, window_bounds = array<i64: 9, 16, 128>}, {pipeline_mode = #tpu.pipeline_mode<synchronous>, transform_indices = @transform_1, window_bounds = array<i64: 128, 32>}, {pipeline_mode = #tpu.pipeline_mode<synchronous>, transform_indices = @transform_2, window_bounds = array<i64: 1, 32>}, {transform_indices = @transform_3, window_bounds = array<i64: 16, 32>}]} {
    %c0 = arith.constant 0 : index
    %c0_0 = arith.constant 0 : index
    %c0_1 = arith.constant 0 : index
    %0 = vector.load %arg1[%c0, %c0_0, %c0_1] : memref<9x16x128xbf16, #tpu.memory_space<vmem>>, vector<1x16x128xbf16>
    %1 = vector.shape_cast %0 : vector<1x16x128xbf16> to vector<16x128xbf16>
    %c1 = arith.constant 1 : index
    %c0_2 = arith.constant 0 : index
    %c0_3 = arith.constant 0 : index
    %2 = vector.load %arg1[%c1, %c0_2, %c0_3] : memref<9x16x128xbf16, #tpu.memory_space<vmem>>, vector<1x16x128xbf16>
    %3 = vector.shape_cast %2 : vector<1x16x128xbf16> to vector<16x128xbf16>
    %c2 = arith.constant 2 : index
    %c0_4 = arith.constant 0 : index
    %c0_5 = arith.constant 0 : index
    %4 = vector.load %arg1[%c2, %c0_4, %c0_5] : memref<9x16x128xbf16, #tpu.memory_space<vmem>>, vector<1x16x128xbf16>
    %5 = vector.shape_cast %4 : vector<1x16x128xbf16> to vector<16x128xbf16>
    %c3 = arith.constant 3 : index
    %c0_6 = arith.constant 0 : index
    %c0_7 = arith.constant 0 : index
    %6 = vector.load %arg1[%c3, %c0_6, %c0_7] : memref<9x16x128xbf16, #tpu.memory_space<vmem>>, vector<1x16x128xbf16>
    %7 = vector.shape_cast %6 : vector<1x16x128xbf16> to vector<16x128xbf16>
    %c4 = arith.constant 4 : index
    %c0_8 = arith.constant 0 : index
    %c0_9 = arith.constant 0 : index
    %8 = vector.load %arg1[%c4, %c0_8, %c0_9] : memref<9x16x128xbf16, #tpu.memory_space<vmem>>, vector<1x16x128xbf16>
    %9 = vector.shape_cast %8 : vector<1x16x128xbf16> to vector<16x128xbf16>
    %c5 = arith.constant 5 : index
    %c0_10 = arith.constant 0 : index
    %c0_11 = arith.constant 0 : index
    %10 = vector.load %arg1[%c5, %c0_10, %c0_11] : memref<9x16x128xbf16, #tpu.memory_space<vmem>>, vector<1x16x128xbf16>
    %11 = vector.shape_cast %10 : vector<1x16x128xbf16> to vector<16x128xbf16>
    %c6 = arith.constant 6 : index
    %c0_12 = arith.constant 0 : index
    %c0_13 = arith.constant 0 : index
    %12 = vector.load %arg1[%c6, %c0_12, %c0_13] : memref<9x16x128xbf16, #tpu.memory_space<vmem>>, vector<1x16x128xbf16>
    %13 = vector.shape_cast %12 : vector<1x16x128xbf16> to vector<16x128xbf16>
    %c7 = arith.constant 7 : index
    %c0_14 = arith.constant 0 : index
    %c0_15 = arith.constant 0 : index
    %14 = vector.load %arg1[%c7, %c0_14, %c0_15] : memref<9x16x128xbf16, #tpu.memory_space<vmem>>, vector<1x16x128xbf16>
    %15 = vector.shape_cast %14 : vector<1x16x128xbf16> to vector<16x128xbf16>
    %c8 = arith.constant 8 : index
    %c0_16 = arith.constant 0 : index
    %c0_17 = arith.constant 0 : index
    %16 = vector.load %arg1[%c8, %c0_16, %c0_17] : memref<9x16x128xbf16, #tpu.memory_space<vmem>>, vector<1x16x128xbf16>
    %17 = vector.shape_cast %16 : vector<1x16x128xbf16> to vector<16x128xbf16>
    %18 = arith.maximumf %1, %3 : vector<16x128xbf16>
    %19 = arith.maximumf %5, %7 : vector<16x128xbf16>
    %20 = arith.maximumf %9, %11 : vector<16x128xbf16>
    %21 = arith.maximumf %13, %15 : vector<16x128xbf16>
    %22 = arith.maximumf %18, %19 : vector<16x128xbf16>
    %23 = arith.maximumf %20, %21 : vector<16x128xbf16>
    %24 = arith.maximumf %22, %23 : vector<16x128xbf16>
    %25 = arith.maximumf %24, %17 : vector<16x128xbf16>
    %c0_18 = arith.constant 0 : index
    %c0_19 = arith.constant 0 : index
    %26 = vector.load %arg2[%c0_18, %c0_19] : memref<128x32xbf16, #tpu.memory_space<vmem>>, vector<128x32xbf16>
    %cst = arith.constant dense<0.000000e+00> : vector<16x32xf32>
    %27 = tpu.matmul %25, %26, %cst {dimension_numbers = #tpu.dot_dimension_numbers<[1], [0], [0], [1], [0, 0, 1, 1], [], []>} : vector<16x128xbf16>, vector<128x32xbf16>, vector<16x32xf32> -> vector<16x32xf32>
    %c0_20 = arith.constant 0 : index
    %c0_21 = arith.constant 0 : index
    %28 = vector.load %arg3[%c0_20, %c0_21] : memref<1x32xf32, #tpu.memory_space<vmem>>, vector<1x32xf32>
    %29 = vector.broadcast %28 : vector<1x32xf32> to vector<16x32xf32>
    %30 = arith.addf %27, %29 : vector<16x32xf32>
    %31 = arith.truncf %30 : vector<16x32xf32> to vector<16x32xbf16>
    %c0_22 = arith.constant 0 : index
    %c0_23 = arith.constant 0 : index
    %32 = vector.load %arg4[%c0_22, %c0_23] : memref<16x32xbf16, #tpu.memory_space<vmem>>, vector<16x32xbf16>
    tpu.vector_store %arg4[%c0_22, %c0_23], %31 {strides = array<i32>} : memref<16x32xbf16, #tpu.memory_space<vmem>>, vector<16x32xbf16>,
    return
  }
  func.func @transform_0(%arg0: i32) -> (i32, i32, i32) {
    %c0_i32 = arith.constant 0 : i32
    %c0_i32_0 = arith.constant 0 : i32
    %c0_i32_1 = arith.constant 0 : i32
    return %c0_i32, %arg0, %c0_i32_0 : i32, i32, i32
  }
  func.func @transform_1(%arg0: i32) -> (i32, i32) {
    %c0_i32 = arith.constant 0 : i32
    %c0_i32_0 = arith.constant 0 : i32
    %c0_i32_1 = arith.constant 0 : i32
    return %c0_i32, %c0_i32_0 : i32, i32
  }
  func.func @transform_2(%arg0: i32) -> (i32, i32) {
    %c0_i32 = arith.constant 0 : i32
    %c0_i32_0 = arith.constant 0 : i32
    %c0_i32_1 = arith.constant 0 : i32
    return %c0_i32, %c0_i32_0 : i32, i32
  }
  func.func @transform_3(%arg0: i32) -> (i32, i32) {
    %c0_i32 = arith.constant 0 : i32
    %c0_i32_0 = arith.constant 0 : i32
    return %arg0, %c0_i32 : i32, i32
  }
}

module attributes {stable_mosaic.version = 11 : i64} {
  func.func @_mm_kernel(%arg0: i32, %arg1: memref<16x128xbf16, #tpu.memory_space<vmem>>, %arg2: memref<128x80xbf16, #tpu.memory_space<vmem>>, %arg3: memref<1x80xf32, #tpu.memory_space<vmem>>, %arg4: memref<16x80xbf16, #tpu.memory_space<vmem>>) attributes {dimension_semantics = [#tpu.dimension_semantics<parallel>], iteration_bounds = array<i64: 2>, scalar_prefetch = 0 : i64, scratch_operands = 0 : i64, tpu.core_type = #tpu.core_type<tc>, window_params = [{transform_indices = @transform_0, window_bounds = array<i64: 16, 128>}, {pipeline_mode = #tpu.pipeline_mode<synchronous>, transform_indices = @transform_1, window_bounds = array<i64: 128, 80>}, {pipeline_mode = #tpu.pipeline_mode<synchronous>, transform_indices = @transform_2, window_bounds = array<i64: 1, 80>}, {transform_indices = @transform_3, window_bounds = array<i64: 16, 80>}]} {
    %c0 = arith.constant 0 : index
    %c0_0 = arith.constant 0 : index
    %0 = vector.load %arg1[%c0, %c0_0] : memref<16x128xbf16, #tpu.memory_space<vmem>>, vector<16x128xbf16>
    %c0_1 = arith.constant 0 : index
    %c0_2 = arith.constant 0 : index
    %1 = vector.load %arg2[%c0_1, %c0_2] : memref<128x80xbf16, #tpu.memory_space<vmem>>, vector<128x80xbf16>
    %cst = arith.constant dense<0.000000e+00> : vector<16x80xf32>
    %2 = tpu.matmul %0, %1, %cst {dimension_numbers = #tpu.dot_dimension_numbers<[1], [0], [0], [1], [0, 0, 1, 1], [], []>} : vector<16x128xbf16>, vector<128x80xbf16>, vector<16x80xf32> -> vector<16x80xf32>
    %c0_3 = arith.constant 0 : index
    %c0_4 = arith.constant 0 : index
    %3 = vector.load %arg3[%c0_3, %c0_4] : memref<1x80xf32, #tpu.memory_space<vmem>>, vector<1x80xf32>
    %4 = vector.broadcast %3 : vector<1x80xf32> to vector<16x80xf32>
    %5 = arith.addf %2, %4 : vector<16x80xf32>
    %6 = arith.truncf %5 : vector<16x80xf32> to vector<16x80xbf16>
    %c0_5 = arith.constant 0 : index
    %c0_6 = arith.constant 0 : index
    %7 = vector.load %arg4[%c0_5, %c0_6] : memref<16x80xbf16, #tpu.memory_space<vmem>>, vector<16x80xbf16>
    tpu.vector_store %arg4[%c0_5, %c0_6], %6 {strides = array<i32>} : memref<16x80xbf16, #tpu.memory_space<vmem>>, vector<16x80xbf16>,
    return
  }
  func.func @transform_0(%arg0: i32) -> (i32, i32) {
    %c0_i32 = arith.constant 0 : i32
    %c0_i32_0 = arith.constant 0 : i32
    return %arg0, %c0_i32 : i32, i32
  }
  func.func @transform_1(%arg0: i32) -> (i32, i32) {
    %c0_i32 = arith.constant 0 : i32
    %c0_i32_0 = arith.constant 0 : i32
    %c0_i32_1 = arith.constant 0 : i32
    return %c0_i32, %c0_i32_0 : i32, i32
  }
  func.func @transform_2(%arg0: i32) -> (i32, i32) {
    %c0_i32 = arith.constant 0 : i32
    %c0_i32_0 = arith.constant 0 : i32
    %c0_i32_1 = arith.constant 0 : i32
    return %c0_i32, %c0_i32_0 : i32, i32
  }
  func.func @transform_3(%arg0: i32) -> (i32, i32) {
    %c0_i32 = arith.constant 0 : i32
    %c0_i32_0 = arith.constant 0 : i32
    return %arg0, %c0_i32 : i32, i32
  }
}

module attributes {stable_mosaic.version = 11 : i64} {
  func.func @_mm_kernel(%arg0: i32, %arg1: memref<16x512xbf16, #tpu.memory_space<vmem>>, %arg2: memref<512x64xbf16, #tpu.memory_space<vmem>>, %arg3: memref<1x64xf32, #tpu.memory_space<vmem>>, %arg4: memref<16x64xbf16, #tpu.memory_space<vmem>>) attributes {dimension_semantics = [#tpu.dimension_semantics<parallel>], iteration_bounds = array<i64: 2>, scalar_prefetch = 0 : i64, scratch_operands = 0 : i64, tpu.core_type = #tpu.core_type<tc>, window_params = [{transform_indices = @transform_0, window_bounds = array<i64: 16, 512>}, {pipeline_mode = #tpu.pipeline_mode<synchronous>, transform_indices = @transform_1, window_bounds = array<i64: 512, 64>}, {pipeline_mode = #tpu.pipeline_mode<synchronous>, transform_indices = @transform_2, window_bounds = array<i64: 1, 64>}, {transform_indices = @transform_3, window_bounds = array<i64: 16, 64>}]} {
    %c0 = arith.constant 0 : index
    %c0_0 = arith.constant 0 : index
    %0 = vector.load %arg1[%c0, %c0_0] : memref<16x512xbf16, #tpu.memory_space<vmem>>, vector<16x512xbf16>
    %c0_1 = arith.constant 0 : index
    %c0_2 = arith.constant 0 : index
    %1 = vector.load %arg2[%c0_1, %c0_2] : memref<512x64xbf16, #tpu.memory_space<vmem>>, vector<512x64xbf16>
    %cst = arith.constant dense<0.000000e+00> : vector<16x64xf32>
    %2 = tpu.matmul %0, %1, %cst {dimension_numbers = #tpu.dot_dimension_numbers<[1], [0], [0], [1], [0, 0, 1, 1], [], []>} : vector<16x512xbf16>, vector<512x64xbf16>, vector<16x64xf32> -> vector<16x64xf32>
    %c0_3 = arith.constant 0 : index
    %c0_4 = arith.constant 0 : index
    %3 = vector.load %arg3[%c0_3, %c0_4] : memref<1x64xf32, #tpu.memory_space<vmem>>, vector<1x64xf32>
    %4 = vector.broadcast %3 : vector<1x64xf32> to vector<16x64xf32>
    %5 = arith.addf %2, %4 : vector<16x64xf32>
    %6 = arith.truncf %5 : vector<16x64xf32> to vector<16x64xbf16>
    %c0_5 = arith.constant 0 : index
    %c0_6 = arith.constant 0 : index
    %7 = vector.load %arg4[%c0_5, %c0_6] : memref<16x64xbf16, #tpu.memory_space<vmem>>, vector<16x64xbf16>
    tpu.vector_store %arg4[%c0_5, %c0_6], %6 {strides = array<i32>} : memref<16x64xbf16, #tpu.memory_space<vmem>>, vector<16x64xbf16>,
    return
  }
  func.func @transform_0(%arg0: i32) -> (i32, i32) {
    %c0_i32 = arith.constant 0 : i32
    %c0_i32_0 = arith.constant 0 : i32
    return %arg0, %c0_i32 : i32, i32
  }
  func.func @transform_1(%arg0: i32) -> (i32, i32) {
    %c0_i32 = arith.constant 0 : i32
    %c0_i32_0 = arith.constant 0 : i32
    %c0_i32_1 = arith.constant 0 : i32
    return %c0_i32, %c0_i32_0 : i32, i32
  }
  func.func @transform_2(%arg0: i32) -> (i32, i32) {
    %c0_i32 = arith.constant 0 : i32
    %c0_i32_0 = arith.constant 0 : i32
    %c0_i32_1 = arith.constant 0 : i32
    return %c0_i32, %c0_i32_0 : i32, i32
  }
  func.func @transform_3(%arg0: i32) -> (i32, i32) {
    %c0_i32 = arith.constant 0 : i32
    %c0_i32_0 = arith.constant 0 : i32
    return %arg0, %c0_i32 : i32, i32
  }
}

module attributes {stable_mosaic.version = 11 : i64} {
  func.func @_mm_kernel(%arg0: i32, %arg1: memref<16x384xbf16, #tpu.memory_space<vmem>>, %arg2: memref<384x32xbf16, #tpu.memory_space<vmem>>, %arg3: memref<1x32xf32, #tpu.memory_space<vmem>>, %arg4: memref<16x32xbf16, #tpu.memory_space<vmem>>) attributes {dimension_semantics = [#tpu.dimension_semantics<parallel>], iteration_bounds = array<i64: 2>, scalar_prefetch = 0 : i64, scratch_operands = 0 : i64, tpu.core_type = #tpu.core_type<tc>, window_params = [{transform_indices = @transform_0, window_bounds = array<i64: 16, 384>}, {pipeline_mode = #tpu.pipeline_mode<synchronous>, transform_indices = @transform_1, window_bounds = array<i64: 384, 32>}, {pipeline_mode = #tpu.pipeline_mode<synchronous>, transform_indices = @transform_2, window_bounds = array<i64: 1, 32>}, {transform_indices = @transform_3, window_bounds = array<i64: 16, 32>}]} {
    %c0 = arith.constant 0 : index
    %c0_0 = arith.constant 0 : index
    %0 = vector.load %arg1[%c0, %c0_0] : memref<16x384xbf16, #tpu.memory_space<vmem>>, vector<16x384xbf16>
    %c0_1 = arith.constant 0 : index
    %c0_2 = arith.constant 0 : index
    %1 = vector.load %arg2[%c0_1, %c0_2] : memref<384x32xbf16, #tpu.memory_space<vmem>>, vector<384x32xbf16>
    %cst = arith.constant dense<0.000000e+00> : vector<16x32xf32>
    %2 = tpu.matmul %0, %1, %cst {dimension_numbers = #tpu.dot_dimension_numbers<[1], [0], [0], [1], [0, 0, 1, 1], [], []>} : vector<16x384xbf16>, vector<384x32xbf16>, vector<16x32xf32> -> vector<16x32xf32>
    %c0_3 = arith.constant 0 : index
    %c0_4 = arith.constant 0 : index
    %3 = vector.load %arg3[%c0_3, %c0_4] : memref<1x32xf32, #tpu.memory_space<vmem>>, vector<1x32xf32>
    %4 = vector.broadcast %3 : vector<1x32xf32> to vector<16x32xf32>
    %5 = arith.addf %2, %4 : vector<16x32xf32>
    %6 = arith.truncf %5 : vector<16x32xf32> to vector<16x32xbf16>
    %c0_5 = arith.constant 0 : index
    %c0_6 = arith.constant 0 : index
    %7 = vector.load %arg4[%c0_5, %c0_6] : memref<16x32xbf16, #tpu.memory_space<vmem>>, vector<16x32xbf16>
    tpu.vector_store %arg4[%c0_5, %c0_6], %6 {strides = array<i32>} : memref<16x32xbf16, #tpu.memory_space<vmem>>, vector<16x32xbf16>,
    return
  }
  func.func @transform_0(%arg0: i32) -> (i32, i32) {
    %c0_i32 = arith.constant 0 : i32
    %c0_i32_0 = arith.constant 0 : i32
    return %arg0, %c0_i32 : i32, i32
  }
  func.func @transform_1(%arg0: i32) -> (i32, i32) {
    %c0_i32 = arith.constant 0 : i32
    %c0_i32_0 = arith.constant 0 : i32
    %c0_i32_1 = arith.constant 0 : i32
    return %c0_i32, %c0_i32_0 : i32, i32
  }
  func.func @transform_2(%arg0: i32) -> (i32, i32) {
    %c0_i32 = arith.constant 0 : i32
    %c0_i32_0 = arith.constant 0 : i32
    %c0_i32_1 = arith.constant 0 : i32
    return %c0_i32, %c0_i32_0 : i32, i32
  }
  func.func @transform_3(%arg0: i32) -> (i32, i32) {
    %c0_i32 = arith.constant 0 : i32
    %c0_i32_0 = arith.constant 0 : i32
    return %arg0, %c0_i32 : i32, i32
  }
}

module attributes {stable_mosaic.version = 11 : i64} {
  func.func @_mm_kernel(%arg0: i32, %arg1: memref<16x128xbf16, #tpu.memory_space<vmem>>, %arg2: memref<128x128xbf16, #tpu.memory_space<vmem>>, %arg3: memref<1x128xf32, #tpu.memory_space<vmem>>, %arg4: memref<16x128xbf16, #tpu.memory_space<vmem>>) attributes {dimension_semantics = [#tpu.dimension_semantics<parallel>], iteration_bounds = array<i64: 2>, scalar_prefetch = 0 : i64, scratch_operands = 0 : i64, tpu.core_type = #tpu.core_type<tc>, window_params = [{transform_indices = @transform_0, window_bounds = array<i64: 16, 128>}, {pipeline_mode = #tpu.pipeline_mode<synchronous>, transform_indices = @transform_1, window_bounds = array<i64: 128, 128>}, {pipeline_mode = #tpu.pipeline_mode<synchronous>, transform_indices = @transform_2, window_bounds = array<i64: 1, 128>}, {transform_indices = @transform_3, window_bounds = array<i64: 16, 128>}]} {
    %c0 = arith.constant 0 : index
    %c0_0 = arith.constant 0 : index
    %0 = vector.load %arg1[%c0, %c0_0] : memref<16x128xbf16, #tpu.memory_space<vmem>>, vector<16x128xbf16>
    %c0_1 = arith.constant 0 : index
    %c0_2 = arith.constant 0 : index
    %1 = vector.load %arg2[%c0_1, %c0_2] : memref<128x128xbf16, #tpu.memory_space<vmem>>, vector<128x128xbf16>
    %cst = arith.constant dense<0.000000e+00> : vector<16x128xf32>
    %2 = tpu.matmul %0, %1, %cst {dimension_numbers = #tpu.dot_dimension_numbers<[1], [0], [0], [1], [0, 0, 1, 1], [], []>} : vector<16x128xbf16>, vector<128x128xbf16>, vector<16x128xf32> -> vector<16x128xf32>
    %c0_3 = arith.constant 0 : index
    %c0_4 = arith.constant 0 : index
    %3 = vector.load %arg3[%c0_3, %c0_4] : memref<1x128xf32, #tpu.memory_space<vmem>>, vector<1x128xf32>
    %4 = vector.broadcast %3 : vector<1x128xf32> to vector<16x128xf32>
    %5 = arith.addf %2, %4 : vector<16x128xf32>
    %6 = arith.truncf %5 : vector<16x128xf32> to vector<16x128xbf16>
    %c0_5 = arith.constant 0 : index
    %c0_6 = arith.constant 0 : index
    %7 = vector.load %arg4[%c0_5, %c0_6] : memref<16x128xbf16, #tpu.memory_space<vmem>>, vector<16x128xbf16>
    tpu.vector_store %arg4[%c0_5, %c0_6], %6 {strides = array<i32>} : memref<16x128xbf16, #tpu.memory_space<vmem>>, vector<16x128xbf16>,
    return
  }
  func.func @transform_0(%arg0: i32) -> (i32, i32) {
    %c0_i32 = arith.constant 0 : i32
    %c0_i32_0 = arith.constant 0 : i32
    return %arg0, %c0_i32 : i32, i32
  }
  func.func @transform_1(%arg0: i32) -> (i32, i32) {
    %c0_i32 = arith.constant 0 : i32
    %c0_i32_0 = arith.constant 0 : i32
    %c0_i32_1 = arith.constant 0 : i32
    return %c0_i32, %c0_i32_0 : i32, i32
  }
  func.func @transform_2(%arg0: i32) -> (i32, i32) {
    %c0_i32 = arith.constant 0 : i32
    %c0_i32_0 = arith.constant 0 : i32
    %c0_i32_1 = arith.constant 0 : i32
    return %c0_i32, %c0_i32_0 : i32, i32
  }
  func.func @transform_3(%arg0: i32) -> (i32, i32) {
    %c0_i32 = arith.constant 0 : i32
    %c0_i32_0 = arith.constant 0 : i32
    return %arg0, %c0_i32 : i32, i32
  }
}

module attributes {stable_mosaic.version = 11 : i64} {
  func.func @_mm_kernel(%arg0: i32, %arg1: memref<8x1152xbf16, #tpu.memory_space<vmem>>, %arg2: memref<1152x256xbf16, #tpu.memory_space<vmem>>, %arg3: memref<1x256xf32, #tpu.memory_space<vmem>>, %arg4: memref<8x256xbf16, #tpu.memory_space<vmem>>) attributes {dimension_semantics = [#tpu.dimension_semantics<parallel>], iteration_bounds = array<i64: 1>, scalar_prefetch = 0 : i64, scratch_operands = 0 : i64, tpu.core_type = #tpu.core_type<tc>, window_params = [{transform_indices = @transform_0, window_bounds = array<i64: 8, 1152>}, {pipeline_mode = #tpu.pipeline_mode<synchronous>, transform_indices = @transform_1, window_bounds = array<i64: 1152, 256>}, {pipeline_mode = #tpu.pipeline_mode<synchronous>, transform_indices = @transform_2, window_bounds = array<i64: 1, 256>}, {transform_indices = @transform_3, window_bounds = array<i64: 8, 256>}]} {
    %c0 = arith.constant 0 : index
    %c0_0 = arith.constant 0 : index
    %0 = vector.load %arg1[%c0, %c0_0] : memref<8x1152xbf16, #tpu.memory_space<vmem>>, vector<8x1152xbf16>
    %c0_1 = arith.constant 0 : index
    %c0_2 = arith.constant 0 : index
    %1 = vector.load %arg2[%c0_1, %c0_2] : memref<1152x256xbf16, #tpu.memory_space<vmem>>, vector<1152x256xbf16>
    %cst = arith.constant dense<0.000000e+00> : vector<8x256xf32>
    %2 = tpu.matmul %0, %1, %cst {dimension_numbers = #tpu.dot_dimension_numbers<[1], [0], [0], [1], [0, 0, 1, 1], [], []>} : vector<8x1152xbf16>, vector<1152x256xbf16>, vector<8x256xf32> -> vector<8x256xf32>
    %c0_3 = arith.constant 0 : index
    %c0_4 = arith.constant 0 : index
    %3 = vector.load %arg3[%c0_3, %c0_4] : memref<1x256xf32, #tpu.memory_space<vmem>>, vector<1x256xf32>
    %4 = vector.broadcast %3 : vector<1x256xf32> to vector<8x256xf32>
    %5 = arith.addf %2, %4 : vector<8x256xf32>
    %6 = arith.truncf %5 : vector<8x256xf32> to vector<8x256xbf16>
    %c0_5 = arith.constant 0 : index
    %c0_6 = arith.constant 0 : index
    %7 = vector.load %arg4[%c0_5, %c0_6] : memref<8x256xbf16, #tpu.memory_space<vmem>>, vector<8x256xbf16>
    tpu.vector_store %arg4[%c0_5, %c0_6], %6 {strides = array<i32>} : memref<8x256xbf16, #tpu.memory_space<vmem>>, vector<8x256xbf16>,
    return
  }
  func.func @transform_0(%arg0: i32) -> (i32, i32) {
    %c0_i32 = arith.constant 0 : i32
    %c0_i32_0 = arith.constant 0 : i32
    return %arg0, %c0_i32 : i32, i32
  }
  func.func @transform_1(%arg0: i32) -> (i32, i32) {
    %c0_i32 = arith.constant 0 : i32
    %c0_i32_0 = arith.constant 0 : i32
    %c0_i32_1 = arith.constant 0 : i32
    return %c0_i32, %c0_i32_0 : i32, i32
  }
  func.func @transform_2(%arg0: i32) -> (i32, i32) {
    %c0_i32 = arith.constant 0 : i32
    %c0_i32_0 = arith.constant 0 : i32
    %c0_i32_1 = arith.constant 0 : i32
    return %c0_i32, %c0_i32_0 : i32, i32
  }
  func.func @transform_3(%arg0: i32) -> (i32, i32) {
    %c0_i32 = arith.constant 0 : i32
    %c0_i32_0 = arith.constant 0 : i32
    return %arg0, %c0_i32 : i32, i32
  }
}

module attributes {stable_mosaic.version = 11 : i64} {
  func.func @_mm_kernel(%arg0: i32, %arg1: memref<8x256xbf16, #tpu.memory_space<vmem>>, %arg2: memref<256x128xbf16, #tpu.memory_space<vmem>>, %arg3: memref<1x128xf32, #tpu.memory_space<vmem>>, %arg4: memref<8x128xbf16, #tpu.memory_space<vmem>>) attributes {dimension_semantics = [#tpu.dimension_semantics<parallel>], iteration_bounds = array<i64: 1>, scalar_prefetch = 0 : i64, scratch_operands = 0 : i64, tpu.core_type = #tpu.core_type<tc>, window_params = [{transform_indices = @transform_0, window_bounds = array<i64: 8, 256>}, {pipeline_mode = #tpu.pipeline_mode<synchronous>, transform_indices = @transform_1, window_bounds = array<i64: 256, 128>}, {pipeline_mode = #tpu.pipeline_mode<synchronous>, transform_indices = @transform_2, window_bounds = array<i64: 1, 128>}, {transform_indices = @transform_3, window_bounds = array<i64: 8, 128>}]} {
    %c0 = arith.constant 0 : index
    %c0_0 = arith.constant 0 : index
    %0 = vector.load %arg1[%c0, %c0_0] : memref<8x256xbf16, #tpu.memory_space<vmem>>, vector<8x256xbf16>
    %c0_1 = arith.constant 0 : index
    %c0_2 = arith.constant 0 : index
    %1 = vector.load %arg2[%c0_1, %c0_2] : memref<256x128xbf16, #tpu.memory_space<vmem>>, vector<256x128xbf16>
    %cst = arith.constant dense<0.000000e+00> : vector<8x128xf32>
    %2 = tpu.matmul %0, %1, %cst {dimension_numbers = #tpu.dot_dimension_numbers<[1], [0], [0], [1], [0, 0, 1, 1], [], []>} : vector<8x256xbf16>, vector<256x128xbf16>, vector<8x128xf32> -> vector<8x128xf32>
    %c0_3 = arith.constant 0 : index
    %c0_4 = arith.constant 0 : index
    %3 = vector.load %arg3[%c0_3, %c0_4] : memref<1x128xf32, #tpu.memory_space<vmem>>, vector<1x128xf32>
    %4 = vector.broadcast %3 : vector<1x128xf32> to vector<8x128xf32>
    %5 = arith.addf %2, %4 : vector<8x128xf32>
    %6 = arith.truncf %5 : vector<8x128xf32> to vector<8x128xbf16>
    %c0_5 = arith.constant 0 : index
    %c0_6 = arith.constant 0 : index
    %7 = vector.load %arg4[%c0_5, %c0_6] : memref<8x128xbf16, #tpu.memory_space<vmem>>, vector<8x128xbf16>
    tpu.vector_store %arg4[%c0_5, %c0_6], %6 {strides = array<i32>} : memref<8x128xbf16, #tpu.memory_space<vmem>>, vector<8x128xbf16>,
    return
  }
  func.func @transform_0(%arg0: i32) -> (i32, i32) {
    %c0_i32 = arith.constant 0 : i32
    %c0_i32_0 = arith.constant 0 : i32
    return %arg0, %c0_i32 : i32, i32
  }
  func.func @transform_1(%arg0: i32) -> (i32, i32) {
    %c0_i32 = arith.constant 0 : i32
    %c0_i32_0 = arith.constant 0 : i32
    %c0_i32_1 = arith.constant 0 : i32
    return %c0_i32, %c0_i32_0 : i32, i32
  }
  func.func @transform_2(%arg0: i32) -> (i32, i32) {
    %c0_i32 = arith.constant 0 : i32
    %c0_i32_0 = arith.constant 0 : i32
    %c0_i32_1 = arith.constant 0 : i32
    return %c0_i32, %c0_i32_0 : i32, i32
  }
  func.func @transform_3(%arg0: i32) -> (i32, i32) {
    %c0_i32 = arith.constant 0 : i32
    %c0_i32_0 = arith.constant 0 : i32
    return %arg0, %c0_i32 : i32, i32
  }
}

</mosaic_0001>

<llo_original>
// kernel: neg.5
$region0: #{neg.5}
  #allocation0 [shape = 's32[1]{0}', space=sflag, size = 0x4, scoped, tag = 'scoped memory for neg.5']
  %s0 = inlined_call_operand.vmem [shape: f32[24], index: 0, kind: input, shape index: {}]
  %s1 = inlined_call_operand.vmem [shape: f32[24], index: 1, kind: output, shape index: {}]
  %v2 = vld [vmem:[%s0] sm:$0x1]
  %3 = xla_tuple %v2
  %4 = xla_tuple %3
  %v5 = vxor.u32 %v2, 2147483648
  %6 = xla_tuple %v5
  %7 = vst [vmem:[%s1] sm:$0x1] %v5

// kernel: facebox_forward.20
$region0: #{facebox_forward.20}
  #allocation0 [shape = 'u32[]', space=smem, size = 0x4, offset = 0x4, fixed_abs, tag = 'smem constant byte address 0x4 - core index']
  #allocation1 [shape = 'u32[144,128]{1,0:T(1,128)}', space=vmem, size = 0x12000, scoped, tag = 'internal scratch']
  %s0 = inlined_call_operand.vmem [shape: bf16[2048,256], index: 0, kind: input, shape index: {}]
  %s1 = inlined_call_operand.vmem [shape: bf16[256,48], index: 1, kind: input, shape index: {}]
  %s2 = inlined_call_operand.vmem [shape: f32[1,48], index: 2, kind: input, shape index: {}]
  %s3 = inlined_call_operand.vmem [shape: bf16[2048,48], index: 3, kind: output, shape index: {}]
  %s4 = sld [smem:[#allocation0]]
  $region45: #{facebox_forward.20} parent=0
    _
  %s6 = ssub.s32 1, %s4
  %s7 = scalar_select 0, %s6, %s4
  loop: start=0, step=1, limit=4
  $region2: #{facebox_forward.20} parent=0 // loop_pre_header
    _
  $region3: #{facebox_forward.20} parent=0 // loop_header
    %s9 = sphi 0, %s13
    %p10 = scmp.ge.s32.totalorder %s9, 4
    %s19 = sphi 0, %s21
    %s22 = sphi 0, %s19
    %s23 = sphi 0, %s22
    %s39 = sphi 0, %s23
    %s43 = sphi 0, %s43
    %s45 = sphi 0, %s43
    %s46 = sphi 0, %s45
    %s60 = sphi 0, %s46
    %s64 = sphi 0, %s64
    %s66 = sphi 0, %s64
    %s67 = sphi 0, %s66
    %s81 = sphi 0, %s67
    %s87 = sphi 0, %s89
    %s90 = sphi 0, %s87
    %s91 = sphi 0, %s90
    %s107 = sphi 0, %s91
  $region4: #{facebox_forward.20} parent=0 // loop_header_branch
    %12 = sbr.rel (%p10) target = $region8
  $region5: #{facebox_forward.20} parent=0 // loop_body
    %s14 = ssub.s32 %s9, 1
    %s15 = ssub.s32 %s9, 2
    %s16 = sadd.s32 %s9, 1
    %s17 = ssub.s32 %s9, %s16
    %p18 = scmp.eq.s32.totalorder %s17, 0
    %s20 = sadd.s32 %s19, 1
    %s21 = scalar_select %p18, %s19, %s20
    %p24 = pneg %p18
    %p25 = scmp.eq.s32.totalorder %s9, 1
    %p26 = por %p24, %p25
    %p27 = scmp.ne.s32.totalorder %s19, %s22
    %p28 = scmp.eq.s32.totalorder %s9, 0
    %p29 = por %p27, %p28
    %p30 = scmp.ne.s32.totalorder %s19, %s22
    %p31 = scmp.eq.s32.totalorder %s14, 1
    %p32 = por %p30, %p31
    %p33 = scmp.ne.s32.totalorder %s22, %s23
    %p34 = scmp.eq.s32.totalorder %s14, 0
    %p35 = por %p33, %p34
    %p36 = scmp.ne.s32.totalorder %s22, %s23
    %p37 = scmp.eq.s32.totalorder %s15, 1
    %p38 = por %p36, %p37
    %p40 = scmp.ne.s32.totalorder %s23, %s39
    %p41 = scmp.eq.s32.totalorder %s15, 0
    %p42 = por %p40, %p41
    %s44 = sadd.s32 %s43, 1
    %p47 = scmp.eq.s32.totalorder %s9, 1
    %p48 = scmp.ne.s32.totalorder %s43, %s45
    %p49 = scmp.eq.s32.totalorder %s9, 0
    %p50 = por %p48, %p49
    %p51 = scmp.ne.s32.totalorder %s43, %s45
    %p52 = scmp.eq.s32.totalorder %s14, 1
    %p53 = por %p51, %p52
    %p54 = scmp.ne.s32.totalorder %s45, %s46
    %p55 = scmp.eq.s32.totalorder %s14, 0
    %p56 = por %p54, %p55
    %p57 = scmp.ne.s32.totalorder %s45, %s46
    %p58 = scmp.eq.s32.totalorder %s15, 1
    %p59 = por %p57, %p58
    %p61 = scmp.ne.s32.totalorder %s46, %s60
    %p62 = scmp.eq.s32.totalorder %s15, 0
    %p63 = por %p61, %p62
    %s65 = sadd.s32 %s64, 1
    %p68 = scmp.eq.s32.totalorder %s9, 1
    %p69 = scmp.ne.s32.totalorder %s64, %s66
    %p70 = scmp.eq.s32.totalorder %s9, 0
    %p71 = por %p69, %p70
    %p72 = scmp.ne.s32.totalorder %s64, %s66
    %p73 = scmp.eq.s32.totalorder %s14, 1
    %p74 = por %p72, %p73
    %p75 = scmp.ne.s32.totalorder %s66, %s67
    %p76 = scmp.eq.s32.totalorder %s14, 0
    %p77 = por %p75, %p76
    %p78 = scmp.ne.s32.totalorder %s66, %s67
    %p79 = scmp.eq.s32.totalorder %s15, 1
    %p80 = por %p78, %p79
    %p82 = scmp.ne.s32.totalorder %s67, %s81
    %p83 = scmp.eq.s32.totalorder %s15, 0
    %p84 = por %p82, %p83
    %s85 = ssub.s32 %s9, %s16
    %p86 = scmp.eq.s32.totalorder %s85, 0
    %s88 = sadd.s32 %s87, 1
    %s89 = scalar_select %p86, %s87, %s88
    %p92 = pneg %p86
    %p93 = scmp.eq.s32.totalorder %s9, 1
    %p94 = por %p92, %p93
    %p95 = scmp.ne.s32.totalorder %s87, %s90
    %p96 = scmp.eq.s32.totalorder %s9, 0
    %p97 = por %p95, %p96
    %p98 = scmp.ne.s32.totalorder %s87, %s90
    %p99 = scmp.eq.s32.totalorder %s14, 1
    %p100 = por %p98, %p99
    %p101 = scmp.ne.s32.totalorder %s90, %s91
    %p102 = scmp.eq.s32.totalorder %s14, 0
    %p103 = por %p101, %p102
    %p104 = scmp.ne.s32.totalorder %s90, %s91
    %p105 = scmp.eq.s32.totalorder %s15, 1
    %p106 = por %p104, %p105
    %p108 = scmp.ne.s32.totalorder %s91, %s107
    %p109 = scmp.eq.s32.totalorder %s15, 0
    %p110 = por %p108, %p109
    %p111 = scmp.le.s32.totalorder 1, %s9
    %p112 = scmp.lt.s32.totalorder %s9, 3
    %p113 = pnand %p111, %p112
    %p114 = pneg %p113
    // Predicated region
    $region9: #{facebox_forward.20} parent=5 // pred_check
      _
    $region10: #{facebox_forward.20} parent=5 // pred_check_branch
      %116 = sbr.rel (%p113) target = $region12
    $region11: #{facebox_forward.20} parent=5 // pred_region
      %s117 = ssub.s32 %s9, 1
      // Predicated region
      $region13: #{facebox_forward.20} parent=11 // pred_check
        %p118 = pneg %p56
      $region14: #{facebox_forward.20} parent=11 // pred_check_branch
        %120 = sbr.rel (%p118) target = $region16
      $region15: #{facebox_forward.20} parent=11 // pred_region
        _
      $region16: #{facebox_forward.20} parent=11 // pred_fallthru
        _
      // Predicated region
      $region17: #{facebox_forward.20} parent=11 // pred_check
        %p121 = pneg %p77
      $region18: #{facebox_forward.20} parent=11 // pred_check_branch
        %123 = sbr.rel (%p121) target = $region20
      $region19: #{facebox_forward.20} parent=11 // pred_region
        _
      $region20: #{facebox_forward.20} parent=11 // pred_fallthru
        _
    $region12: #{facebox_forward.20} parent=5 // pred_fallthru
      _
    %p124 = scmp.lt.s32.totalorder %s9, 2
    // Predicated region
    $region21: #{facebox_forward.20} parent=5 // pred_check
      %p125 = pneg %p124
    $region22: #{facebox_forward.20} parent=5 // pred_check_branch
      %127 = sbr.rel (%p125) target = $region24
    $region23: #{facebox_forward.20} parent=5 // pred_region
      // Predicated region
      $region25: #{facebox_forward.20} parent=23 // pred_check
        %p128 = pneg %p29
      $region26: #{facebox_forward.20} parent=23 // pred_check_branch
        %130 = sbr.rel (%p128) target = $region28
      $region27: #{facebox_forward.20} parent=23 // pred_region
        %s131 = smul.u32 128, %s9
        %p132 = scmp.lt.s32.totalorder %s131, 255
        %s133 = scalar_select %p132, %s131, 255
        %s134 = smul.addr %s133, 2
        %s135 = smul.addr %s134, 4
        %s136 = scalar_lea.vmem %s0, %s135
        %s137 = smul.u32 128, %s9
      $region28: #{facebox_forward.20} parent=23 // pred_fallthru
        _
    $region24: #{facebox_forward.20} parent=5 // pred_fallthru
      _
    %p138 = scmp.le.s32.totalorder 1, %s9
    %p139 = scmp.lt.s32.totalorder %s9, 3
    %p140 = pnand %p138, %p139
    %p141 = pneg %p140
    // Predicated region
    $region29: #{facebox_forward.20} parent=5 // pred_check
      _
    $region30: #{facebox_forward.20} parent=5 // pred_check_branch
      %143 = sbr.rel (%p140) target = $region32
    $region31: #{facebox_forward.20} parent=5 // pred_region
      %s144 = ssub.s32 %s9, 1
      %s145 = smul.u32 128, %s14
      %p146 = scmp.lt.s32.totalorder %s145, 255
      %s147 = scalar_select %p146, %s145, 255
      %s148 = smul.addr %s147, 2
      %s149 = smul.addr %s148, 4
      %s150 = scalar_lea.vmem %s0, %s149
      %p151 = pneg %p35
      %p152 = pneg %p32
      %p153 = pneg %p56
      %p154 = pneg %p53
      %p155 = pneg %p77
      %p156 = pneg %p74
      %p157 = pneg %p103
      %p158 = pneg %p100
      %s159 = smul.u32 128, %s14
      %p160 = scmp.lt.s32.totalorder %s159, 255
      %s161 = scalar_select %p160, %s159, 255
      %s162 = smul.addr %s161, 4
      %s163 = scalar_lea.vmem %s3, %s162
      %s164 = smul.u32 128, %s14
      %p165 = scmp.lt.s32.totalorder %s164, 255
      %s166 = scalar_select %p165, %s164, 255
      %s167 = smul.addr %s166, 2
      %s168 = smul.addr %s167, 4
      %s169 = scalar_lea.vmem %s0, %s168
      %s170 = smul.u32 128, %s14
      %s171 = smul.u32 128, %s14
      %p172 = scmp.lt.s32.totalorder %s171, 255
      %s173 = scalar_select %p172, %s171, 255
      %s174 = smul.addr %s173, 4
      %s175 = scalar_lea.vmem %s3, %s174
      %s176 = smul.u32 128, %s14
      %v178 = vld [vmem:[%s169] sm:$0xff]
      %v179 = vld [vmem:[%s169 + $0x8] sm:$0xff]
      %v180 = vld [vmem:[%s169 + $0x10] sm:$0xff]
      %v181 = vld [vmem:[%s169 + $0x18] sm:$0xff]
      %v182 = vld [vmem:[%s169 + $0x20] sm:$0xff]
      %v183 = vld [vmem:[%s169 + $0x28] sm:$0xff]
      %v184 = vld [vmem:[%s169 + $0x30] sm:$0xff]
      %v185 = vld [vmem:[%s169 + $0x38] sm:$0xff]
      %v186 = vld [vmem:[%s169 + $0x40] sm:$0xff]
      %v187 = vld [vmem:[%s169 + $0x48] sm:$0xff]
      %v188 = vld [vmem:[%s169 + $0x50] sm:$0xff]
      %v189 = vld [vmem:[%s169 + $0x58] sm:$0xff]
      %v190 = vld [vmem:[%s169 + $0x60] sm:$0xff]
      %v191 = vld [vmem:[%s169 + $0x68] sm:$0xff]
      %v192 = vld [vmem:[%s169 + $0x70] sm:$0xff]
      %v193 = vld [vmem:[%s169 + $0x78] sm:$0xff]
      %v194 = vld [vmem:[%s169 + $0x80] sm:$0xff]
      %v195 = vld [vmem:[%s169 + $0x88] sm:$0xff]
      %v196 = vld [vmem:[%s169 + $0x90] sm:$0xff]
      %v197 = vld [vmem:[%s169 + $0x98] sm:$0xff]
      %v198 = vld [vmem:[%s169 + $0xa0] sm:$0xff]
      %v199 = vld [vmem:[%s169 + $0xa8] sm:$0xff]
      %v200 = vld [vmem:[%s169 + $0xb0] sm:$0xff]
      %v201 = vld [vmem:[%s169 + $0xb8] sm:$0xff]
      %v202 = vld [vmem:[%s169 + $0xc0] sm:$0xff]
      %v203 = vld [vmem:[%s169 + $0xc8] sm:$0xff]
      %v204 = vld [vmem:[%s169 + $0xd0] sm:$0xff]
      %v205 = vld [vmem:[%s169 + $0xd8] sm:$0xff]
      %v206 = vld [vmem:[%s169 + $0xe0] sm:$0xff]
      %v207 = vld [vmem:[%s169 + $0xe8] sm:$0xff]
      %v208 = vld [vmem:[%s169 + $0xf0] sm:$0xff]
      %v209 = vld [vmem:[%s169 + $0xf8] sm:$0xff]
      %v210 = vld [vmem:[%s169 + $0x100] sm:$0xff]
      %v211 = vld [vmem:[%s169 + $0x108] sm:$0xff]
      %v212 = vld [vmem:[%s169 + $0x110] sm:$0xff]
      %v213 = vld [vmem:[%s169 + $0x118] sm:$0xff]
      %v214 = vld [vmem:[%s169 + $0x120] sm:$0xff]
      %v215 = vld [vmem:[%s169 + $0x128] sm:$0xff]
      %v216 = vld [vmem:[%s169 + $0x130] sm:$0xff]
      %v217 = vld [vmem:[%s169 + $0x138] sm:$0xff]
      %v218 = vld [vmem:[%s169 + $0x140] sm:$0xff]
      %v219 = vld [vmem:[%s169 + $0x148] sm:$0xff]
      %v220 = vld [vmem:[%s169 + $0x150] sm:$0xff]
      %v221 = vld [vmem:[%s169 + $0x158] sm:$0xff]
      %v222 = vld [vmem:[%s169 + $0x160] sm:$0xff]
      %v223 = vld [vmem:[%s169 + $0x168] sm:$0xff]
      %v224 = vld [vmem:[%s169 + $0x170] sm:$0xff]
      %v225 = vld [vmem:[%s169 + $0x178] sm:$0xff]
      %v226 = vld [vmem:[%s169 + $0x180] sm:$0xff]
      %v227 = vld [vmem:[%s169 + $0x188] sm:$0xff]
      %v228 = vld [vmem:[%s169 + $0x190] sm:$0xff]
      %v229 = vld [vmem:[%s169 + $0x198] sm:$0xff]
      %v230 = vld [vmem:[%s169 + $0x1a0] sm:$0xff]
      %v231 = vld [vmem:[%s169 + $0x1a8] sm:$0xff]
      %v232 = vld [vmem:[%s169 + $0x1b0] sm:$0xff]
      %v233 = vld [vmem:[%s169 + $0x1b8] sm:$0xff]
      %v234 = vld [vmem:[%s169 + $0x1c0] sm:$0xff]
      %v235 = vld [vmem:[%s169 + $0x1c8] sm:$0xff]
      %v236 = vld [vmem:[%s169 + $0x1d0] sm:$0xff]
      %v237 = vld [vmem:[%s169 + $0x1d8] sm:$0xff]
      %v238 = vld [vmem:[%s169 + $0x1e0] sm:$0xff]
      %v239 = vld [vmem:[%s169 + $0x1e8] sm:$0xff]
      %v240 = vld [vmem:[%s169 + $0x1f0] sm:$0xff]
      %v241 = vld [vmem:[%s169 + $0x1f8] sm:$0xff]
      %v242 = vld [vmem:[%s169 + $0x200] sm:$0xff]
      %v243 = vld [vmem:[%s169 + $0x208] sm:$0xff]
      %v244 = vld [vmem:[%s169 + $0x210] sm:$0xff]
      %v245 = vld [vmem:[%s169 + $0x218] sm:$0xff]
      %v246 = vld [vmem:[%s169 + $0x220] sm:$0xff]
      %v247 = vld [vmem:[%s169 + $0x228] sm:$0xff]
      %v248 = vld [vmem:[%s169 + $0x230] sm:$0xff]
      %v249 = vld [vmem:[%s169 + $0x238] sm:$0xff]
      %v250 = vld [vmem:[%s169 + $0x240] sm:$0xff]
      %v251 = vld [vmem:[%s169 + $0x248] sm:$0xff]
      %v252 = vld [vmem:[%s169 + $0x250] sm:$0xff]
      %v253 = vld [vmem:[%s169 + $0x258] sm:$0xff]
      %v254 = vld [vmem:[%s169 + $0x260] sm:$0xff]
      %v255 = vld [vmem:[%s169 + $0x268] sm:$0xff]
      %v256 = vld [vmem:[%s169 + $0x270] sm:$0xff]
      %v257 = vld [vmem:[%s169 + $0x278] sm:$0xff]
      %v258 = vld [vmem:[%s169 + $0x280] sm:$0xff]
      %v259 = vld [vmem:[%s169 + $0x288] sm:$0xff]
      %v260 = vld [vmem:[%s169 + $0x290] sm:$0xff]
      %v261 = vld [vmem:[%s169 + $0x298] sm:$0xff]
      %v262 = vld [vmem:[%s169 + $0x2a0] sm:$0xff]
      %v263 = vld [vmem:[%s169 + $0x2a8] sm:$0xff]
      %v264 = vld [vmem:[%s169 + $0x2b0] sm:$0xff]
      %v265 = vld [vmem:[%s169 + $0x2b8] sm:$0xff]
      %v266 = vld [vmem:[%s169 + $0x2c0] sm:$0xff]
      %v267 = vld [vmem:[%s169 + $0x2c8] sm:$0xff]
      %v268 = vld [vmem:[%s169 + $0x2d0] sm:$0xff]
      %v269 = vld [vmem:[%s169 + $0x2d8] sm:$0xff]
      %v270 = vld [vmem:[%s169 + $0x2e0] sm:$0xff]
      %v271 = vld [vmem:[%s169 + $0x2e8] sm:$0xff]
      %v272 = vld [vmem:[%s169 + $0x2f0] sm:$0xff]
      %v273 = vld [vmem:[%s169 + $0x2f8] sm:$0xff]
      %v274 = vld [vmem:[%s169 + $0x300] sm:$0xff]
      %v275 = vld [vmem:[%s169 + $0x308] sm:$0xff]
      %v276 = vld [vmem:[%s169 + $0x310] sm:$0xff]
      %v277 = vld [vmem:[%s169 + $0x318] sm:$0xff]
      %v278 = vld [vmem:[%s169 + $0x320] sm:$0xff]
      %v279 = vld [vmem:[%s169 + $0x328] sm:$0xff]
      %v280 = vld [vmem:[%s169 + $0x330] sm:$0xff]
      %v281 = vld [vmem:[%s169 + $0x338] sm:$0xff]
      %v282 = vld [vmem:[%s169 + $0x340] sm:$0xff]
      %v283 = vld [vmem:[%s169 + $0x348] sm:$0xff]
      %v284 = vld [vmem:[%s169 + $0x350] sm:$0xff]
      %v285 = vld [vmem:[%s169 + $0x358] sm:$0xff]
      %v286 = vld [vmem:[%s169 + $0x360] sm:$0xff]
      %v287 = vld [vmem:[%s169 + $0x368] sm:$0xff]
      %v288 = vld [vmem:[%s169 + $0x370] sm:$0xff]
      %v289 = vld [vmem:[%s169 + $0x378] sm:$0xff]
      %v290 = vld [vmem:[%s169 + $0x380] sm:$0xff]
      %v291 = vld [vmem:[%s169 + $0x388] sm:$0xff]
      %v292 = vld [vmem:[%s169 + $0x390] sm:$0xff]
      %v293 = vld [vmem:[%s169 + $0x398] sm:$0xff]
      %v294 = vld [vmem:[%s169 + $0x3a0] sm:$0xff]
      %v295 = vld [vmem:[%s169 + $0x3a8] sm:$0xff]
      %v296 = vld [vmem:[%s169 + $0x3b0] sm:$0xff]
      %v297 = vld [vmem:[%s169 + $0x3b8] sm:$0xff]
      %v298 = vld [vmem:[%s169 + $0x3c0] sm:$0xff]
      %v299 = vld [vmem:[%s169 + $0x3c8] sm:$0xff]
      %v300 = vld [vmem:[%s169 + $0x3d0] sm:$0xff]
      %v301 = vld [vmem:[%s169 + $0x3d8] sm:$0xff]
      %v302 = vld [vmem:[%s169 + $0x3e0] sm:$0xff]
      %v303 = vld [vmem:[%s169 + $0x3e8] sm:$0xff]
      %v304 = vld [vmem:[%s169 + $0x3f0] sm:$0xff]
      %v305 = vld [vmem:[%s169 + $0x3f8] sm:$0xff]
      %v306 = vld [vmem:[%s1] sm:$0xf]
      %v307 = vld [vmem:[%s1 + $0x4] sm:$0xf]
      %v308 = vld [vmem:[%s1 + $0x8] sm:$0xf]
      %v309 = vld [vmem:[%s1 + $0xc] sm:$0xf]
      %v310 = vld [vmem:[%s1 + $0x10] sm:$0xf]
      %v311 = vld [vmem:[%s1 + $0x14] sm:$0xf]
      %v312 = vld [vmem:[%s1 + $0x18] sm:$0xf]
      %v313 = vld [vmem:[%s1 + $0x1c] sm:$0xf]
      %v314 = vld [vmem:[%s1 + $0x20] sm:$0xf]
      %v315 = vld [vmem:[%s1 + $0x24] sm:$0xf]
      %v316 = vld [vmem:[%s1 + $0x28] sm:$0xf]
      %v317 = vld [vmem:[%s1 + $0x2c] sm:$0xf]
      %v318 = vld [vmem:[%s1 + $0x30] sm:$0xf]
      %v319 = vld [vmem:[%s1 + $0x34] sm:$0xf]
      %v320 = vld [vmem:[%s1 + $0x38] sm:$0xf]
      %v321 = vld [vmem:[%s1 + $0x3c] sm:$0xf]
      %v322 = vld [vmem:[%s1 + $0x40] sm:$0xf]
      %v323 = vld [vmem:[%s1 + $0x44] sm:$0xf]
      %v324 = vld [vmem:[%s1 + $0x48] sm:$0xf]
      %v325 = vld [vmem:[%s1 + $0x4c] sm:$0xf]
      %v326 = vld [vmem:[%s1 + $0x50] sm:$0xf]
      %v327 = vld [vmem:[%s1 + $0x54] sm:$0xf]
      %v328 = vld [vmem:[%s1 + $0x58] sm:$0xf]
      %v329 = vld [vmem:[%s1 + $0x5c] sm:$0xf]
      %v330 = vld [vmem:[%s1 + $0x60] sm:$0xf]
      %v331 = vld [vmem:[%s1 + $0x64] sm:$0xf]
      %v332 = vld [vmem:[%s1 + $0x68] sm:$0xf]
      %v333 = vld [vmem:[%s1 + $0x6c] sm:$0xf]
      %v334 = vld [vmem:[%s1 + $0x70] sm:$0xf]
      %v335 = vld [vmem:[%s1 + $0x74] sm:$0xf]
      %v336 = vld [vmem:[%s1 + $0x78] sm:$0xf]
      %v337 = vld [vmem:[%s1 + $0x7c] sm:$0xf]
      %v338 = vld [vmem:[%s2] sm:$0x1]
      %v340 = vlaneseq
      %v341 = vshrl.u32 %v340, 7
      %v342 = vsub.s32 0, %v341
      %v343 = vrot.slane %v338, %v342
      %v473 = vunpack.c.l.b16 %v178
      %v474 = vunpack.c.h.b16 %v178
      %v475 = vunpack.c.l.b16 %v179
      %v476 = vunpack.c.h.b16 %v179
      %v477 = vunpack.c.l.b16 %v180
      %v478 = vunpack.c.h.b16 %v180
      %v479 = vunpack.c.l.b16 %v181
      %v480 = vunpack.c.h.b16 %v181
      %v481 = vunpack.c.l.b16 %v182
      %v482 = vunpack.c.h.b16 %v182
      %v483 = vunpack.c.l.b16 %v183
      %v484 = vunpack.c.h.b16 %v183
      %v485 = vunpack.c.l.b16 %v184
      %v486 = vunpack.c.h.b16 %v184
      %v487 = vunpack.c.l.b16 %v185
      %v488 = vunpack.c.h.b16 %v185
      %v489 = vunpack.c.l.b16 %v186
      %v490 = vunpack.c.h.b16 %v186
      %v491 = vunpack.c.l.b16 %v187
      %v492 = vunpack.c.h.b16 %v187
      %v493 = vunpack.c.l.b16 %v188
      %v494 = vunpack.c.h.b16 %v188
      %v495 = vunpack.c.l.b16 %v189
      %v496 = vunpack.c.h.b16 %v189
      %v497 = vunpack.c.l.b16 %v190
      %v498 = vunpack.c.h.b16 %v190
      %v499 = vunpack.c.l.b16 %v191
      %v500 = vunpack.c.h.b16 %v191
      %v501 = vunpack.c.l.b16 %v192
      %v502 = vunpack.c.h.b16 %v192
      %v503 = vunpack.c.l.b16 %v193
      %v504 = vunpack.c.h.b16 %v193
      %v505 = vunpack.c.l.b16 %v194
      %v506 = vunpack.c.h.b16 %v194
      %v507 = vunpack.c.l.b16 %v195
      %v508 = vunpack.c.h.b16 %v195
      %v509 = vunpack.c.l.b16 %v196
      %v510 = vunpack.c.h.b16 %v196
      %v511 = vunpack.c.l.b16 %v197
      %v512 = vunpack.c.h.b16 %v197
      %v513 = vunpack.c.l.b16 %v198
      %v514 = vunpack.c.h.b16 %v198
      %v515 = vunpack.c.l.b16 %v199
      %v516 = vunpack.c.h.b16 %v199
      %v517 = vunpack.c.l.b16 %v200
      %v518 = vunpack.c.h.b16 %v200
      %v519 = vunpack.c.l.b16 %v201
      %v520 = vunpack.c.h.b16 %v201
      %v521 = vunpack.c.l.b16 %v202
      %v522 = vunpack.c.h.b16 %v202
      %v523 = vunpack.c.l.b16 %v203
      %v524 = vunpack.c.h.b16 %v203
      %v525 = vunpack.c.l.b16 %v204
      %v526 = vunpack.c.h.b16 %v204
      %v527 = vunpack.c.l.b16 %v205
      %v528 = vunpack.c.h.b16 %v205
      %v529 = vunpack.c.l.b16 %v206
      %v530 = vunpack.c.h.b16 %v206
      %v531 = vunpack.c.l.b16 %v207
      %v532 = vunpack.c.h.b16 %v207
      %v533 = vunpack.c.l.b16 %v208
      %v534 = vunpack.c.h.b16 %v208
      %v535 = vunpack.c.l.b16 %v209
      %v536 = vunpack.c.h.b16 %v209
      %v537 = vunpack.c.l.b16 %v210
      %v538 = vunpack.c.h.b16 %v210
      %v539 = vunpack.c.l.b16 %v211
      %v540 = vunpack.c.h.b16 %v211
      %v541 = vunpack.c.l.b16 %v212
      %v542 = vunpack.c.h.b16 %v212
      %v543 = vunpack.c.l.b16 %v213
      %v544 = vunpack.c.h.b16 %v213
      %v545 = vunpack.c.l.b16 %v214
      %v546 = vunpack.c.h.b16 %v214
      %v547 = vunpack.c.l.b16 %v215
      %v548 = vunpack.c.h.b16 %v215
      %v549 = vunpack.c.l.b16 %v216
      %v550 = vunpack.c.h.b16 %v216
      %v551 = vunpack.c.l.b16 %v217
      %v552 = vunpack.c.h.b16 %v217
      %v553 = vunpack.c.l.b16 %v218
      %v554 = vunpack.c.h.b16 %v218
      %v555 = vunpack.c.l.b16 %v219
      %v556 = vunpack.c.h.b16 %v219
      %v557 = vunpack.c.l.b16 %v220
      %v558 = vunpack.c.h.b16 %v220
      %v559 = vunpack.c.l.b16 %v221
      %v560 = vunpack.c.h.b16 %v221
      %v561 = vunpack.c.l.b16 %v222
      %v562 = vunpack.c.h.b16 %v222
      %v563 = vunpack.c.l.b16 %v223
      %v564 = vunpack.c.h.b16 %v223
      %v565 = vunpack.c.l.b16 %v224
      %v566 = vunpack.c.h.b16 %v224
      %v567 = vunpack.c.l.b16 %v225
      %v568 = vunpack.c.h.b16 %v225
      %v569 = vunpack.c.l.b16 %v226
      %v570 = vunpack.c.h.b16 %v226
      %v571 = vunpack.c.l.b16 %v227
      %v572 = vunpack.c.h.b16 %v227
      %v573 = vunpack.c.l.b16 %v228
      %v574 = vunpack.c.h.b16 %v228
      %v575 = vunpack.c.l.b16 %v229
      %v576 = vunpack.c.h.b16 %v229
      %v577 = vunpack.c.l.b16 %v230
      %v578 = vunpack.c.h.b16 %v230
      %v579 = vunpack.c.l.b16 %v231
      %v580 = vunpack.c.h.b16 %v231
      %v581 = vunpack.c.l.b16 %v232
      %v582 = vunpack.c.h.b16 %v232
      %v583 = vunpack.c.l.b16 %v233
      %v584 = vunpack.c.h.b16 %v233
      %v585 = vunpack.c.l.b16 %v234
      %v586 = vunpack.c.h.b16 %v234
      %v587 = vunpack.c.l.b16 %v235
      %v588 = vunpack.c.h.b16 %v235
      %v589 = vunpack.c.l.b16 %v236
      %v590 = vunpack.c.h.b16 %v236
      %v591 = vunpack.c.l.b16 %v237
      %v592 = vunpack.c.h.b16 %v237
      %v593 = vunpack.c.l.b16 %v238
      %v594 = vunpack.c.h.b16 %v238
      %v595 = vunpack.c.l.b16 %v239
      %v596 = vunpack.c.h.b16 %v239
      %v597 = vunpack.c.l.b16 %v240
      %v598 = vunpack.c.h.b16 %v240
      %v599 = vunpack.c.l.b16 %v241
      %v600 = vunpack.c.h.b16 %v241
      %v601 = vunpack.c.l.b16 %v242
      %v602 = vunpack.c.h.b16 %v242
      %v603 = vunpack.c.l.b16 %v243
      %v604 = vunpack.c.h.b16 %v243
      %v605 = vunpack.c.l.b16 %v244
      %v606 = vunpack.c.h.b16 %v244
      %v607 = vunpack.c.l.b16 %v245
      %v608 = vunpack.c.h.b16 %v245
      %v609 = vunpack.c.l.b16 %v246
      %v610 = vunpack.c.h.b16 %v246
      %v611 = vunpack.c.l.b16 %v247
      %v612 = vunpack.c.h.b16 %v247
      %v613 = vunpack.c.l.b16 %v248
      %v614 = vunpack.c.h.b16 %v248
      %v615 = vunpack.c.l.b16 %v249
      %v616 = vunpack.c.h.b16 %v249
      %v617 = vunpack.c.l.b16 %v250
      %v618 = vunpack.c.h.b16 %v250
      %v619 = vunpack.c.l.b16 %v251
      %v620 = vunpack.c.h.b16 %v251
      %v621 = vunpack.c.l.b16 %v252
      %v622 = vunpack.c.h.b16 %v252
      %v623 = vunpack.c.l.b16 %v253
      %v624 = vunpack.c.h.b16 %v253
      %v625 = vunpack.c.l.b16 %v254
      %v626 = vunpack.c.h.b16 %v254
      %v627 = vunpack.c.l.b16 %v255
      %v628 = vunpack.c.h.b16 %v255
      %v629 = vunpack.c.l.b16 %v256
      %v630 = vunpack.c.h.b16 %v256
      %v631 = vunpack.c.l.b16 %v257
      %v632 = vunpack.c.h.b16 %v257
      %v633 = vunpack.c.l.b16 %v258
      %v634 = vunpack.c.h.b16 %v258
      %v635 = vunpack.c.l.b16 %v259
      %v636 = vunpack.c.h.b16 %v259
      %v637 = vunpack.c.l.b16 %v260
      %v638 = vunpack.c.h.b16 %v260
      %v639 = vunpack.c.l.b16 %v261
      %v640 = vunpack.c.h.b16 %v261
      %v641 = vunpack.c.l.b16 %v262
      %v642 = vunpack.c.h.b16 %v262
      %v643 = vunpack.c.l.b16 %v263
      %v644 = vunpack.c.h.b16 %v263
      %v645 = vunpack.c.l.b16 %v264
      %v646 = vunpack.c.h.b16 %v264
      %v647 = vunpack.c.l.b16 %v265
      %v648 = vunpack.c.h.b16 %v265
      %v649 = vunpack.c.l.b16 %v266
      %v650 = vunpack.c.h.b16 %v266
      %v651 = vunpack.c.l.b16 %v267
      %v652 = vunpack.c.h.b16 %v267
      %v653 = vunpack.c.l.b16 %v268
      %v654 = vunpack.c.h.b16 %v268
      %v655 = vunpack.c.l.b16 %v269
      %v656 = vunpack.c.h.b16 %v269
      %v657 = vunpack.c.l.b16 %v270
      %v658 = vunpack.c.h.b16 %v270
      %v659 = vunpack.c.l.b16 %v271
      %v660 = vunpack.c.h.b16 %v271
      %v661 = vunpack.c.l.b16 %v272
      %v662 = vunpack.c.h.b16 %v272
      %v663 = vunpack.c.l.b16 %v273
      %v664 = vunpack.c.h.b16 %v273
      %v665 = vunpack.c.l.b16 %v274
      %v666 = vunpack.c.h.b16 %v274
      %v667 = vunpack.c.l.b16 %v275
      %v668 = vunpack.c.h.b16 %v275
      %v669 = vunpack.c.l.b16 %v276
      %v670 = vunpack.c.h.b16 %v276
      %v671 = vunpack.c.l.b16 %v277
      %v672 = vunpack.c.h.b16 %v277
      %v673 = vunpack.c.l.b16 %v278
      %v674 = vunpack.c.h.b16 %v278
      %v675 = vunpack.c.l.b16 %v279
      %v676 = vunpack.c.h.b16 %v279
      %v677 = vunpack.c.l.b16 %v280
      %v678 = vunpack.c.h.b16 %v280
      %v679 = vunpack.c.l.b16 %v281
      %v680 = vunpack.c.h.b16 %v281
      %v681 = vunpack.c.l.b16 %v282
      %v682 = vunpack.c.h.b16 %v282
      %v683 = vunpack.c.l.b16 %v283
      %v684 = vunpack.c.h.b16 %v283
      %v685 = vunpack.c.l.b16 %v284
      %v686 = vunpack.c.h.b16 %v284
      %v687 = vunpack.c.l.b16 %v285
      %v688 = vunpack.c.h.b16 %v285
      %v689 = vunpack.c.l.b16 %v286
      %v690 = vunpack.c.h.b16 %v286
      %v691 = vunpack.c.l.b16 %v287
      %v692 = vunpack.c.h.b16 %v287
      %v693 = vunpack.c.l.b16 %v288
      %v694 = vunpack.c.h.b16 %v288
      %v695 = vunpack.c.l.b16 %v289
      %v696 = vunpack.c.h.b16 %v289
      %v697 = vunpack.c.l.b16 %v290
      %v698 = vunpack.c.h.b16 %v290
      %v699 = vunpack.c.l.b16 %v291
      %v700 = vunpack.c.h.b16 %v291
      %v701 = vunpack.c.l.b16 %v292
      %v702 = vunpack.c.h.b16 %v292
      %v703 = vunpack.c.l.b16 %v293
      %v704 = vunpack.c.h.b16 %v293
      %v705 = vunpack.c.l.b16 %v294
      %v706 = vunpack.c.h.b16 %v294
      %v707 = vunpack.c.l.b16 %v295
      %v708 = vunpack.c.h.b16 %v295
      %v709 = vunpack.c.l.b16 %v296
      %v710 = vunpack.c.h.b16 %v296
      %v711 = vunpack.c.l.b16 %v297
      %v712 = vunpack.c.h.b16 %v297
      %v713 = vunpack.c.l.b16 %v298
      %v714 = vunpack.c.h.b16 %v298
      %v715 = vunpack.c.l.b16 %v299
      %v716 = vunpack.c.h.b16 %v299
      %v717 = vunpack.c.l.b16 %v300
      %v718 = vunpack.c.h.b16 %v300
      %v719 = vunpack.c.l.b16 %v301
      %v720 = vunpack.c.h.b16 %v301
      %v721 = vunpack.c.l.b16 %v302
      %v722 = vunpack.c.h.b16 %v302
      %v723 = vunpack.c.l.b16 %v303
      %v724 = vunpack.c.h.b16 %v303
      %v725 = vunpack.c.l.b16 %v304
      %v726 = vunpack.c.h.b16 %v304
      %v727 = vunpack.c.l.b16 %v305
      %v728 = vunpack.c.h.b16 %v305
      %v729 = vpack.c.b16 %v475, %v473
      %v730 = vpack.c.b16 %v476, %v474
      %v731 = vpack.c.b16 %v479, %v477
      %v732 = vpack.c.b16 %v480, %v478
      %v733 = vpack.c.b16 %v483, %v481
      %v734 = vpack.c.b16 %v484, %v482
      %v735 = vpack.c.b16 %v487, %v485
      %v736 = vpack.c.b16 %v488, %v486
      %v737 = vpack.c.b16 %v491, %v489
      %v738 = vpack.c.b16 %v492, %v490
      %v739 = vpack.c.b16 %v495, %v493
      %v740 = vpack.c.b16 %v496, %v494
      %v741 = vpack.c.b16 %v499, %v497
      %v742 = vpack.c.b16 %v500, %v498
      %v743 = vpack.c.b16 %v503, %v501
      %v744 = vpack.c.b16 %v504, %v502
      %v745 = vpack.c.b16 %v507, %v505
      %v746 = vpack.c.b16 %v508, %v506
      %v747 = vpack.c.b16 %v511, %v509
      %v748 = vpack.c.b16 %v512, %v510
      %v749 = vpack.c.b16 %v515, %v513
      %v750 = vpack.c.b16 %v516, %v514
      %v751 = vpack.c.b16 %v519, %v517
      %v752 = vpack.c.b16 %v520, %v518
      %v753 = vpack.c.b16 %v523, %v521
      %v754 = vpack.c.b16 %v524, %v522
      %v755 = vpack.c.b16 %v527, %v525
      %v756 = vpack.c.b16 %v528, %v526
      %v757 = vpack.c.b16 %v531, %v529
      %v758 = vpack.c.b16 %v532, %v530
      %v759 = vpack.c.b16 %v535, %v533
      %v760 = vpack.c.b16 %v536, %v534
      %v761 = vpack.c.b16 %v539, %v537
      %v762 = vpack.c.b16 %v540, %v538
      %v763 = vpack.c.b16 %v543, %v541
      %v764 = vpack.c.b16 %v544, %v542
      %v765 = vpack.c.b16 %v547, %v545
      %v766 = vpack.c.b16 %v548, %v546
      %v767 = vpack.c.b16 %v551, %v549
      %v768 = vpack.c.b16 %v552, %v550
      %v769 = vpack.c.b16 %v555, %v553
      %v770 = vpack.c.b16 %v556, %v554
      %v771 = vpack.c.b16 %v559, %v557
      %v772 = vpack.c.b16 %v560, %v558
      %v773 = vpack.c.b16 %v563, %v561
      %v774 = vpack.c.b16 %v564, %v562
      %v775 = vpack.c.b16 %v567, %v565
      %v776 = vpack.c.b16 %v568, %v566
      %v777 = vpack.c.b16 %v571, %v569
      %v778 = vpack.c.b16 %v572, %v570
      %v779 = vpack.c.b16 %v575, %v573
      %v780 = vpack.c.b16 %v576, %v574
      %v781 = vpack.c.b16 %v579, %v577
      %v782 = vpack.c.b16 %v580, %v578
      %v783 = vpack.c.b16 %v583, %v581
      %v784 = vpack.c.b16 %v584, %v582
      %v785 = vpack.c.b16 %v587, %v585
      %v786 = vpack.c.b16 %v588, %v586
      %v787 = vpack.c.b16 %v591, %v589
      %v788 = vpack.c.b16 %v592, %v590
      %v789 = vpack.c.b16 %v595, %v593
      %v790 = vpack.c.b16 %v596, %v594
      %v791 = vpack.c.b16 %v599, %v597
      %v792 = vpack.c.b16 %v600, %v598
      %v793 = vpack.c.b16 %v603, %v601
      %v794 = vpack.c.b16 %v604, %v602
      %v795 = vpack.c.b16 %v607, %v605
      %v796 = vpack.c.b16 %v608, %v606
      %v797 = vpack.c.b16 %v611, %v609
      %v798 = vpack.c.b16 %v612, %v610
      %v799 = vpack.c.b16 %v615, %v613
      %v800 = vpack.c.b16 %v616, %v614
      %v801 = vpack.c.b16 %v619, %v617
      %v802 = vpack.c.b16 %v620, %v618
      %v803 = vpack.c.b16 %v623, %v621
      %v804 = vpack.c.b16 %v624, %v622
      %v805 = vpack.c.b16 %v627, %v625
      %v806 = vpack.c.b16 %v628, %v626
      %v807 = vpack.c.b16 %v631, %v629
      %v808 = vpack.c.b16 %v632, %v630
      %v809 = vpack.c.b16 %v635, %v633
      %v810 = vpack.c.b16 %v636, %v634
      %v811 = vpack.c.b16 %v639, %v637
      %v812 = vpack.c.b16 %v640, %v638
      %v813 = vpack.c.b16 %v643, %v641
      %v814 = vpack.c.b16 %v644, %v642
      %v815 = vpack.c.b16 %v647, %v645
      %v816 = vpack.c.b16 %v648, %v646
      %v817 = vpack.c.b16 %v651, %v649
      %v818 = vpack.c.b16 %v652, %v650
      %v819 = vpack.c.b16 %v655, %v653
      %v820 = vpack.c.b16 %v656, %v654
      %v821 = vpack.c.b16 %v659, %v657
      %v822 = vpack.c.b16 %v660, %v658
      %v823 = vpack.c.b16 %v663, %v661
      %v824 = vpack.c.b16 %v664, %v662
      %v825 = vpack.c.b16 %v667, %v665
      %v826 = vpack.c.b16 %v668, %v666
      %v827 = vpack.c.b16 %v671, %v669
      %v828 = vpack.c.b16 %v672, %v670
      %v829 = vpack.c.b16 %v675, %v673
      %v830 = vpack.c.b16 %v676, %v674
      %v831 = vpack.c.b16 %v679, %v677
      %v832 = vpack.c.b16 %v680, %v678
      %v833 = vpack.c.b16 %v683, %v681
      %v834 = vpack.c.b16 %v684, %v682
      %v835 = vpack.c.b16 %v687, %v685
      %v836 = vpack.c.b16 %v688, %v686
      %v837 = vpack.c.b16 %v691, %v689
      %v838 = vpack.c.b16 %v692, %v690
      %v839 = vpack.c.b16 %v695, %v693
      %v840 = vpack.c.b16 %v696, %v694
      %v841 = vpack.c.b16 %v699, %v697
      %v842 = vpack.c.b16 %v700, %v698
      %v843 = vpack.c.b16 %v703, %v701
      %v844 = vpack.c.b16 %v704, %v702
      %v845 = vpack.c.b16 %v707, %v705
      %v846 = vpack.c.b16 %v708, %v706
      %v847 = vpack.c.b16 %v711, %v709
      %v848 = vpack.c.b16 %v712, %v710
      %v849 = vpack.c.b16 %v715, %v713
      %v850 = vpack.c.b16 %v716, %v714
      %v851 = vpack.c.b16 %v719, %v717
      %v852 = vpack.c.b16 %v720, %v718
      %v853 = vpack.c.b16 %v723, %v721
      %v854 = vpack.c.b16 %v724, %v722
      %v855 = vpack.c.b16 %v727, %v725
      %v856 = vpack.c.b16 %v728, %v726
      %v1017 = vunpack.c.l.b16 %v306
      %v1018 = vunpack.c.l.b16 %v307
      %v1019 = vunpack.c.l.b16 %v308
      %v1020 = vunpack.c.l.b16 %v309
      %v1021 = vunpack.c.l.b16 %v310
      %v1022 = vunpack.c.l.b16 %v311
      %v1023 = vunpack.c.l.b16 %v312
      %v1024 = vunpack.c.l.b16 %v313
      %v1025 = vunpack.c.l.b16 %v314
      %v1026 = vunpack.c.l.b16 %v315
      %v1027 = vunpack.c.l.b16 %v316
      %v1028 = vunpack.c.l.b16 %v317
      %v1029 = vunpack.c.l.b16 %v318
      %v1030 = vunpack.c.l.b16 %v319
      %v1031 = vunpack.c.l.b16 %v320
      %v1032 = vunpack.c.l.b16 %v321
      %v1033 = vunpack.c.l.b16 %v322
      %v1034 = vunpack.c.l.b16 %v323
      %v1035 = vunpack.c.l.b16 %v324
      %v1036 = vunpack.c.l.b16 %v325
      %v1037 = vunpack.c.l.b16 %v326
      %v1038 = vunpack.c.l.b16 %v327
      %v1039 = vunpack.c.l.b16 %v328
      %v1040 = vunpack.c.l.b16 %v329
      %v1041 = vunpack.c.l.b16 %v330
      %v1042 = vunpack.c.l.b16 %v331
      %v1043 = vunpack.c.l.b16 %v332
      %v1044 = vunpack.c.l.b16 %v333
      %v1045 = vunpack.c.l.b16 %v334
      %v1046 = vunpack.c.l.b16 %v335
      %v1047 = vunpack.c.l.b16 %v336
      %v1048 = vunpack.c.l.b16 %v337
      %v1049 = vpack.c.b16 %v1018, %v1017
      %v1050 = vpack.c.b16 %v1020, %v1019
      %v1051 = vpack.c.b16 %v1022, %v1021
      %v1052 = vpack.c.b16 %v1024, %v1023
      %v1053 = vpack.c.b16 %v1026, %v1025
      %v1054 = vpack.c.b16 %v1028, %v1027
      %v1055 = vpack.c.b16 %v1030, %v1029
      %v1056 = vpack.c.b16 %v1032, %v1031
      %v1057 = vpack.c.b16 %v1034, %v1033
      %v1058 = vpack.c.b16 %v1036, %v1035
      %v1059 = vpack.c.b16 %v1038, %v1037
      %v1060 = vpack.c.b16 %v1040, %v1039
      %v1061 = vpack.c.b16 %v1042, %v1041
      %v1062 = vpack.c.b16 %v1044, %v1043
      %v1063 = vpack.c.b16 %v1046, %v1045
      %v1064 = vpack.c.b16 %v1048, %v1047
      %1081 = vmatprep.subr.bf16.mxu0 0
      %1082 = vmatpush1.bf16.msra.mxu0 %v1056
      %1083 = vmatprep.subr.bf16.mxu0 0
      %1084 = vmatpush1.bf16.msra.mxu0 %v1055
      %1085 = vmatprep.subr.bf16.mxu0 0
      %1086 = vmatpush1.bf16.msra.mxu0 %v1054
      %1087 = vmatprep.subr.bf16.mxu0 0
      %1088 = vmatpush1.bf16.msra.mxu0 %v1053
      %1089 = vmatprep.subr.bf16.mxu0 0
      %1090 = vmatpush1.bf16.msra.mxu0 %v1052
      %1091 = vmatprep.subr.bf16.mxu0 0
      %1092 = vmatpush1.bf16.msra.mxu0 %v1051
      %1093 = vmatprep.subr.bf16.mxu0 0
      %1094 = vmatpush1.bf16.msra.mxu0 %v1050
      %1095 = vmatprep.subr.bf16.mxu0 0
      %1096 = vmatpush1.bf16.msra.mxu0 %v1049
      %1097 = vmatprep.subr.bf16.mxu0 0
      %1098 = vmatpush2.bf16.msra.mxu0 %v1064
      %1099 = vmatprep.subr.bf16.mxu0 0
      %1100 = vmatpush2.bf16.msra.mxu0 %v1063
      %1101 = vmatprep.subr.bf16.mxu0 0
      %1102 = vmatpush2.bf16.msra.mxu0 %v1062
      %1103 = vmatprep.subr.bf16.mxu0 0
      %1104 = vmatpush2.bf16.msra.mxu0 %v1061
      %1105 = vmatprep.subr.bf16.mxu0 0
      %1106 = vmatpush2.bf16.msra.mxu0 %v1060
      %1107 = vmatprep.subr.bf16.mxu0 0
      %1108 = vmatpush2.bf16.msra.mxu0 %v1059
      %1109 = vmatprep.subr.bf16.mxu0 0
      %1110 = vmatpush2.bf16.msra.mxu0 %v1058
      %1111 = vmatprep.subr.bf16.mxu0 0
      %1112 = vmatpush2.bf16.msra.mxu0 %v1057
      %1113 = vmatprep.mubr.bf16.mxu0 %v730
      %1114 = vmatmul.mubr.bf16.gmra.mxu0 %v729
      %v1115 = vpop.f32.mrf.mxu0
      %v1116 = vadd.f32 %v343, %v1115
      %v1117 = vpop.f32.mrf.mxu0
      %v1118 = vpop.f32.mrf.mxu0
      %v1119 = vadd.f32 %v343, %v1118
      %v1120 = vpop.f32.mrf.mxu0
      %1121 = vmatprep.mubr.bf16.mxu0 %v732
      %1122 = vmatmul.mubr.bf16.gmra.mxu0 %v731
      %v1123 = vpop.f32.mrf.mxu0
      %v1124 = vadd.f32 %v343, %v1123
      %v1125 = vpop.f32.mrf.mxu0
      %v1126 = vpop.f32.mrf.mxu0
      %v1127 = vadd.f32 %v343, %v1126
      %v1128 = vpop.f32.mrf.mxu0
      %1129 = vmatprep.mubr.bf16.mxu0 %v734
      %1130 = vmatmul.mubr.bf16.gmra.mxu0 %v733
      %v1131 = vpop.f32.mrf.mxu0
      %v1132 = vadd.f32 %v343, %v1131
      %v1133 = vpop.f32.mrf.mxu0
      %v1134 = vpop.f32.mrf.mxu0
      %v1135 = vadd.f32 %v343, %v1134
      %v1136 = vpop.f32.mrf.mxu0
      %1137 = vmatprep.mubr.bf16.mxu0 %v736
      %1138 = vmatmul.mubr.bf16.gmra.mxu0 %v735
      %v1139 = vpop.f32.mrf.mxu0
      %v1140 = vadd.f32 %v343, %v1139
      %v1141 = vpop.f32.mrf.mxu0
      %v1142 = vpop.f32.mrf.mxu0
      %v1143 = vadd.f32 %v343, %v1142
      %v1144 = vpop.f32.mrf.mxu0
      %1145 = vmatprep.mubr.bf16.mxu0 %v738
      %1146 = vmatmul.mubr.bf16.gmra.mxu0 %v737
      %v1147 = vpop.f32.mrf.mxu0
      %v1148 = vadd.f32 %v343, %v1147
      %v1149 = vpop.f32.mrf.mxu0
      %v1150 = vpop.f32.mrf.mxu0
      %v1151 = vadd.f32 %v343, %v1150
      %v1152 = vpop.f32.mrf.mxu0
      %1153 = vmatprep.mubr.bf16.mxu0 %v740
      %1154 = vmatmul.mubr.bf16.gmra.mxu0 %v739
      %v1155 = vpop.f32.mrf.mxu0
      %v1156 = vadd.f32 %v343, %v1155
      %v1157 = vpop.f32.mrf.mxu0
      %v1158 = vpop.f32.mrf.mxu0
      %v1159 = vadd.f32 %v343, %v1158
      %v1160 = vpop.f32.mrf.mxu0
      %1161 = vmatprep.mubr.bf16.mxu0 %v742
      %1162 = vmatmul.mubr.bf16.gmra.mxu0 %v741
      %v1163 = vpop.f32.mrf.mxu0
      %v1164 = vadd.f32 %v343, %v1163
      %v1165 = vpop.f32.mrf.mxu0
      %v1166 = vpop.f32.mrf.mxu0
      %v1167 = vadd.f32 %v343, %v1166
      %v1168 = vpop.f32.mrf.mxu0
      %1169 = vmatprep.mubr.bf16.mxu0 %v744
      %1170 = vmatmul.mubr.bf16.gmra.mxu0 %v743
      %v1171 = vpop.f32.mrf.mxu0
      %v1172 = vadd.f32 %v343, %v1171
      %v1173 = vpop.f32.mrf.mxu0
      %v1174 = vpop.f32.mrf.mxu0
      %v1175 = vadd.f32 %v343, %v1174
      %v1176 = vpop.f32.mrf.mxu0
      %1177 = vmatprep.mubr.bf16.mxu0 %v746
      %1178 = vmatmul.mubr.bf16.gmra.mxu0 %v745
      %v1179 = vpop.f32.mrf.mxu0
      %v1180 = vadd.f32 %v343, %v1179
      %v1181 = vpop.f32.mrf.mxu0
      %v1182 = vpop.f32.mrf.mxu0
      %v1183 = vadd.f32 %v343, %v1182
      %v1184 = vpop.f32.mrf.mxu0
      %1185 = vmatprep.mubr.bf16.mxu0 %v748
      %1186 = vmatmul.mubr.bf16.gmra.mxu0 %v747
      %v1187 = vpop.f32.mrf.mxu0
      %v1188 = vadd.f32 %v343, %v1187
      %v1189 = vpop.f32.mrf.mxu0
      %v1190 = vpop.f32.mrf.mxu0
      %v1191 = vadd.f32 %v343, %v1190
      %v1192 = vpop.f32.mrf.mxu0
      %1193 = vmatprep.mubr.bf16.mxu0 %v750
      %1194 = vmatmul.mubr.bf16.gmra.mxu0 %v749
      %v1195 = vpop.f32.mrf.mxu0
      %v1196 = vadd.f32 %v343, %v1195
      %v1197 = vpop.f32.mrf.mxu0
      %v1198 = vpop.f32.mrf.mxu0
      %v1199 = vadd.f32 %v343, %v1198
      %v1200 = vpop.f32.mrf.mxu0
      %1201 = vmatprep.mubr.bf16.mxu0 %v752
      %1202 = vmatmul.mubr.bf16.gmra.mxu0 %v751
      %v1203 = vpop.f32.mrf.mxu0
      %v1204 = vadd.f32 %v343, %v1203
      %v1205 = vpop.f32.mrf.mxu0
      %v1206 = vpop.f32.mrf.mxu0
      %v1207 = vadd.f32 %v343, %v1206
      %v1208 = vpop.f32.mrf.mxu0
      %1209 = vmatprep.mubr.bf16.mxu0 %v754
      %1210 = vmatmul.mubr.bf16.gmra.mxu0 %v753
      %v1211 = vpop.f32.mrf.mxu0
      %v1212 = vadd.f32 %v343, %v1211
      %v1213 = vpop.f32.mrf.mxu0
      %v1214 = vpop.f32.mrf.mxu0
      %v1215 = vadd.f32 %v343, %v1214
      %v1216 = vpop.f32.mrf.mxu0
      %1217 = vmatprep.mubr.bf16.mxu0 %v756
      %1218 = vmatmul.mubr.bf16.gmra.mxu0 %v755
      %v1219 = vpop.f32.mrf.mxu0
      %v1220 = vadd.f32 %v343, %v1219
      %v1221 = vpop.f32.mrf.mxu0
      %v1222 = vpop.f32.mrf.mxu0
      %v1223 = vadd.f32 %v343, %v1222
      %v1224 = vpop.f32.mrf.mxu0
      %1225 = vmatprep.mubr.bf16.mxu0 %v758
      %1226 = vmatmul.mubr.bf16.gmra.mxu0 %v757
      %v1227 = vpop.f32.mrf.mxu0
      %v1228 = vadd.f32 %v343, %v1227
      %v1229 = vpop.f32.mrf.mxu0
      %v1230 = vpop.f32.mrf.mxu0
      %v1231 = vadd.f32 %v343, %v1230
      %v1232 = vpop.f32.mrf.mxu0
      %1233 = vmatprep.mubr.bf16.mxu0 %v760
      %1234 = vmatmul.mubr.bf16.gmra.mxu0 %v759
      %v1235 = vpop.f32.mrf.mxu0
      %v1236 = vadd.f32 %v343, %v1235
      %v1237 = vpop.f32.mrf.mxu0
      %v1238 = vpop.f32.mrf.mxu0
      %v1239 = vadd.f32 %v343, %v1238
      %v1240 = vpop.f32.mrf.mxu0
      %1241 = vmatprep.mubr.bf16.mxu0 %v762
      %1242 = vmatmul.mubr.bf16.gmra.mxu0 %v761
      %v1243 = vpop.f32.mrf.mxu0
      %v1244 = vadd.f32 %v343, %v1243
      %v1245 = vpop.f32.mrf.mxu0
      %v1246 = vpop.f32.mrf.mxu0
      %v1247 = vadd.f32 %v343, %v1246
      %v1248 = vpop.f32.mrf.mxu0
      %1249 = vmatprep.mubr.bf16.mxu0 %v764
      %1250 = vmatmul.mubr.bf16.gmra.mxu0 %v763
      %v1251 = vpop.f32.mrf.mxu0
      %v1252 = vadd.f32 %v343, %v1251
      %v1253 = vpop.f32.mrf.mxu0
      %v1254 = vpop.f32.mrf.mxu0
      %v1255 = vadd.f32 %v343, %v1254
      %v1256 = vpop.f32.mrf.mxu0
      %1257 = vmatprep.mubr.bf16.mxu0 %v766
      %1258 = vmatmul.mubr.bf16.gmra.mxu0 %v765
      %v1259 = vpop.f32.mrf.mxu0
      %v1260 = vadd.f32 %v343, %v1259
      %v1261 = vpop.f32.mrf.mxu0
      %v1262 = vpop.f32.mrf.mxu0
      %v1263 = vadd.f32 %v343, %v1262
      %v1264 = vpop.f32.mrf.mxu0
      %1265 = vmatprep.mubr.bf16.mxu0 %v768
      %1266 = vmatmul.mubr.bf16.gmra.mxu0 %v767
      %v1267 = vpop.f32.mrf.mxu0
      %v1268 = vadd.f32 %v343, %v1267
      %v1269 = vpop.f32.mrf.mxu0
      %v1270 = vpop.f32.mrf.mxu0
      %v1271 = vadd.f32 %v343, %v1270
      %v1272 = vpop.f32.mrf.mxu0
      %1273 = vmatprep.mubr.bf16.mxu0 %v770
      %1274 = vmatmul.mubr.bf16.gmra.mxu0 %v769
      %v1275 = vpop.f32.mrf.mxu0
      %v1276 = vadd.f32 %v343, %v1275
      %v1277 = vpop.f32.mrf.mxu0
      %v1278 = vpop.f32.mrf.mxu0
      %v1279 = vadd.f32 %v343, %v1278
      %v1280 = vpop.f32.mrf.mxu0
      %1281 = vmatprep.mubr.bf16.mxu0 %v772
      %1282 = vmatmul.mubr.bf16.gmra.mxu0 %v771
      %v1283 = vpop.f32.mrf.mxu0
      %v1284 = vadd.f32 %v343, %v1283
      %v1285 = vpop.f32.mrf.mxu0
      %v1286 = vpop.f32.mrf.mxu0
      %v1287 = vadd.f32 %v343, %v1286
      %v1288 = vpop.f32.mrf.mxu0
      %1289 = vmatprep.mubr.bf16.mxu0 %v774
      %1290 = vmatmul.mubr.bf16.gmra.mxu0 %v773
      %v1291 = vpop.f32.mrf.mxu0
      %v1292 = vadd.f32 %v343, %v1291
      %v1293 = vpop.f32.mrf.mxu0
      %v1294 = vpop.f32.mrf.mxu0
      %v1295 = vadd.f32 %v343, %v1294
      %v1296 = vpop.f32.mrf.mxu0
      %1297 = vmatprep.mubr.bf16.mxu0 %v776
      %1298 = vmatmul.mubr.bf16.gmra.mxu0 %v775
      %v1299 = vpop.f32.mrf.mxu0
      %v1300 = vadd.f32 %v343, %v1299
      %v1301 = vpop.f32.mrf.mxu0
      %v1302 = vpop.f32.mrf.mxu0
      %v1303 = vadd.f32 %v343, %v1302
      %v1304 = vpop.f32.mrf.mxu0
      %1305 = vmatprep.mubr.bf16.mxu0 %v778
      %1306 = vmatmul.mubr.bf16.gmra.mxu0 %v777
      %v1307 = vpop.f32.mrf.mxu0
      %v1308 = vadd.f32 %v343, %v1307
      %v1309 = vpop.f32.mrf.mxu0
      %v1310 = vpop.f32.mrf.mxu0
      %v1311 = vadd.f32 %v343, %v1310
      %v1312 = vpop.f32.mrf.mxu0
      %1313 = vmatprep.mubr.bf16.mxu0 %v780
      %1314 = vmatmul.mubr.bf16.gmra.mxu0 %v779
      %v1315 = vpop.f32.mrf.mxu0
      %v1316 = vadd.f32 %v343, %v1315
      %v1317 = vpop.f32.mrf.mxu0
      %v1318 = vpop.f32.mrf.mxu0
      %v1319 = vadd.f32 %v343, %v1318
      %v1320 = vpop.f32.mrf.mxu0
      %1321 = vmatprep.mubr.bf16.mxu0 %v782
      %1322 = vmatmul.mubr.bf16.gmra.mxu0 %v781
      %v1323 = vpop.f32.mrf.mxu0
      %v1324 = vadd.f32 %v343, %v1323
      %v1325 = vpop.f32.mrf.mxu0
      %v1326 = vpop.f32.mrf.mxu0
      %v1327 = vadd.f32 %v343, %v1326
      %v1328 = vpop.f32.mrf.mxu0
      %1329 = vmatprep.mubr.bf16.mxu0 %v784
      %1330 = vmatmul.mubr.bf16.gmra.mxu0 %v783
      %v1331 = vpop.f32.mrf.mxu0
      %v1332 = vadd.f32 %v343, %v1331
      %v1333 = vpop.f32.mrf.mxu0
      %v1334 = vpop.f32.mrf.mxu0
      %v1335 = vadd.f32 %v343, %v1334
      %v1336 = vpop.f32.mrf.mxu0
      %1337 = vmatprep.mubr.bf16.mxu0 %v786
      %1338 = vmatmul.mubr.bf16.gmra.mxu0 %v785
      %v1339 = vpop.f32.mrf.mxu0
      %v1340 = vadd.f32 %v343, %v1339
      %v1341 = vpop.f32.mrf.mxu0
      %v1342 = vpop.f32.mrf.mxu0
      %v1343 = vadd.f32 %v343, %v1342
      %v1344 = vpop.f32.mrf.mxu0
      %1345 = vmatprep.mubr.bf16.mxu0 %v788
      %1346 = vmatmul.mubr.bf16.gmra.mxu0 %v787
      %v1347 = vpop.f32.mrf.mxu0
      %v1348 = vadd.f32 %v343, %v1347
      %v1349 = vpop.f32.mrf.mxu0
      %v1350 = vpop.f32.mrf.mxu0
      %v1351 = vadd.f32 %v343, %v1350
      %v1352 = vpop.f32.mrf.mxu0
      %1353 = vmatprep.mubr.bf16.mxu0 %v790
      %1354 = vmatmul.mubr.bf16.gmra.mxu0 %v789
      %v1355 = vpop.f32.mrf.mxu0
      %v1356 = vadd.f32 %v343, %v1355
      %v1357 = vpop.f32.mrf.mxu0
      %v1358 = vpop.f32.mrf.mxu0
      %v1359 = vadd.f32 %v343, %v1358
      %v1360 = vpop.f32.mrf.mxu0
      %1361 = vmatprep.mubr.bf16.mxu0 %v792
      %1362 = vmatmul.mubr.bf16.gmra.mxu0 %v791
      %v1363 = vpop.f32.mrf.mxu0
      %v1364 = vadd.f32 %v343, %v1363
      %v1365 = vpop.f32.mrf.mxu0
      %v1366 = vpop.f32.mrf.mxu0
      %v1367 = vadd.f32 %v343, %v1366
      %v1368 = vpop.f32.mrf.mxu0
      %1369 = vmatprep.mubr.bf16.mxu0 %v794
      %1370 = vmatmul.mubr.bf16.gmra.mxu0 %v793
      %v1371 = vpop.f32.mrf.mxu0
      %v1372 = vadd.f32 %v343, %v1371
      %v1373 = vpop.f32.mrf.mxu0
      %v1374 = vpop.f32.mrf.mxu0
      %v1375 = vadd.f32 %v343, %v1374
      %v1376 = vpop.f32.mrf.mxu0
      %1377 = vmatprep.mubr.bf16.mxu0 %v796
      %1378 = vmatmul.mubr.bf16.gmra.mxu0 %v795
      %v1379 = vpop.f32.mrf.mxu0
      %v1380 = vadd.f32 %v343, %v1379
      %v1381 = vpop.f32.mrf.mxu0
      %v1382 = vpop.f32.mrf.mxu0
      %v1383 = vadd.f32 %v343, %v1382
      %v1384 = vpop.f32.mrf.mxu0
      %1385 = vmatprep.mubr.bf16.mxu0 %v798
      %1386 = vmatmul.mubr.bf16.gmra.mxu0 %v797
      %v1387 = vpop.f32.mrf.mxu0
      %v1388 = vadd.f32 %v343, %v1387
      %v1389 = vpop.f32.mrf.mxu0
      %v1390 = vpop.f32.mrf.mxu0
      %v1391 = vadd.f32 %v343, %v1390
      %v1392 = vpop.f32.mrf.mxu0
      %1393 = vmatprep.mubr.bf16.mxu0 %v800
      %1394 = vmatmul.mubr.bf16.gmra.mxu0 %v799
      %v1395 = vpop.f32.mrf.mxu0
      %v1396 = vadd.f32 %v343, %v1395
      %v1397 = vpop.f32.mrf.mxu0
      %v1398 = vpop.f32.mrf.mxu0
      %v1399 = vadd.f32 %v343, %v1398
      %v1400 = vpop.f32.mrf.mxu0
      %1401 = vmatprep.mubr.bf16.mxu0 %v802
      %1402 = vmatmul.mubr.bf16.gmra.mxu0 %v801
      %v1403 = vpop.f32.mrf.mxu0
      %v1404 = vadd.f32 %v343, %v1403
      %v1405 = vpop.f32.mrf.mxu0
      %v1406 = vpop.f32.mrf.mxu0
      %v1407 = vadd.f32 %v343, %v1406
      %v1408 = vpop.f32.mrf.mxu0
      %1409 = vmatprep.mubr.bf16.mxu0 %v804
      %1410 = vmatmul.mubr.bf16.gmra.mxu0 %v803
      %v1411 = vpop.f32.mrf.mxu0
      %v1412 = vadd.f32 %v343, %v1411
      %v1413 = vpop.f32.mrf.mxu0
      %v1414 = vpop.f32.mrf.mxu0
      %v1415 = vadd.f32 %v343, %v1414
      %v1416 = vpop.f32.mrf.mxu0
      %1417 = vmatprep.mubr.bf16.mxu0 %v806
      %1418 = vmatmul.mubr.bf16.gmra.mxu0 %v805
      %v1419 = vpop.f32.mrf.mxu0
      %v1420 = vadd.f32 %v343, %v1419
      %v1421 = vpop.f32.mrf.mxu0
      %v1422 = vpop.f32.mrf.mxu0
      %v1423 = vadd.f32 %v343, %v1422
      %v1424 = vpop.f32.mrf.mxu0
      %1425 = vmatprep.mubr.bf16.mxu0 %v808
      %1426 = vmatmul.mubr.bf16.gmra.mxu0 %v807
      %v1427 = vpop.f32.mrf.mxu0
      %v1428 = vadd.f32 %v343, %v1427
      %v1429 = vpop.f32.mrf.mxu0
      %v1430 = vpop.f32.mrf.mxu0
      %v1431 = vadd.f32 %v343, %v1430
      %v1432 = vpop.f32.mrf.mxu0
      %1433 = vmatprep.mubr.bf16.mxu0 %v810
      %1434 = vmatmul.mubr.bf16.gmra.mxu0 %v809
      %v1435 = vpop.f32.mrf.mxu0
      %v1436 = vadd.f32 %v343, %v1435
      %v1437 = vpop.f32.mrf.mxu0
      %v1438 = vpop.f32.mrf.mxu0
      %v1439 = vadd.f32 %v343, %v1438
      %v1440 = vpop.f32.mrf.mxu0
      %1441 = vmatprep.mubr.bf16.mxu0 %v812
      %1442 = vmatmul.mubr.bf16.gmra.mxu0 %v811
      %v1443 = vpop.f32.mrf.mxu0
      %v1444 = vadd.f32 %v343, %v1443
      %v1445 = vpop.f32.mrf.mxu0
      %v1446 = vpop.f32.mrf.mxu0
      %v1447 = vadd.f32 %v343, %v1446
      %v1448 = vpop.f32.mrf.mxu0
      %1449 = vmatprep.mubr.bf16.mxu0 %v814
      %1450 = vmatmul.mubr.bf16.gmra.mxu0 %v813
      %v1451 = vpop.f32.mrf.mxu0
      %v1452 = vadd.f32 %v343, %v1451
      %v1453 = vpop.f32.mrf.mxu0
      %v1454 = vpop.f32.mrf.mxu0
      %v1455 = vadd.f32 %v343, %v1454
      %v1456 = vpop.f32.mrf.mxu0
      %1457 = vmatprep.mubr.bf16.mxu0 %v816
      %1458 = vmatmul.mubr.bf16.gmra.mxu0 %v815
      %v1459 = vpop.f32.mrf.mxu0
      %v1460 = vadd.f32 %v343, %v1459
      %v1461 = vpop.f32.mrf.mxu0
      %v1462 = vpop.f32.mrf.mxu0
      %v1463 = vadd.f32 %v343, %v1462
      %v1464 = vpop.f32.mrf.mxu0
      %1465 = vmatprep.mubr.bf16.mxu0 %v818
      %1466 = vmatmul.mubr.bf16.gmra.mxu0 %v817
      %v1467 = vpop.f32.mrf.mxu0
      %v1468 = vadd.f32 %v343, %v1467
      %v1469 = vpop.f32.mrf.mxu0
      %v1470 = vpop.f32.mrf.mxu0
      %v1471 = vadd.f32 %v343, %v1470
      %v1472 = vpop.f32.mrf.mxu0
      %1473 = vmatprep.mubr.bf16.mxu0 %v820
      %1474 = vmatmul.mubr.bf16.gmra.mxu0 %v819
      %v1475 = vpop.f32.mrf.mxu0
      %v1476 = vadd.f32 %v343, %v1475
      %v1477 = vpop.f32.mrf.mxu0
      %v1478 = vpop.f32.mrf.mxu0
      %v1479 = vadd.f32 %v343, %v1478
      %v1480 = vpop.f32.mrf.mxu0
      %1481 = vmatprep.mubr.bf16.mxu0 %v822
      %1482 = vmatmul.mubr.bf16.gmra.mxu0 %v821
      %v1483 = vpop.f32.mrf.mxu0
      %v1484 = vadd.f32 %v343, %v1483
      %v1485 = vpop.f32.mrf.mxu0
      %v1486 = vpop.f32.mrf.mxu0
      %v1487 = vadd.f32 %v343, %v1486
      %v1488 = vpop.f32.mrf.mxu0
      %1489 = vmatprep.mubr.bf16.mxu0 %v824
      %1490 = vmatmul.mubr.bf16.gmra.mxu0 %v823
      %v1491 = vpop.f32.mrf.mxu0
      %v1492 = vadd.f32 %v343, %v1491
      %v1493 = vpop.f32.mrf.mxu0
      %v1494 = vpop.f32.mrf.mxu0
      %v1495 = vadd.f32 %v343, %v1494
      %v1496 = vpop.f32.mrf.mxu0
      %1497 = vmatprep.mubr.bf16.mxu0 %v826
      %1498 = vmatmul.mubr.bf16.gmra.mxu0 %v825
      %v1499 = vpop.f32.mrf.mxu0
      %v1500 = vadd.f32 %v343, %v1499
      %v1501 = vpop.f32.mrf.mxu0
      %v1502 = vpop.f32.mrf.mxu0
      %v1503 = vadd.f32 %v343, %v1502
      %v1504 = vpop.f32.mrf.mxu0
      %1505 = vmatprep.mubr.bf16.mxu0 %v828
      %1506 = vmatmul.mubr.bf16.gmra.mxu0 %v827
      %v1507 = vpop.f32.mrf.mxu0
      %v1508 = vadd.f32 %v343, %v1507
      %v1509 = vpop.f32.mrf.mxu0
      %v1510 = vpop.f32.mrf.mxu0
      %v1511 = vadd.f32 %v343, %v1510
      %v1512 = vpop.f32.mrf.mxu0
      %1513 = vmatprep.mubr.bf16.mxu0 %v830
      %1514 = vmatmul.mubr.bf16.gmra.mxu0 %v829
      %v1515 = vpop.f32.mrf.mxu0
      %v1516 = vadd.f32 %v343, %v1515
      %v1517 = vpop.f32.mrf.mxu0
      %v1518 = vpop.f32.mrf.mxu0
      %v1519 = vadd.f32 %v343, %v1518
      %v1520 = vpop.f32.mrf.mxu0
      %1521 = vmatprep.mubr.bf16.mxu0 %v832
      %1522 = vmatmul.mubr.bf16.gmra.mxu0 %v831
      %v1523 = vpop.f32.mrf.mxu0
      %v1524 = vadd.f32 %v343, %v1523
      %v1525 = vpop.f32.mrf.mxu0
      %v1526 = vpop.f32.mrf.mxu0
      %v1527 = vadd.f32 %v343, %v1526
      %v1528 = vpop.f32.mrf.mxu0
      %1529 = vmatprep.mubr.bf16.mxu0 %v834
      %1530 = vmatmul.mubr.bf16.gmra.mxu0 %v833
      %v1531 = vpop.f32.mrf.mxu0
      %v1532 = vadd.f32 %v343, %v1531
      %v1533 = vpop.f32.mrf.mxu0
      %v1534 = vpop.f32.mrf.mxu0
      %v1535 = vadd.f32 %v343, %v1534
      %v1536 = vpop.f32.mrf.mxu0
      %1537 = vmatprep.mubr.bf16.mxu0 %v836
      %1538 = vmatmul.mubr.bf16.gmra.mxu0 %v835
      %v1539 = vpop.f32.mrf.mxu0
      %v1540 = vadd.f32 %v343, %v1539
      %v1541 = vpop.f32.mrf.mxu0
      %v1542 = vpop.f32.mrf.mxu0
      %v1543 = vadd.f32 %v343, %v1542
      %v1544 = vpop.f32.mrf.mxu0
      %1545 = vmatprep.mubr.bf16.mxu0 %v838
      %1546 = vmatmul.mubr.bf16.gmra.mxu0 %v837
      %v1547 = vpop.f32.mrf.mxu0
      %v1548 = vadd.f32 %v343, %v1547
      %v1549 = vpop.f32.mrf.mxu0
      %v1550 = vpop.f32.mrf.mxu0
      %v1551 = vadd.f32 %v343, %v1550
      %v1552 = vpop.f32.mrf.mxu0
      %1553 = vmatprep.mubr.bf16.mxu0 %v840
      %1554 = vmatmul.mubr.bf16.gmra.mxu0 %v839
      %v1555 = vpop.f32.mrf.mxu0
      %v1556 = vadd.f32 %v343, %v1555
      %v1557 = vpop.f32.mrf.mxu0
      %v1558 = vpop.f32.mrf.mxu0
      %v1559 = vadd.f32 %v343, %v1558
      %v1560 = vpop.f32.mrf.mxu0
      %1561 = vmatprep.mubr.bf16.mxu0 %v842
      %1562 = vmatmul.mubr.bf16.gmra.mxu0 %v841
      %v1563 = vpop.f32.mrf.mxu0
      %v1564 = vadd.f32 %v343, %v1563
      %v1565 = vpop.f32.mrf.mxu0
      %v1566 = vpop.f32.mrf.mxu0
      %v1567 = vadd.f32 %v343, %v1566
      %v1568 = vpop.f32.mrf.mxu0
      %1569 = vmatprep.mubr.bf16.mxu0 %v844
      %1570 = vmatmul.mubr.bf16.gmra.mxu0 %v843
      %v1571 = vpop.f32.mrf.mxu0
      %v1572 = vadd.f32 %v343, %v1571
      %v1573 = vpop.f32.mrf.mxu0
      %v1574 = vpop.f32.mrf.mxu0
      %v1575 = vadd.f32 %v343, %v1574
      %v1576 = vpop.f32.mrf.mxu0
      %1577 = vmatprep.mubr.bf16.mxu0 %v846
      %1578 = vmatmul.mubr.bf16.gmra.mxu0 %v845
      %v1579 = vpop.f32.mrf.mxu0
      %v1580 = vadd.f32 %v343, %v1579
      %v1581 = vpop.f32.mrf.mxu0
      %v1582 = vpop.f32.mrf.mxu0
      %v1583 = vadd.f32 %v343, %v1582
      %v1584 = vpop.f32.mrf.mxu0
      %1585 = vmatprep.mubr.bf16.mxu0 %v848
      %1586 = vmatmul.mubr.bf16.gmra.mxu0 %v847
      %v1587 = vpop.f32.mrf.mxu0
      %v1588 = vadd.f32 %v343, %v1587
      %v1589 = vpop.f32.mrf.mxu0
      %v1590 = vpop.f32.mrf.mxu0
      %v1591 = vadd.f32 %v343, %v1590
      %v1592 = vpop.f32.mrf.mxu0
      %1593 = vmatprep.mubr.bf16.mxu0 %v850
      %1594 = vmatmul.mubr.bf16.gmra.mxu0 %v849
      %v1595 = vpop.f32.mrf.mxu0
      %v1596 = vadd.f32 %v343, %v1595
      %v1597 = vpop.f32.mrf.mxu0
      %v1598 = vpop.f32.mrf.mxu0
      %v1599 = vadd.f32 %v343, %v1598
      %v1600 = vpop.f32.mrf.mxu0
      %1601 = vmatprep.mubr.bf16.mxu0 %v852
      %1602 = vmatmul.mubr.bf16.gmra.mxu0 %v851
      %v1603 = vpop.f32.mrf.mxu0
      %v1604 = vadd.f32 %v343, %v1603
      %v1605 = vpop.f32.mrf.mxu0
      %v1606 = vpop.f32.mrf.mxu0
      %v1607 = vadd.f32 %v343, %v1606
      %v1608 = vpop.f32.mrf.mxu0
      %1609 = vmatprep.mubr.bf16.mxu0 %v854
      %1610 = vmatmul.mubr.bf16.gmra.mxu0 %v853
      %v1611 = vpop.f32.mrf.mxu0
      %v1612 = vadd.f32 %v343, %v1611
      %v1613 = vpop.f32.mrf.mxu0
      %v1614 = vpop.f32.mrf.mxu0
      %v1615 = vadd.f32 %v343, %v1614
      %v1616 = vpop.f32.mrf.mxu0
      %1617 = vmatprep.mubr.bf16.mxu0 %v856
      %1618 = vmatmul.mubr.bf16.gmra.mxu0 %v855
      %v1619 = vpop.f32.mrf.mxu0
      %v1620 = vadd.f32 %v343, %v1619
      %v1621 = vpop.f32.mrf.mxu0
      %v1622 = vpop.f32.mrf.mxu0
      %v1623 = vadd.f32 %v343, %v1622
      %v1624 = vpop.f32.mrf.mxu0
      %1625 = vdwg.mxu0
      %v1626 = vmax.f32 %v1116, 0.0
      %v1627 = vmax.f32 %v1119, 0.0
      %v1628 = vmax.f32 %v1124, 0.0
      %v1629 = vmax.f32 %v1127, 0.0
      %v1630 = vmax.f32 %v1132, 0.0
      %v1631 = vmax.f32 %v1135, 0.0
      %v1632 = vmax.f32 %v1140, 0.0
      %v1633 = vmax.f32 %v1143, 0.0
      %v1634 = vmax.f32 %v1148, 0.0
      %v1635 = vmax.f32 %v1151, 0.0
      %v1636 = vmax.f32 %v1156, 0.0
      %v1637 = vmax.f32 %v1159, 0.0
      %v1638 = vmax.f32 %v1164, 0.0
      %v1639 = vmax.f32 %v1167, 0.0
      %v1640 = vmax.f32 %v1172, 0.0
      %v1641 = vmax.f32 %v1175, 0.0
      %v1642 = vmax.f32 %v1180, 0.0
      %v1643 = vmax.f32 %v1183, 0.0
      %v1644 = vmax.f32 %v1188, 0.0
      %v1645 = vmax.f32 %v1191, 0.0
      %v1646 = vmax.f32 %v1196, 0.0
      %v1647 = vmax.f32 %v1199, 0.0
      %v1648 = vmax.f32 %v1204, 0.0
      %v1649 = vmax.f32 %v1207, 0.0
      %v1650 = vmax.f32 %v1212, 0.0
      %v1651 = vmax.f32 %v1215, 0.0
      %v1652 = vmax.f32 %v1220, 0.0
      %v1653 = vmax.f32 %v1223, 0.0
      %v1654 = vmax.f32 %v1228, 0.0
      %v1655 = vmax.f32 %v1231, 0.0
      %v1656 = vmax.f32 %v1236, 0.0
      %v1657 = vmax.f32 %v1239, 0.0
      %v1658 = vmax.f32 %v1244, 0.0
      %v1659 = vmax.f32 %v1247, 0.0
      %v1660 = vmax.f32 %v1252, 0.0
      %v1661 = vmax.f32 %v1255, 0.0
      %v1662 = vmax.f32 %v1260, 0.0
      %v1663 = vmax.f32 %v1263, 0.0
      %v1664 = vmax.f32 %v1268, 0.0
      %v1665 = vmax.f32 %v1271, 0.0
      %v1666 = vmax.f32 %v1276, 0.0
      %v1667 = vmax.f32 %v1279, 0.0
      %v1668 = vmax.f32 %v1284, 0.0
      %v1669 = vmax.f32 %v1287, 0.0
      %v1670 = vmax.f32 %v1292, 0.0
      %v1671 = vmax.f32 %v1295, 0.0
      %v1672 = vmax.f32 %v1300, 0.0
      %v1673 = vmax.f32 %v1303, 0.0
      %v1674 = vmax.f32 %v1308, 0.0
      %v1675 = vmax.f32 %v1311, 0.0
      %v1676 = vmax.f32 %v1316, 0.0
      %v1677 = vmax.f32 %v1319, 0.0
      %v1678 = vmax.f32 %v1324, 0.0
      %v1679 = vmax.f32 %v1327, 0.0
      %v1680 = vmax.f32 %v1332, 0.0
      %v1681 = vmax.f32 %v1335, 0.0
      %v1682 = vmax.f32 %v1340, 0.0
      %v1683 = vmax.f32 %v1343, 0.0
      %v1684 = vmax.f32 %v1348, 0.0
      %v1685 = vmax.f32 %v1351, 0.0
      %v1686 = vmax.f32 %v1356, 0.0
      %v1687 = vmax.f32 %v1359, 0.0
      %v1688 = vmax.f32 %v1364, 0.0
      %v1689 = vmax.f32 %v1367, 0.0
      %v1690 = vmax.f32 %v1372, 0.0
      %v1691 = vmax.f32 %v1375, 0.0
      %v1692 = vmax.f32 %v1380, 0.0
      %v1693 = vmax.f32 %v1383, 0.0
      %v1694 = vmax.f32 %v1388, 0.0
      %v1695 = vmax.f32 %v1391, 0.0
      %v1696 = vmax.f32 %v1396, 0.0
      %v1697 = vmax.f32 %v1399, 0.0
      %v1698 = vmax.f32 %v1404, 0.0
      %v1699 = vmax.f32 %v1407, 0.0
      %v1700 = vmax.f32 %v1412, 0.0
      %v1701 = vmax.f32 %v1415, 0.0
      %v1702 = vmax.f32 %v1420, 0.0
      %v1703 = vmax.f32 %v1423, 0.0
      %v1704 = vmax.f32 %v1428, 0.0
      %v1705 = vmax.f32 %v1431, 0.0
      %v1706 = vmax.f32 %v1436, 0.0
      %v1707 = vmax.f32 %v1439, 0.0
      %v1708 = vmax.f32 %v1444, 0.0
      %v1709 = vmax.f32 %v1447, 0.0
      %v1710 = vmax.f32 %v1452, 0.0
      %v1711 = vmax.f32 %v1455, 0.0
      %v1712 = vmax.f32 %v1460, 0.0
      %v1713 = vmax.f32 %v1463, 0.0
      %v1714 = vmax.f32 %v1468, 0.0
      %v1715 = vmax.f32 %v1471, 0.0
      %v1716 = vmax.f32 %v1476, 0.0
      %v1717 = vmax.f32 %v1479, 0.0
      %v1718 = vmax.f32 %v1484, 0.0
      %v1719 = vmax.f32 %v1487, 0.0
      %v1720 = vmax.f32 %v1492, 0.0
      %v1721 = vmax.f32 %v1495, 0.0
      %v1722 = vmax.f32 %v1500, 0.0
      %v1723 = vmax.f32 %v1503, 0.0
      %v1724 = vmax.f32 %v1508, 0.0
      %v1725 = vmax.f32 %v1511, 0.0
      %v1726 = vmax.f32 %v1516, 0.0
      %v1727 = vmax.f32 %v1519, 0.0
      %v1728 = vmax.f32 %v1524, 0.0
      %v1729 = vmax.f32 %v1527, 0.0
      %v1730 = vmax.f32 %v1532, 0.0
      %v1731 = vmax.f32 %v1535, 0.0
      %v1732 = vmax.f32 %v1540, 0.0
      %v1733 = vmax.f32 %v1543, 0.0
      %v1734 = vmax.f32 %v1548, 0.0
      %v1735 = vmax.f32 %v1551, 0.0
      %v1736 = vmax.f32 %v1556, 0.0
      %v1737 = vmax.f32 %v1559, 0.0
      %v1738 = vmax.f32 %v1564, 0.0
      %v1739 = vmax.f32 %v1567, 0.0
      %v1740 = vmax.f32 %v1572, 0.0
      %v1741 = vmax.f32 %v1575, 0.0
      %v1742 = vmax.f32 %v1580, 0.0
      %v1743 = vmax.f32 %v1583, 0.0
      %v1744 = vmax.f32 %v1588, 0.0
      %v1745 = vmax.f32 %v1591, 0.0
      %v1746 = vmax.f32 %v1596, 0.0
      %v1747 = vmax.f32 %v1599, 0.0
      %v1748 = vmax.f32 %v1604, 0.0
      %v1749 = vmax.f32 %v1607, 0.0
      %v1750 = vmax.f32 %v1612, 0.0
      %v1751 = vmax.f32 %v1615, 0.0
      %v1752 = vmax.f32 %v1620, 0.0
      %v1753 = vmax.f32 %v1623, 0.0
      %v1754 = vpack.c.bf16 %v1627, %v1626
      %v1755 = vpack.c.bf16 %v1629, %v1628
      %v1756 = vpack.c.bf16 %v1631, %v1630
      %v1757 = vpack.c.bf16 %v1633, %v1632
      %v1758 = vpack.c.bf16 %v1635, %v1634
      %v1759 = vpack.c.bf16 %v1637, %v1636
      %v1760 = vpack.c.bf16 %v1639, %v1638
      %v1761 = vpack.c.bf16 %v1641, %v1640
      %v1762 = vpack.c.bf16 %v1643, %v1642
      %v1763 = vpack.c.bf16 %v1645, %v1644
      %v1764 = vpack.c.bf16 %v1647, %v1646
      %v1765 = vpack.c.bf16 %v1649, %v1648
      %v1766 = vpack.c.bf16 %v1651, %v1650
      %v1767 = vpack.c.bf16 %v1653, %v1652
      %v1768 = vpack.c.bf16 %v1655, %v1654
      %v1769 = vpack.c.bf16 %v1657, %v1656
      %v1770 = vpack.c.bf16 %v1659, %v1658
      %v1771 = vpack.c.bf16 %v1661, %v1660
      %v1772 = vpack.c.bf16 %v1663, %v1662
      %v1773 = vpack.c.bf16 %v1665, %v1664
      %v1774 = vpack.c.bf16 %v1667, %v1666
      %v1775 = vpack.c.bf16 %v1669, %v1668
      %v1776 = vpack.c.bf16 %v1671, %v1670
      %v1777 = vpack.c.bf16 %v1673, %v1672
      %v1778 = vpack.c.bf16 %v1675, %v1674
      %v1779 = vpack.c.bf16 %v1677, %v1676
      %v1780 = vpack.c.bf16 %v1679, %v1678
      %v1781 = vpack.c.bf16 %v1681, %v1680
      %v1782 = vpack.c.bf16 %v1683, %v1682
      %v1783 = vpack.c.bf16 %v1685, %v1684
      %v1784 = vpack.c.bf16 %v1687, %v1686
      %v1785 = vpack.c.bf16 %v1689, %v1688
      %v1786 = vpack.c.bf16 %v1691, %v1690
      %v1787 = vpack.c.bf16 %v1693, %v1692
      %v1788 = vpack.c.bf16 %v1695, %v1694
      %v1789 = vpack.c.bf16 %v1697, %v1696
      %v1790 = vpack.c.bf16 %v1699, %v1698
      %v1791 = vpack.c.bf16 %v1701, %v1700
      %v1792 = vpack.c.bf16 %v1703, %v1702
      %v1793 = vpack.c.bf16 %v1705, %v1704
      %v1794 = vpack.c.bf16 %v1707, %v1706
      %v1795 = vpack.c.bf16 %v1709, %v1708
      %v1796 = vpack.c.bf16 %v1711, %v1710
      %v1797 = vpack.c.bf16 %v1713, %v1712
      %v1798 = vpack.c.bf16 %v1715, %v1714
      %v1799 = vpack.c.bf16 %v1717, %v1716
      %v1800 = vpack.c.bf16 %v1719, %v1718
      %v1801 = vpack.c.bf16 %v1721, %v1720
      %v1802 = vpack.c.bf16 %v1723, %v1722
      %v1803 = vpack.c.bf16 %v1725, %v1724
      %v1804 = vpack.c.bf16 %v1727, %v1726
      %v1805 = vpack.c.bf16 %v1729, %v1728
      %v1806 = vpack.c.bf16 %v1731, %v1730
      %v1807 = vpack.c.bf16 %v1733, %v1732
      %v1808 = vpack.c.bf16 %v1735, %v1734
      %v1809 = vpack.c.bf16 %v1737, %v1736
      %v1810 = vpack.c.bf16 %v1739, %v1738
      %v1811 = vpack.c.bf16 %v1741, %v1740
      %v1812 = vpack.c.bf16 %v1743, %v1742
      %v1813 = vpack.c.bf16 %v1745, %v1744
      %v1814 = vpack.c.bf16 %v1747, %v1746
      %v1815 = vpack.c.bf16 %v1749, %v1748
      %v1816 = vpack.c.bf16 %v1751, %v1750
      %v1817 = vpack.c.bf16 %v1753, %v1752
      %v1882 = vunpack.c.l.b16 %v1754
      %v1883 = vunpack.c.h.b16 %v1754
      %v1884 = vunpack.c.l.b16 %v1755
      %v1885 = vunpack.c.h.b16 %v1755
      %v1886 = vunpack.c.l.b16 %v1756
      %v1887 = vunpack.c.h.b16 %v1756
      %v1888 = vunpack.c.l.b16 %v1757
      %v1889 = vunpack.c.h.b16 %v1757
      %v1890 = vunpack.c.l.b16 %v1758
      %v1891 = vunpack.c.h.b16 %v1758
      %v1892 = vunpack.c.l.b16 %v1759
      %v1893 = vunpack.c.h.b16 %v1759
      %v1894 = vunpack.c.l.b16 %v1760
      %v1895 = vunpack.c.h.b16 %v1760
      %v1896 = vunpack.c.l.b16 %v1761
      %v1897 = vunpack.c.h.b16 %v1761
      %v1898 = vunpack.c.l.b16 %v1762
      %v1899 = vunpack.c.h.b16 %v1762
      %v1900 = vunpack.c.l.b16 %v1763
      %v1901 = vunpack.c.h.b16 %v1763
      %v1902 = vunpack.c.l.b16 %v1764
      %v1903 = vunpack.c.h.b16 %v1764
      %v1904 = vunpack.c.l.b16 %v1765
      %v1905 = vunpack.c.h.b16 %v1765
      %v1906 = vunpack.c.l.b16 %v1766
      %v1907 = vunpack.c.h.b16 %v1766
      %v1908 = vunpack.c.l.b16 %v1767
      %v1909 = vunpack.c.h.b16 %v1767
      %v1910 = vunpack.c.l.b16 %v1768
      %v1911 = vunpack.c.h.b16 %v1768
      %v1912 = vunpack.c.l.b16 %v1769
      %v1913 = vunpack.c.h.b16 %v1769
      %v1914 = vunpack.c.l.b16 %v1770
      %v1915 = vunpack.c.h.b16 %v1770
      %v1916 = vunpack.c.l.b16 %v1771
      %v1917 = vunpack.c.h.b16 %v1771
      %v1918 = vunpack.c.l.b16 %v1772
      %v1919 = vunpack.c.h.b16 %v1772
      %v1920 = vunpack.c.l.b16 %v1773
      %v1921 = vunpack.c.h.b16 %v1773
      %v1922 = vunpack.c.l.b16 %v1774
      %v1923 = vunpack.c.h.b16 %v1774
      %v1924 = vunpack.c.l.b16 %v1775
      %v1925 = vunpack.c.h.b16 %v1775
      %v1926 = vunpack.c.l.b16 %v1776
      %v1927 = vunpack.c.h.b16 %v1776
      %v1928 = vunpack.c.l.b16 %v1777
      %v1929 = vunpack.c.h.b16 %v1777
      %v1930 = vunpack.c.l.b16 %v1778
      %v1931 = vunpack.c.h.b16 %v1778
      %v1932 = vunpack.c.l.b16 %v1779
      %v1933 = vunpack.c.h.b16 %v1779
      %v1934 = vunpack.c.l.b16 %v1780
      %v1935 = vunpack.c.h.b16 %v1780
      %v1936 = vunpack.c.l.b16 %v1781
      %v1937 = vunpack.c.h.b16 %v1781
      %v1938 = vunpack.c.l.b16 %v1782
      %v1939 = vunpack.c.h.b16 %v1782
      %v1940 = vunpack.c.l.b16 %v1783
      %v1941 = vunpack.c.h.b16 %v1783
      %v1942 = vunpack.c.l.b16 %v1784
      %v1943 = vunpack.c.h.b16 %v1784
      %v1944 = vunpack.c.l.b16 %v1785
      %v1945 = vunpack.c.h.b16 %v1785
      %v1946 = vunpack.c.l.b16 %v1786
      %v1947 = vunpack.c.h.b16 %v1786
      %v1948 = vunpack.c.l.b16 %v1787
      %v1949 = vunpack.c.h.b16 %v1787
      %v1950 = vunpack.c.l.b16 %v1788
      %v1951 = vunpack.c.h.b16 %v1788
      %v1952 = vunpack.c.l.b16 %v1789
      %v1953 = vunpack.c.h.b16 %v1789
      %v1954 = vunpack.c.l.b16 %v1790
      %v1955 = vunpack.c.h.b16 %v1790
      %v1956 = vunpack.c.l.b16 %v1791
      %v1957 = vunpack.c.h.b16 %v1791
      %v1958 = vunpack.c.l.b16 %v1792
      %v1959 = vunpack.c.h.b16 %v1792
      %v1960 = vunpack.c.l.b16 %v1793
      %v1961 = vunpack.c.h.b16 %v1793
      %v1962 = vunpack.c.l.b16 %v1794
      %v1963 = vunpack.c.h.b16 %v1794
      %v1964 = vunpack.c.l.b16 %v1795
      %v1965 = vunpack.c.h.b16 %v1795
      %v1966 = vunpack.c.l.b16 %v1796
      %v1967 = vunpack.c.h.b16 %v1796
      %v1968 = vunpack.c.l.b16 %v1797
      %v1969 = vunpack.c.h.b16 %v1797
      %v1970 = vunpack.c.l.b16 %v1798
      %v1971 = vunpack.c.h.b16 %v1798
      %v1972 = vunpack.c.l.b16 %v1799
      %v1973 = vunpack.c.h.b16 %v1799
      %v1974 = vunpack.c.l.b16 %v1800
      %v1975 = vunpack.c.h.b16 %v1800
      %v1976 = vunpack.c.l.b16 %v1801
      %v1977 = vunpack.c.h.b16 %v1801
      %v1978 = vunpack.c.l.b16 %v1802
      %v1979 = vunpack.c.h.b16 %v1802
      %v1980 = vunpack.c.l.b16 %v1803
      %v1981 = vunpack.c.h.b16 %v1803
      %v1982 = vunpack.c.l.b16 %v1804
      %v1983 = vunpack.c.h.b16 %v1804
      %v1984 = vunpack.c.l.b16 %v1805
      %v1985 = vunpack.c.h.b16 %v1805
      %v1986 = vunpack.c.l.b16 %v1806
      %v1987 = vunpack.c.h.b16 %v1806
      %v1988 = vunpack.c.l.b16 %v1807
      %v1989 = vunpack.c.h.b16 %v1807
      %v1990 = vunpack.c.l.b16 %v1808
      %v1991 = vunpack.c.h.b16 %v1808
      %v1992 = vunpack.c.l.b16 %v1809
      %v1993 = vunpack.c.h.b16 %v1809
      %v1994 = vunpack.c.l.b16 %v1810
      %v1995 = vunpack.c.h.b16 %v1810
      %v1996 = vunpack.c.l.b16 %v1811
      %v1997 = vunpack.c.h.b16 %v1811
      %v1998 = vunpack.c.l.b16 %v1812
      %v1999 = vunpack.c.h.b16 %v1812
      %v2000 = vunpack.c.l.b16 %v1813
      %v2001 = vunpack.c.h.b16 %v1813
      %v2002 = vunpack.c.l.b16 %v1814
      %v2003 = vunpack.c.h.b16 %v1814
      %v2004 = vunpack.c.l.b16 %v1815
      %v2005 = vunpack.c.h.b16 %v1815
      %v2006 = vunpack.c.l.b16 %v1816
      %v2007 = vunpack.c.h.b16 %v1816
      %v2008 = vunpack.c.l.b16 %v1817
      %v2009 = vunpack.c.h.b16 %v1817
      %v2010 = vpack.c.b16 %v1882, %v1882
      %v2011 = vpack.c.b16 %v1883, %v1883
      %v2012 = vpack.c.b16 %v1884, %v1884
      %v2013 = vpack.c.b16 %v1885, %v1885
      %v2014 = vpack.c.b16 %v1886, %v1886
      %v2015 = vpack.c.b16 %v1887, %v1887
      %v2016 = vpack.c.b16 %v1888, %v1888
      %v2017 = vpack.c.b16 %v1889, %v1889
      %v2018 = vpack.c.b16 %v1890, %v1890
      %v2019 = vpack.c.b16 %v1891, %v1891
      %v2020 = vpack.c.b16 %v1892, %v1892
      %v2021 = vpack.c.b16 %v1893, %v1893
      %v2022 = vpack.c.b16 %v1894, %v1894
      %v2023 = vpack.c.b16 %v1895, %v1895
      %v2024 = vpack.c.b16 %v1896, %v1896
      %v2025 = vpack.c.b16 %v1897, %v1897
      %v2026 = vpack.c.b16 %v1898, %v1898
      %v2027 = vpack.c.b16 %v1899, %v1899
      %v2028 = vpack.c.b16 %v1900, %v1900
      %v2029 = vpack.c.b16 %v1901, %v1901
      %v2030 = vpack.c.b16 %v1902, %v1902
      %v2031 = vpack.c.b16 %v1903, %v1903
      %v2032 = vpack.c.b16 %v1904, %v1904
      %v2033 = vpack.c.b16 %v1905, %v1905
      %v2034 = vpack.c.b16 %v1906, %v1906
      %v2035 = vpack.c.b16 %v1907, %v1907
      %v2036 = vpack.c.b16 %v1908, %v1908
      %v2037 = vpack.c.b16 %v1909, %v1909
      %v2038 = vpack.c.b16 %v1910, %v1910
      %v2039 = vpack.c.b16 %v1911, %v1911
      %v2040 = vpack.c.b16 %v1912, %v1912
      %v2041 = vpack.c.b16 %v1913, %v1913
      %v2042 = vpack.c.b16 %v1914, %v1914
      %v2043 = vpack.c.b16 %v1915, %v1915
      %v2044 = vpack.c.b16 %v1916, %v1916
      %v2045 = vpack.c.b16 %v1917, %v1917
      %v2046 = vpack.c.b16 %v1918, %v1918
      %v2047 = vpack.c.b16 %v1919, %v1919
      %v2048 = vpack.c.b16 %v1920, %v1920
      %v2049 = vpack.c.b16 %v1921, %v1921
      %v2050 = vpack.c.b16 %v1922, %v1922
      %v2051 = vpack.c.b16 %v1923, %v1923
      %v2052 = vpack.c.b16 %v1924, %v1924
      %v2053 = vpack.c.b16 %v1925, %v1925
      %v2054 = vpack.c.b16 %v1926, %v1926
      %v2055 = vpack.c.b16 %v1927, %v1927
      %v2056 = vpack.c.b16 %v1928, %v1928
      %v2057 = vpack.c.b16 %v1929, %v1929
      %v2058 = vpack.c.b16 %v1930, %v1930
      %v2059 = vpack.c.b16 %v1931, %v1931
      %v2060 = vpack.c.b16 %v1932, %v1932
      %v2061 = vpack.c.b16 %v1933, %v1933
      %v2062 = vpack.c.b16 %v1934, %v1934
      %v2063 = vpack.c.b16 %v1935, %v1935
      %v2064 = vpack.c.b16 %v1936, %v1936
      %v2065 = vpack.c.b16 %v1937, %v1937
      %v2066 = vpack.c.b16 %v1938, %v1938
      %v2067 = vpack.c.b16 %v1939, %v1939
      %v2068 = vpack.c.b16 %v1940, %v1940
      %v2069 = vpack.c.b16 %v1941, %v1941
      %v2070 = vpack.c.b16 %v1942, %v1942
      %v2071 = vpack.c.b16 %v1943, %v1943
      %v2072 = vpack.c.b16 %v1944, %v1944
      %v2073 = vpack.c.b16 %v1945, %v1945
      %v2074 = vpack.c.b16 %v1946, %v1946
      %v2075 = vpack.c.b16 %v1947, %v1947
      %v2076 = vpack.c.b16 %v1948, %v1948
      %v2077 = vpack.c.b16 %v1949, %v1949
      %v2078 = vpack.c.b16 %v1950, %v1950
      %v2079 = vpack.c.b16 %v1951, %v1951
      %v2080 = vpack.c.b16 %v1952, %v1952
      %v2081 = vpack.c.b16 %v1953, %v1953
      %v2082 = vpack.c.b16 %v1954, %v1954
      %v2083 = vpack.c.b16 %v1955, %v1955
      %v2084 = vpack.c.b16 %v1956, %v1956
      %v2085 = vpack.c.b16 %v1957, %v1957
      %v2086 = vpack.c.b16 %v1958, %v1958
      %v2087 = vpack.c.b16 %v1959, %v1959
      %v2088 = vpack.c.b16 %v1960, %v1960
      %v2089 = vpack.c.b16 %v1961, %v1961
      %v2090 = vpack.c.b16 %v1962, %v1962
      %v2091 = vpack.c.b16 %v1963, %v1963
      %v2092 = vpack.c.b16 %v1964, %v1964
      %v2093 = vpack.c.b16 %v1965, %v1965
      %v2094 = vpack.c.b16 %v1966, %v1966
      %v2095 = vpack.c.b16 %v1967, %v1967
      %v2096 = vpack.c.b16 %v1968, %v1968
      %v2097 = vpack.c.b16 %v1969, %v1969
      %v2098 = vpack.c.b16 %v1970, %v1970
      %v2099 = vpack.c.b16 %v1971, %v1971
      %v2100 = vpack.c.b16 %v1972, %v1972
      %v2101 = vpack.c.b16 %v1973, %v1973
      %v2102 = vpack.c.b16 %v1974, %v1974
      %v2103 = vpack.c.b16 %v1975, %v1975
      %v2104 = vpack.c.b16 %v1976, %v1976
      %v2105 = vpack.c.b16 %v1977, %v1977
      %v2106 = vpack.c.b16 %v1978, %v1978
      %v2107 = vpack.c.b16 %v1979, %v1979
      %v2108 = vpack.c.b16 %v1980, %v1980
      %v2109 = vpack.c.b16 %v1981, %v1981
      %v2110 = vpack.c.b16 %v1982, %v1982
      %v2111 = vpack.c.b16 %v1983, %v1983
      %v2112 = vpack.c.b16 %v1984, %v1984
      %v2113 = vpack.c.b16 %v1985, %v1985
      %v2114 = vpack.c.b16 %v1986, %v1986
      %v2115 = vpack.c.b16 %v1987, %v1987
      %v2116 = vpack.c.b16 %v1988, %v1988
      %v2117 = vpack.c.b16 %v1989, %v1989
      %v2118 = vpack.c.b16 %v1990, %v1990
      %v2119 = vpack.c.b16 %v1991, %v1991
      %v2120 = vpack.c.b16 %v1992, %v1992
      %v2121 = vpack.c.b16 %v1993, %v1993
      %v2122 = vpack.c.b16 %v1994, %v1994
      %v2123 = vpack.c.b16 %v1995, %v1995
      %v2124 = vpack.c.b16 %v1996, %v1996
      %v2125 = vpack.c.b16 %v1997, %v1997
      %v2126 = vpack.c.b16 %v1998, %v1998
      %v2127 = vpack.c.b16 %v1999, %v1999
      %v2128 = vpack.c.b16 %v2000, %v2000
      %v2129 = vpack.c.b16 %v2001, %v2001
      %v2130 = vpack.c.b16 %v2002, %v2002
      %v2131 = vpack.c.b16 %v2003, %v2003
      %v2132 = vpack.c.b16 %v2004, %v2004
      %v2133 = vpack.c.b16 %v2005, %v2005
      %v2134 = vpack.c.b16 %v2006, %v2006
      %v2135 = vpack.c.b16 %v2007, %v2007
      %v2136 = vpack.c.b16 %v2008, %v2008
      %v2137 = vpack.c.b16 %v2009, %v2009
      %vm2266 = vcmask 388096
      %2267 = vst.msk [vmem:[%s175] sm:$0xf] %vm2266, %v2010
      %2268 = vst.msk [vmem:[%s175 + $0x4] sm:$0xf] %vm2266, %v2011
      %2269 = vst.msk [vmem:[%s175 + $0x8] sm:$0xf] %vm2266, %v2012
      %2270 = vst.msk [vmem:[%s175 + $0xc] sm:$0xf] %vm2266, %v2013
      %2271 = vst.msk [vmem:[%s175 + $0x10] sm:$0xf] %vm2266, %v2014
      %2272 = vst.msk [vmem:[%s175 + $0x14] sm:$0xf] %vm2266, %v2015
      %2273 = vst.msk [vmem:[%s175 + $0x18] sm:$0xf] %vm2266, %v2016
      %2274 = vst.msk [vmem:[%s175 + $0x1c] sm:$0xf] %vm2266, %v2017
      %2275 = vst.msk [vmem:[%s175 + $0x20] sm:$0xf] %vm2266, %v2018
      %2276 = vst.msk [vmem:[%s175 + $0x24] sm:$0xf] %vm2266, %v2019
      %2277 = vst.msk [vmem:[%s175 + $0x28] sm:$0xf] %vm2266, %v2020
      %2278 = vst.msk [vmem:[%s175 + $0x2c] sm:$0xf] %vm2266, %v2021
      %2279 = vst.msk [vmem:[%s175 + $0x30] sm:$0xf] %vm2266, %v2022
      %2280 = vst.msk [vmem:[%s175 + $0x34] sm:$0xf] %vm2266, %v2023
      %2281 = vst.msk [vmem:[%s175 + $0x38] sm:$0xf] %vm2266, %v2024
      %2282 = vst.msk [vmem:[%s175 + $0x3c] sm:$0xf] %vm2266, %v2025
      %2283 = vst.msk [vmem:[%s175 + $0x40] sm:$0xf] %vm2266, %v2026
      %2284 = vst.msk [vmem:[%s175 + $0x44] sm:$0xf] %vm2266, %v2027
      %2285 = vst.msk [vmem:[%s175 + $0x48] sm:$0xf] %vm2266, %v2028
      %2286 = vst.msk [vmem:[%s175 + $0x4c] sm:$0xf] %vm2266, %v2029
      %2287 = vst.msk [vmem:[%s175 + $0x50] sm:$0xf] %vm2266, %v2030
      %2288 = vst.msk [vmem:[%s175 + $0x54] sm:$0xf] %vm2266, %v2031
      %2289 = vst.msk [vmem:[%s175 + $0x58] sm:$0xf] %vm2266, %v2032
      %2290 = vst.msk [vmem:[%s175 + $0x5c] sm:$0xf] %vm2266, %v2033
      %2291 = vst.msk [vmem:[%s175 + $0x60] sm:$0xf] %vm2266, %v2034
      %2292 = vst.msk [vmem:[%s175 + $0x64] sm:$0xf] %vm2266, %v2035
      %2293 = vst.msk [vmem:[%s175 + $0x68] sm:$0xf] %vm2266, %v2036
      %2294 = vst.msk [vmem:[%s175 + $0x6c] sm:$0xf] %vm2266, %v2037
      %2295 = vst.msk [vmem:[%s175 + $0x70] sm:$0xf] %vm2266, %v2038
      %2296 = vst.msk [vmem:[%s175 + $0x74] sm:$0xf] %vm2266, %v2039
      %2297 = vst.msk [vmem:[%s175 + $0x78] sm:$0xf] %vm2266, %v2040
      %2298 = vst.msk [vmem:[%s175 + $0x7c] sm:$0xf] %vm2266, %v2041
      %2299 = vst.msk [vmem:[%s175 + $0x80] sm:$0xf] %vm2266, %v2042
      %2300 = vst.msk [vmem:[%s175 + $0x84] sm:$0xf] %vm2266, %v2043
      %2301 = vst.msk [vmem:[%s175 + $0x88] sm:$0xf] %vm2266, %v2044
      %2302 = vst.msk [vmem:[%s175 + $0x8c] sm:$0xf] %vm2266, %v2045
      %2303 = vst.msk [vmem:[%s175 + $0x90] sm:$0xf] %vm2266, %v2046
      %2304 = vst.msk [vmem:[%s175 + $0x94] sm:$0xf] %vm2266, %v2047
      %2305 = vst.msk [vmem:[%s175 + $0x98] sm:$0xf] %vm2266, %v2048
      %2306 = vst.msk [vmem:[%s175 + $0x9c] sm:$0xf] %vm2266, %v2049
      %2307 = vst.msk [vmem:[%s175 + $0xa0] sm:$0xf] %vm2266, %v2050
      %2308 = vst.msk [vmem:[%s175 + $0xa4] sm:$0xf] %vm2266, %v2051
      %2309 = vst.msk [vmem:[%s175 + $0xa8] sm:$0xf] %vm2266, %v2052
      %2310 = vst.msk [vmem:[%s175 + $0xac] sm:$0xf] %vm2266, %v2053
      %2311 = vst.msk [vmem:[%s175 + $0xb0] sm:$0xf] %vm2266, %v2054
      %2312 = vst.msk [vmem:[%s175 + $0xb4] sm:$0xf] %vm2266, %v2055
      %2313 = vst.msk [vmem:[%s175 + $0xb8] sm:$0xf] %vm2266, %v2056
      %2314 = vst.msk [vmem:[%s175 + $0xbc] sm:$0xf] %vm2266, %v2057
      %2315 = vst.msk [vmem:[%s175 + $0xc0] sm:$0xf] %vm2266, %v2058
      %2316 = vst.msk [vmem:[%s175 + $0xc4] sm:$0xf] %vm2266, %v2059
      %2317 = vst.msk [vmem:[%s175 + $0xc8] sm:$0xf] %vm2266, %v2060
      %2318 = vst.msk [vmem:[%s175 + $0xcc] sm:$0xf] %vm2266, %v2061
      %2319 = vst.msk [vmem:[%s175 + $0xd0] sm:$0xf] %vm2266, %v2062
      %2320 = vst.msk [vmem:[%s175 + $0xd4] sm:$0xf] %vm2266, %v2063
      %2321 = vst.msk [vmem:[%s175 + $0xd8] sm:$0xf] %vm2266, %v2064
      %2322 = vst.msk [vmem:[%s175 + $0xdc] sm:$0xf] %vm2266, %v2065
      %2323 = vst.msk [vmem:[%s175 + $0xe0] sm:$0xf] %vm2266, %v2066
      %2324 = vst.msk [vmem:[%s175 + $0xe4] sm:$0xf] %vm2266, %v2067
      %2325 = vst.msk [vmem:[%s175 + $0xe8] sm:$0xf] %vm2266, %v2068
      %2326 = vst.msk [vmem:[%s175 + $0xec] sm:$0xf] %vm2266, %v2069
      %2327 = vst.msk [vmem:[%s175 + $0xf0] sm:$0xf] %vm2266, %v2070
      %2328 = vst.msk [vmem:[%s175 + $0xf4] sm:$0xf] %vm2266, %v2071
      %2329 = vst.msk [vmem:[%s175 + $0xf8] sm:$0xf] %vm2266, %v2072
      %2330 = vst.msk [vmem:[%s175 + $0xfc] sm:$0xf] %vm2266, %v2073
      %2331 = vst.msk [vmem:[%s175 + $0x100] sm:$0xf] %vm2266, %v2074
      %2332 = vst.msk [vmem:[%s175 + $0x104] sm:$0xf] %vm2266, %v2075
      %2333 = vst.msk [vmem:[%s175 + $0x108] sm:$0xf] %vm2266, %v2076
      %2334 = vst.msk [vmem:[%s175 + $0x10c] sm:$0xf] %vm2266, %v2077
      %2335 = vst.msk [vmem:[%s175 + $0x110] sm:$0xf] %vm2266, %v2078
      %2336 = vst.msk [vmem:[%s175 + $0x114] sm:$0xf] %vm2266, %v2079
      %2337 = vst.msk [vmem:[%s175 + $0x118] sm:$0xf] %vm2266, %v2080
      %2338 = vst.msk [vmem:[%s175 + $0x11c] sm:$0xf] %vm2266, %v2081
      %2339 = vst.msk [vmem:[%s175 + $0x120] sm:$0xf] %vm2266, %v2082
      %2340 = vst.msk [vmem:[%s175 + $0x124] sm:$0xf] %vm2266, %v2083
      %2341 = vst.msk [vmem:[%s175 + $0x128] sm:$0xf] %vm2266, %v2084
      %2342 = vst.msk [vmem:[%s175 + $0x12c] sm:$0xf] %vm2266, %v2085
      %2343 = vst.msk [vmem:[%s175 + $0x130] sm:$0xf] %vm2266, %v2086
      %2344 = vst.msk [vmem:[%s175 + $0x134] sm:$0xf] %vm2266, %v2087
      %2345 = vst.msk [vmem:[%s175 + $0x138] sm:$0xf] %vm2266, %v2088
      %2346 = vst.msk [vmem:[%s175 + $0x13c] sm:$0xf] %vm2266, %v2089
      %2347 = vst.msk [vmem:[%s175 + $0x140] sm:$0xf] %vm2266, %v2090
      %2348 = vst.msk [vmem:[%s175 + $0x144] sm:$0xf] %vm2266, %v2091
      %2349 = vst.msk [vmem:[%s175 + $0x148] sm:$0xf] %vm2266, %v2092
      %2350 = vst.msk [vmem:[%s175 + $0x14c] sm:$0xf] %vm2266, %v2093
      %2351 = vst.msk [vmem:[%s175 + $0x150] sm:$0xf] %vm2266, %v2094
      %2352 = vst.msk [vmem:[%s175 + $0x154] sm:$0xf] %vm2266, %v2095
      %2353 = vst.msk [vmem:[%s175 + $0x158] sm:$0xf] %vm2266, %v2096
      %2354 = vst.msk [vmem:[%s175 + $0x15c] sm:$0xf] %vm2266, %v2097
      %2355 = vst.msk [vmem:[%s175 + $0x160] sm:$0xf] %vm2266, %v2098
      %2356 = vst.msk [vmem:[%s175 + $0x164] sm:$0xf] %vm2266, %v2099
      %2357 = vst.msk [vmem:[%s175 + $0x168] sm:$0xf] %vm2266, %v2100
      %2358 = vst.msk [vmem:[%s175 + $0x16c] sm:$0xf] %vm2266, %v2101
      %2359 = vst.msk [vmem:[%s175 + $0x170] sm:$0xf] %vm2266, %v2102
      %2360 = vst.msk [vmem:[%s175 + $0x174] sm:$0xf] %vm2266, %v2103
      %2361 = vst.msk [vmem:[%s175 + $0x178] sm:$0xf] %vm2266, %v2104
      %2362 = vst.msk [vmem:[%s175 + $0x17c] sm:$0xf] %vm2266, %v2105
      %2363 = vst.msk [vmem:[%s175 + $0x180] sm:$0xf] %vm2266, %v2106
      %2364 = vst.msk [vmem:[%s175 + $0x184] sm:$0xf] %vm2266, %v2107
      %2365 = vst.msk [vmem:[%s175 + $0x188] sm:$0xf] %vm2266, %v2108
      %2366 = vst.msk [vmem:[%s175 + $0x18c] sm:$0xf] %vm2266, %v2109
      %2367 = vst.msk [vmem:[%s175 + $0x190] sm:$0xf] %vm2266, %v2110
      %2368 = vst.msk [vmem:[%s175 + $0x194] sm:$0xf] %vm2266, %v2111
      %2369 = vst.msk [vmem:[%s175 + $0x198] sm:$0xf] %vm2266, %v2112
      %2370 = vst.msk [vmem:[%s175 + $0x19c] sm:$0xf] %vm2266, %v2113
      %2371 = vst.msk [vmem:[%s175 + $0x1a0] sm:$0xf] %vm2266, %v2114
      %2372 = vst.msk [vmem:[%s175 + $0x1a4] sm:$0xf] %vm2266, %v2115
      %2373 = vst.msk [vmem:[%s175 + $0x1a8] sm:$0xf] %vm2266, %v2116
      %2374 = vst.msk [vmem:[%s175 + $0x1ac] sm:$0xf] %vm2266, %v2117
      %2375 = vst.msk [vmem:[%s175 + $0x1b0] sm:$0xf] %vm2266, %v2118
      %2376 = vst.msk [vmem:[%s175 + $0x1b4] sm:$0xf] %vm2266, %v2119
      %2377 = vst.msk [vmem:[%s175 + $0x1b8] sm:$0xf] %vm2266, %v2120
      %2378 = vst.msk [vmem:[%s175 + $0x1bc] sm:$0xf] %vm2266, %v2121
      %2379 = vst.msk [vmem:[%s175 + $0x1c0] sm:$0xf] %vm2266, %v2122
      %2380 = vst.msk [vmem:[%s175 + $0x1c4] sm:$0xf] %vm2266, %v2123
      %2381 = vst.msk [vmem:[%s175 + $0x1c8] sm:$0xf] %vm2266, %v2124
      %2382 = vst.msk [vmem:[%s175 + $0x1cc] sm:$0xf] %vm2266, %v2125
      %2383 = vst.msk [vmem:[%s175 + $0x1d0] sm:$0xf] %vm2266, %v2126
      %2384 = vst.msk [vmem:[%s175 + $0x1d4] sm:$0xf] %vm2266, %v2127
      %2385 = vst.msk [vmem:[%s175 + $0x1d8] sm:$0xf] %vm2266, %v2128
      %2386 = vst.msk [vmem:[%s175 + $0x1dc] sm:$0xf] %vm2266, %v2129
      %2387 = vst.msk [vmem:[%s175 + $0x1e0] sm:$0xf] %vm2266, %v2130
      %2388 = vst.msk [vmem:[%s175 + $0x1e4] sm:$0xf] %vm2266, %v2131
      %2389 = vst.msk [vmem:[%s175 + $0x1e8] sm:$0xf] %vm2266, %v2132
      %2390 = vst.msk [vmem:[%s175 + $0x1ec] sm:$0xf] %vm2266, %v2133
      %2391 = vst.msk [vmem:[%s175 + $0x1f0] sm:$0xf] %vm2266, %v2134
      %2392 = vst.msk [vmem:[%s175 + $0x1f4] sm:$0xf] %vm2266, %v2135
      %2393 = vst.msk [vmem:[%s175 + $0x1f8] sm:$0xf] %vm2266, %v2136
      %2394 = vst.msk [vmem:[%s175 + $0x1fc] sm:$0xf] %vm2266, %v2137
      %s2395 = smul.u32 128, %s14
      %p2396 = scmp.lt.s32.totalorder %s2395, 255
      %s2397 = scalar_select %p2396, %s2395, 255
      %s2398 = smul.addr %s2397, 4
      %s2399 = scalar_lea.vmem %s3, %s2398
      // Predicated region
      $region33: #{facebox_forward.20} parent=31 // pred_check
        %p2400 = pneg %p100
      $region34: #{facebox_forward.20} parent=31 // pred_check_branch
        %2402 = sbr.rel (%p2400) target = $region36
      $region35: #{facebox_forward.20} parent=31 // pred_region
        %s2403 = smul.u32 128, %s14
      $region36: #{facebox_forward.20} parent=31 // pred_fallthru
        _
    $region32: #{facebox_forward.20} parent=5 // pred_fallthru
      _
    %p2404 = scmp.le.s32.totalorder 2, %s9
    // Predicated region
    $region37: #{facebox_forward.20} parent=5 // pred_check
      %p2405 = pneg %p2404
    $region38: #{facebox_forward.20} parent=5 // pred_check_branch
      %2407 = sbr.rel (%p2405) target = $region40
    $region39: #{facebox_forward.20} parent=5 // pred_region
      %s2408 = ssub.s32 %s9, 2
      // Predicated region
      $region41: #{facebox_forward.20} parent=39 // pred_check
        %p2409 = pneg %p106
      $region42: #{facebox_forward.20} parent=39 // pred_check_branch
        %2411 = sbr.rel (%p2409) target = $region44
      $region43: #{facebox_forward.20} parent=39 // pred_region
        %s2412 = smul.u32 128, %s15
        %p2413 = scmp.lt.s32.totalorder %s2412, 255
        %s2414 = scalar_select %p2413, %s2412, 255
        %s2415 = smul.addr %s2414, 4
        %s2416 = scalar_lea.vmem %s3, %s2415
      $region44: #{facebox_forward.20} parent=39 // pred_fallthru
        _
    $region40: #{facebox_forward.20} parent=5 // pred_fallthru
      _
  $region6: #{facebox_forward.20} parent=0 // loop_footer
    %s13 = sadd.s32 1, %s9
  $region7: #{facebox_forward.20} parent=0 // loop_footer_branch
    %8 = sbr.rel target = $region3
  $region8: #{facebox_forward.20} parent=0 // loop_exit
    _

// kernel: facebox_forward.21
$region0: #{facebox_forward.21}
  #allocation0 [shape = 'u32[]', space=smem, size = 0x4, offset = 0x4, fixed_abs, tag = 'smem constant byte address 0x4 - core index']
  #allocation1 [shape = 'u32[144,128]{1,0:T(1,128)}', space=vmem, size = 0x12000, scoped, tag = 'internal scratch']
  %s0 = inlined_call_operand.vmem [shape: bf16[9,512,48], index: 0, kind: input, shape index: {}]
  %s1 = inlined_call_operand.vmem [shape: bf16[512,48], index: 1, kind: output, shape index: {}]
  %s2 = sld [smem:[#allocation0]]
  $region78: #{facebox_forward.21} parent=0
    _
  %s4 = ssub.s32 1, %s2
  %s5 = scalar_select 0, %s4, %s2
  $region1: #{facebox_forward.21} parent=0
    #allocation2 [shape = 'u8[1179648]{0}', space=vmem, size = 0x120000, scoped, tag = 'input window, operand 0']
    loop: start=0, step=1, limit=4
    $region2: #{facebox_forward.21} parent=1 // loop_pre_header
      _
    $region3: #{facebox_forward.21} parent=1 // loop_header
      %s7 = sphi 0, %s11
      %p8 = scmp.ge.s32.totalorder %s7, 4
      %s17 = sphi 0, %s19
      %s20 = sphi 0, %s17
      %s21 = sphi 0, %s20
      %s37 = sphi 0, %s21
      %s43 = sphi 0, %s45
      %s46 = sphi 0, %s43
      %s47 = sphi 0, %s46
      %s63 = sphi 0, %s47
    $region4: #{facebox_forward.21} parent=1 // loop_header_branch
      %10 = sbr.rel (%p8) target = $region8
    $region5: #{facebox_forward.21} parent=1 // loop_body
      %s12 = ssub.s32 %s7, 1
      %s13 = ssub.s32 %s7, 2
      %s14 = sadd.s32 %s7, 1
      %s15 = ssub.s32 %s7, %s14
      %p16 = scmp.eq.s32.totalorder %s15, 0
      %s18 = sadd.s32 %s17, 1
      %s19 = scalar_select %p16, %s17, %s18
      %p22 = pneg %p16
      %p23 = scmp.eq.s32.totalorder %s7, 1
      %p24 = por %p22, %p23
      %p25 = scmp.ne.s32.totalorder %s17, %s20
      %p26 = scmp.eq.s32.totalorder %s7, 0
      %p27 = por %p25, %p26
      %p28 = scmp.ne.s32.totalorder %s17, %s20
      %p29 = scmp.eq.s32.totalorder %s12, 1
      %p30 = por %p28, %p29
      %p31 = scmp.ne.s32.totalorder %s20, %s21
      %p32 = scmp.eq.s32.totalorder %s12, 0
      %p33 = por %p31, %p32
      %p34 = scmp.ne.s32.totalorder %s20, %s21
      %p35 = scmp.eq.s32.totalorder %s13, 1
      %p36 = por %p34, %p35
      %p38 = scmp.ne.s32.totalorder %s21, %s37
      %p39 = scmp.eq.s32.totalorder %s13, 0
      %p40 = por %p38, %p39
      %s41 = ssub.s32 %s7, %s14
      %p42 = scmp.eq.s32.totalorder %s41, 0
      %s44 = sadd.s32 %s43, 1
      %s45 = scalar_select %p42, %s43, %s44
      %p48 = pneg %p42
      %p49 = scmp.eq.s32.totalorder %s7, 1
      %p50 = por %p48, %p49
      %p51 = scmp.ne.s32.totalorder %s43, %s46
      %p52 = scmp.eq.s32.totalorder %s7, 0
      %p53 = por %p51, %p52
      %p54 = scmp.ne.s32.totalorder %s43, %s46
      %p55 = scmp.eq.s32.totalorder %s12, 1
      %p56 = por %p54, %p55
      %p57 = scmp.ne.s32.totalorder %s46, %s47
      %p58 = scmp.eq.s32.totalorder %s12, 0
      %p59 = por %p57, %p58
      %p60 = scmp.ne.s32.totalorder %s46, %s47
      %p61 = scmp.eq.s32.totalorder %s13, 1
      %p62 = por %p60, %p61
      %p64 = scmp.ne.s32.totalorder %s47, %s63
      %p65 = scmp.eq.s32.totalorder %s13, 0
      %p66 = por %p64, %p65
      %p67 = scmp.le.s32.totalorder 1, %s7
      %p68 = scmp.lt.s32.totalorder %s7, 3
      %p69 = pnand %p67, %p68
      %p70 = pneg %p69
      // Predicated region
      $region9: #{facebox_forward.21} parent=5 // pred_check
        _
      $region10: #{facebox_forward.21} parent=5 // pred_check_branch
        %72 = sbr.rel (%p69) target = $region12
      $region11: #{facebox_forward.21} parent=5 // pred_region
        %s73 = ssub.s32 %s7, 1
      $region12: #{facebox_forward.21} parent=5 // pred_fallthru
        _
      %p74 = scmp.lt.s32.totalorder %s7, 2
      // Predicated region
      $region13: #{facebox_forward.21} parent=5 // pred_check
        %p75 = pneg %p74
      $region14: #{facebox_forward.21} parent=5 // pred_check_branch
        %77 = sbr.rel (%p75) target = $region16
      $region15: #{facebox_forward.21} parent=5 // pred_region
        // Predicated region
        $region17: #{facebox_forward.21} parent=15 // pred_check
          %p78 = pneg %p27
        $region18: #{facebox_forward.21} parent=15 // pred_check_branch
          %80 = sbr.rel (%p78) target = $region20
        $region19: #{facebox_forward.21} parent=15 // pred_region
          %s81 = sand.u32 %s17, 1
          %s82 = sand.u32 %s17, 1
          %s83 = smul.addr %s82, 1152
          %s84 = scalar_lea.vmem [#allocation2], %s83
          %s85 = smul.u32 32, %s7
          %s86 = smul.addr %s85, 4
          %s87 = scalar_lea.vmem %s0, %s86
          // Predicated region
          $region21: #{facebox_forward.21} parent=19 // pred_check
            _
          $region22: #{facebox_forward.21} parent=19 // pred_check_branch
            %89 = sbr.rel (0) target = $region24
          $region23: #{facebox_forward.21} parent=19 // pred_region
            // Predicated region
            $region25: #{facebox_forward.21} parent=23 // pred_check
              _
            $region26: #{facebox_forward.21} parent=23 // pred_check_branch
              %91 = sbr.rel target = $region28
            $region27: #{facebox_forward.21} parent=23 // pred_region
              // Predicated region
              $region40: #{facebox_forward.21} parent=27 // pred_check
                _
              $region41: #{facebox_forward.21} parent=27 // pred_check_branch
                %681 = sbr.rel (0) target = $region43
              $region42: #{facebox_forward.21} parent=27 // pred_region
                loop: start=0, step=1, limit=1
                $region44: #{facebox_forward.21} parent=42 // loop_pre_header
                  _
                $region45: #{facebox_forward.21} parent=42 // loop_header
                  %s683 = sphi 0, %s687
                  %p684 = scmp.ge.s32.totalorder %s683, 1
                  %s688 = sphi %s87, %s87
                  %s689 = sphi %s84, %s84
                $region46: #{facebox_forward.21} parent=42 // loop_header_branch
                  %686 = sbr.rel (%p684) target = $region50
                $region47: #{facebox_forward.21} parent=42 // loop_body
                  _
                $region48: #{facebox_forward.21} parent=42 // loop_footer
                  %s687 = sadd.s32 1, %s683
                $region49: #{facebox_forward.21} parent=42 // loop_footer_branch
                  %682 = sbr.rel target = $region45
                $region50: #{facebox_forward.21} parent=42 // loop_exit
                  _
                %s691 = ssub.s32 16, 1
                loop: start=0, step=1, limit=1
                $region51: #{facebox_forward.21} parent=42 // loop_pre_header
                  _
                $region52: #{facebox_forward.21} parent=42 // loop_header
                  %s693 = sphi 0, %s697
                  %p694 = scmp.ge.s32.totalorder %s693, 1
                  %s698 = sphi %s87, %s87
                  %s699 = sphi %s84, %s84
                $region53: #{facebox_forward.21} parent=42 // loop_header_branch
                  %696 = sbr.rel (%p694) target = $region57
                $region54: #{facebox_forward.21} parent=42 // loop_body
                  %v700 = vld [vmem:[%s698] sm:%s691]
                  %701 = vst [vmem:[%s699] sm:%s691] %v700
                  %v702 = vld [vmem:[%s698 + $0x4] sm:%s691]
                  %703 = vst [vmem:[%s699 + $0x4] sm:%s691] %v702
                  %v704 = vld [vmem:[%s698 + $0x8] sm:%s691]
                  %705 = vst [vmem:[%s699 + $0x8] sm:%s691] %v704
                  %v706 = vld [vmem:[%s698 + $0xc] sm:%s691]
                  %707 = vst [vmem:[%s699 + $0xc] sm:%s691] %v706
                  %v708 = vld [vmem:[%s698 + $0x10] sm:%s691]
                  %709 = vst [vmem:[%s699 + $0x10] sm:%s691] %v708
                  %v710 = vld [vmem:[%s698 + $0x14] sm:%s691]
                  %711 = vst [vmem:[%s699 + $0x14] sm:%s691] %v710
                  %v712 = vld [vmem:[%s698 + $0x18] sm:%s691]
                  %713 = vst [vmem:[%s699 + $0x18] sm:%s691] %v712
                  %v714 = vld [vmem:[%s698 + $0x1c] sm:%s691]
                  %715 = vst [vmem:[%s699 + $0x1c] sm:%s691] %v714
                  %v716 = vld [vmem:[%s698 + $0x20] sm:%s691]
                  %717 = vst [vmem:[%s699 + $0x20] sm:%s691] %v716
                  %v718 = vld [vmem:[%s698 + $0x24] sm:%s691]
                  %719 = vst [vmem:[%s699 + $0x24] sm:%s691] %v718
                  %v720 = vld [vmem:[%s698 + $0x28] sm:%s691]
                  %721 = vst [vmem:[%s699 + $0x28] sm:%s691] %v720
                  %v722 = vld [vmem:[%s698 + $0x2c] sm:%s691]
                  %723 = vst [vmem:[%s699 + $0x2c] sm:%s691] %v722
                  %v724 = vld [vmem:[%s698 + $0x30] sm:%s691]
                  %725 = vst [vmem:[%s699 + $0x30] sm:%s691] %v724
                  %v726 = vld [vmem:[%s698 + $0x34] sm:%s691]
                  %727 = vst [vmem:[%s699 + $0x34] sm:%s691] %v726
                  %v728 = vld [vmem:[%s698 + $0x38] sm:%s691]
                  %729 = vst [vmem:[%s699 + $0x38] sm:%s691] %v728
                  %v730 = vld [vmem:[%s698 + $0x3c] sm:%s691]
                  %731 = vst [vmem:[%s699 + $0x3c] sm:%s691] %v730
                  %v732 = vld [vmem:[%s698 + $0x40] sm:%s691]
                  %733 = vst [vmem:[%s699 + $0x40] sm:%s691] %v732
                  %v734 = vld [vmem:[%s698 + $0x44] sm:%s691]
                  %735 = vst [vmem:[%s699 + $0x44] sm:%s691] %v734
                  %v736 = vld [vmem:[%s698 + $0x48] sm:%s691]
                  %737 = vst [vmem:[%s699 + $0x48] sm:%s691] %v736
                  %v738 = vld [vmem:[%s698 + $0x4c] sm:%s691]
                  %739 = vst [vmem:[%s699 + $0x4c] sm:%s691] %v738
                  %v740 = vld [vmem:[%s698 + $0x50] sm:%s691]
                  %741 = vst [vmem:[%s699 + $0x50] sm:%s691] %v740
                  %v742 = vld [vmem:[%s698 + $0x54] sm:%s691]
                  %743 = vst [vmem:[%s699 + $0x54] sm:%s691] %v742
                  %v744 = vld [vmem:[%s698 + $0x58] sm:%s691]
                  %745 = vst [vmem:[%s699 + $0x58] sm:%s691] %v744
                  %v746 = vld [vmem:[%s698 + $0x5c] sm:%s691]
                  %747 = vst [vmem:[%s699 + $0x5c] sm:%s691] %v746
                  %v748 = vld [vmem:[%s698 + $0x60] sm:%s691]
                  %749 = vst [vmem:[%s699 + $0x60] sm:%s691] %v748
                  %v750 = vld [vmem:[%s698 + $0x64] sm:%s691]
                  %751 = vst [vmem:[%s699 + $0x64] sm:%s691] %v750
                  %v752 = vld [vmem:[%s698 + $0x68] sm:%s691]
                  %753 = vst [vmem:[%s699 + $0x68] sm:%s691] %v752
                  %v754 = vld [vmem:[%s698 + $0x6c] sm:%s691]
                  %755 = vst [vmem:[%s699 + $0x6c] sm:%s691] %v754
                  %v756 = vld [vmem:[%s698 + $0x70] sm:%s691]
                  %757 = vst [vmem:[%s699 + $0x70] sm:%s691] %v756
                  %v758 = vld [vmem:[%s698 + $0x74] sm:%s691]
                  %759 = vst [vmem:[%s699 + $0x74] sm:%s691] %v758
                  %v760 = vld [vmem:[%s698 + $0x78] sm:%s691]
                  %761 = vst [vmem:[%s699 + $0x78] sm:%s691] %v760
                  %v762 = vld [vmem:[%s698 + $0x7c] sm:%s691]
                  %763 = vst [vmem:[%s699 + $0x7c] sm:%s691] %v762
                  %v764 = vld [vmem:[%s698 + $0x100] sm:%s691]
                  %765 = vst [vmem:[%s699 + $0x80] sm:%s691] %v764
                  %v766 = vld [vmem:[%s698 + $0x104] sm:%s691]
                  %767 = vst [vmem:[%s699 + $0x84] sm:%s691] %v766
                  %v768 = vld [vmem:[%s698 + $0x108] sm:%s691]
                  %769 = vst [vmem:[%s699 + $0x88] sm:%s691] %v768
                  %v770 = vld [vmem:[%s698 + $0x10c] sm:%s691]
                  %771 = vst [vmem:[%s699 + $0x8c] sm:%s691] %v770
                  %v772 = vld [vmem:[%s698 + $0x110] sm:%s691]
                  %773 = vst [vmem:[%s699 + $0x90] sm:%s691] %v772
                  %v774 = vld [vmem:[%s698 + $0x114] sm:%s691]
                  %775 = vst [vmem:[%s699 + $0x94] sm:%s691] %v774
                  %v776 = vld [vmem:[%s698 + $0x118] sm:%s691]
                  %777 = vst [vmem:[%s699 + $0x98] sm:%s691] %v776
                  %v778 = vld [vmem:[%s698 + $0x11c] sm:%s691]
                  %779 = vst [vmem:[%s699 + $0x9c] sm:%s691] %v778
                  %v780 = vld [vmem:[%s698 + $0x120] sm:%s691]
                  %781 = vst [vmem:[%s699 + $0xa0] sm:%s691] %v780
                  %v782 = vld [vmem:[%s698 + $0x124] sm:%s691]
                  %783 = vst [vmem:[%s699 + $0xa4] sm:%s691] %v782
                  %v784 = vld [vmem:[%s698 + $0x128] sm:%s691]
                  %785 = vst [vmem:[%s699 + $0xa8] sm:%s691] %v784
                  %v786 = vld [vmem:[%s698 + $0x12c] sm:%s691]
                  %787 = vst [vmem:[%s699 + $0xac] sm:%s691] %v786
                  %v788 = vld [vmem:[%s698 + $0x130] sm:%s691]
                  %789 = vst [vmem:[%s699 + $0xb0] sm:%s691] %v788
                  %v790 = vld [vmem:[%s698 + $0x134] sm:%s691]
                  %791 = vst [vmem:[%s699 + $0xb4] sm:%s691] %v790
                  %v792 = vld [vmem:[%s698 + $0x138] sm:%s691]
                  %793 = vst [vmem:[%s699 + $0xb8] sm:%s691] %v792
                  %v794 = vld [vmem:[%s698 + $0x13c] sm:%s691]
                  %795 = vst [vmem:[%s699 + $0xbc] sm:%s691] %v794
                  %v796 = vld [vmem:[%s698 + $0x140] sm:%s691]
                  %797 = vst [vmem:[%s699 + $0xc0] sm:%s691] %v796
                  %v798 = vld [vmem:[%s698 + $0x144] sm:%s691]
                  %799 = vst [vmem:[%s699 + $0xc4] sm:%s691] %v798
                  %v800 = vld [vmem:[%s698 + $0x148] sm:%s691]
                  %801 = vst [vmem:[%s699 + $0xc8] sm:%s691] %v800
                  %v802 = vld [vmem:[%s698 + $0x14c] sm:%s691]
                  %803 = vst [vmem:[%s699 + $0xcc] sm:%s691] %v802
                  %v804 = vld [vmem:[%s698 + $0x150] sm:%s691]
                  %805 = vst [vmem:[%s699 + $0xd0] sm:%s691] %v804
                  %v806 = vld [vmem:[%s698 + $0x154] sm:%s691]
                  %807 = vst [vmem:[%s699 + $0xd4] sm:%s691] %v806
                  %v808 = vld [vmem:[%s698 + $0x158] sm:%s691]
                  %809 = vst [vmem:[%s699 + $0xd8] sm:%s691] %v808
                  %v810 = vld [vmem:[%s698 + $0x15c] sm:%s691]
                  %811 = vst [vmem:[%s699 + $0xdc] sm:%s691] %v810
                  %v812 = vld [vmem:[%s698 + $0x160] sm:%s691]
                  %813 = vst [vmem:[%s699 + $0xe0] sm:%s691] %v812
                  %v814 = vld [vmem:[%s698 + $0x164] sm:%s691]
                  %815 = vst [vmem:[%s699 + $0xe4] sm:%s691] %v814
                  %v816 = vld [vmem:[%s698 + $0x168] sm:%s691]
                  %817 = vst [vmem:[%s699 + $0xe8] sm:%s691] %v816
                  %v818 = vld [vmem:[%s698 + $0x16c] sm:%s691]
                  %819 = vst [vmem:[%s699 + $0xec] sm:%s691] %v818
                  %v820 = vld [vmem:[%s698 + $0x170] sm:%s691]
                  %821 = vst [vmem:[%s699 + $0xf0] sm:%s691] %v820
                  %v822 = vld [vmem:[%s698 + $0x174] sm:%s691]
                  %823 = vst [vmem:[%s699 + $0xf4] sm:%s691] %v822
                  %v824 = vld [vmem:[%s698 + $0x178] sm:%s691]
                  %825 = vst [vmem:[%s699 + $0xf8] sm:%s691] %v824
                  %v826 = vld [vmem:[%s698 + $0x17c] sm:%s691]
                  %827 = vst [vmem:[%s699 + $0xfc] sm:%s691] %v826
                  %v828 = vld [vmem:[%s698 + $0x200] sm:%s691]
                  %829 = vst [vmem:[%s699 + $0x100] sm:%s691] %v828
                  %v830 = vld [vmem:[%s698 + $0x204] sm:%s691]
                  %831 = vst [vmem:[%s699 + $0x104] sm:%s691] %v830
                  %v832 = vld [vmem:[%s698 + $0x208] sm:%s691]
                  %833 = vst [vmem:[%s699 + $0x108] sm:%s691] %v832
                  %v834 = vld [vmem:[%s698 + $0x20c] sm:%s691]
                  %835 = vst [vmem:[%s699 + $0x10c] sm:%s691] %v834
                  %v836 = vld [vmem:[%s698 + $0x210] sm:%s691]
                  %837 = vst [vmem:[%s699 + $0x110] sm:%s691] %v836
                  %v838 = vld [vmem:[%s698 + $0x214] sm:%s691]
                  %839 = vst [vmem:[%s699 + $0x114] sm:%s691] %v838
                  %v840 = vld [vmem:[%s698 + $0x218] sm:%s691]
                  %841 = vst [vmem:[%s699 + $0x118] sm:%s691] %v840
                  %v842 = vld [vmem:[%s698 + $0x21c] sm:%s691]
                  %843 = vst [vmem:[%s699 + $0x11c] sm:%s691] %v842
                  %v844 = vld [vmem:[%s698 + $0x220] sm:%s691]
                  %845 = vst [vmem:[%s699 + $0x120] sm:%s691] %v844
                  %v846 = vld [vmem:[%s698 + $0x224] sm:%s691]
                  %847 = vst [vmem:[%s699 + $0x124] sm:%s691] %v846
                  %v848 = vld [vmem:[%s698 + $0x228] sm:%s691]
                  %849 = vst [vmem:[%s699 + $0x128] sm:%s691] %v848
                  %v850 = vld [vmem:[%s698 + $0x22c] sm:%s691]
                  %851 = vst [vmem:[%s699 + $0x12c] sm:%s691] %v850
                  %v852 = vld [vmem:[%s698 + $0x230] sm:%s691]
                  %853 = vst [vmem:[%s699 + $0x130] sm:%s691] %v852
                  %v854 = vld [vmem:[%s698 + $0x234] sm:%s691]
                  %855 = vst [vmem:[%s699 + $0x134] sm:%s691] %v854
                  %v856 = vld [vmem:[%s698 + $0x238] sm:%s691]
                  %857 = vst [vmem:[%s699 + $0x138] sm:%s691] %v856
                  %v858 = vld [vmem:[%s698 + $0x23c] sm:%s691]
                  %859 = vst [vmem:[%s699 + $0x13c] sm:%s691] %v858
                  %v860 = vld [vmem:[%s698 + $0x240] sm:%s691]
                  %861 = vst [vmem:[%s699 + $0x140] sm:%s691] %v860
                  %v862 = vld [vmem:[%s698 + $0x244] sm:%s691]
                  %863 = vst [vmem:[%s699 + $0x144] sm:%s691] %v862
                  %v864 = vld [vmem:[%s698 + $0x248] sm:%s691]
                  %865 = vst [vmem:[%s699 + $0x148] sm:%s691] %v864
                  %v866 = vld [vmem:[%s698 + $0x24c] sm:%s691]
                  %867 = vst [vmem:[%s699 + $0x14c] sm:%s691] %v866
                  %v868 = vld [vmem:[%s698 + $0x250] sm:%s691]
                  %869 = vst [vmem:[%s699 + $0x150] sm:%s691] %v868
                  %v870 = vld [vmem:[%s698 + $0x254] sm:%s691]
                  %871 = vst [vmem:[%s699 + $0x154] sm:%s691] %v870
                  %v872 = vld [vmem:[%s698 + $0x258] sm:%s691]
                  %873 = vst [vmem:[%s699 + $0x158] sm:%s691] %v872
                  %v874 = vld [vmem:[%s698 + $0x25c] sm:%s691]
                  %875 = vst [vmem:[%s699 + $0x15c] sm:%s691] %v874
                  %v876 = vld [vmem:[%s698 + $0x260] sm:%s691]
                  %877 = vst [vmem:[%s699 + $0x160] sm:%s691] %v876
                  %v878 = vld [vmem:[%s698 + $0x264] sm:%s691]
                  %879 = vst [vmem:[%s699 + $0x164] sm:%s691] %v878
                  %v880 = vld [vmem:[%s698 + $0x268] sm:%s691]
                  %881 = vst [vmem:[%s699 + $0x168] sm:%s691] %v880
                  %v882 = vld [vmem:[%s698 + $0x26c] sm:%s691]
                  %883 = vst [vmem:[%s699 + $0x16c] sm:%s691] %v882
                  %v884 = vld [vmem:[%s698 + $0x270] sm:%s691]
                  %885 = vst [vmem:[%s699 + $0x170] sm:%s691] %v884
                  %v886 = vld [vmem:[%s698 + $0x274] sm:%s691]
                  %887 = vst [vmem:[%s699 + $0x174] sm:%s691] %v886
                  %v888 = vld [vmem:[%s698 + $0x278] sm:%s691]
                  %889 = vst [vmem:[%s699 + $0x178] sm:%s691] %v888
                  %v890 = vld [vmem:[%s698 + $0x27c] sm:%s691]
                  %891 = vst [vmem:[%s699 + $0x17c] sm:%s691] %v890
                  %v892 = vld [vmem:[%s698 + $0x300] sm:%s691]
                  %893 = vst [vmem:[%s699 + $0x180] sm:%s691] %v892
                  %v894 = vld [vmem:[%s698 + $0x304] sm:%s691]
                  %895 = vst [vmem:[%s699 + $0x184] sm:%s691] %v894
                  %v896 = vld [vmem:[%s698 + $0x308] sm:%s691]
                  %897 = vst [vmem:[%s699 + $0x188] sm:%s691] %v896
                  %v898 = vld [vmem:[%s698 + $0x30c] sm:%s691]
                  %899 = vst [vmem:[%s699 + $0x18c] sm:%s691] %v898
                  %v900 = vld [vmem:[%s698 + $0x310] sm:%s691]
                  %901 = vst [vmem:[%s699 + $0x190] sm:%s691] %v900
                  %v902 = vld [vmem:[%s698 + $0x314] sm:%s691]
                  %903 = vst [vmem:[%s699 + $0x194] sm:%s691] %v902
                  %v904 = vld [vmem:[%s698 + $0x318] sm:%s691]
                  %905 = vst [vmem:[%s699 + $0x198] sm:%s691] %v904
                  %v906 = vld [vmem:[%s698 + $0x31c] sm:%s691]
                  %907 = vst [vmem:[%s699 + $0x19c] sm:%s691] %v906
                  %v908 = vld [vmem:[%s698 + $0x320] sm:%s691]
                  %909 = vst [vmem:[%s699 + $0x1a0] sm:%s691] %v908
                  %v910 = vld [vmem:[%s698 + $0x324] sm:%s691]
                  %911 = vst [vmem:[%s699 + $0x1a4] sm:%s691] %v910
                  %v912 = vld [vmem:[%s698 + $0x328] sm:%s691]
                  %913 = vst [vmem:[%s699 + $0x1a8] sm:%s691] %v912
                  %v914 = vld [vmem:[%s698 + $0x32c] sm:%s691]
                  %915 = vst [vmem:[%s699 + $0x1ac] sm:%s691] %v914
                  %v916 = vld [vmem:[%s698 + $0x330] sm:%s691]
                  %917 = vst [vmem:[%s699 + $0x1b0] sm:%s691] %v916
                  %v918 = vld [vmem:[%s698 + $0x334] sm:%s691]
                  %919 = vst [vmem:[%s699 + $0x1b4] sm:%s691] %v918
                  %v920 = vld [vmem:[%s698 + $0x338] sm:%s691]
                  %921 = vst [vmem:[%s699 + $0x1b8] sm:%s691] %v920
                  %v922 = vld [vmem:[%s698 + $0x33c] sm:%s691]
                  %923 = vst [vmem:[%s699 + $0x1bc] sm:%s691] %v922
                  %v924 = vld [vmem:[%s698 + $0x340] sm:%s691]
                  %925 = vst [vmem:[%s699 + $0x1c0] sm:%s691] %v924
                  %v926 = vld [vmem:[%s698 + $0x344] sm:%s691]
                  %927 = vst [vmem:[%s699 + $0x1c4] sm:%s691] %v926
                  %v928 = vld [vmem:[%s698 + $0x348] sm:%s691]
                  %929 = vst [vmem:[%s699 + $0x1c8] sm:%s691] %v928
                  %v930 = vld [vmem:[%s698 + $0x34c] sm:%s691]
                  %931 = vst [vmem:[%s699 + $0x1cc] sm:%s691] %v930
                  %v932 = vld [vmem:[%s698 + $0x350] sm:%s691]
                  %933 = vst [vmem:[%s699 + $0x1d0] sm:%s691] %v932
                  %v934 = vld [vmem:[%s698 + $0x354] sm:%s691]
                  %935 = vst [vmem:[%s699 + $0x1d4] sm:%s691] %v934
                  %v936 = vld [vmem:[%s698 + $0x358] sm:%s691]
                  %937 = vst [vmem:[%s699 + $0x1d8] sm:%s691] %v936
                  %v938 = vld [vmem:[%s698 + $0x35c] sm:%s691]
                  %939 = vst [vmem:[%s699 + $0x1dc] sm:%s691] %v938
                  %v940 = vld [vmem:[%s698 + $0x360] sm:%s691]
                  %941 = vst [vmem:[%s699 + $0x1e0] sm:%s691] %v940
                  %v942 = vld [vmem:[%s698 + $0x364] sm:%s691]
                  %943 = vst [vmem:[%s699 + $0x1e4] sm:%s691] %v942
                  %v944 = vld [vmem:[%s698 + $0x368] sm:%s691]
                  %945 = vst [vmem:[%s699 + $0x1e8] sm:%s691] %v944
                  %v946 = vld [vmem:[%s698 + $0x36c] sm:%s691]
                  %947 = vst [vmem:[%s699 + $0x1ec] sm:%s691] %v946
                  %v948 = vld [vmem:[%s698 + $0x370] sm:%s691]
                  %949 = vst [vmem:[%s699 + $0x1f0] sm:%s691] %v948
                  %v950 = vld [vmem:[%s698 + $0x374] sm:%s691]
                  %951 = vst [vmem:[%s699 + $0x1f4] sm:%s691] %v950
                  %v952 = vld [vmem:[%s698 + $0x378] sm:%s691]
                  %953 = vst [vmem:[%s699 + $0x1f8] sm:%s691] %v952
                  %v954 = vld [vmem:[%s698 + $0x37c] sm:%s691]
                  %955 = vst [vmem:[%s699 + $0x1fc] sm:%s691] %v954
                  %v956 = vld [vmem:[%s698 + $0x400] sm:%s691]
                  %957 = vst [vmem:[%s699 + $0x200] sm:%s691] %v956
                  %v958 = vld [vmem:[%s698 + $0x404] sm:%s691]
                  %959 = vst [vmem:[%s699 + $0x204] sm:%s691] %v958
                  %v960 = vld [vmem:[%s698 + $0x408] sm:%s691]
                  %961 = vst [vmem:[%s699 + $0x208] sm:%s691] %v960
                  %v962 = vld [vmem:[%s698 + $0x40c] sm:%s691]
                  %963 = vst [vmem:[%s699 + $0x20c] sm:%s691] %v962
                  %v964 = vld [vmem:[%s698 + $0x410] sm:%s691]
                  %965 = vst [vmem:[%s699 + $0x210] sm:%s691] %v964
                  %v966 = vld [vmem:[%s698 + $0x414] sm:%s691]
                  %967 = vst [vmem:[%s699 + $0x214] sm:%s691] %v966
                  %v968 = vld [vmem:[%s698 + $0x418] sm:%s691]
                  %969 = vst [vmem:[%s699 + $0x218] sm:%s691] %v968
                  %v970 = vld [vmem:[%s698 + $0x41c] sm:%s691]
                  %971 = vst [vmem:[%s699 + $0x21c] sm:%s691] %v970
                  %v972 = vld [vmem:[%s698 + $0x420] sm:%s691]
                  %973 = vst [vmem:[%s699 + $0x220] sm:%s691] %v972
                  %v974 = vld [vmem:[%s698 + $0x424] sm:%s691]
                  %975 = vst [vmem:[%s699 + $0x224] sm:%s691] %v974
                  %v976 = vld [vmem:[%s698 + $0x428] sm:%s691]
                  %977 = vst [vmem:[%s699 + $0x228] sm:%s691] %v976
                  %v978 = vld [vmem:[%s698 + $0x42c] sm:%s691]
                  %979 = vst [vmem:[%s699 + $0x22c] sm:%s691] %v978
                  %v980 = vld [vmem:[%s698 + $0x430] sm:%s691]
                  %981 = vst [vmem:[%s699 + $0x230] sm:%s691] %v980
                  %v982 = vld [vmem:[%s698 + $0x434] sm:%s691]
                  %983 = vst [vmem:[%s699 + $0x234] sm:%s691] %v982
                  %v984 = vld [vmem:[%s698 + $0x438] sm:%s691]
                  %985 = vst [vmem:[%s699 + $0x238] sm:%s691] %v984
                  %v986 = vld [vmem:[%s698 + $0x43c] sm:%s691]
                  %987 = vst [vmem:[%s699 + $0x23c] sm:%s691] %v986
                  %v988 = vld [vmem:[%s698 + $0x440] sm:%s691]
                  %989 = vst [vmem:[%s699 + $0x240] sm:%s691] %v988
                  %v990 = vld [vmem:[%s698 + $0x444] sm:%s691]
                  %991 = vst [vmem:[%s699 + $0x244] sm:%s691] %v990
                  %v992 = vld [vmem:[%s698 + $0x448] sm:%s691]
                  %993 = vst [vmem:[%s699 + $0x248] sm:%s691] %v992
                  %v994 = vld [vmem:[%s698 + $0x44c] sm:%s691]
                  %995 = vst [vmem:[%s699 + $0x24c] sm:%s691] %v994
                  %v996 = vld [vmem:[%s698 + $0x450] sm:%s691]
                  %997 = vst [vmem:[%s699 + $0x250] sm:%s691] %v996
                  %v998 = vld [vmem:[%s698 + $0x454] sm:%s691]
                  %999 = vst [vmem:[%s699 + $0x254] sm:%s691] %v998
                  %v1000 = vld [vmem:[%s698 + $0x458] sm:%s691]
                  %1001 = vst [vmem:[%s699 + $0x258] sm:%s691] %v1000
                  %v1002 = vld [vmem:[%s698 + $0x45c] sm:%s691]
                  %1003 = vst [vmem:[%s699 + $0x25c] sm:%s691] %v1002
                  %v1004 = vld [vmem:[%s698 + $0x460] sm:%s691]
                  %1005 = vst [vmem:[%s699 + $0x260] sm:%s691] %v1004
                  %v1006 = vld [vmem:[%s698 + $0x464] sm:%s691]
                  %1007 = vst [vmem:[%s699 + $0x264] sm:%s691] %v1006
                  %v1008 = vld [vmem:[%s698 + $0x468] sm:%s691]
                  %1009 = vst [vmem:[%s699 + $0x268] sm:%s691] %v1008
                  %v1010 = vld [vmem:[%s698 + $0x46c] sm:%s691]
                  %1011 = vst [vmem:[%s699 + $0x26c] sm:%s691] %v1010
                  %v1012 = vld [vmem:[%s698 + $0x470] sm:%s691]
                  %1013 = vst [vmem:[%s699 + $0x270] sm:%s691] %v1012
                  %v1014 = vld [vmem:[%s698 + $0x474] sm:%s691]
                  %1015 = vst [vmem:[%s699 + $0x274] sm:%s691] %v1014
                  %v1016 = vld [vmem:[%s698 + $0x478] sm:%s691]
                  %1017 = vst [vmem:[%s699 + $0x278] sm:%s691] %v1016
                  %v1018 = vld [vmem:[%s698 + $0x47c] sm:%s691]
                  %1019 = vst [vmem:[%s699 + $0x27c] sm:%s691] %v1018
                  %v1020 = vld [vmem:[%s698 + $0x500] sm:%s691]
                  %1021 = vst [vmem:[%s699 + $0x280] sm:%s691] %v1020
                  %v1022 = vld [vmem:[%s698 + $0x504] sm:%s691]
                  %1023 = vst [vmem:[%s699 + $0x284] sm:%s691] %v1022
                  %v1024 = vld [vmem:[%s698 + $0x508] sm:%s691]
                  %1025 = vst [vmem:[%s699 + $0x288] sm:%s691] %v1024
                  %v1026 = vld [vmem:[%s698 + $0x50c] sm:%s691]
                  %1027 = vst [vmem:[%s699 + $0x28c] sm:%s691] %v1026
                  %v1028 = vld [vmem:[%s698 + $0x510] sm:%s691]
                  %1029 = vst [vmem:[%s699 + $0x290] sm:%s691] %v1028
                  %v1030 = vld [vmem:[%s698 + $0x514] sm:%s691]
                  %1031 = vst [vmem:[%s699 + $0x294] sm:%s691] %v1030
                  %v1032 = vld [vmem:[%s698 + $0x518] sm:%s691]
                  %1033 = vst [vmem:[%s699 + $0x298] sm:%s691] %v1032
                  %v1034 = vld [vmem:[%s698 + $0x51c] sm:%s691]
                  %1035 = vst [vmem:[%s699 + $0x29c] sm:%s691] %v1034
                  %v1036 = vld [vmem:[%s698 + $0x520] sm:%s691]
                  %1037 = vst [vmem:[%s699 + $0x2a0] sm:%s691] %v1036
                  %v1038 = vld [vmem:[%s698 + $0x524] sm:%s691]
                  %1039 = vst [vmem:[%s699 + $0x2a4] sm:%s691] %v1038
                  %v1040 = vld [vmem:[%s698 + $0x528] sm:%s691]
                  %1041 = vst [vmem:[%s699 + $0x2a8] sm:%s691] %v1040
                  %v1042 = vld [vmem:[%s698 + $0x52c] sm:%s691]
                  %1043 = vst [vmem:[%s699 + $0x2ac] sm:%s691] %v1042
                  %v1044 = vld [vmem:[%s698 + $0x530] sm:%s691]
                  %1045 = vst [vmem:[%s699 + $0x2b0] sm:%s691] %v1044
                  %v1046 = vld [vmem:[%s698 + $0x534] sm:%s691]
                  %1047 = vst [vmem:[%s699 + $0x2b4] sm:%s691] %v1046
                  %v1048 = vld [vmem:[%s698 + $0x538] sm:%s691]
                  %1049 = vst [vmem:[%s699 + $0x2b8] sm:%s691] %v1048
                  %v1050 = vld [vmem:[%s698 + $0x53c] sm:%s691]
                  %1051 = vst [vmem:[%s699 + $0x2bc] sm:%s691] %v1050
                  %v1052 = vld [vmem:[%s698 + $0x540] sm:%s691]
                  %1053 = vst [vmem:[%s699 + $0x2c0] sm:%s691] %v1052
                  %v1054 = vld [vmem:[%s698 + $0x544] sm:%s691]
                  %1055 = vst [vmem:[%s699 + $0x2c4] sm:%s691] %v1054
                  %v1056 = vld [vmem:[%s698 + $0x548] sm:%s691]
                  %1057 = vst [vmem:[%s699 + $0x2c8] sm:%s691] %v1056
                  %v1058 = vld [vmem:[%s698 + $0x54c] sm:%s691]
                  %1059 = vst [vmem:[%s699 + $0x2cc] sm:%s691] %v1058
                  %v1060 = vld [vmem:[%s698 + $0x550] sm:%s691]
                  %1061 = vst [vmem:[%s699 + $0x2d0] sm:%s691] %v1060
                  %v1062 = vld [vmem:[%s698 + $0x554] sm:%s691]
                  %1063 = vst [vmem:[%s699 + $0x2d4] sm:%s691] %v1062
                  %v1064 = vld [vmem:[%s698 + $0x558] sm:%s691]
                  %1065 = vst [vmem:[%s699 + $0x2d8] sm:%s691] %v1064
                  %v1066 = vld [vmem:[%s698 + $0x55c] sm:%s691]
                  %1067 = vst [vmem:[%s699 + $0x2dc] sm:%s691] %v1066
                  %v1068 = vld [vmem:[%s698 + $0x560] sm:%s691]
                  %1069 = vst [vmem:[%s699 + $0x2e0] sm:%s691] %v1068
                  %v1070 = vld [vmem:[%s698 + $0x564] sm:%s691]
                  %1071 = vst [vmem:[%s699 + $0x2e4] sm:%s691] %v1070
                  %v1072 = vld [vmem:[%s698 + $0x568] sm:%s691]
                  %1073 = vst [vmem:[%s699 + $0x2e8] sm:%s691] %v1072
                  %v1074 = vld [vmem:[%s698 + $0x56c] sm:%s691]
                  %1075 = vst [vmem:[%s699 + $0x2ec] sm:%s691] %v1074
                  %v1076 = vld [vmem:[%s698 + $0x570] sm:%s691]
                  %1077 = vst [vmem:[%s699 + $0x2f0] sm:%s691] %v1076
                  %v1078 = vld [vmem:[%s698 + $0x574] sm:%s691]
                  %1079 = vst [vmem:[%s699 + $0x2f4] sm:%s691] %v1078
                  %v1080 = vld [vmem:[%s698 + $0x578] sm:%s691]
                  %1081 = vst [vmem:[%s699 + $0x2f8] sm:%s691] %v1080
                  %v1082 = vld [vmem:[%s698 + $0x57c] sm:%s691]
                  %1083 = vst [vmem:[%s699 + $0x2fc] sm:%s691] %v1082
                  %v1084 = vld [vmem:[%s698 + $0x600] sm:%s691]
                  %1085 = vst [vmem:[%s699 + $0x300] sm:%s691] %v1084
                  %v1086 = vld [vmem:[%s698 + $0x604] sm:%s691]
                  %1087 = vst [vmem:[%s699 + $0x304] sm:%s691] %v1086
                  %v1088 = vld [vmem:[%s698 + $0x608] sm:%s691]
                  %1089 = vst [vmem:[%s699 + $0x308] sm:%s691] %v1088
                  %v1090 = vld [vmem:[%s698 + $0x60c] sm:%s691]
                  %1091 = vst [vmem:[%s699 + $0x30c] sm:%s691] %v1090
                  %v1092 = vld [vmem:[%s698 + $0x610] sm:%s691]
                  %1093 = vst [vmem:[%s699 + $0x310] sm:%s691] %v1092
                  %v1094 = vld [vmem:[%s698 + $0x614] sm:%s691]
                  %1095 = vst [vmem:[%s699 + $0x314] sm:%s691] %v1094
                  %v1096 = vld [vmem:[%s698 + $0x618] sm:%s691]
                  %1097 = vst [vmem:[%s699 + $0x318] sm:%s691] %v1096
                  %v1098 = vld [vmem:[%s698 + $0x61c] sm:%s691]
                  %1099 = vst [vmem:[%s699 + $0x31c] sm:%s691] %v1098
                  %v1100 = vld [vmem:[%s698 + $0x620] sm:%s691]
                  %1101 = vst [vmem:[%s699 + $0x320] sm:%s691] %v1100
                  %v1102 = vld [vmem:[%s698 + $0x624] sm:%s691]
                  %1103 = vst [vmem:[%s699 + $0x324] sm:%s691] %v1102
                  %v1104 = vld [vmem:[%s698 + $0x628] sm:%s691]
                  %1105 = vst [vmem:[%s699 + $0x328] sm:%s691] %v1104
                  %v1106 = vld [vmem:[%s698 + $0x62c] sm:%s691]
                  %1107 = vst [vmem:[%s699 + $0x32c] sm:%s691] %v1106
                  %v1108 = vld [vmem:[%s698 + $0x630] sm:%s691]
                  %1109 = vst [vmem:[%s699 + $0x330] sm:%s691] %v1108
                  %v1110 = vld [vmem:[%s698 + $0x634] sm:%s691]
                  %1111 = vst [vmem:[%s699 + $0x334] sm:%s691] %v1110
                  %v1112 = vld [vmem:[%s698 + $0x638] sm:%s691]
                  %1113 = vst [vmem:[%s699 + $0x338] sm:%s691] %v1112
                  %v1114 = vld [vmem:[%s698 + $0x63c] sm:%s691]
                  %1115 = vst [vmem:[%s699 + $0x33c] sm:%s691] %v1114
                  %v1116 = vld [vmem:[%s698 + $0x640] sm:%s691]
                  %1117 = vst [vmem:[%s699 + $0x340] sm:%s691] %v1116
                  %v1118 = vld [vmem:[%s698 + $0x644] sm:%s691]
                  %1119 = vst [vmem:[%s699 + $0x344] sm:%s691] %v1118
                  %v1120 = vld [vmem:[%s698 + $0x648] sm:%s691]
                  %1121 = vst [vmem:[%s699 + $0x348] sm:%s691] %v1120
                  %v1122 = vld [vmem:[%s698 + $0x64c] sm:%s691]
                  %1123 = vst [vmem:[%s699 + $0x34c] sm:%s691] %v1122
                  %v1124 = vld [vmem:[%s698 + $0x650] sm:%s691]
                  %1125 = vst [vmem:[%s699 + $0x350] sm:%s691] %v1124
                  %v1126 = vld [vmem:[%s698 + $0x654] sm:%s691]
                  %1127 = vst [vmem:[%s699 + $0x354] sm:%s691] %v1126
                  %v1128 = vld [vmem:[%s698 + $0x658] sm:%s691]
                  %1129 = vst [vmem:[%s699 + $0x358] sm:%s691] %v1128
                  %v1130 = vld [vmem:[%s698 + $0x65c] sm:%s691]
                  %1131 = vst [vmem:[%s699 + $0x35c] sm:%s691] %v1130
                  %v1132 = vld [vmem:[%s698 + $0x660] sm:%s691]
                  %1133 = vst [vmem:[%s699 + $0x360] sm:%s691] %v1132
                  %v1134 = vld [vmem:[%s698 + $0x664] sm:%s691]
                  %1135 = vst [vmem:[%s699 + $0x364] sm:%s691] %v1134
                  %v1136 = vld [vmem:[%s698 + $0x668] sm:%s691]
                  %1137 = vst [vmem:[%s699 + $0x368] sm:%s691] %v1136
                  %v1138 = vld [vmem:[%s698 + $0x66c] sm:%s691]
                  %1139 = vst [vmem:[%s699 + $0x36c] sm:%s691] %v1138
                  %v1140 = vld [vmem:[%s698 + $0x670] sm:%s691]
                  %1141 = vst [vmem:[%s699 + $0x370] sm:%s691] %v1140
                  %v1142 = vld [vmem:[%s698 + $0x674] sm:%s691]
                  %1143 = vst [vmem:[%s699 + $0x374] sm:%s691] %v1142
                  %v1144 = vld [vmem:[%s698 + $0x678] sm:%s691]
                  %1145 = vst [vmem:[%s699 + $0x378] sm:%s691] %v1144
                  %v1146 = vld [vmem:[%s698 + $0x67c] sm:%s691]
                  %1147 = vst [vmem:[%s699 + $0x37c] sm:%s691] %v1146
                  %v1148 = vld [vmem:[%s698 + $0x700] sm:%s691]
                  %1149 = vst [vmem:[%s699 + $0x380] sm:%s691] %v1148
                  %v1150 = vld [vmem:[%s698 + $0x704] sm:%s691]
                  %1151 = vst [vmem:[%s699 + $0x384] sm:%s691] %v1150
                  %v1152 = vld [vmem:[%s698 + $0x708] sm:%s691]
                  %1153 = vst [vmem:[%s699 + $0x388] sm:%s691] %v1152
                  %v1154 = vld [vmem:[%s698 + $0x70c] sm:%s691]
                  %1155 = vst [vmem:[%s699 + $0x38c] sm:%s691] %v1154
                  %v1156 = vld [vmem:[%s698 + $0x710] sm:%s691]
                  %1157 = vst [vmem:[%s699 + $0x390] sm:%s691] %v1156
                  %v1158 = vld [vmem:[%s698 + $0x714] sm:%s691]
                  %1159 = vst [vmem:[%s699 + $0x394] sm:%s691] %v1158
                  %v1160 = vld [vmem:[%s698 + $0x718] sm:%s691]
                  %1161 = vst [vmem:[%s699 + $0x398] sm:%s691] %v1160
                  %v1162 = vld [vmem:[%s698 + $0x71c] sm:%s691]
                  %1163 = vst [vmem:[%s699 + $0x39c] sm:%s691] %v1162
                  %v1164 = vld [vmem:[%s698 + $0x720] sm:%s691]
                  %1165 = vst [vmem:[%s699 + $0x3a0] sm:%s691] %v1164
                  %v1166 = vld [vmem:[%s698 + $0x724] sm:%s691]
                  %1167 = vst [vmem:[%s699 + $0x3a4] sm:%s691] %v1166
                  %v1168 = vld [vmem:[%s698 + $0x728] sm:%s691]
                  %1169 = vst [vmem:[%s699 + $0x3a8] sm:%s691] %v1168
                  %v1170 = vld [vmem:[%s698 + $0x72c] sm:%s691]
                  %1171 = vst [vmem:[%s699 + $0x3ac] sm:%s691] %v1170
                  %v1172 = vld [vmem:[%s698 + $0x730] sm:%s691]
                  %1173 = vst [vmem:[%s699 + $0x3b0] sm:%s691] %v1172
                  %v1174 = vld [vmem:[%s698 + $0x734] sm:%s691]
                  %1175 = vst [vmem:[%s699 + $0x3b4] sm:%s691] %v1174
                  %v1176 = vld [vmem:[%s698 + $0x738] sm:%s691]
                  %1177 = vst [vmem:[%s699 + $0x3b8] sm:%s691] %v1176
                  %v1178 = vld [vmem:[%s698 + $0x73c] sm:%s691]
                  %1179 = vst [vmem:[%s699 + $0x3bc] sm:%s691] %v1178
                  %v1180 = vld [vmem:[%s698 + $0x740] sm:%s691]
                  %1181 = vst [vmem:[%s699 + $0x3c0] sm:%s691] %v1180
                  %v1182 = vld [vmem:[%s698 + $0x744] sm:%s691]
                  %1183 = vst [vmem:[%s699 + $0x3c4] sm:%s691] %v1182
                  %v1184 = vld [vmem:[%s698 + $0x748] sm:%s691]
                  %1185 = vst [vmem:[%s699 + $0x3c8] sm:%s691] %v1184
                  %v1186 = vld [vmem:[%s698 + $0x74c] sm:%s691]
                  %1187 = vst [vmem:[%s699 + $0x3cc] sm:%s691] %v1186
                  %v1188 = vld [vmem:[%s698 + $0x750] sm:%s691]
                  %1189 = vst [vmem:[%s699 + $0x3d0] sm:%s691] %v1188
                  %v1190 = vld [vmem:[%s698 + $0x754] sm:%s691]
                  %1191 = vst [vmem:[%s699 + $0x3d4] sm:%s691] %v1190
                  %v1192 = vld [vmem:[%s698 + $0x758] sm:%s691]
                  %1193 = vst [vmem:[%s699 + $0x3d8] sm:%s691] %v1192
                  %v1194 = vld [vmem:[%s698 + $0x75c] sm:%s691]
                  %1195 = vst [vmem:[%s699 + $0x3dc] sm:%s691] %v1194
                  %v1196 = vld [vmem:[%s698 + $0x760] sm:%s691]
                  %1197 = vst [vmem:[%s699 + $0x3e0] sm:%s691] %v1196
                  %v1198 = vld [vmem:[%s698 + $0x764] sm:%s691]
                  %1199 = vst [vmem:[%s699 + $0x3e4] sm:%s691] %v1198
                  %v1200 = vld [vmem:[%s698 + $0x768] sm:%s691]
                  %1201 = vst [vmem:[%s699 + $0x3e8] sm:%s691] %v1200
                  %v1202 = vld [vmem:[%s698 + $0x76c] sm:%s691]
                  %1203 = vst [vmem:[%s699 + $0x3ec] sm:%s691] %v1202
                  %v1204 = vld [vmem:[%s698 + $0x770] sm:%s691]
                  %1205 = vst [vmem:[%s699 + $0x3f0] sm:%s691] %v1204
                  %v1206 = vld [vmem:[%s698 + $0x774] sm:%s691]
                  %1207 = vst [vmem:[%s699 + $0x3f4] sm:%s691] %v1206
                  %v1208 = vld [vmem:[%s698 + $0x778] sm:%s691]
                  %1209 = vst [vmem:[%s699 + $0x3f8] sm:%s691] %v1208
                  %v1210 = vld [vmem:[%s698 + $0x77c] sm:%s691]
                  %1211 = vst [vmem:[%s699 + $0x3fc] sm:%s691] %v1210
                  %v1212 = vld [vmem:[%s698 + $0x800] sm:%s691]
                  %1213 = vst [vmem:[%s699 + $0x400] sm:%s691] %v1212
                  %v1214 = vld [vmem:[%s698 + $0x804] sm:%s691]
                  %1215 = vst [vmem:[%s699 + $0x404] sm:%s691] %v1214
                  %v1216 = vld [vmem:[%s698 + $0x808] sm:%s691]
                  %1217 = vst [vmem:[%s699 + $0x408] sm:%s691] %v1216
                  %v1218 = vld [vmem:[%s698 + $0x80c] sm:%s691]
                  %1219 = vst [vmem:[%s699 + $0x40c] sm:%s691] %v1218
                  %v1220 = vld [vmem:[%s698 + $0x810] sm:%s691]
                  %1221 = vst [vmem:[%s699 + $0x410] sm:%s691] %v1220
                  %v1222 = vld [vmem:[%s698 + $0x814] sm:%s691]
                  %1223 = vst [vmem:[%s699 + $0x414] sm:%s691] %v1222
                  %v1224 = vld [vmem:[%s698 + $0x818] sm:%s691]
                  %1225 = vst [vmem:[%s699 + $0x418] sm:%s691] %v1224
                  %v1226 = vld [vmem:[%s698 + $0x81c] sm:%s691]
                  %1227 = vst [vmem:[%s699 + $0x41c] sm:%s691] %v1226
                  %v1228 = vld [vmem:[%s698 + $0x820] sm:%s691]
                  %1229 = vst [vmem:[%s699 + $0x420] sm:%s691] %v1228
                  %v1230 = vld [vmem:[%s698 + $0x824] sm:%s691]
                  %1231 = vst [vmem:[%s699 + $0x424] sm:%s691] %v1230
                  %v1232 = vld [vmem:[%s698 + $0x828] sm:%s691]
                  %1233 = vst [vmem:[%s699 + $0x428] sm:%s691] %v1232
                  %v1234 = vld [vmem:[%s698 + $0x82c] sm:%s691]
                  %1235 = vst [vmem:[%s699 + $0x42c] sm:%s691] %v1234
                  %v1236 = vld [vmem:[%s698 + $0x830] sm:%s691]
                  %1237 = vst [vmem:[%s699 + $0x430] sm:%s691] %v1236
                  %v1238 = vld [vmem:[%s698 + $0x834] sm:%s691]
                  %1239 = vst [vmem:[%s699 + $0x434] sm:%s691] %v1238
                  %v1240 = vld [vmem:[%s698 + $0x838] sm:%s691]
                  %1241 = vst [vmem:[%s699 + $0x438] sm:%s691] %v1240
                  %v1242 = vld [vmem:[%s698 + $0x83c] sm:%s691]
                  %1243 = vst [vmem:[%s699 + $0x43c] sm:%s691] %v1242
                  %v1244 = vld [vmem:[%s698 + $0x840] sm:%s691]
                  %1245 = vst [vmem:[%s699 + $0x440] sm:%s691] %v1244
                  %v1246 = vld [vmem:[%s698 + $0x844] sm:%s691]
                  %1247 = vst [vmem:[%s699 + $0x444] sm:%s691] %v1246
                  %v1248 = vld [vmem:[%s698 + $0x848] sm:%s691]
                  %1249 = vst [vmem:[%s699 + $0x448] sm:%s691] %v1248
                  %v1250 = vld [vmem:[%s698 + $0x84c] sm:%s691]
                  %1251 = vst [vmem:[%s699 + $0x44c] sm:%s691] %v1250
                  %v1252 = vld [vmem:[%s698 + $0x850] sm:%s691]
                  %1253 = vst [vmem:[%s699 + $0x450] sm:%s691] %v1252
                  %v1254 = vld [vmem:[%s698 + $0x854] sm:%s691]
                  %1255 = vst [vmem:[%s699 + $0x454] sm:%s691] %v1254
                  %v1256 = vld [vmem:[%s698 + $0x858] sm:%s691]
                  %1257 = vst [vmem:[%s699 + $0x458] sm:%s691] %v1256
                  %v1258 = vld [vmem:[%s698 + $0x85c] sm:%s691]
                  %1259 = vst [vmem:[%s699 + $0x45c] sm:%s691] %v1258
                  %v1260 = vld [vmem:[%s698 + $0x860] sm:%s691]
                  %1261 = vst [vmem:[%s699 + $0x460] sm:%s691] %v1260
                  %v1262 = vld [vmem:[%s698 + $0x864] sm:%s691]
                  %1263 = vst [vmem:[%s699 + $0x464] sm:%s691] %v1262
                  %v1264 = vld [vmem:[%s698 + $0x868] sm:%s691]
                  %1265 = vst [vmem:[%s699 + $0x468] sm:%s691] %v1264
                  %v1266 = vld [vmem:[%s698 + $0x86c] sm:%s691]
                  %1267 = vst [vmem:[%s699 + $0x46c] sm:%s691] %v1266
                  %v1268 = vld [vmem:[%s698 + $0x870] sm:%s691]
                  %1269 = vst [vmem:[%s699 + $0x470] sm:%s691] %v1268
                  %v1270 = vld [vmem:[%s698 + $0x874] sm:%s691]
                  %1271 = vst [vmem:[%s699 + $0x474] sm:%s691] %v1270
                  %v1272 = vld [vmem:[%s698 + $0x878] sm:%s691]
                  %1273 = vst [vmem:[%s699 + $0x478] sm:%s691] %v1272
                  %v1274 = vld [vmem:[%s698 + $0x87c] sm:%s691]
                  %1275 = vst [vmem:[%s699 + $0x47c] sm:%s691] %v1274
                $region55: #{facebox_forward.21} parent=42 // loop_footer
                  %s697 = sadd.s32 1, %s693
                $region56: #{facebox_forward.21} parent=42 // loop_footer_branch
                  %692 = sbr.rel target = $region52
                $region57: #{facebox_forward.21} parent=42 // loop_exit
                  _
              $region43: #{facebox_forward.21} parent=27 // pred_fallthru
                _
            $region28: #{facebox_forward.21} parent=23 // pred_fallthru
              _
            // Predicated region
            $region29: #{facebox_forward.21} parent=23 // pred_check
              _
            $region30: #{facebox_forward.21} parent=23 // pred_check_branch
              %93 = sbr.rel (0) target = $region32
            $region31: #{facebox_forward.21} parent=23 // pred_region
              %s95 = ssub.s32 16, 1
              loop: start=0, step=1, limit=1
              $region33: #{facebox_forward.21} parent=31 // loop_pre_header
                _
              $region34: #{facebox_forward.21} parent=31 // loop_header
                %s97 = sphi 0, %s101
                %p98 = scmp.ge.s32.totalorder %s97, 1
                %s102 = sphi %s87, %s87
                %s103 = sphi %s84, %s84
              $region35: #{facebox_forward.21} parent=31 // loop_header_branch
                %100 = sbr.rel (%p98) target = $region39
              $region36: #{facebox_forward.21} parent=31 // loop_body
                %v104 = vld [vmem:[%s102] sm:%s95]
                %105 = vst [vmem:[%s103] sm:%s95] %v104
                %v106 = vld [vmem:[%s102 + $0x4] sm:%s95]
                %107 = vst [vmem:[%s103 + $0x4] sm:%s95] %v106
                %v108 = vld [vmem:[%s102 + $0x8] sm:%s95]
                %109 = vst [vmem:[%s103 + $0x8] sm:%s95] %v108
                %v110 = vld [vmem:[%s102 + $0xc] sm:%s95]
                %111 = vst [vmem:[%s103 + $0xc] sm:%s95] %v110
                %v112 = vld [vmem:[%s102 + $0x10] sm:%s95]
                %113 = vst [vmem:[%s103 + $0x10] sm:%s95] %v112
                %v114 = vld [vmem:[%s102 + $0x14] sm:%s95]
                %115 = vst [vmem:[%s103 + $0x14] sm:%s95] %v114
                %v116 = vld [vmem:[%s102 + $0x18] sm:%s95]
                %117 = vst [vmem:[%s103 + $0x18] sm:%s95] %v116
                %v118 = vld [vmem:[%s102 + $0x1c] sm:%s95]
                %119 = vst [vmem:[%s103 + $0x1c] sm:%s95] %v118
                %v120 = vld [vmem:[%s102 + $0x20] sm:%s95]
                %121 = vst [vmem:[%s103 + $0x20] sm:%s95] %v120
                %v122 = vld [vmem:[%s102 + $0x24] sm:%s95]
                %123 = vst [vmem:[%s103 + $0x24] sm:%s95] %v122
                %v124 = vld [vmem:[%s102 + $0x28] sm:%s95]
                %125 = vst [vmem:[%s103 + $0x28] sm:%s95] %v124
                %v126 = vld [vmem:[%s102 + $0x2c] sm:%s95]
                %127 = vst [vmem:[%s103 + $0x2c] sm:%s95] %v126
                %v128 = vld [vmem:[%s102 + $0x30] sm:%s95]
                %129 = vst [vmem:[%s103 + $0x30] sm:%s95] %v128
                %v130 = vld [vmem:[%s102 + $0x34] sm:%s95]
                %131 = vst [vmem:[%s103 + $0x34] sm:%s95] %v130
                %v132 = vld [vmem:[%s102 + $0x38] sm:%s95]
                %133 = vst [vmem:[%s103 + $0x38] sm:%s95] %v132
                %v134 = vld [vmem:[%s102 + $0x3c] sm:%s95]
                %135 = vst [vmem:[%s103 + $0x3c] sm:%s95] %v134
                %v136 = vld [vmem:[%s102 + $0x40] sm:%s95]
                %137 = vst [vmem:[%s103 + $0x40] sm:%s95] %v136
                %v138 = vld [vmem:[%s102 + $0x44] sm:%s95]
                %139 = vst [vmem:[%s103 + $0x44] sm:%s95] %v138
                %v140 = vld [vmem:[%s102 + $0x48] sm:%s95]
                %141 = vst [vmem:[%s103 + $0x48] sm:%s95] %v140
                %v142 = vld [vmem:[%s102 + $0x4c] sm:%s95]
                %143 = vst [vmem:[%s103 + $0x4c] sm:%s95] %v142
                %v144 = vld [vmem:[%s102 + $0x50] sm:%s95]
                %145 = vst [vmem:[%s103 + $0x50] sm:%s95] %v144
                %v146 = vld [vmem:[%s102 + $0x54] sm:%s95]
                %147 = vst [vmem:[%s103 + $0x54] sm:%s95] %v146
                %v148 = vld [vmem:[%s102 + $0x58] sm:%s95]
                %149 = vst [vmem:[%s103 + $0x58] sm:%s95] %v148
                %v150 = vld [vmem:[%s102 + $0x5c] sm:%s95]
                %151 = vst [vmem:[%s103 + $0x5c] sm:%s95] %v150
                %v152 = vld [vmem:[%s102 + $0x60] sm:%s95]
                %153 = vst [vmem:[%s103 + $0x60] sm:%s95] %v152
                %v154 = vld [vmem:[%s102 + $0x64] sm:%s95]
                %155 = vst [vmem:[%s103 + $0x64] sm:%s95] %v154
                %v156 = vld [vmem:[%s102 + $0x68] sm:%s95]
                %157 = vst [vmem:[%s103 + $0x68] sm:%s95] %v156
                %v158 = vld [vmem:[%s102 + $0x6c] sm:%s95]
                %159 = vst [vmem:[%s103 + $0x6c] sm:%s95] %v158
                %v160 = vld [vmem:[%s102 + $0x70] sm:%s95]
                %161 = vst [vmem:[%s103 + $0x70] sm:%s95] %v160
                %v162 = vld [vmem:[%s102 + $0x74] sm:%s95]
                %163 = vst [vmem:[%s103 + $0x74] sm:%s95] %v162
                %v164 = vld [vmem:[%s102 + $0x78] sm:%s95]
                %165 = vst [vmem:[%s103 + $0x78] sm:%s95] %v164
                %v166 = vld [vmem:[%s102 + $0x7c] sm:%s95]
                %167 = vst [vmem:[%s103 + $0x7c] sm:%s95] %v166
                %v168 = vld [vmem:[%s102 + $0x100] sm:%s95]
                %169 = vst [vmem:[%s103 + $0x80] sm:%s95] %v168
                %v170 = vld [vmem:[%s102 + $0x104] sm:%s95]
                %171 = vst [vmem:[%s103 + $0x84] sm:%s95] %v170
                %v172 = vld [vmem:[%s102 + $0x108] sm:%s95]
                %173 = vst [vmem:[%s103 + $0x88] sm:%s95] %v172
                %v174 = vld [vmem:[%s102 + $0x10c] sm:%s95]
                %175 = vst [vmem:[%s103 + $0x8c] sm:%s95] %v174
                %v176 = vld [vmem:[%s102 + $0x110] sm:%s95]
                %177 = vst [vmem:[%s103 + $0x90] sm:%s95] %v176
                %v178 = vld [vmem:[%s102 + $0x114] sm:%s95]
                %179 = vst [vmem:[%s103 + $0x94] sm:%s95] %v178
                %v180 = vld [vmem:[%s102 + $0x118] sm:%s95]
                %181 = vst [vmem:[%s103 + $0x98] sm:%s95] %v180
                %v182 = vld [vmem:[%s102 + $0x11c] sm:%s95]
                %183 = vst [vmem:[%s103 + $0x9c] sm:%s95] %v182
                %v184 = vld [vmem:[%s102 + $0x120] sm:%s95]
                %185 = vst [vmem:[%s103 + $0xa0] sm:%s95] %v184
                %v186 = vld [vmem:[%s102 + $0x124] sm:%s95]
                %187 = vst [vmem:[%s103 + $0xa4] sm:%s95] %v186
                %v188 = vld [vmem:[%s102 + $0x128] sm:%s95]
                %189 = vst [vmem:[%s103 + $0xa8] sm:%s95] %v188
                %v190 = vld [vmem:[%s102 + $0x12c] sm:%s95]
                %191 = vst [vmem:[%s103 + $0xac] sm:%s95] %v190
                %v192 = vld [vmem:[%s102 + $0x130] sm:%s95]
                %193 = vst [vmem:[%s103 + $0xb0] sm:%s95] %v192
                %v194 = vld [vmem:[%s102 + $0x134] sm:%s95]
                %195 = vst [vmem:[%s103 + $0xb4] sm:%s95] %v194
                %v196 = vld [vmem:[%s102 + $0x138] sm:%s95]
                %197 = vst [vmem:[%s103 + $0xb8] sm:%s95] %v196
                %v198 = vld [vmem:[%s102 + $0x13c] sm:%s95]
                %199 = vst [vmem:[%s103 + $0xbc] sm:%s95] %v198
                %v200 = vld [vmem:[%s102 + $0x140] sm:%s95]
                %201 = vst [vmem:[%s103 + $0xc0] sm:%s95] %v200
                %v202 = vld [vmem:[%s102 + $0x144] sm:%s95]
                %203 = vst [vmem:[%s103 + $0xc4] sm:%s95] %v202
                %v204 = vld [vmem:[%s102 + $0x148] sm:%s95]
                %205 = vst [vmem:[%s103 + $0xc8] sm:%s95] %v204
                %v206 = vld [vmem:[%s102 + $0x14c] sm:%s95]
                %207 = vst [vmem:[%s103 + $0xcc] sm:%s95] %v206
                %v208 = vld [vmem:[%s102 + $0x150] sm:%s95]
                %209 = vst [vmem:[%s103 + $0xd0] sm:%s95] %v208
                %v210 = vld [vmem:[%s102 + $0x154] sm:%s95]
                %211 = vst [vmem:[%s103 + $0xd4] sm:%s95] %v210
                %v212 = vld [vmem:[%s102 + $0x158] sm:%s95]
                %213 = vst [vmem:[%s103 + $0xd8] sm:%s95] %v212
                %v214 = vld [vmem:[%s102 + $0x15c] sm:%s95]
                %215 = vst [vmem:[%s103 + $0xdc] sm:%s95] %v214
                %v216 = vld [vmem:[%s102 + $0x160] sm:%s95]
                %217 = vst [vmem:[%s103 + $0xe0] sm:%s95] %v216
                %v218 = vld [vmem:[%s102 + $0x164] sm:%s95]
                %219 = vst [vmem:[%s103 + $0xe4] sm:%s95] %v218
                %v220 = vld [vmem:[%s102 + $0x168] sm:%s95]
                %221 = vst [vmem:[%s103 + $0xe8] sm:%s95] %v220
                %v222 = vld [vmem:[%s102 + $0x16c] sm:%s95]
                %223 = vst [vmem:[%s103 + $0xec] sm:%s95] %v222
                %v224 = vld [vmem:[%s102 + $0x170] sm:%s95]
                %225 = vst [vmem:[%s103 + $0xf0] sm:%s95] %v224
                %v226 = vld [vmem:[%s102 + $0x174] sm:%s95]
                %227 = vst [vmem:[%s103 + $0xf4] sm:%s95] %v226
                %v228 = vld [vmem:[%s102 + $0x178] sm:%s95]
                %229 = vst [vmem:[%s103 + $0xf8] sm:%s95] %v228
                %v230 = vld [vmem:[%s102 + $0x17c] sm:%s95]
                %231 = vst [vmem:[%s103 + $0xfc] sm:%s95] %v230
                %v232 = vld [vmem:[%s102 + $0x200] sm:%s95]
                %233 = vst [vmem:[%s103 + $0x100] sm:%s95] %v232
                %v234 = vld [vmem:[%s102 + $0x204] sm:%s95]
                %235 = vst [vmem:[%s103 + $0x104] sm:%s95] %v234
                %v236 = vld [vmem:[%s102 + $0x208] sm:%s95]
                %237 = vst [vmem:[%s103 + $0x108] sm:%s95] %v236
                %v238 = vld [vmem:[%s102 + $0x20c] sm:%s95]
                %239 = vst [vmem:[%s103 + $0x10c] sm:%s95] %v238
                %v240 = vld [vmem:[%s102 + $0x210] sm:%s95]
                %241 = vst [vmem:[%s103 + $0x110] sm:%s95] %v240
                %v242 = vld [vmem:[%s102 + $0x214] sm:%s95]
                %243 = vst [vmem:[%s103 + $0x114] sm:%s95] %v242
                %v244 = vld [vmem:[%s102 + $0x218] sm:%s95]
                %245 = vst [vmem:[%s103 + $0x118] sm:%s95] %v244
                %v246 = vld [vmem:[%s102 + $0x21c] sm:%s95]
                %247 = vst [vmem:[%s103 + $0x11c] sm:%s95] %v246
                %v248 = vld [vmem:[%s102 + $0x220] sm:%s95]
                %249 = vst [vmem:[%s103 + $0x120] sm:%s95] %v248
                %v250 = vld [vmem:[%s102 + $0x224] sm:%s95]
                %251 = vst [vmem:[%s103 + $0x124] sm:%s95] %v250
                %v252 = vld [vmem:[%s102 + $0x228] sm:%s95]
                %253 = vst [vmem:[%s103 + $0x128] sm:%s95] %v252
                %v254 = vld [vmem:[%s102 + $0x22c] sm:%s95]
                %255 = vst [vmem:[%s103 + $0x12c] sm:%s95] %v254
                %v256 = vld [vmem:[%s102 + $0x230] sm:%s95]
                %257 = vst [vmem:[%s103 + $0x130] sm:%s95] %v256
                %v258 = vld [vmem:[%s102 + $0x234] sm:%s95]
                %259 = vst [vmem:[%s103 + $0x134] sm:%s95] %v258
                %v260 = vld [vmem:[%s102 + $0x238] sm:%s95]
                %261 = vst [vmem:[%s103 + $0x138] sm:%s95] %v260
                %v262 = vld [vmem:[%s102 + $0x23c] sm:%s95]
                %263 = vst [vmem:[%s103 + $0x13c] sm:%s95] %v262
                %v264 = vld [vmem:[%s102 + $0x240] sm:%s95]
                %265 = vst [vmem:[%s103 + $0x140] sm:%s95] %v264
                %v266 = vld [vmem:[%s102 + $0x244] sm:%s95]
                %267 = vst [vmem:[%s103 + $0x144] sm:%s95] %v266
                %v268 = vld [vmem:[%s102 + $0x248] sm:%s95]
                %269 = vst [vmem:[%s103 + $0x148] sm:%s95] %v268
                %v270 = vld [vmem:[%s102 + $0x24c] sm:%s95]
                %271 = vst [vmem:[%s103 + $0x14c] sm:%s95] %v270
                %v272 = vld [vmem:[%s102 + $0x250] sm:%s95]
                %273 = vst [vmem:[%s103 + $0x150] sm:%s95] %v272
                %v274 = vld [vmem:[%s102 + $0x254] sm:%s95]
                %275 = vst [vmem:[%s103 + $0x154] sm:%s95] %v274
                %v276 = vld [vmem:[%s102 + $0x258] sm:%s95]
                %277 = vst [vmem:[%s103 + $0x158] sm:%s95] %v276
                %v278 = vld [vmem:[%s102 + $0x25c] sm:%s95]
                %279 = vst [vmem:[%s103 + $0x15c] sm:%s95] %v278
                %v280 = vld [vmem:[%s102 + $0x260] sm:%s95]
                %281 = vst [vmem:[%s103 + $0x160] sm:%s95] %v280
                %v282 = vld [vmem:[%s102 + $0x264] sm:%s95]
                %283 = vst [vmem:[%s103 + $0x164] sm:%s95] %v282
                %v284 = vld [vmem:[%s102 + $0x268] sm:%s95]
                %285 = vst [vmem:[%s103 + $0x168] sm:%s95] %v284
                %v286 = vld [vmem:[%s102 + $0x26c] sm:%s95]
                %287 = vst [vmem:[%s103 + $0x16c] sm:%s95] %v286
                %v288 = vld [vmem:[%s102 + $0x270] sm:%s95]
                %289 = vst [vmem:[%s103 + $0x170] sm:%s95] %v288
                %v290 = vld [vmem:[%s102 + $0x274] sm:%s95]
                %291 = vst [vmem:[%s103 + $0x174] sm:%s95] %v290
                %v292 = vld [vmem:[%s102 + $0x278] sm:%s95]
                %293 = vst [vmem:[%s103 + $0x178] sm:%s95] %v292
                %v294 = vld [vmem:[%s102 + $0x27c] sm:%s95]
                %295 = vst [vmem:[%s103 + $0x17c] sm:%s95] %v294
                %v296 = vld [vmem:[%s102 + $0x300] sm:%s95]
                %297 = vst [vmem:[%s103 + $0x180] sm:%s95] %v296
                %v298 = vld [vmem:[%s102 + $0x304] sm:%s95]
                %299 = vst [vmem:[%s103 + $0x184] sm:%s95] %v298
                %v300 = vld [vmem:[%s102 + $0x308] sm:%s95]
                %301 = vst [vmem:[%s103 + $0x188] sm:%s95] %v300
                %v302 = vld [vmem:[%s102 + $0x30c] sm:%s95]
                %303 = vst [vmem:[%s103 + $0x18c] sm:%s95] %v302
                %v304 = vld [vmem:[%s102 + $0x310] sm:%s95]
                %305 = vst [vmem:[%s103 + $0x190] sm:%s95] %v304
                %v306 = vld [vmem:[%s102 + $0x314] sm:%s95]
                %307 = vst [vmem:[%s103 + $0x194] sm:%s95] %v306
                %v308 = vld [vmem:[%s102 + $0x318] sm:%s95]
                %309 = vst [vmem:[%s103 + $0x198] sm:%s95] %v308
                %v310 = vld [vmem:[%s102 + $0x31c] sm:%s95]
                %311 = vst [vmem:[%s103 + $0x19c] sm:%s95] %v310
                %v312 = vld [vmem:[%s102 + $0x320] sm:%s95]
                %313 = vst [vmem:[%s103 + $0x1a0] sm:%s95] %v312
                %v314 = vld [vmem:[%s102 + $0x324] sm:%s95]
                %315 = vst [vmem:[%s103 + $0x1a4] sm:%s95] %v314
                %v316 = vld [vmem:[%s102 + $0x328] sm:%s95]
                %317 = vst [vmem:[%s103 + $0x1a8] sm:%s95] %v316
                %v318 = vld [vmem:[%s102 + $0x32c] sm:%s95]
                %319 = vst [vmem:[%s103 + $0x1ac] sm:%s95] %v318
                %v320 = vld [vmem:[%s102 + $0x330] sm:%s95]
                %321 = vst [vmem:[%s103 + $0x1b0] sm:%s95] %v320
                %v322 = vld [vmem:[%s102 + $0x334] sm:%s95]
                %323 = vst [vmem:[%s103 + $0x1b4] sm:%s95] %v322
                %v324 = vld [vmem:[%s102 + $0x338] sm:%s95]
                %325 = vst [vmem:[%s103 + $0x1b8] sm:%s95] %v324
                %v326 = vld [vmem:[%s102 + $0x33c] sm:%s95]
                %327 = vst [vmem:[%s103 + $0x1bc] sm:%s95] %v326
                %v328 = vld [vmem:[%s102 + $0x340] sm:%s95]
                %329 = vst [vmem:[%s103 + $0x1c0] sm:%s95] %v328
                %v330 = vld [vmem:[%s102 + $0x344] sm:%s95]
                %331 = vst [vmem:[%s103 + $0x1c4] sm:%s95] %v330
                %v332 = vld [vmem:[%s102 + $0x348] sm:%s95]
                %333 = vst [vmem:[%s103 + $0x1c8] sm:%s95] %v332
                %v334 = vld [vmem:[%s102 + $0x34c] sm:%s95]
                %335 = vst [vmem:[%s103 + $0x1cc] sm:%s95] %v334
                %v336 = vld [vmem:[%s102 + $0x350] sm:%s95]
                %337 = vst [vmem:[%s103 + $0x1d0] sm:%s95] %v336
                %v338 = vld [vmem:[%s102 + $0x354] sm:%s95]
                %339 = vst [vmem:[%s103 + $0x1d4] sm:%s95] %v338
                %v340 = vld [vmem:[%s102 + $0x358] sm:%s95]
                %341 = vst [vmem:[%s103 + $0x1d8] sm:%s95] %v340
                %v342 = vld [vmem:[%s102 + $0x35c] sm:%s95]
                %343 = vst [vmem:[%s103 + $0x1dc] sm:%s95] %v342
                %v344 = vld [vmem:[%s102 + $0x360] sm:%s95]
                %345 = vst [vmem:[%s103 + $0x1e0] sm:%s95] %v344
                %v346 = vld [vmem:[%s102 + $0x364] sm:%s95]
                %347 = vst [vmem:[%s103 + $0x1e4] sm:%s95] %v346
                %v348 = vld [vmem:[%s102 + $0x368] sm:%s95]
                %349 = vst [vmem:[%s103 + $0x1e8] sm:%s95] %v348
                %v350 = vld [vmem:[%s102 + $0x36c] sm:%s95]
                %351 = vst [vmem:[%s103 + $0x1ec] sm:%s95] %v350
                %v352 = vld [vmem:[%s102 + $0x370] sm:%s95]
                %353 = vst [vmem:[%s103 + $0x1f0] sm:%s95] %v352
                %v354 = vld [vmem:[%s102 + $0x374] sm:%s95]
                %355 = vst [vmem:[%s103 + $0x1f4] sm:%s95] %v354
                %v356 = vld [vmem:[%s102 + $0x378] sm:%s95]
                %357 = vst [vmem:[%s103 + $0x1f8] sm:%s95] %v356
                %v358 = vld [vmem:[%s102 + $0x37c] sm:%s95]
                %359 = vst [vmem:[%s103 + $0x1fc] sm:%s95] %v358
                %v360 = vld [vmem:[%s102 + $0x400] sm:%s95]
                %361 = vst [vmem:[%s103 + $0x200] sm:%s95] %v360
                %v362 = vld [vmem:[%s102 + $0x404] sm:%s95]
                %363 = vst [vmem:[%s103 + $0x204] sm:%s95] %v362
                %v364 = vld [vmem:[%s102 + $0x408] sm:%s95]
                %365 = vst [vmem:[%s103 + $0x208] sm:%s95] %v364
                %v366 = vld [vmem:[%s102 + $0x40c] sm:%s95]
                %367 = vst [vmem:[%s103 + $0x20c] sm:%s95] %v366
                %v368 = vld [vmem:[%s102 + $0x410] sm:%s95]
                %369 = vst [vmem:[%s103 + $0x210] sm:%s95] %v368
                %v370 = vld [vmem:[%s102 + $0x414] sm:%s95]
                %371 = vst [vmem:[%s103 + $0x214] sm:%s95] %v370
                %v372 = vld [vmem:[%s102 + $0x418] sm:%s95]
                %373 = vst [vmem:[%s103 + $0x218] sm:%s95] %v372
                %v374 = vld [vmem:[%s102 + $0x41c] sm:%s95]
                %375 = vst [vmem:[%s103 + $0x21c] sm:%s95] %v374
                %v376 = vld [vmem:[%s102 + $0x420] sm:%s95]
                %377 = vst [vmem:[%s103 + $0x220] sm:%s95] %v376
                %v378 = vld [vmem:[%s102 + $0x424] sm:%s95]
                %379 = vst [vmem:[%s103 + $0x224] sm:%s95] %v378
                %v380 = vld [vmem:[%s102 + $0x428] sm:%s95]
                %381 = vst [vmem:[%s103 + $0x228] sm:%s95] %v380
                %v382 = vld [vmem:[%s102 + $0x42c] sm:%s95]
                %383 = vst [vmem:[%s103 + $0x22c] sm:%s95] %v382
                %v384 = vld [vmem:[%s102 + $0x430] sm:%s95]
                %385 = vst [vmem:[%s103 + $0x230] sm:%s95] %v384
                %v386 = vld [vmem:[%s102 + $0x434] sm:%s95]
                %387 = vst [vmem:[%s103 + $0x234] sm:%s95] %v386
                %v388 = vld [vmem:[%s102 + $0x438] sm:%s95]
                %389 = vst [vmem:[%s103 + $0x238] sm:%s95] %v388
                %v390 = vld [vmem:[%s102 + $0x43c] sm:%s95]
                %391 = vst [vmem:[%s103 + $0x23c] sm:%s95] %v390
                %v392 = vld [vmem:[%s102 + $0x440] sm:%s95]
                %393 = vst [vmem:[%s103 + $0x240] sm:%s95] %v392
                %v394 = vld [vmem:[%s102 + $0x444] sm:%s95]
                %395 = vst [vmem:[%s103 + $0x244] sm:%s95] %v394
                %v396 = vld [vmem:[%s102 + $0x448] sm:%s95]
                %397 = vst [vmem:[%s103 + $0x248] sm:%s95] %v396
                %v398 = vld [vmem:[%s102 + $0x44c] sm:%s95]
                %399 = vst [vmem:[%s103 + $0x24c] sm:%s95] %v398
                %v400 = vld [vmem:[%s102 + $0x450] sm:%s95]
                %401 = vst [vmem:[%s103 + $0x250] sm:%s95] %v400
                %v402 = vld [vmem:[%s102 + $0x454] sm:%s95]
                %403 = vst [vmem:[%s103 + $0x254] sm:%s95] %v402
                %v404 = vld [vmem:[%s102 + $0x458] sm:%s95]
                %405 = vst [vmem:[%s103 + $0x258] sm:%s95] %v404
                %v406 = vld [vmem:[%s102 + $0x45c] sm:%s95]
                %407 = vst [vmem:[%s103 + $0x25c] sm:%s95] %v406
                %v408 = vld [vmem:[%s102 + $0x460] sm:%s95]
                %409 = vst [vmem:[%s103 + $0x260] sm:%s95] %v408
                %v410 = vld [vmem:[%s102 + $0x464] sm:%s95]
                %411 = vst [vmem:[%s103 + $0x264] sm:%s95] %v410
                %v412 = vld [vmem:[%s102 + $0x468] sm:%s95]
                %413 = vst [vmem:[%s103 + $0x268] sm:%s95] %v412
                %v414 = vld [vmem:[%s102 + $0x46c] sm:%s95]
                %415 = vst [vmem:[%s103 + $0x26c] sm:%s95] %v414
                %v416 = vld [vmem:[%s102 + $0x470] sm:%s95]
                %417 = vst [vmem:[%s103 + $0x270] sm:%s95] %v416
                %v418 = vld [vmem:[%s102 + $0x474] sm:%s95]
                %419 = vst [vmem:[%s103 + $0x274] sm:%s95] %v418
                %v420 = vld [vmem:[%s102 + $0x478] sm:%s95]
                %421 = vst [vmem:[%s103 + $0x278] sm:%s95] %v420
                %v422 = vld [vmem:[%s102 + $0x47c] sm:%s95]
                %423 = vst [vmem:[%s103 + $0x27c] sm:%s95] %v422
                %v424 = vld [vmem:[%s102 + $0x500] sm:%s95]
                %425 = vst [vmem:[%s103 + $0x280] sm:%s95] %v424
                %v426 = vld [vmem:[%s102 + $0x504] sm:%s95]
                %427 = vst [vmem:[%s103 + $0x284] sm:%s95] %v426
                %v428 = vld [vmem:[%s102 + $0x508] sm:%s95]
                %429 = vst [vmem:[%s103 + $0x288] sm:%s95] %v428
                %v430 = vld [vmem:[%s102 + $0x50c] sm:%s95]
                %431 = vst [vmem:[%s103 + $0x28c] sm:%s95] %v430
                %v432 = vld [vmem:[%s102 + $0x510] sm:%s95]
                %433 = vst [vmem:[%s103 + $0x290] sm:%s95] %v432
                %v434 = vld [vmem:[%s102 + $0x514] sm:%s95]
                %435 = vst [vmem:[%s103 + $0x294] sm:%s95] %v434
                %v436 = vld [vmem:[%s102 + $0x518] sm:%s95]
                %437 = vst [vmem:[%s103 + $0x298] sm:%s95] %v436
                %v438 = vld [vmem:[%s102 + $0x51c] sm:%s95]
                %439 = vst [vmem:[%s103 + $0x29c] sm:%s95] %v438
                %v440 = vld [vmem:[%s102 + $0x520] sm:%s95]
                %441 = vst [vmem:[%s103 + $0x2a0] sm:%s95] %v440
                %v442 = vld [vmem:[%s102 + $0x524] sm:%s95]
                %443 = vst [vmem:[%s103 + $0x2a4] sm:%s95] %v442
                %v444 = vld [vmem:[%s102 + $0x528] sm:%s95]
                %445 = vst [vmem:[%s103 + $0x2a8] sm:%s95] %v444
                %v446 = vld [vmem:[%s102 + $0x52c] sm:%s95]
                %447 = vst [vmem:[%s103 + $0x2ac] sm:%s95] %v446
                %v448 = vld [vmem:[%s102 + $0x530] sm:%s95]
                %449 = vst [vmem:[%s103 + $0x2b0] sm:%s95] %v448
                %v450 = vld [vmem:[%s102 + $0x534] sm:%s95]
                %451 = vst [vmem:[%s103 + $0x2b4] sm:%s95] %v450
                %v452 = vld [vmem:[%s102 + $0x538] sm:%s95]
                %453 = vst [vmem:[%s103 + $0x2b8] sm:%s95] %v452
                %v454 = vld [vmem:[%s102 + $0x53c] sm:%s95]
                %455 = vst [vmem:[%s103 + $0x2bc] sm:%s95] %v454
                %v456 = vld [vmem:[%s102 + $0x540] sm:%s95]
                %457 = vst [vmem:[%s103 + $0x2c0] sm:%s95] %v456
                %v458 = vld [vmem:[%s102 + $0x544] sm:%s95]
                %459 = vst [vmem:[%s103 + $0x2c4] sm:%s95] %v458
                %v460 = vld [vmem:[%s102 + $0x548] sm:%s95]
                %461 = vst [vmem:[%s103 + $0x2c8] sm:%s95] %v460
                %v462 = vld [vmem:[%s102 + $0x54c] sm:%s95]
                %463 = vst [vmem:[%s103 + $0x2cc] sm:%s95] %v462
                %v464 = vld [vmem:[%s102 + $0x550] sm:%s95]
                %465 = vst [vmem:[%s103 + $0x2d0] sm:%s95] %v464
                %v466 = vld [vmem:[%s102 + $0x554] sm:%s95]
                %467 = vst [vmem:[%s103 + $0x2d4] sm:%s95] %v466
                %v468 = vld [vmem:[%s102 + $0x558] sm:%s95]
                %469 = vst [vmem:[%s103 + $0x2d8] sm:%s95] %v468
                %v470 = vld [vmem:[%s102 + $0x55c] sm:%s95]
                %471 = vst [vmem:[%s103 + $0x2dc] sm:%s95] %v470
                %v472 = vld [vmem:[%s102 + $0x560] sm:%s95]
                %473 = vst [vmem:[%s103 + $0x2e0] sm:%s95] %v472
                %v474 = vld [vmem:[%s102 + $0x564] sm:%s95]
                %475 = vst [vmem:[%s103 + $0x2e4] sm:%s95] %v474
                %v476 = vld [vmem:[%s102 + $0x568] sm:%s95]
                %477 = vst [vmem:[%s103 + $0x2e8] sm:%s95] %v476
                %v478 = vld [vmem:[%s102 + $0x56c] sm:%s95]
                %479 = vst [vmem:[%s103 + $0x2ec] sm:%s95] %v478
                %v480 = vld [vmem:[%s102 + $0x570] sm:%s95]
                %481 = vst [vmem:[%s103 + $0x2f0] sm:%s95] %v480
                %v482 = vld [vmem:[%s102 + $0x574] sm:%s95]
                %483 = vst [vmem:[%s103 + $0x2f4] sm:%s95] %v482
                %v484 = vld [vmem:[%s102 + $0x578] sm:%s95]
                %485 = vst [vmem:[%s103 + $0x2f8] sm:%s95] %v484
                %v486 = vld [vmem:[%s102 + $0x57c] sm:%s95]
                %487 = vst [vmem:[%s103 + $0x2fc] sm:%s95] %v486
                %v488 = vld [vmem:[%s102 + $0x600] sm:%s95]
                %489 = vst [vmem:[%s103 + $0x300] sm:%s95] %v488
                %v490 = vld [vmem:[%s102 + $0x604] sm:%s95]
                %491 = vst [vmem:[%s103 + $0x304] sm:%s95] %v490
                %v492 = vld [vmem:[%s102 + $0x608] sm:%s95]
                %493 = vst [vmem:[%s103 + $0x308] sm:%s95] %v492
                %v494 = vld [vmem:[%s102 + $0x60c] sm:%s95]
                %495 = vst [vmem:[%s103 + $0x30c] sm:%s95] %v494
                %v496 = vld [vmem:[%s102 + $0x610] sm:%s95]
                %497 = vst [vmem:[%s103 + $0x310] sm:%s95] %v496
                %v498 = vld [vmem:[%s102 + $0x614] sm:%s95]
                %499 = vst [vmem:[%s103 + $0x314] sm:%s95] %v498
                %v500 = vld [vmem:[%s102 + $0x618] sm:%s95]
                %501 = vst [vmem:[%s103 + $0x318] sm:%s95] %v500
                %v502 = vld [vmem:[%s102 + $0x61c] sm:%s95]
                %503 = vst [vmem:[%s103 + $0x31c] sm:%s95] %v502
                %v504 = vld [vmem:[%s102 + $0x620] sm:%s95]
                %505 = vst [vmem:[%s103 + $0x320] sm:%s95] %v504
                %v506 = vld [vmem:[%s102 + $0x624] sm:%s95]
                %507 = vst [vmem:[%s103 + $0x324] sm:%s95] %v506
                %v508 = vld [vmem:[%s102 + $0x628] sm:%s95]
                %509 = vst [vmem:[%s103 + $0x328] sm:%s95] %v508
                %v510 = vld [vmem:[%s102 + $0x62c] sm:%s95]
                %511 = vst [vmem:[%s103 + $0x32c] sm:%s95] %v510
                %v512 = vld [vmem:[%s102 + $0x630] sm:%s95]
                %513 = vst [vmem:[%s103 + $0x330] sm:%s95] %v512
                %v514 = vld [vmem:[%s102 + $0x634] sm:%s95]
                %515 = vst [vmem:[%s103 + $0x334] sm:%s95] %v514
                %v516 = vld [vmem:[%s102 + $0x638] sm:%s95]
                %517 = vst [vmem:[%s103 + $0x338] sm:%s95] %v516
                %v518 = vld [vmem:[%s102 + $0x63c] sm:%s95]
                %519 = vst [vmem:[%s103 + $0x33c] sm:%s95] %v518
                %v520 = vld [vmem:[%s102 + $0x640] sm:%s95]
                %521 = vst [vmem:[%s103 + $0x340] sm:%s95] %v520
                %v522 = vld [vmem:[%s102 + $0x644] sm:%s95]
                %523 = vst [vmem:[%s103 + $0x344] sm:%s95] %v522
                %v524 = vld [vmem:[%s102 + $0x648] sm:%s95]
                %525 = vst [vmem:[%s103 + $0x348] sm:%s95] %v524
                %v526 = vld [vmem:[%s102 + $0x64c] sm:%s95]
                %527 = vst [vmem:[%s103 + $0x34c] sm:%s95] %v526
                %v528 = vld [vmem:[%s102 + $0x650] sm:%s95]
                %529 = vst [vmem:[%s103 + $0x350] sm:%s95] %v528
                %v530 = vld [vmem:[%s102 + $0x654] sm:%s95]
                %531 = vst [vmem:[%s103 + $0x354] sm:%s95] %v530
                %v532 = vld [vmem:[%s102 + $0x658] sm:%s95]
                %533 = vst [vmem:[%s103 + $0x358] sm:%s95] %v532
                %v534 = vld [vmem:[%s102 + $0x65c] sm:%s95]
                %535 = vst [vmem:[%s103 + $0x35c] sm:%s95] %v534
                %v536 = vld [vmem:[%s102 + $0x660] sm:%s95]
                %537 = vst [vmem:[%s103 + $0x360] sm:%s95] %v536
                %v538 = vld [vmem:[%s102 + $0x664] sm:%s95]
                %539 = vst [vmem:[%s103 + $0x364] sm:%s95] %v538
                %v540 = vld [vmem:[%s102 + $0x668] sm:%s95]
                %541 = vst [vmem:[%s103 + $0x368] sm:%s95] %v540
                %v542 = vld [vmem:[%s102 + $0x66c] sm:%s95]
                %543 = vst [vmem:[%s103 + $0x36c] sm:%s95] %v542
                %v544 = vld [vmem:[%s102 + $0x670] sm:%s95]
                %545 = vst [vmem:[%s103 + $0x370] sm:%s95] %v544
                %v546 = vld [vmem:[%s102 + $0x674] sm:%s95]
                %547 = vst [vmem:[%s103 + $0x374] sm:%s95] %v546
                %v548 = vld [vmem:[%s102 + $0x678] sm:%s95]
                %549 = vst [vmem:[%s103 + $0x378] sm:%s95] %v548
                %v550 = vld [vmem:[%s102 + $0x67c] sm:%s95]
                %551 = vst [vmem:[%s103 + $0x37c] sm:%s95] %v550
                %v552 = vld [vmem:[%s102 + $0x700] sm:%s95]
                %553 = vst [vmem:[%s103 + $0x380] sm:%s95] %v552
                %v554 = vld [vmem:[%s102 + $0x704] sm:%s95]
                %555 = vst [vmem:[%s103 + $0x384] sm:%s95] %v554
                %v556 = vld [vmem:[%s102 + $0x708] sm:%s95]
                %557 = vst [vmem:[%s103 + $0x388] sm:%s95] %v556
                %v558 = vld [vmem:[%s102 + $0x70c] sm:%s95]
                %559 = vst [vmem:[%s103 + $0x38c] sm:%s95] %v558
                %v560 = vld [vmem:[%s102 + $0x710] sm:%s95]
                %561 = vst [vmem:[%s103 + $0x390] sm:%s95] %v560
                %v562 = vld [vmem:[%s102 + $0x714] sm:%s95]
                %563 = vst [vmem:[%s103 + $0x394] sm:%s95] %v562
                %v564 = vld [vmem:[%s102 + $0x718] sm:%s95]
                %565 = vst [vmem:[%s103 + $0x398] sm:%s95] %v564
                %v566 = vld [vmem:[%s102 + $0x71c] sm:%s95]
                %567 = vst [vmem:[%s103 + $0x39c] sm:%s95] %v566
                %v568 = vld [vmem:[%s102 + $0x720] sm:%s95]
                %569 = vst [vmem:[%s103 + $0x3a0] sm:%s95] %v568
                %v570 = vld [vmem:[%s102 + $0x724] sm:%s95]
                %571 = vst [vmem:[%s103 + $0x3a4] sm:%s95] %v570
                %v572 = vld [vmem:[%s102 + $0x728] sm:%s95]
                %573 = vst [vmem:[%s103 + $0x3a8] sm:%s95] %v572
                %v574 = vld [vmem:[%s102 + $0x72c] sm:%s95]
                %575 = vst [vmem:[%s103 + $0x3ac] sm:%s95] %v574
                %v576 = vld [vmem:[%s102 + $0x730] sm:%s95]
                %577 = vst [vmem:[%s103 + $0x3b0] sm:%s95] %v576
                %v578 = vld [vmem:[%s102 + $0x734] sm:%s95]
                %579 = vst [vmem:[%s103 + $0x3b4] sm:%s95] %v578
                %v580 = vld [vmem:[%s102 + $0x738] sm:%s95]
                %581 = vst [vmem:[%s103 + $0x3b8] sm:%s95] %v580
                %v582 = vld [vmem:[%s102 + $0x73c] sm:%s95]
                %583 = vst [vmem:[%s103 + $0x3bc] sm:%s95] %v582
                %v584 = vld [vmem:[%s102 + $0x740] sm:%s95]
                %585 = vst [vmem:[%s103 + $0x3c0] sm:%s95] %v584
                %v586 = vld [vmem:[%s102 + $0x744] sm:%s95]
                %587 = vst [vmem:[%s103 + $0x3c4] sm:%s95] %v586
                %v588 = vld [vmem:[%s102 + $0x748] sm:%s95]
                %589 = vst [vmem:[%s103 + $0x3c8] sm:%s95] %v588
                %v590 = vld [vmem:[%s102 + $0x74c] sm:%s95]
                %591 = vst [vmem:[%s103 + $0x3cc] sm:%s95] %v590
                %v592 = vld [vmem:[%s102 + $0x750] sm:%s95]
                %593 = vst [vmem:[%s103 + $0x3d0] sm:%s95] %v592
                %v594 = vld [vmem:[%s102 + $0x754] sm:%s95]
                %595 = vst [vmem:[%s103 + $0x3d4] sm:%s95] %v594
                %v596 = vld [vmem:[%s102 + $0x758] sm:%s95]
                %597 = vst [vmem:[%s103 + $0x3d8] sm:%s95] %v596
                %v598 = vld [vmem:[%s102 + $0x75c] sm:%s95]
                %599 = vst [vmem:[%s103 + $0x3dc] sm:%s95] %v598
                %v600 = vld [vmem:[%s102 + $0x760] sm:%s95]
                %601 = vst [vmem:[%s103 + $0x3e0] sm:%s95] %v600
                %v602 = vld [vmem:[%s102 + $0x764] sm:%s95]
                %603 = vst [vmem:[%s103 + $0x3e4] sm:%s95] %v602
                %v604 = vld [vmem:[%s102 + $0x768] sm:%s95]
                %605 = vst [vmem:[%s103 + $0x3e8] sm:%s95] %v604
                %v606 = vld [vmem:[%s102 + $0x76c] sm:%s95]
                %607 = vst [vmem:[%s103 + $0x3ec] sm:%s95] %v606
                %v608 = vld [vmem:[%s102 + $0x770] sm:%s95]
                %609 = vst [vmem:[%s103 + $0x3f0] sm:%s95] %v608
                %v610 = vld [vmem:[%s102 + $0x774] sm:%s95]
                %611 = vst [vmem:[%s103 + $0x3f4] sm:%s95] %v610
                %v612 = vld [vmem:[%s102 + $0x778] sm:%s95]
                %613 = vst [vmem:[%s103 + $0x3f8] sm:%s95] %v612
                %v614 = vld [vmem:[%s102 + $0x77c] sm:%s95]
                %615 = vst [vmem:[%s103 + $0x3fc] sm:%s95] %v614
                %v616 = vld [vmem:[%s102 + $0x800] sm:%s95]
                %617 = vst [vmem:[%s103 + $0x400] sm:%s95] %v616
                %v618 = vld [vmem:[%s102 + $0x804] sm:%s95]
                %619 = vst [vmem:[%s103 + $0x404] sm:%s95] %v618
                %v620 = vld [vmem:[%s102 + $0x808] sm:%s95]
                %621 = vst [vmem:[%s103 + $0x408] sm:%s95] %v620
                %v622 = vld [vmem:[%s102 + $0x80c] sm:%s95]
                %623 = vst [vmem:[%s103 + $0x40c] sm:%s95] %v622
                %v624 = vld [vmem:[%s102 + $0x810] sm:%s95]
                %625 = vst [vmem:[%s103 + $0x410] sm:%s95] %v624
                %v626 = vld [vmem:[%s102 + $0x814] sm:%s95]
                %627 = vst [vmem:[%s103 + $0x414] sm:%s95] %v626
                %v628 = vld [vmem:[%s102 + $0x818] sm:%s95]
                %629 = vst [vmem:[%s103 + $0x418] sm:%s95] %v628
                %v630 = vld [vmem:[%s102 + $0x81c] sm:%s95]
                %631 = vst [vmem:[%s103 + $0x41c] sm:%s95] %v630
                %v632 = vld [vmem:[%s102 + $0x820] sm:%s95]
                %633 = vst [vmem:[%s103 + $0x420] sm:%s95] %v632
                %v634 = vld [vmem:[%s102 + $0x824] sm:%s95]
                %635 = vst [vmem:[%s103 + $0x424] sm:%s95] %v634
                %v636 = vld [vmem:[%s102 + $0x828] sm:%s95]
                %637 = vst [vmem:[%s103 + $0x428] sm:%s95] %v636
                %v638 = vld [vmem:[%s102 + $0x82c] sm:%s95]
                %639 = vst [vmem:[%s103 + $0x42c] sm:%s95] %v638
                %v640 = vld [vmem:[%s102 + $0x830] sm:%s95]
                %641 = vst [vmem:[%s103 + $0x430] sm:%s95] %v640
                %v642 = vld [vmem:[%s102 + $0x834] sm:%s95]
                %643 = vst [vmem:[%s103 + $0x434] sm:%s95] %v642
                %v644 = vld [vmem:[%s102 + $0x838] sm:%s95]
                %645 = vst [vmem:[%s103 + $0x438] sm:%s95] %v644
                %v646 = vld [vmem:[%s102 + $0x83c] sm:%s95]
                %647 = vst [vmem:[%s103 + $0x43c] sm:%s95] %v646
                %v648 = vld [vmem:[%s102 + $0x840] sm:%s95]
                %649 = vst [vmem:[%s103 + $0x440] sm:%s95] %v648
                %v650 = vld [vmem:[%s102 + $0x844] sm:%s95]
                %651 = vst [vmem:[%s103 + $0x444] sm:%s95] %v650
                %v652 = vld [vmem:[%s102 + $0x848] sm:%s95]
                %653 = vst [vmem:[%s103 + $0x448] sm:%s95] %v652
                %v654 = vld [vmem:[%s102 + $0x84c] sm:%s95]
                %655 = vst [vmem:[%s103 + $0x44c] sm:%s95] %v654
                %v656 = vld [vmem:[%s102 + $0x850] sm:%s95]
                %657 = vst [vmem:[%s103 + $0x450] sm:%s95] %v656
                %v658 = vld [vmem:[%s102 + $0x854] sm:%s95]
                %659 = vst [vmem:[%s103 + $0x454] sm:%s95] %v658
                %v660 = vld [vmem:[%s102 + $0x858] sm:%s95]
                %661 = vst [vmem:[%s103 + $0x458] sm:%s95] %v660
                %v662 = vld [vmem:[%s102 + $0x85c] sm:%s95]
                %663 = vst [vmem:[%s103 + $0x45c] sm:%s95] %v662
                %v664 = vld [vmem:[%s102 + $0x860] sm:%s95]
                %665 = vst [vmem:[%s103 + $0x460] sm:%s95] %v664
                %v666 = vld [vmem:[%s102 + $0x864] sm:%s95]
                %667 = vst [vmem:[%s103 + $0x464] sm:%s95] %v666
                %v668 = vld [vmem:[%s102 + $0x868] sm:%s95]
                %669 = vst [vmem:[%s103 + $0x468] sm:%s95] %v668
                %v670 = vld [vmem:[%s102 + $0x86c] sm:%s95]
                %671 = vst [vmem:[%s103 + $0x46c] sm:%s95] %v670
                %v672 = vld [vmem:[%s102 + $0x870] sm:%s95]
                %673 = vst [vmem:[%s103 + $0x470] sm:%s95] %v672
                %v674 = vld [vmem:[%s102 + $0x874] sm:%s95]
                %675 = vst [vmem:[%s103 + $0x474] sm:%s95] %v674
                %v676 = vld [vmem:[%s102 + $0x878] sm:%s95]
                %677 = vst [vmem:[%s103 + $0x478] sm:%s95] %v676
                %v678 = vld [vmem:[%s102 + $0x87c] sm:%s95]
                %679 = vst [vmem:[%s103 + $0x47c] sm:%s95] %v678
              $region37: #{facebox_forward.21} parent=31 // loop_footer
                %s101 = sadd.s32 1, %s97
              $region38: #{facebox_forward.21} parent=31 // loop_footer_branch
                %96 = sbr.rel target = $region34
              $region39: #{facebox_forward.21} parent=31 // loop_exit
                _
            $region32: #{facebox_forward.21} parent=23 // pred_fallthru
              _
          $region24: #{facebox_forward.21} parent=19 // pred_fallthru
            _
          %1276 = vnop
        $region20: #{facebox_forward.21} parent=15 // pred_fallthru
          _
      $region16: #{facebox_forward.21} parent=5 // pred_fallthru
        _
      %p1277 = scmp.le.s32.totalorder 1, %s7
      %p1278 = scmp.lt.s32.totalorder %s7, 3
      %p1279 = pnand %p1277, %p1278
      %p1280 = pneg %p1279
      // Predicated region
      $region58: #{facebox_forward.21} parent=5 // pred_check
        _
      $region59: #{facebox_forward.21} parent=5 // pred_check_branch
        %1282 = sbr.rel (%p1279) target = $region61
      $region60: #{facebox_forward.21} parent=5 // pred_region
        %s1283 = ssub.s32 %s7, 1
        %s1284 = sand.u32 %s20, 1
        %s1285 = sand.u32 %s20, 1
        %s1286 = smul.addr %s1285, 1152
        %s1287 = scalar_lea.vmem [#allocation2], %s1286
        // Predicated region
        $region62: #{facebox_forward.21} parent=60 // pred_check
          %p1288 = pneg %p33
        $region63: #{facebox_forward.21} parent=60 // pred_check_branch
          %1290 = sbr.rel (%p1288) target = $region65
        $region64: #{facebox_forward.21} parent=60 // pred_region
          _
        $region65: #{facebox_forward.21} parent=60 // pred_fallthru
          _
        %s1291 = sand.u32 %s20, 1
        %s1292 = sand.u32 %s20, 1
        %s1293 = smul.addr %s1292, 1152
        %s1294 = scalar_lea.vmem [#allocation2], %s1293
        %p1295 = pneg %p33
        %p1296 = pneg %p30
        %p1297 = pneg %p59
        %p1298 = pneg %p56
        %s1299 = smul.u32 32, %s12
        %p1300 = scmp.lt.s32.totalorder %s1299, 63
        %s1301 = scalar_select %p1300, %s1299, 63
        %s1302 = smul.addr %s1301, 4
        %s1303 = scalar_lea.vmem %s1, %s1302
        %s1304 = smul.u32 32, %s12
        %s1305 = smul.u32 32, %s12
        %p1306 = scmp.lt.s32.totalorder %s1305, 63
        %s1307 = scalar_select %p1306, %s1305, 63
        %s1308 = smul.addr %s1307, 4
        %s1309 = scalar_lea.vmem %s1, %s1308
        %s1310 = smul.u32 32, %s12
        %v1311 = vld [vmem:[%s1287] sm:$0xf]
        %v1312 = vld [vmem:[%s1287 + $0x4] sm:$0xf]
        %v1313 = vld [vmem:[%s1287 + $0x8] sm:$0xf]
        %v1314 = vld [vmem:[%s1287 + $0xc] sm:$0xf]
        %v1315 = vld [vmem:[%s1287 + $0x10] sm:$0xf]
        %v1316 = vld [vmem:[%s1287 + $0x14] sm:$0xf]
        %v1317 = vld [vmem:[%s1287 + $0x18] sm:$0xf]
        %v1318 = vld [vmem:[%s1287 + $0x1c] sm:$0xf]
        %v1319 = vld [vmem:[%s1287 + $0x20] sm:$0xf]
        %v1320 = vld [vmem:[%s1287 + $0x24] sm:$0xf]
        %v1321 = vld [vmem:[%s1287 + $0x28] sm:$0xf]
        %v1322 = vld [vmem:[%s1287 + $0x2c] sm:$0xf]
        %v1323 = vld [vmem:[%s1287 + $0x30] sm:$0xf]
        %v1324 = vld [vmem:[%s1287 + $0x34] sm:$0xf]
        %v1325 = vld [vmem:[%s1287 + $0x38] sm:$0xf]
        %v1326 = vld [vmem:[%s1287 + $0x3c] sm:$0xf]
        %v1327 = vld [vmem:[%s1287 + $0x40] sm:$0xf]
        %v1328 = vld [vmem:[%s1287 + $0x44] sm:$0xf]
        %v1329 = vld [vmem:[%s1287 + $0x48] sm:$0xf]
        %v1330 = vld [vmem:[%s1287 + $0x4c] sm:$0xf]
        %v1331 = vld [vmem:[%s1287 + $0x50] sm:$0xf]
        %v1332 = vld [vmem:[%s1287 + $0x54] sm:$0xf]
        %v1333 = vld [vmem:[%s1287 + $0x58] sm:$0xf]
        %v1334 = vld [vmem:[%s1287 + $0x5c] sm:$0xf]
        %v1335 = vld [vmem:[%s1287 + $0x60] sm:$0xf]
        %v1336 = vld [vmem:[%s1287 + $0x64] sm:$0xf]
        %v1337 = vld [vmem:[%s1287 + $0x68] sm:$0xf]
        %v1338 = vld [vmem:[%s1287 + $0x6c] sm:$0xf]
        %v1339 = vld [vmem:[%s1287 + $0x70] sm:$0xf]
        %v1340 = vld [vmem:[%s1287 + $0x74] sm:$0xf]
        %v1341 = vld [vmem:[%s1287 + $0x78] sm:$0xf]
        %v1342 = vld [vmem:[%s1287 + $0x7c] sm:$0xf]
        %s1343 = scalar_lea.vmem %s1287, 128 [#allocation2]
        %v1344 = vld [vmem:[%s1343] sm:$0xf]
        %v1345 = vld [vmem:[%s1343 + $0x4] sm:$0xf]
        %v1346 = vld [vmem:[%s1343 + $0x8] sm:$0xf]
        %v1347 = vld [vmem:[%s1343 + $0xc] sm:$0xf]
        %v1348 = vld [vmem:[%s1343 + $0x10] sm:$0xf]
        %v1349 = vld [vmem:[%s1343 + $0x14] sm:$0xf]
        %v1350 = vld [vmem:[%s1343 + $0x18] sm:$0xf]
        %v1351 = vld [vmem:[%s1343 + $0x1c] sm:$0xf]
        %v1352 = vld [vmem:[%s1343 + $0x20] sm:$0xf]
        %v1353 = vld [vmem:[%s1343 + $0x24] sm:$0xf]
        %v1354 = vld [vmem:[%s1343 + $0x28] sm:$0xf]
        %v1355 = vld [vmem:[%s1343 + $0x2c] sm:$0xf]
        %v1356 = vld [vmem:[%s1343 + $0x30] sm:$0xf]
        %v1357 = vld [vmem:[%s1343 + $0x34] sm:$0xf]
        %v1358 = vld [vmem:[%s1343 + $0x38] sm:$0xf]
        %v1359 = vld [vmem:[%s1343 + $0x3c] sm:$0xf]
        %v1360 = vld [vmem:[%s1343 + $0x40] sm:$0xf]
        %v1361 = vld [vmem:[%s1343 + $0x44] sm:$0xf]
        %v1362 = vld [vmem:[%s1343 + $0x48] sm:$0xf]
        %v1363 = vld [vmem:[%s1343 + $0x4c] sm:$0xf]
        %v1364 = vld [vmem:[%s1343 + $0x50] sm:$0xf]
        %v1365 = vld [vmem:[%s1343 + $0x54] sm:$0xf]
        %v1366 = vld [vmem:[%s1343 + $0x58] sm:$0xf]
        %v1367 = vld [vmem:[%s1343 + $0x5c] sm:$0xf]
        %v1368 = vld [vmem:[%s1343 + $0x60] sm:$0xf]
        %v1369 = vld [vmem:[%s1343 + $0x64] sm:$0xf]
        %v1370 = vld [vmem:[%s1343 + $0x68] sm:$0xf]
        %v1371 = vld [vmem:[%s1343 + $0x6c] sm:$0xf]
        %v1372 = vld [vmem:[%s1343 + $0x70] sm:$0xf]
        %v1373 = vld [vmem:[%s1343 + $0x74] sm:$0xf]
        %v1374 = vld [vmem:[%s1343 + $0x78] sm:$0xf]
        %v1375 = vld [vmem:[%s1343 + $0x7c] sm:$0xf]
        %s1376 = scalar_lea.vmem %s1287, 256 [#allocation2]
        %v1377 = vld [vmem:[%s1376] sm:$0xf]
        %v1378 = vld [vmem:[%s1376 + $0x4] sm:$0xf]
        %v1379 = vld [vmem:[%s1376 + $0x8] sm:$0xf]
        %v1380 = vld [vmem:[%s1376 + $0xc] sm:$0xf]
        %v1381 = vld [vmem:[%s1376 + $0x10] sm:$0xf]
        %v1382 = vld [vmem:[%s1376 + $0x14] sm:$0xf]
        %v1383 = vld [vmem:[%s1376 + $0x18] sm:$0xf]
        %v1384 = vld [vmem:[%s1376 + $0x1c] sm:$0xf]
        %v1385 = vld [vmem:[%s1376 + $0x20] sm:$0xf]
        %v1386 = vld [vmem:[%s1376 + $0x24] sm:$0xf]
        %v1387 = vld [vmem:[%s1376 + $0x28] sm:$0xf]
        %v1388 = vld [vmem:[%s1376 + $0x2c] sm:$0xf]
        %v1389 = vld [vmem:[%s1376 + $0x30] sm:$0xf]
        %v1390 = vld [vmem:[%s1376 + $0x34] sm:$0xf]
        %v1391 = vld [vmem:[%s1376 + $0x38] sm:$0xf]
        %v1392 = vld [vmem:[%s1376 + $0x3c] sm:$0xf]
        %v1393 = vld [vmem:[%s1376 + $0x40] sm:$0xf]
        %v1394 = vld [vmem:[%s1376 + $0x44] sm:$0xf]
        %v1395 = vld [vmem:[%s1376 + $0x48] sm:$0xf]
        %v1396 = vld [vmem:[%s1376 + $0x4c] sm:$0xf]
        %v1397 = vld [vmem:[%s1376 + $0x50] sm:$0xf]
        %v1398 = vld [vmem:[%s1376 + $0x54] sm:$0xf]
        %v1399 = vld [vmem:[%s1376 + $0x58] sm:$0xf]
        %v1400 = vld [vmem:[%s1376 + $0x5c] sm:$0xf]
        %v1401 = vld [vmem:[%s1376 + $0x60] sm:$0xf]
        %v1402 = vld [vmem:[%s1376 + $0x64] sm:$0xf]
        %v1403 = vld [vmem:[%s1376 + $0x68] sm:$0xf]
        %v1404 = vld [vmem:[%s1376 + $0x6c] sm:$0xf]
        %v1405 = vld [vmem:[%s1376 + $0x70] sm:$0xf]
        %v1406 = vld [vmem:[%s1376 + $0x74] sm:$0xf]
        %v1407 = vld [vmem:[%s1376 + $0x78] sm:$0xf]
        %v1408 = vld [vmem:[%s1376 + $0x7c] sm:$0xf]
        %s1409 = scalar_lea.vmem %s1287, 384 [#allocation2]
        %v1410 = vld [vmem:[%s1409] sm:$0xf]
        %v1411 = vld [vmem:[%s1409 + $0x4] sm:$0xf]
        %v1412 = vld [vmem:[%s1409 + $0x8] sm:$0xf]
        %v1413 = vld [vmem:[%s1409 + $0xc] sm:$0xf]
        %v1414 = vld [vmem:[%s1409 + $0x10] sm:$0xf]
        %v1415 = vld [vmem:[%s1409 + $0x14] sm:$0xf]
        %v1416 = vld [vmem:[%s1409 + $0x18] sm:$0xf]
        %v1417 = vld [vmem:[%s1409 + $0x1c] sm:$0xf]
        %v1418 = vld [vmem:[%s1409 + $0x20] sm:$0xf]
        %v1419 = vld [vmem:[%s1409 + $0x24] sm:$0xf]
        %v1420 = vld [vmem:[%s1409 + $0x28] sm:$0xf]
        %v1421 = vld [vmem:[%s1409 + $0x2c] sm:$0xf]
        %v1422 = vld [vmem:[%s1409 + $0x30] sm:$0xf]
        %v1423 = vld [vmem:[%s1409 + $0x34] sm:$0xf]
        %v1424 = vld [vmem:[%s1409 + $0x38] sm:$0xf]
        %v1425 = vld [vmem:[%s1409 + $0x3c] sm:$0xf]
        %v1426 = vld [vmem:[%s1409 + $0x40] sm:$0xf]
        %v1427 = vld [vmem:[%s1409 + $0x44] sm:$0xf]
        %v1428 = vld [vmem:[%s1409 + $0x48] sm:$0xf]
        %v1429 = vld [vmem:[%s1409 + $0x4c] sm:$0xf]
        %v1430 = vld [vmem:[%s1409 + $0x50] sm:$0xf]
        %v1431 = vld [vmem:[%s1409 + $0x54] sm:$0xf]
        %v1432 = vld [vmem:[%s1409 + $0x58] sm:$0xf]
        %v1433 = vld [vmem:[%s1409 + $0x5c] sm:$0xf]
        %v1434 = vld [vmem:[%s1409 + $0x60] sm:$0xf]
        %v1435 = vld [vmem:[%s1409 + $0x64] sm:$0xf]
        %v1436 = vld [vmem:[%s1409 + $0x68] sm:$0xf]
        %v1437 = vld [vmem:[%s1409 + $0x6c] sm:$0xf]
        %v1438 = vld [vmem:[%s1409 + $0x70] sm:$0xf]
        %v1439 = vld [vmem:[%s1409 + $0x74] sm:$0xf]
        %v1440 = vld [vmem:[%s1409 + $0x78] sm:$0xf]
        %v1441 = vld [vmem:[%s1409 + $0x7c] sm:$0xf]
        %s1442 = scalar_lea.vmem %s1287, 512 [#allocation2]
        %v1443 = vld [vmem:[%s1442] sm:$0xf]
        %v1444 = vld [vmem:[%s1442 + $0x4] sm:$0xf]
        %v1445 = vld [vmem:[%s1442 + $0x8] sm:$0xf]
        %v1446 = vld [vmem:[%s1442 + $0xc] sm:$0xf]
        %v1447 = vld [vmem:[%s1442 + $0x10] sm:$0xf]
        %v1448 = vld [vmem:[%s1442 + $0x14] sm:$0xf]
        %v1449 = vld [vmem:[%s1442 + $0x18] sm:$0xf]
        %v1450 = vld [vmem:[%s1442 + $0x1c] sm:$0xf]
        %v1451 = vld [vmem:[%s1442 + $0x20] sm:$0xf]
        %v1452 = vld [vmem:[%s1442 + $0x24] sm:$0xf]
        %v1453 = vld [vmem:[%s1442 + $0x28] sm:$0xf]
        %v1454 = vld [vmem:[%s1442 + $0x2c] sm:$0xf]
        %v1455 = vld [vmem:[%s1442 + $0x30] sm:$0xf]
        %v1456 = vld [vmem:[%s1442 + $0x34] sm:$0xf]
        %v1457 = vld [vmem:[%s1442 + $0x38] sm:$0xf]
        %v1458 = vld [vmem:[%s1442 + $0x3c] sm:$0xf]
        %v1459 = vld [vmem:[%s1442 + $0x40] sm:$0xf]
        %v1460 = vld [vmem:[%s1442 + $0x44] sm:$0xf]
        %v1461 = vld [vmem:[%s1442 + $0x48] sm:$0xf]
        %v1462 = vld [vmem:[%s1442 + $0x4c] sm:$0xf]
        %v1463 = vld [vmem:[%s1442 + $0x50] sm:$0xf]
        %v1464 = vld [vmem:[%s1442 + $0x54] sm:$0xf]
        %v1465 = vld [vmem:[%s1442 + $0x58] sm:$0xf]
        %v1466 = vld [vmem:[%s1442 + $0x5c] sm:$0xf]
        %v1467 = vld [vmem:[%s1442 + $0x60] sm:$0xf]
        %v1468 = vld [vmem:[%s1442 + $0x64] sm:$0xf]
        %v1469 = vld [vmem:[%s1442 + $0x68] sm:$0xf]
        %v1470 = vld [vmem:[%s1442 + $0x6c] sm:$0xf]
        %v1471 = vld [vmem:[%s1442 + $0x70] sm:$0xf]
        %v1472 = vld [vmem:[%s1442 + $0x74] sm:$0xf]
        %v1473 = vld [vmem:[%s1442 + $0x78] sm:$0xf]
        %v1474 = vld [vmem:[%s1442 + $0x7c] sm:$0xf]
        %s1475 = scalar_lea.vmem %s1287, 640 [#allocation2]
        %v1476 = vld [vmem:[%s1475] sm:$0xf]
        %v1477 = vld [vmem:[%s1475 + $0x4] sm:$0xf]
        %v1478 = vld [vmem:[%s1475 + $0x8] sm:$0xf]
        %v1479 = vld [vmem:[%s1475 + $0xc] sm:$0xf]
        %v1480 = vld [vmem:[%s1475 + $0x10] sm:$0xf]
        %v1481 = vld [vmem:[%s1475 + $0x14] sm:$0xf]
        %v1482 = vld [vmem:[%s1475 + $0x18] sm:$0xf]
        %v1483 = vld [vmem:[%s1475 + $0x1c] sm:$0xf]
        %v1484 = vld [vmem:[%s1475 + $0x20] sm:$0xf]
        %v1485 = vld [vmem:[%s1475 + $0x24] sm:$0xf]
        %v1486 = vld [vmem:[%s1475 + $0x28] sm:$0xf]
        %v1487 = vld [vmem:[%s1475 + $0x2c] sm:$0xf]
        %v1488 = vld [vmem:[%s1475 + $0x30] sm:$0xf]
        %v1489 = vld [vmem:[%s1475 + $0x34] sm:$0xf]
        %v1490 = vld [vmem:[%s1475 + $0x38] sm:$0xf]
        %v1491 = vld [vmem:[%s1475 + $0x3c] sm:$0xf]
        %v1492 = vld [vmem:[%s1475 + $0x40] sm:$0xf]
        %v1493 = vld [vmem:[%s1475 + $0x44] sm:$0xf]
        %v1494 = vld [vmem:[%s1475 + $0x48] sm:$0xf]
        %v1495 = vld [vmem:[%s1475 + $0x4c] sm:$0xf]
        %v1496 = vld [vmem:[%s1475 + $0x50] sm:$0xf]
        %v1497 = vld [vmem:[%s1475 + $0x54] sm:$0xf]
        %v1498 = vld [vmem:[%s1475 + $0x58] sm:$0xf]
        %v1499 = vld [vmem:[%s1475 + $0x5c] sm:$0xf]
        %v1500 = vld [vmem:[%s1475 + $0x60] sm:$0xf]
        %v1501 = vld [vmem:[%s1475 + $0x64] sm:$0xf]
        %v1502 = vld [vmem:[%s1475 + $0x68] sm:$0xf]
        %v1503 = vld [vmem:[%s1475 + $0x6c] sm:$0xf]
        %v1504 = vld [vmem:[%s1475 + $0x70] sm:$0xf]
        %v1505 = vld [vmem:[%s1475 + $0x74] sm:$0xf]
        %v1506 = vld [vmem:[%s1475 + $0x78] sm:$0xf]
        %v1507 = vld [vmem:[%s1475 + $0x7c] sm:$0xf]
        %s1508 = scalar_lea.vmem %s1287, 768 [#allocation2]
        %v1509 = vld [vmem:[%s1508] sm:$0xf]
        %v1510 = vld [vmem:[%s1508 + $0x4] sm:$0xf]
        %v1511 = vld [vmem:[%s1508 + $0x8] sm:$0xf]
        %v1512 = vld [vmem:[%s1508 + $0xc] sm:$0xf]
        %v1513 = vld [vmem:[%s1508 + $0x10] sm:$0xf]
        %v1514 = vld [vmem:[%s1508 + $0x14] sm:$0xf]
        %v1515 = vld [vmem:[%s1508 + $0x18] sm:$0xf]
        %v1516 = vld [vmem:[%s1508 + $0x1c] sm:$0xf]
        %v1517 = vld [vmem:[%s1508 + $0x20] sm:$0xf]
        %v1518 = vld [vmem:[%s1508 + $0x24] sm:$0xf]
        %v1519 = vld [vmem:[%s1508 + $0x28] sm:$0xf]
        %v1520 = vld [vmem:[%s1508 + $0x2c] sm:$0xf]
        %v1521 = vld [vmem:[%s1508 + $0x30] sm:$0xf]
        %v1522 = vld [vmem:[%s1508 + $0x34] sm:$0xf]
        %v1523 = vld [vmem:[%s1508 + $0x38] sm:$0xf]
        %v1524 = vld [vmem:[%s1508 + $0x3c] sm:$0xf]
        %v1525 = vld [vmem:[%s1508 + $0x40] sm:$0xf]
        %v1526 = vld [vmem:[%s1508 + $0x44] sm:$0xf]
        %v1527 = vld [vmem:[%s1508 + $0x48] sm:$0xf]
        %v1528 = vld [vmem:[%s1508 + $0x4c] sm:$0xf]
        %v1529 = vld [vmem:[%s1508 + $0x50] sm:$0xf]
        %v1530 = vld [vmem:[%s1508 + $0x54] sm:$0xf]
        %v1531 = vld [vmem:[%s1508 + $0x58] sm:$0xf]
        %v1532 = vld [vmem:[%s1508 + $0x5c] sm:$0xf]
        %v1533 = vld [vmem:[%s1508 + $0x60] sm:$0xf]
        %v1534 = vld [vmem:[%s1508 + $0x64] sm:$0xf]
        %v1535 = vld [vmem:[%s1508 + $0x68] sm:$0xf]
        %v1536 = vld [vmem:[%s1508 + $0x6c] sm:$0xf]
        %v1537 = vld [vmem:[%s1508 + $0x70] sm:$0xf]
        %v1538 = vld [vmem:[%s1508 + $0x74] sm:$0xf]
        %v1539 = vld [vmem:[%s1508 + $0x78] sm:$0xf]
        %v1540 = vld [vmem:[%s1508 + $0x7c] sm:$0xf]
        %s1541 = scalar_lea.vmem %s1287, 896 [#allocation2]
        %v1542 = vld [vmem:[%s1541] sm:$0xf]
        %v1543 = vld [vmem:[%s1541 + $0x4] sm:$0xf]
        %v1544 = vld [vmem:[%s1541 + $0x8] sm:$0xf]
        %v1545 = vld [vmem:[%s1541 + $0xc] sm:$0xf]
        %v1546 = vld [vmem:[%s1541 + $0x10] sm:$0xf]
        %v1547 = vld [vmem:[%s1541 + $0x14] sm:$0xf]
        %v1548 = vld [vmem:[%s1541 + $0x18] sm:$0xf]
        %v1549 = vld [vmem:[%s1541 + $0x1c] sm:$0xf]
        %v1550 = vld [vmem:[%s1541 + $0x20] sm:$0xf]
        %v1551 = vld [vmem:[%s1541 + $0x24] sm:$0xf]
        %v1552 = vld [vmem:[%s1541 + $0x28] sm:$0xf]
        %v1553 = vld [vmem:[%s1541 + $0x2c] sm:$0xf]
        %v1554 = vld [vmem:[%s1541 + $0x30] sm:$0xf]
        %v1555 = vld [vmem:[%s1541 + $0x34] sm:$0xf]
        %v1556 = vld [vmem:[%s1541 + $0x38] sm:$0xf]
        %v1557 = vld [vmem:[%s1541 + $0x3c] sm:$0xf]
        %v1558 = vld [vmem:[%s1541 + $0x40] sm:$0xf]
        %v1559 = vld [vmem:[%s1541 + $0x44] sm:$0xf]
        %v1560 = vld [vmem:[%s1541 + $0x48] sm:$0xf]
        %v1561 = vld [vmem:[%s1541 + $0x4c] sm:$0xf]
        %v1562 = vld [vmem:[%s1541 + $0x50] sm:$0xf]
        %v1563 = vld [vmem:[%s1541 + $0x54] sm:$0xf]
        %v1564 = vld [vmem:[%s1541 + $0x58] sm:$0xf]
        %v1565 = vld [vmem:[%s1541 + $0x5c] sm:$0xf]
        %v1566 = vld [vmem:[%s1541 + $0x60] sm:$0xf]
        %v1567 = vld [vmem:[%s1541 + $0x64] sm:$0xf]
        %v1568 = vld [vmem:[%s1541 + $0x68] sm:$0xf]
        %v1569 = vld [vmem:[%s1541 + $0x6c] sm:$0xf]
        %v1570 = vld [vmem:[%s1541 + $0x70] sm:$0xf]
        %v1571 = vld [vmem:[%s1541 + $0x74] sm:$0xf]
        %v1572 = vld [vmem:[%s1541 + $0x78] sm:$0xf]
        %v1573 = vld [vmem:[%s1541 + $0x7c] sm:$0xf]
        %s1574 = scalar_lea.vmem %s1287, 1024 [#allocation2]
        %v1575 = vld [vmem:[%s1574] sm:$0xf]
        %v1576 = vld [vmem:[%s1574 + $0x4] sm:$0xf]
        %v1577 = vld [vmem:[%s1574 + $0x8] sm:$0xf]
        %v1578 = vld [vmem:[%s1574 + $0xc] sm:$0xf]
        %v1579 = vld [vmem:[%s1574 + $0x10] sm:$0xf]
        %v1580 = vld [vmem:[%s1574 + $0x14] sm:$0xf]
        %v1581 = vld [vmem:[%s1574 + $0x18] sm:$0xf]
        %v1582 = vld [vmem:[%s1574 + $0x1c] sm:$0xf]
        %v1583 = vld [vmem:[%s1574 + $0x20] sm:$0xf]
        %v1584 = vld [vmem:[%s1574 + $0x24] sm:$0xf]
        %v1585 = vld [vmem:[%s1574 + $0x28] sm:$0xf]
        %v1586 = vld [vmem:[%s1574 + $0x2c] sm:$0xf]
        %v1587 = vld [vmem:[%s1574 + $0x30] sm:$0xf]
        %v1588 = vld [vmem:[%s1574 + $0x34] sm:$0xf]
        %v1589 = vld [vmem:[%s1574 + $0x38] sm:$0xf]
        %v1590 = vld [vmem:[%s1574 + $0x3c] sm:$0xf]
        %v1591 = vld [vmem:[%s1574 + $0x40] sm:$0xf]
        %v1592 = vld [vmem:[%s1574 + $0x44] sm:$0xf]
        %v1593 = vld [vmem:[%s1574 + $0x48] sm:$0xf]
        %v1594 = vld [vmem:[%s1574 + $0x4c] sm:$0xf]
        %v1595 = vld [vmem:[%s1574 + $0x50] sm:$0xf]
        %v1596 = vld [vmem:[%s1574 + $0x54] sm:$0xf]
        %v1597 = vld [vmem:[%s1574 + $0x58] sm:$0xf]
        %v1598 = vld [vmem:[%s1574 + $0x5c] sm:$0xf]
        %v1599 = vld [vmem:[%s1574 + $0x60] sm:$0xf]
        %v1600 = vld [vmem:[%s1574 + $0x64] sm:$0xf]
        %v1601 = vld [vmem:[%s1574 + $0x68] sm:$0xf]
        %v1602 = vld [vmem:[%s1574 + $0x6c] sm:$0xf]
        %v1603 = vld [vmem:[%s1574 + $0x70] sm:$0xf]
        %v1604 = vld [vmem:[%s1574 + $0x74] sm:$0xf]
        %v1605 = vld [vmem:[%s1574 + $0x78] sm:$0xf]
        %v1606 = vld [vmem:[%s1574 + $0x7c] sm:$0xf]
        %v1607 = vmax.bf16 %v1311, %v1344
        %v1608 = vmax.bf16 %v1312, %v1345
        %v1609 = vmax.bf16 %v1313, %v1346
        %v1610 = vmax.bf16 %v1314, %v1347
        %v1611 = vmax.bf16 %v1315, %v1348
        %v1612 = vmax.bf16 %v1316, %v1349
        %v1613 = vmax.bf16 %v1317, %v1350
        %v1614 = vmax.bf16 %v1318, %v1351
        %v1615 = vmax.bf16 %v1319, %v1352
        %v1616 = vmax.bf16 %v1320, %v1353
        %v1617 = vmax.bf16 %v1321, %v1354
        %v1618 = vmax.bf16 %v1322, %v1355
        %v1619 = vmax.bf16 %v1323, %v1356
        %v1620 = vmax.bf16 %v1324, %v1357
        %v1621 = vmax.bf16 %v1325, %v1358
        %v1622 = vmax.bf16 %v1326, %v1359
        %v1623 = vmax.bf16 %v1327, %v1360
        %v1624 = vmax.bf16 %v1328, %v1361
        %v1625 = vmax.bf16 %v1329, %v1362
        %v1626 = vmax.bf16 %v1330, %v1363
        %v1627 = vmax.bf16 %v1331, %v1364
        %v1628 = vmax.bf16 %v1332, %v1365
        %v1629 = vmax.bf16 %v1333, %v1366
        %v1630 = vmax.bf16 %v1334, %v1367
        %v1631 = vmax.bf16 %v1335, %v1368
        %v1632 = vmax.bf16 %v1336, %v1369
        %v1633 = vmax.bf16 %v1337, %v1370
        %v1634 = vmax.bf16 %v1338, %v1371
        %v1635 = vmax.bf16 %v1339, %v1372
        %v1636 = vmax.bf16 %v1340, %v1373
        %v1637 = vmax.bf16 %v1341, %v1374
        %v1638 = vmax.bf16 %v1342, %v1375
        %v1639 = vmax.bf16 %v1377, %v1410
        %v1640 = vmax.bf16 %v1378, %v1411
        %v1641 = vmax.bf16 %v1379, %v1412
        %v1642 = vmax.bf16 %v1380, %v1413
        %v1643 = vmax.bf16 %v1381, %v1414
        %v1644 = vmax.bf16 %v1382, %v1415
        %v1645 = vmax.bf16 %v1383, %v1416
        %v1646 = vmax.bf16 %v1384, %v1417
        %v1647 = vmax.bf16 %v1385, %v1418
        %v1648 = vmax.bf16 %v1386, %v1419
        %v1649 = vmax.bf16 %v1387, %v1420
        %v1650 = vmax.bf16 %v1388, %v1421
        %v1651 = vmax.bf16 %v1389, %v1422
        %v1652 = vmax.bf16 %v1390, %v1423
        %v1653 = vmax.bf16 %v1391, %v1424
        %v1654 = vmax.bf16 %v1392, %v1425
        %v1655 = vmax.bf16 %v1393, %v1426
        %v1656 = vmax.bf16 %v1394, %v1427
        %v1657 = vmax.bf16 %v1395, %v1428
        %v1658 = vmax.bf16 %v1396, %v1429
        %v1659 = vmax.bf16 %v1397, %v1430
        %v1660 = vmax.bf16 %v1398, %v1431
        %v1661 = vmax.bf16 %v1399, %v1432
        %v1662 = vmax.bf16 %v1400, %v1433
        %v1663 = vmax.bf16 %v1401, %v1434
        %v1664 = vmax.bf16 %v1402, %v1435
        %v1665 = vmax.bf16 %v1403, %v1436
        %v1666 = vmax.bf16 %v1404, %v1437
        %v1667 = vmax.bf16 %v1405, %v1438
        %v1668 = vmax.bf16 %v1406, %v1439
        %v1669 = vmax.bf16 %v1407, %v1440
        %v1670 = vmax.bf16 %v1408, %v1441
        %v1671 = vmax.bf16 %v1443, %v1476
        %v1672 = vmax.bf16 %v1444, %v1477
        %v1673 = vmax.bf16 %v1445, %v1478
        %v1674 = vmax.bf16 %v1446, %v1479
        %v1675 = vmax.bf16 %v1447, %v1480
        %v1676 = vmax.bf16 %v1448, %v1481
        %v1677 = vmax.bf16 %v1449, %v1482
        %v1678 = vmax.bf16 %v1450, %v1483
        %v1679 = vmax.bf16 %v1451, %v1484
        %v1680 = vmax.bf16 %v1452, %v1485
        %v1681 = vmax.bf16 %v1453, %v1486
        %v1682 = vmax.bf16 %v1454, %v1487
        %v1683 = vmax.bf16 %v1455, %v1488
        %v1684 = vmax.bf16 %v1456, %v1489
        %v1685 = vmax.bf16 %v1457, %v1490
        %v1686 = vmax.bf16 %v1458, %v1491
        %v1687 = vmax.bf16 %v1459, %v1492
        %v1688 = vmax.bf16 %v1460, %v1493
        %v1689 = vmax.bf16 %v1461, %v1494
        %v1690 = vmax.bf16 %v1462, %v1495
        %v1691 = vmax.bf16 %v1463, %v1496
        %v1692 = vmax.bf16 %v1464, %v1497
        %v1693 = vmax.bf16 %v1465, %v1498
        %v1694 = vmax.bf16 %v1466, %v1499
        %v1695 = vmax.bf16 %v1467, %v1500
        %v1696 = vmax.bf16 %v1468, %v1501
        %v1697 = vmax.bf16 %v1469, %v1502
        %v1698 = vmax.bf16 %v1470, %v1503
        %v1699 = vmax.bf16 %v1471, %v1504
        %v1700 = vmax.bf16 %v1472, %v1505
        %v1701 = vmax.bf16 %v1473, %v1506
        %v1702 = vmax.bf16 %v1474, %v1507
        %v1703 = vmax.bf16 %v1509, %v1542
        %v1704 = vmax.bf16 %v1510, %v1543
        %v1705 = vmax.bf16 %v1511, %v1544
        %v1706 = vmax.bf16 %v1512, %v1545
        %v1707 = vmax.bf16 %v1513, %v1546
        %v1708 = vmax.bf16 %v1514, %v1547
        %v1709 = vmax.bf16 %v1515, %v1548
        %v1710 = vmax.bf16 %v1516, %v1549
        %v1711 = vmax.bf16 %v1517, %v1550
        %v1712 = vmax.bf16 %v1518, %v1551
        %v1713 = vmax.bf16 %v1519, %v1552
        %v1714 = vmax.bf16 %v1520, %v1553
        %v1715 = vmax.bf16 %v1521, %v1554
        %v1716 = vmax.bf16 %v1522, %v1555
        %v1717 = vmax.bf16 %v1523, %v1556
        %v1718 = vmax.bf16 %v1524, %v1557
        %v1719 = vmax.bf16 %v1525, %v1558
        %v1720 = vmax.bf16 %v1526, %v1559
        %v1721 = vmax.bf16 %v1527, %v1560
        %v1722 = vmax.bf16 %v1528, %v1561
        %v1723 = vmax.bf16 %v1529, %v1562
        %v1724 = vmax.bf16 %v1530, %v1563
        %v1725 = vmax.bf16 %v1531, %v1564
        %v1726 = vmax.bf16 %v1532, %v1565
        %v1727 = vmax.bf16 %v1533, %v1566
        %v1728 = vmax.bf16 %v1534, %v1567
        %v1729 = vmax.bf16 %v1535, %v1568
        %v1730 = vmax.bf16 %v1536, %v1569
        %v1731 = vmax.bf16 %v1537, %v1570
        %v1732 = vmax.bf16 %v1538, %v1571
        %v1733 = vmax.bf16 %v1539, %v1572
        %v1734 = vmax.bf16 %v1540, %v1573
        %v1735 = vmax.bf16 %v1607, %v1639
        %v1736 = vmax.bf16 %v1608, %v1640
        %v1737 = vmax.bf16 %v1609, %v1641
        %v1738 = vmax.bf16 %v1610, %v1642
        %v1739 = vmax.bf16 %v1611, %v1643
        %v1740 = vmax.bf16 %v1612, %v1644
        %v1741 = vmax.bf16 %v1613, %v1645
        %v1742 = vmax.bf16 %v1614, %v1646
        %v1743 = vmax.bf16 %v1615, %v1647
        %v1744 = vmax.bf16 %v1616, %v1648
        %v1745 = vmax.bf16 %v1617, %v1649
        %v1746 = vmax.bf16 %v1618, %v1650
        %v1747 = vmax.bf16 %v1619, %v1651
        %v1748 = vmax.bf16 %v1620, %v1652
        %v1749 = vmax.bf16 %v1621, %v1653
        %v1750 = vmax.bf16 %v1622, %v1654
        %v1751 = vmax.bf16 %v1623, %v1655
        %v1752 = vmax.bf16 %v1624, %v1656
        %v1753 = vmax.bf16 %v1625, %v1657
        %v1754 = vmax.bf16 %v1626, %v1658
        %v1755 = vmax.bf16 %v1627, %v1659
        %v1756 = vmax.bf16 %v1628, %v1660
        %v1757 = vmax.bf16 %v1629, %v1661
        %v1758 = vmax.bf16 %v1630, %v1662
        %v1759 = vmax.bf16 %v1631, %v1663
        %v1760 = vmax.bf16 %v1632, %v1664
        %v1761 = vmax.bf16 %v1633, %v1665
        %v1762 = vmax.bf16 %v1634, %v1666
        %v1763 = vmax.bf16 %v1635, %v1667
        %v1764 = vmax.bf16 %v1636, %v1668
        %v1765 = vmax.bf16 %v1637, %v1669
        %v1766 = vmax.bf16 %v1638, %v1670
        %v1767 = vmax.bf16 %v1671, %v1703
        %v1768 = vmax.bf16 %v1672, %v1704
        %v1769 = vmax.bf16 %v1673, %v1705
        %v1770 = vmax.bf16 %v1674, %v1706
        %v1771 = vmax.bf16 %v1675, %v1707
        %v1772 = vmax.bf16 %v1676, %v1708
        %v1773 = vmax.bf16 %v1677, %v1709
        %v1774 = vmax.bf16 %v1678, %v1710
        %v1775 = vmax.bf16 %v1679, %v1711
        %v1776 = vmax.bf16 %v1680, %v1712
        %v1777 = vmax.bf16 %v1681, %v1713
        %v1778 = vmax.bf16 %v1682, %v1714
        %v1779 = vmax.bf16 %v1683, %v1715
        %v1780 = vmax.bf16 %v1684, %v1716
        %v1781 = vmax.bf16 %v1685, %v1717
        %v1782 = vmax.bf16 %v1686, %v1718
        %v1783 = vmax.bf16 %v1687, %v1719
        %v1784 = vmax.bf16 %v1688, %v1720
        %v1785 = vmax.bf16 %v1689, %v1721
        %v1786 = vmax.bf16 %v1690, %v1722
        %v1787 = vmax.bf16 %v1691, %v1723
        %v1788 = vmax.bf16 %v1692, %v1724
        %v1789 = vmax.bf16 %v1693, %v1725
        %v1790 = vmax.bf16 %v1694, %v1726
        %v1791 = vmax.bf16 %v1695, %v1727
        %v1792 = vmax.bf16 %v1696, %v1728
        %v1793 = vmax.bf16 %v1697, %v1729
        %v1794 = vmax.bf16 %v1698, %v1730
        %v1795 = vmax.bf16 %v1699, %v1731
        %v1796 = vmax.bf16 %v1700, %v1732
        %v1797 = vmax.bf16 %v1701, %v1733
        %v1798 = vmax.bf16 %v1702, %v1734
        %v1799 = vmax.bf16 %v1735, %v1767
        %v1800 = vmax.bf16 %v1736, %v1768
        %v1801 = vmax.bf16 %v1737, %v1769
        %v1802 = vmax.bf16 %v1738, %v1770
        %v1803 = vmax.bf16 %v1739, %v1771
        %v1804 = vmax.bf16 %v1740, %v1772
        %v1805 = vmax.bf16 %v1741, %v1773
        %v1806 = vmax.bf16 %v1742, %v1774
        %v1807 = vmax.bf16 %v1743, %v1775
        %v1808 = vmax.bf16 %v1744, %v1776
        %v1809 = vmax.bf16 %v1745, %v1777
        %v1810 = vmax.bf16 %v1746, %v1778
        %v1811 = vmax.bf16 %v1747, %v1779
        %v1812 = vmax.bf16 %v1748, %v1780
        %v1813 = vmax.bf16 %v1749, %v1781
        %v1814 = vmax.bf16 %v1750, %v1782
        %v1815 = vmax.bf16 %v1751, %v1783
        %v1816 = vmax.bf16 %v1752, %v1784
        %v1817 = vmax.bf16 %v1753, %v1785
        %v1818 = vmax.bf16 %v1754, %v1786
        %v1819 = vmax.bf16 %v1755, %v1787
        %v1820 = vmax.bf16 %v1756, %v1788
        %v1821 = vmax.bf16 %v1757, %v1789
        %v1822 = vmax.bf16 %v1758, %v1790
        %v1823 = vmax.bf16 %v1759, %v1791
        %v1824 = vmax.bf16 %v1760, %v1792
        %v1825 = vmax.bf16 %v1761, %v1793
        %v1826 = vmax.bf16 %v1762, %v1794
        %v1827 = vmax.bf16 %v1763, %v1795
        %v1828 = vmax.bf16 %v1764, %v1796
        %v1829 = vmax.bf16 %v1765, %v1797
        %v1830 = vmax.bf16 %v1766, %v1798
        %v1831 = vmax.bf16 %v1799, %v1575
        %v1832 = vmax.bf16 %v1800, %v1576
        %v1833 = vmax.bf16 %v1801, %v1577
        %v1834 = vmax.bf16 %v1802, %v1578
        %v1835 = vmax.bf16 %v1803, %v1579
        %v1836 = vmax.bf16 %v1804, %v1580
        %v1837 = vmax.bf16 %v1805, %v1581
        %v1838 = vmax.bf16 %v1806, %v1582
        %v1839 = vmax.bf16 %v1807, %v1583
        %v1840 = vmax.bf16 %v1808, %v1584
        %v1841 = vmax.bf16 %v1809, %v1585
        %v1842 = vmax.bf16 %v1810, %v1586
        %v1843 = vmax.bf16 %v1811, %v1587
        %v1844 = vmax.bf16 %v1812, %v1588
        %v1845 = vmax.bf16 %v1813, %v1589
        %v1846 = vmax.bf16 %v1814, %v1590
        %v1847 = vmax.bf16 %v1815, %v1591
        %v1848 = vmax.bf16 %v1816, %v1592
        %v1849 = vmax.bf16 %v1817, %v1593
        %v1850 = vmax.bf16 %v1818, %v1594
        %v1851 = vmax.bf16 %v1819, %v1595
        %v1852 = vmax.bf16 %v1820, %v1596
        %v1853 = vmax.bf16 %v1821, %v1597
        %v1854 = vmax.bf16 %v1822, %v1598
        %v1855 = vmax.bf16 %v1823, %v1599
        %v1856 = vmax.bf16 %v1824, %v1600
        %v1857 = vmax.bf16 %v1825, %v1601
        %v1858 = vmax.bf16 %v1826, %v1602
        %v1859 = vmax.bf16 %v1827, %v1603
        %v1860 = vmax.bf16 %v1828, %v1604
        %v1861 = vmax.bf16 %v1829, %v1605
        %v1862 = vmax.bf16 %v1830, %v1606
        %vm1863 = vcmask 388096
        %1864 = vst.msk [vmem:[%s1309] sm:$0xf] %vm1863, %v1831
        %1865 = vst.msk [vmem:[%s1309 + $0x4] sm:$0xf] %vm1863, %v1832
        %1866 = vst.msk [vmem:[%s1309 + $0x8] sm:$0xf] %vm1863, %v1833
        %1867 = vst.msk [vmem:[%s1309 + $0xc] sm:$0xf] %vm1863, %v1834
        %1868 = vst.msk [vmem:[%s1309 + $0x10] sm:$0xf] %vm1863, %v1835
        %1869 = vst.msk [vmem:[%s1309 + $0x14] sm:$0xf] %vm1863, %v1836
        %1870 = vst.msk [vmem:[%s1309 + $0x18] sm:$0xf] %vm1863, %v1837
        %1871 = vst.msk [vmem:[%s1309 + $0x1c] sm:$0xf] %vm1863, %v1838
        %1872 = vst.msk [vmem:[%s1309 + $0x20] sm:$0xf] %vm1863, %v1839
        %1873 = vst.msk [vmem:[%s1309 + $0x24] sm:$0xf] %vm1863, %v1840
        %1874 = vst.msk [vmem:[%s1309 + $0x28] sm:$0xf] %vm1863, %v1841
        %1875 = vst.msk [vmem:[%s1309 + $0x2c] sm:$0xf] %vm1863, %v1842
        %1876 = vst.msk [vmem:[%s1309 + $0x30] sm:$0xf] %vm1863, %v1843
        %1877 = vst.msk [vmem:[%s1309 + $0x34] sm:$0xf] %vm1863, %v1844
        %1878 = vst.msk [vmem:[%s1309 + $0x38] sm:$0xf] %vm1863, %v1845
        %1879 = vst.msk [vmem:[%s1309 + $0x3c] sm:$0xf] %vm1863, %v1846
        %1880 = vst.msk [vmem:[%s1309 + $0x40] sm:$0xf] %vm1863, %v1847
        %1881 = vst.msk [vmem:[%s1309 + $0x44] sm:$0xf] %vm1863, %v1848
        %1882 = vst.msk [vmem:[%s1309 + $0x48] sm:$0xf] %vm1863, %v1849
        %1883 = vst.msk [vmem:[%s1309 + $0x4c] sm:$0xf] %vm1863, %v1850
        %1884 = vst.msk [vmem:[%s1309 + $0x50] sm:$0xf] %vm1863, %v1851
        %1885 = vst.msk [vmem:[%s1309 + $0x54] sm:$0xf] %vm1863, %v1852
        %1886 = vst.msk [vmem:[%s1309 + $0x58] sm:$0xf] %vm1863, %v1853
        %1887 = vst.msk [vmem:[%s1309 + $0x5c] sm:$0xf] %vm1863, %v1854
        %1888 = vst.msk [vmem:[%s1309 + $0x60] sm:$0xf] %vm1863, %v1855
        %1889 = vst.msk [vmem:[%s1309 + $0x64] sm:$0xf] %vm1863, %v1856
        %1890 = vst.msk [vmem:[%s1309 + $0x68] sm:$0xf] %vm1863, %v1857
        %1891 = vst.msk [vmem:[%s1309 + $0x6c] sm:$0xf] %vm1863, %v1858
        %1892 = vst.msk [vmem:[%s1309 + $0x70] sm:$0xf] %vm1863, %v1859
        %1893 = vst.msk [vmem:[%s1309 + $0x74] sm:$0xf] %vm1863, %v1860
        %1894 = vst.msk [vmem:[%s1309 + $0x78] sm:$0xf] %vm1863, %v1861
        %1895 = vst.msk [vmem:[%s1309 + $0x7c] sm:$0xf] %vm1863, %v1862
        %s1896 = smul.u32 32, %s12
        %p1897 = scmp.lt.s32.totalorder %s1896, 63
        %s1898 = scalar_select %p1897, %s1896, 63
        %s1899 = smul.addr %s1898, 4
        %s1900 = scalar_lea.vmem %s1, %s1899
        // Predicated region
        $region66: #{facebox_forward.21} parent=60 // pred_check
          %p1901 = pneg %p56
        $region67: #{facebox_forward.21} parent=60 // pred_check_branch
          %1903 = sbr.rel (%p1901) target = $region69
        $region68: #{facebox_forward.21} parent=60 // pred_region
          %s1904 = smul.u32 32, %s12
        $region69: #{facebox_forward.21} parent=60 // pred_fallthru
          _
      $region61: #{facebox_forward.21} parent=5 // pred_fallthru
        _
      %p1905 = scmp.le.s32.totalorder 2, %s7
      // Predicated region
      $region70: #{facebox_forward.21} parent=5 // pred_check
        %p1906 = pneg %p1905
      $region71: #{facebox_forward.21} parent=5 // pred_check_branch
        %1908 = sbr.rel (%p1906) target = $region73
      $region72: #{facebox_forward.21} parent=5 // pred_region
        %s1909 = ssub.s32 %s7, 2
        // Predicated region
        $region74: #{facebox_forward.21} parent=72 // pred_check
          %p1910 = pneg %p62
        $region75: #{facebox_forward.21} parent=72 // pred_check_branch
          %1912 = sbr.rel (%p1910) target = $region77
        $region76: #{facebox_forward.21} parent=72 // pred_region
          %s1913 = smul.u32 32, %s13
          %p1914 = scmp.lt.s32.totalorder %s1913, 63
          %s1915 = scalar_select %p1914, %s1913, 63
          %s1916 = smul.addr %s1915, 4
          %s1917 = scalar_lea.vmem %s1, %s1916
        $region77: #{facebox_forward.21} parent=72 // pred_fallthru
          _
      $region73: #{facebox_forward.21} parent=5 // pred_fallthru
        _
    $region6: #{facebox_forward.21} parent=1 // loop_footer
      %s11 = sadd.s32 1, %s7
    $region7: #{facebox_forward.21} parent=1 // loop_footer_branch
      %6 = sbr.rel target = $region3
    $region8: #{facebox_forward.21} parent=1 // loop_exit
      _

// kernel: neg.7
$region0: #{neg.7}
  #allocation0 [shape = 's32[1]{0}', space=sflag, size = 0x4, scoped, tag = 'scoped memory for neg.7']
  %s0 = inlined_call_operand.vmem [shape: f32[64], index: 0, kind: input, shape index: {}]
  %s1 = inlined_call_operand.vmem [shape: f32[64], index: 1, kind: output, shape index: {}]
  %v2 = vld [vmem:[%s0] sm:$0x1]
  %3 = xla_tuple %v2
  %4 = xla_tuple %3
  %v5 = vxor.u32 %v2, 2147483648
  %6 = xla_tuple %v5
  %7 = vst [vmem:[%s1] sm:$0x1] %v5

// kernel: facebox_forward.22
$region0: #{facebox_forward.22}
  #allocation0 [shape = 'u32[]', space=smem, size = 0x4, offset = 0x4, fixed_abs, tag = 'smem constant byte address 0x4 - core index']
  #allocation1 [shape = 'u32[144,128]{1,0:T(1,128)}', space=vmem, size = 0x12000, scoped, tag = 'internal scratch']
  %s0 = inlined_call_operand.vmem [shape: bf16[128,1280], index: 0, kind: input, shape index: {}]
  %s1 = inlined_call_operand.vmem [shape: bf16[1280,128], index: 1, kind: input, shape index: {}]
  %s2 = inlined_call_operand.vmem [shape: f32[1,128], index: 2, kind: input, shape index: {}]
  %s3 = inlined_call_operand.vmem [shape: bf16[128,128], index: 3, kind: output, shape index: {}]
  %s4 = sld [smem:[#allocation0]]
  $region45: #{facebox_forward.22} parent=0
    _
  %s6 = ssub.s32 1, %s4
  %s7 = scalar_select 0, %s6, %s4
  loop: start=0, step=1, limit=4
  $region2: #{facebox_forward.22} parent=0 // loop_pre_header
    _
  $region3: #{facebox_forward.22} parent=0 // loop_header
    %s9 = sphi 0, %s13
    %p10 = scmp.ge.s32.totalorder %s9, 4
    %s19 = sphi 0, %s21
    %s22 = sphi 0, %s19
    %s23 = sphi 0, %s22
    %s39 = sphi 0, %s23
    %s43 = sphi 0, %s43
    %s45 = sphi 0, %s43
    %s46 = sphi 0, %s45
    %s60 = sphi 0, %s46
    %s64 = sphi 0, %s64
    %s66 = sphi 0, %s64
    %s67 = sphi 0, %s66
    %s81 = sphi 0, %s67
    %s87 = sphi 0, %s89
    %s90 = sphi 0, %s87
    %s91 = sphi 0, %s90
    %s107 = sphi 0, %s91
  $region4: #{facebox_forward.22} parent=0 // loop_header_branch
    %12 = sbr.rel (%p10) target = $region8
  $region5: #{facebox_forward.22} parent=0 // loop_body
    %s14 = ssub.s32 %s9, 1
    %s15 = ssub.s32 %s9, 2
    %s16 = sadd.s32 %s9, 1
    %s17 = ssub.s32 %s9, %s16
    %p18 = scmp.eq.s32.totalorder %s17, 0
    %s20 = sadd.s32 %s19, 1
    %s21 = scalar_select %p18, %s19, %s20
    %p24 = pneg %p18
    %p25 = scmp.eq.s32.totalorder %s9, 1
    %p26 = por %p24, %p25
    %p27 = scmp.ne.s32.totalorder %s19, %s22
    %p28 = scmp.eq.s32.totalorder %s9, 0
    %p29 = por %p27, %p28
    %p30 = scmp.ne.s32.totalorder %s19, %s22
    %p31 = scmp.eq.s32.totalorder %s14, 1
    %p32 = por %p30, %p31
    %p33 = scmp.ne.s32.totalorder %s22, %s23
    %p34 = scmp.eq.s32.totalorder %s14, 0
    %p35 = por %p33, %p34
    %p36 = scmp.ne.s32.totalorder %s22, %s23
    %p37 = scmp.eq.s32.totalorder %s15, 1
    %p38 = por %p36, %p37
    %p40 = scmp.ne.s32.totalorder %s23, %s39
    %p41 = scmp.eq.s32.totalorder %s15, 0
    %p42 = por %p40, %p41
    %s44 = sadd.s32 %s43, 1
    %p47 = scmp.eq.s32.totalorder %s9, 1
    %p48 = scmp.ne.s32.totalorder %s43, %s45
    %p49 = scmp.eq.s32.totalorder %s9, 0
    %p50 = por %p48, %p49
    %p51 = scmp.ne.s32.totalorder %s43, %s45
    %p52 = scmp.eq.s32.totalorder %s14, 1
    %p53 = por %p51, %p52
    %p54 = scmp.ne.s32.totalorder %s45, %s46
    %p55 = scmp.eq.s32.totalorder %s14, 0
    %p56 = por %p54, %p55
    %p57 = scmp.ne.s32.totalorder %s45, %s46
    %p58 = scmp.eq.s32.totalorder %s15, 1
    %p59 = por %p57, %p58
    %p61 = scmp.ne.s32.totalorder %s46, %s60
    %p62 = scmp.eq.s32.totalorder %s15, 0
    %p63 = por %p61, %p62
    %s65 = sadd.s32 %s64, 1
    %p68 = scmp.eq.s32.totalorder %s9, 1
    %p69 = scmp.ne.s32.totalorder %s64, %s66
    %p70 = scmp.eq.s32.totalorder %s9, 0
    %p71 = por %p69, %p70
    %p72 = scmp.ne.s32.totalorder %s64, %s66
    %p73 = scmp.eq.s32.totalorder %s14, 1
    %p74 = por %p72, %p73
    %p75 = scmp.ne.s32.totalorder %s66, %s67
    %p76 = scmp.eq.s32.totalorder %s14, 0
    %p77 = por %p75, %p76
    %p78 = scmp.ne.s32.totalorder %s66, %s67
    %p79 = scmp.eq.s32.totalorder %s15, 1
    %p80 = por %p78, %p79
    %p82 = scmp.ne.s32.totalorder %s67, %s81
    %p83 = scmp.eq.s32.totalorder %s15, 0
    %p84 = por %p82, %p83
    %s85 = ssub.s32 %s9, %s16
    %p86 = scmp.eq.s32.totalorder %s85, 0
    %s88 = sadd.s32 %s87, 1
    %s89 = scalar_select %p86, %s87, %s88
    %p92 = pneg %p86
    %p93 = scmp.eq.s32.totalorder %s9, 1
    %p94 = por %p92, %p93
    %p95 = scmp.ne.s32.totalorder %s87, %s90
    %p96 = scmp.eq.s32.totalorder %s9, 0
    %p97 = por %p95, %p96
    %p98 = scmp.ne.s32.totalorder %s87, %s90
    %p99 = scmp.eq.s32.totalorder %s14, 1
    %p100 = por %p98, %p99
    %p101 = scmp.ne.s32.totalorder %s90, %s91
    %p102 = scmp.eq.s32.totalorder %s14, 0
    %p103 = por %p101, %p102
    %p104 = scmp.ne.s32.totalorder %s90, %s91
    %p105 = scmp.eq.s32.totalorder %s15, 1
    %p106 = por %p104, %p105
    %p108 = scmp.ne.s32.totalorder %s91, %s107
    %p109 = scmp.eq.s32.totalorder %s15, 0
    %p110 = por %p108, %p109
    %p111 = scmp.le.s32.totalorder 1, %s9
    %p112 = scmp.lt.s32.totalorder %s9, 3
    %p113 = pnand %p111, %p112
    %p114 = pneg %p113
    // Predicated region
    $region9: #{facebox_forward.22} parent=5 // pred_check
      _
    $region10: #{facebox_forward.22} parent=5 // pred_check_branch
      %116 = sbr.rel (%p113) target = $region12
    $region11: #{facebox_forward.22} parent=5 // pred_region
      %s117 = ssub.s32 %s9, 1
      // Predicated region
      $region13: #{facebox_forward.22} parent=11 // pred_check
        %p118 = pneg %p56
      $region14: #{facebox_forward.22} parent=11 // pred_check_branch
        %120 = sbr.rel (%p118) target = $region16
      $region15: #{facebox_forward.22} parent=11 // pred_region
        _
      $region16: #{facebox_forward.22} parent=11 // pred_fallthru
        _
      // Predicated region
      $region17: #{facebox_forward.22} parent=11 // pred_check
        %p121 = pneg %p77
      $region18: #{facebox_forward.22} parent=11 // pred_check_branch
        %123 = sbr.rel (%p121) target = $region20
      $region19: #{facebox_forward.22} parent=11 // pred_region
        _
      $region20: #{facebox_forward.22} parent=11 // pred_fallthru
        _
    $region12: #{facebox_forward.22} parent=5 // pred_fallthru
      _
    %p124 = scmp.lt.s32.totalorder %s9, 2
    // Predicated region
    $region21: #{facebox_forward.22} parent=5 // pred_check
      %p125 = pneg %p124
    $region22: #{facebox_forward.22} parent=5 // pred_check_branch
      %127 = sbr.rel (%p125) target = $region24
    $region23: #{facebox_forward.22} parent=5 // pred_region
      // Predicated region
      $region25: #{facebox_forward.22} parent=23 // pred_check
        %p128 = pneg %p29
      $region26: #{facebox_forward.22} parent=23 // pred_check_branch
        %130 = sbr.rel (%p128) target = $region28
      $region27: #{facebox_forward.22} parent=23 // pred_region
        %s131 = smul.u32 8, %s9
        %p132 = scmp.lt.s32.totalorder %s131, 15
        %s133 = scalar_select %p132, %s131, 15
        %s134 = smul.addr %s133, 10
        %s135 = smul.addr %s134, 4
        %s136 = scalar_lea.vmem %s0, %s135
        %s137 = smul.u32 8, %s9
      $region28: #{facebox_forward.22} parent=23 // pred_fallthru
        _
    $region24: #{facebox_forward.22} parent=5 // pred_fallthru
      _
    %p138 = scmp.le.s32.totalorder 1, %s9
    %p139 = scmp.lt.s32.totalorder %s9, 3
    %p140 = pnand %p138, %p139
    %p141 = pneg %p140
    // Predicated region
    $region29: #{facebox_forward.22} parent=5 // pred_check
      _
    $region30: #{facebox_forward.22} parent=5 // pred_check_branch
      %143 = sbr.rel (%p140) target = $region32
    $region31: #{facebox_forward.22} parent=5 // pred_region
      %s144 = ssub.s32 %s9, 1
      %s145 = smul.u32 8, %s14
      %p146 = scmp.lt.s32.totalorder %s145, 15
      %s147 = scalar_select %p146, %s145, 15
      %s148 = smul.addr %s147, 10
      %s149 = smul.addr %s148, 4
      %s150 = scalar_lea.vmem %s0, %s149
      %p151 = pneg %p35
      %p152 = pneg %p32
      %p153 = pneg %p56
      %p154 = pneg %p53
      %p155 = pneg %p77
      %p156 = pneg %p74
      %p157 = pneg %p103
      %p158 = pneg %p100
      %s159 = smul.u32 8, %s14
      %p160 = scmp.lt.s32.totalorder %s159, 15
      %s161 = scalar_select %p160, %s159, 15
      %s162 = smul.addr %s161, 4
      %s163 = scalar_lea.vmem %s3, %s162
      %s164 = smul.u32 8, %s14
      %p165 = scmp.lt.s32.totalorder %s164, 15
      %s166 = scalar_select %p165, %s164, 15
      %s167 = smul.addr %s166, 10
      %s168 = smul.addr %s167, 4
      %s169 = scalar_lea.vmem %s0, %s168
      %s170 = smul.u32 8, %s14
      %s171 = smul.u32 8, %s14
      %p172 = scmp.lt.s32.totalorder %s171, 15
      %s173 = scalar_select %p172, %s171, 15
      %s174 = smul.addr %s173, 4
      %s175 = scalar_lea.vmem %s3, %s174
      %s176 = smul.u32 8, %s14
      %v178 = vld [vmem:[%s169] sm:$0xff]
      %v179 = vld [vmem:[%s169 + $0x8] sm:$0xff]
      %v180 = vld [vmem:[%s169 + $0x10] sm:$0xff]
      %v181 = vld [vmem:[%s169 + $0x18] sm:$0xff]
      %v182 = vld [vmem:[%s169 + $0x20] sm:$0xff]
      %v183 = vld [vmem:[%s169 + $0x28] sm:$0xff]
      %v184 = vld [vmem:[%s169 + $0x30] sm:$0xff]
      %v185 = vld [vmem:[%s169 + $0x38] sm:$0xff]
      %v186 = vld [vmem:[%s169 + $0x40] sm:$0xff]
      %v187 = vld [vmem:[%s169 + $0x48] sm:$0xff]
      %v188 = vld [vmem:[%s169 + $0x50] sm:$0xff]
      %v189 = vld [vmem:[%s169 + $0x58] sm:$0xff]
      %v190 = vld [vmem:[%s169 + $0x60] sm:$0xff]
      %v191 = vld [vmem:[%s169 + $0x68] sm:$0xff]
      %v192 = vld [vmem:[%s169 + $0x70] sm:$0xff]
      %v193 = vld [vmem:[%s169 + $0x78] sm:$0xff]
      %v194 = vld [vmem:[%s169 + $0x80] sm:$0xff]
      %v195 = vld [vmem:[%s169 + $0x88] sm:$0xff]
      %v196 = vld [vmem:[%s169 + $0x90] sm:$0xff]
      %v197 = vld [vmem:[%s169 + $0x98] sm:$0xff]
      %v198 = vld [vmem:[%s169 + $0xa0] sm:$0xff]
      %v199 = vld [vmem:[%s169 + $0xa8] sm:$0xff]
      %v200 = vld [vmem:[%s169 + $0xb0] sm:$0xff]
      %v201 = vld [vmem:[%s169 + $0xb8] sm:$0xff]
      %v202 = vld [vmem:[%s169 + $0xc0] sm:$0xff]
      %v203 = vld [vmem:[%s169 + $0xc8] sm:$0xff]
      %v204 = vld [vmem:[%s169 + $0xd0] sm:$0xff]
      %v205 = vld [vmem:[%s169 + $0xd8] sm:$0xff]
      %v206 = vld [vmem:[%s169 + $0xe0] sm:$0xff]
      %v207 = vld [vmem:[%s169 + $0xe8] sm:$0xff]
      %v208 = vld [vmem:[%s169 + $0xf0] sm:$0xff]
      %v209 = vld [vmem:[%s169 + $0xf8] sm:$0xff]
      %v210 = vld [vmem:[%s169 + $0x100] sm:$0xff]
      %v211 = vld [vmem:[%s169 + $0x108] sm:$0xff]
      %v212 = vld [vmem:[%s169 + $0x110] sm:$0xff]
      %v213 = vld [vmem:[%s169 + $0x118] sm:$0xff]
      %v214 = vld [vmem:[%s169 + $0x120] sm:$0xff]
      %v215 = vld [vmem:[%s169 + $0x128] sm:$0xff]
      %v216 = vld [vmem:[%s169 + $0x130] sm:$0xff]
      %v217 = vld [vmem:[%s169 + $0x138] sm:$0xff]
      %v218 = vld [vmem:[%s1] sm:$0xf]
      %v219 = vld [vmem:[%s1 + $0x4] sm:$0xf]
      %v220 = vld [vmem:[%s1 + $0x8] sm:$0xf]
      %v221 = vld [vmem:[%s1 + $0xc] sm:$0xf]
      %v222 = vld [vmem:[%s1 + $0x10] sm:$0xf]
      %v223 = vld [vmem:[%s1 + $0x14] sm:$0xf]
      %v224 = vld [vmem:[%s1 + $0x18] sm:$0xf]
      %v225 = vld [vmem:[%s1 + $0x1c] sm:$0xf]
      %v226 = vld [vmem:[%s1 + $0x20] sm:$0xf]
      %v227 = vld [vmem:[%s1 + $0x24] sm:$0xf]
      %v228 = vld [vmem:[%s1 + $0x28] sm:$0xf]
      %v229 = vld [vmem:[%s1 + $0x2c] sm:$0xf]
      %v230 = vld [vmem:[%s1 + $0x30] sm:$0xf]
      %v231 = vld [vmem:[%s1 + $0x34] sm:$0xf]
      %v232 = vld [vmem:[%s1 + $0x38] sm:$0xf]
      %v233 = vld [vmem:[%s1 + $0x3c] sm:$0xf]
      %v234 = vld [vmem:[%s1 + $0x40] sm:$0xf]
      %v235 = vld [vmem:[%s1 + $0x44] sm:$0xf]
      %v236 = vld [vmem:[%s1 + $0x48] sm:$0xf]
      %v237 = vld [vmem:[%s1 + $0x4c] sm:$0xf]
      %v238 = vld [vmem:[%s1 + $0x50] sm:$0xf]
      %v239 = vld [vmem:[%s1 + $0x54] sm:$0xf]
      %v240 = vld [vmem:[%s1 + $0x58] sm:$0xf]
      %v241 = vld [vmem:[%s1 + $0x5c] sm:$0xf]
      %v242 = vld [vmem:[%s1 + $0x60] sm:$0xf]
      %v243 = vld [vmem:[%s1 + $0x64] sm:$0xf]
      %v244 = vld [vmem:[%s1 + $0x68] sm:$0xf]
      %v245 = vld [vmem:[%s1 + $0x6c] sm:$0xf]
      %v246 = vld [vmem:[%s1 + $0x70] sm:$0xf]
      %v247 = vld [vmem:[%s1 + $0x74] sm:$0xf]
      %v248 = vld [vmem:[%s1 + $0x78] sm:$0xf]
      %v249 = vld [vmem:[%s1 + $0x7c] sm:$0xf]
      %v250 = vld [vmem:[%s1 + $0x80] sm:$0xf]
      %v251 = vld [vmem:[%s1 + $0x84] sm:$0xf]
      %v252 = vld [vmem:[%s1 + $0x88] sm:$0xf]
      %v253 = vld [vmem:[%s1 + $0x8c] sm:$0xf]
      %v254 = vld [vmem:[%s1 + $0x90] sm:$0xf]
      %v255 = vld [vmem:[%s1 + $0x94] sm:$0xf]
      %v256 = vld [vmem:[%s1 + $0x98] sm:$0xf]
      %v257 = vld [vmem:[%s1 + $0x9c] sm:$0xf]
      %v258 = vld [vmem:[%s1 + $0xa0] sm:$0xf]
      %v259 = vld [vmem:[%s1 + $0xa4] sm:$0xf]
      %v260 = vld [vmem:[%s1 + $0xa8] sm:$0xf]
      %v261 = vld [vmem:[%s1 + $0xac] sm:$0xf]
      %v262 = vld [vmem:[%s1 + $0xb0] sm:$0xf]
      %v263 = vld [vmem:[%s1 + $0xb4] sm:$0xf]
      %v264 = vld [vmem:[%s1 + $0xb8] sm:$0xf]
      %v265 = vld [vmem:[%s1 + $0xbc] sm:$0xf]
      %v266 = vld [vmem:[%s1 + $0xc0] sm:$0xf]
      %v267 = vld [vmem:[%s1 + $0xc4] sm:$0xf]
      %v268 = vld [vmem:[%s1 + $0xc8] sm:$0xf]
      %v269 = vld [vmem:[%s1 + $0xcc] sm:$0xf]
      %v270 = vld [vmem:[%s1 + $0xd0] sm:$0xf]
      %v271 = vld [vmem:[%s1 + $0xd4] sm:$0xf]
      %v272 = vld [vmem:[%s1 + $0xd8] sm:$0xf]
      %v273 = vld [vmem:[%s1 + $0xdc] sm:$0xf]
      %v274 = vld [vmem:[%s1 + $0xe0] sm:$0xf]
      %v275 = vld [vmem:[%s1 + $0xe4] sm:$0xf]
      %v276 = vld [vmem:[%s1 + $0xe8] sm:$0xf]
      %v277 = vld [vmem:[%s1 + $0xec] sm:$0xf]
      %v278 = vld [vmem:[%s1 + $0xf0] sm:$0xf]
      %v279 = vld [vmem:[%s1 + $0xf4] sm:$0xf]
      %v280 = vld [vmem:[%s1 + $0xf8] sm:$0xf]
      %v281 = vld [vmem:[%s1 + $0xfc] sm:$0xf]
      %v282 = vld [vmem:[%s1 + $0x100] sm:$0xf]
      %v283 = vld [vmem:[%s1 + $0x104] sm:$0xf]
      %v284 = vld [vmem:[%s1 + $0x108] sm:$0xf]
      %v285 = vld [vmem:[%s1 + $0x10c] sm:$0xf]
      %v286 = vld [vmem:[%s1 + $0x110] sm:$0xf]
      %v287 = vld [vmem:[%s1 + $0x114] sm:$0xf]
      %v288 = vld [vmem:[%s1 + $0x118] sm:$0xf]
      %v289 = vld [vmem:[%s1 + $0x11c] sm:$0xf]
      %v290 = vld [vmem:[%s1 + $0x120] sm:$0xf]
      %v291 = vld [vmem:[%s1 + $0x124] sm:$0xf]
      %v292 = vld [vmem:[%s1 + $0x128] sm:$0xf]
      %v293 = vld [vmem:[%s1 + $0x12c] sm:$0xf]
      %v294 = vld [vmem:[%s1 + $0x130] sm:$0xf]
      %v295 = vld [vmem:[%s1 + $0x134] sm:$0xf]
      %v296 = vld [vmem:[%s1 + $0x138] sm:$0xf]
      %v297 = vld [vmem:[%s1 + $0x13c] sm:$0xf]
      %v298 = vld [vmem:[%s1 + $0x140] sm:$0xf]
      %v299 = vld [vmem:[%s1 + $0x144] sm:$0xf]
      %v300 = vld [vmem:[%s1 + $0x148] sm:$0xf]
      %v301 = vld [vmem:[%s1 + $0x14c] sm:$0xf]
      %v302 = vld [vmem:[%s1 + $0x150] sm:$0xf]
      %v303 = vld [vmem:[%s1 + $0x154] sm:$0xf]
      %v304 = vld [vmem:[%s1 + $0x158] sm:$0xf]
      %v305 = vld [vmem:[%s1 + $0x15c] sm:$0xf]
      %v306 = vld [vmem:[%s1 + $0x160] sm:$0xf]
      %v307 = vld [vmem:[%s1 + $0x164] sm:$0xf]
      %v308 = vld [vmem:[%s1 + $0x168] sm:$0xf]
      %v309 = vld [vmem:[%s1 + $0x16c] sm:$0xf]
      %v310 = vld [vmem:[%s1 + $0x170] sm:$0xf]
      %v311 = vld [vmem:[%s1 + $0x174] sm:$0xf]
      %v312 = vld [vmem:[%s1 + $0x178] sm:$0xf]
      %v313 = vld [vmem:[%s1 + $0x17c] sm:$0xf]
      %v314 = vld [vmem:[%s1 + $0x180] sm:$0xf]
      %v315 = vld [vmem:[%s1 + $0x184] sm:$0xf]
      %v316 = vld [vmem:[%s1 + $0x188] sm:$0xf]
      %v317 = vld [vmem:[%s1 + $0x18c] sm:$0xf]
      %v318 = vld [vmem:[%s1 + $0x190] sm:$0xf]
      %v319 = vld [vmem:[%s1 + $0x194] sm:$0xf]
      %v320 = vld [vmem:[%s1 + $0x198] sm:$0xf]
      %v321 = vld [vmem:[%s1 + $0x19c] sm:$0xf]
      %v322 = vld [vmem:[%s1 + $0x1a0] sm:$0xf]
      %v323 = vld [vmem:[%s1 + $0x1a4] sm:$0xf]
      %v324 = vld [vmem:[%s1 + $0x1a8] sm:$0xf]
      %v325 = vld [vmem:[%s1 + $0x1ac] sm:$0xf]
      %v326 = vld [vmem:[%s1 + $0x1b0] sm:$0xf]
      %v327 = vld [vmem:[%s1 + $0x1b4] sm:$0xf]
      %v328 = vld [vmem:[%s1 + $0x1b8] sm:$0xf]
      %v329 = vld [vmem:[%s1 + $0x1bc] sm:$0xf]
      %v330 = vld [vmem:[%s1 + $0x1c0] sm:$0xf]
      %v331 = vld [vmem:[%s1 + $0x1c4] sm:$0xf]
      %v332 = vld [vmem:[%s1 + $0x1c8] sm:$0xf]
      %v333 = vld [vmem:[%s1 + $0x1cc] sm:$0xf]
      %v334 = vld [vmem:[%s1 + $0x1d0] sm:$0xf]
      %v335 = vld [vmem:[%s1 + $0x1d4] sm:$0xf]
      %v336 = vld [vmem:[%s1 + $0x1d8] sm:$0xf]
      %v337 = vld [vmem:[%s1 + $0x1dc] sm:$0xf]
      %v338 = vld [vmem:[%s1 + $0x1e0] sm:$0xf]
      %v339 = vld [vmem:[%s1 + $0x1e4] sm:$0xf]
      %v340 = vld [vmem:[%s1 + $0x1e8] sm:$0xf]
      %v341 = vld [vmem:[%s1 + $0x1ec] sm:$0xf]
      %v342 = vld [vmem:[%s1 + $0x1f0] sm:$0xf]
      %v343 = vld [vmem:[%s1 + $0x1f4] sm:$0xf]
      %v344 = vld [vmem:[%s1 + $0x1f8] sm:$0xf]
      %v345 = vld [vmem:[%s1 + $0x1fc] sm:$0xf]
      %v346 = vld [vmem:[%s1 + $0x200] sm:$0xf]
      %v347 = vld [vmem:[%s1 + $0x204] sm:$0xf]
      %v348 = vld [vmem:[%s1 + $0x208] sm:$0xf]
      %v349 = vld [vmem:[%s1 + $0x20c] sm:$0xf]
      %v350 = vld [vmem:[%s1 + $0x210] sm:$0xf]
      %v351 = vld [vmem:[%s1 + $0x214] sm:$0xf]
      %v352 = vld [vmem:[%s1 + $0x218] sm:$0xf]
      %v353 = vld [vmem:[%s1 + $0x21c] sm:$0xf]
      %v354 = vld [vmem:[%s1 + $0x220] sm:$0xf]
      %v355 = vld [vmem:[%s1 + $0x224] sm:$0xf]
      %v356 = vld [vmem:[%s1 + $0x228] sm:$0xf]
      %v357 = vld [vmem:[%s1 + $0x22c] sm:$0xf]
      %v358 = vld [vmem:[%s1 + $0x230] sm:$0xf]
      %v359 = vld [vmem:[%s1 + $0x234] sm:$0xf]
      %v360 = vld [vmem:[%s1 + $0x238] sm:$0xf]
      %v361 = vld [vmem:[%s1 + $0x23c] sm:$0xf]
      %v362 = vld [vmem:[%s1 + $0x240] sm:$0xf]
      %v363 = vld [vmem:[%s1 + $0x244] sm:$0xf]
      %v364 = vld [vmem:[%s1 + $0x248] sm:$0xf]
      %v365 = vld [vmem:[%s1 + $0x24c] sm:$0xf]
      %v366 = vld [vmem:[%s1 + $0x250] sm:$0xf]
      %v367 = vld [vmem:[%s1 + $0x254] sm:$0xf]
      %v368 = vld [vmem:[%s1 + $0x258] sm:$0xf]
      %v369 = vld [vmem:[%s1 + $0x25c] sm:$0xf]
      %v370 = vld [vmem:[%s1 + $0x260] sm:$0xf]
      %v371 = vld [vmem:[%s1 + $0x264] sm:$0xf]
      %v372 = vld [vmem:[%s1 + $0x268] sm:$0xf]
      %v373 = vld [vmem:[%s1 + $0x26c] sm:$0xf]
      %v374 = vld [vmem:[%s1 + $0x270] sm:$0xf]
      %v375 = vld [vmem:[%s1 + $0x274] sm:$0xf]
      %v376 = vld [vmem:[%s1 + $0x278] sm:$0xf]
      %v377 = vld [vmem:[%s1 + $0x27c] sm:$0xf]
      %v378 = vld [vmem:[%s2] sm:$0x1]
      %v380 = vlaneseq
      %v381 = vshrl.u32 %v380, 7
      %v382 = vsub.s32 0, %v381
      %v383 = vrot.slane %v378, %v382
      %v425 = vunpack.c.l.b16 %v178
      %v426 = vunpack.c.h.b16 %v178
      %v427 = vunpack.c.l.b16 %v179
      %v428 = vunpack.c.h.b16 %v179
      %v429 = vunpack.c.l.b16 %v180
      %v430 = vunpack.c.h.b16 %v180
      %v431 = vunpack.c.l.b16 %v181
      %v432 = vunpack.c.h.b16 %v181
      %v433 = vunpack.c.l.b16 %v182
      %v434 = vunpack.c.h.b16 %v182
      %v435 = vunpack.c.l.b16 %v183
      %v436 = vunpack.c.h.b16 %v183
      %v437 = vunpack.c.l.b16 %v184
      %v438 = vunpack.c.h.b16 %v184
      %v439 = vunpack.c.l.b16 %v185
      %v440 = vunpack.c.h.b16 %v185
      %v441 = vunpack.c.l.b16 %v186
      %v442 = vunpack.c.h.b16 %v186
      %v443 = vunpack.c.l.b16 %v187
      %v444 = vunpack.c.h.b16 %v187
      %v445 = vunpack.c.l.b16 %v188
      %v446 = vunpack.c.h.b16 %v188
      %v447 = vunpack.c.l.b16 %v189
      %v448 = vunpack.c.h.b16 %v189
      %v449 = vunpack.c.l.b16 %v190
      %v450 = vunpack.c.h.b16 %v190
      %v451 = vunpack.c.l.b16 %v191
      %v452 = vunpack.c.h.b16 %v191
      %v453 = vunpack.c.l.b16 %v192
      %v454 = vunpack.c.h.b16 %v192
      %v455 = vunpack.c.l.b16 %v193
      %v456 = vunpack.c.h.b16 %v193
      %v457 = vunpack.c.l.b16 %v194
      %v458 = vunpack.c.h.b16 %v194
      %v459 = vunpack.c.l.b16 %v195
      %v460 = vunpack.c.h.b16 %v195
      %v461 = vunpack.c.l.b16 %v196
      %v462 = vunpack.c.h.b16 %v196
      %v463 = vunpack.c.l.b16 %v197
      %v464 = vunpack.c.h.b16 %v197
      %v465 = vunpack.c.l.b16 %v198
      %v466 = vunpack.c.h.b16 %v198
      %v467 = vunpack.c.l.b16 %v199
      %v468 = vunpack.c.h.b16 %v199
      %v469 = vunpack.c.l.b16 %v200
      %v470 = vunpack.c.h.b16 %v200
      %v471 = vunpack.c.l.b16 %v201
      %v472 = vunpack.c.h.b16 %v201
      %v473 = vunpack.c.l.b16 %v202
      %v474 = vunpack.c.h.b16 %v202
      %v475 = vunpack.c.l.b16 %v203
      %v476 = vunpack.c.h.b16 %v203
      %v477 = vunpack.c.l.b16 %v204
      %v478 = vunpack.c.h.b16 %v204
      %v479 = vunpack.c.l.b16 %v205
      %v480 = vunpack.c.h.b16 %v205
      %v481 = vunpack.c.l.b16 %v206
      %v482 = vunpack.c.h.b16 %v206
      %v483 = vunpack.c.l.b16 %v207
      %v484 = vunpack.c.h.b16 %v207
      %v485 = vunpack.c.l.b16 %v208
      %v486 = vunpack.c.h.b16 %v208
      %v487 = vunpack.c.l.b16 %v209
      %v488 = vunpack.c.h.b16 %v209
      %v489 = vunpack.c.l.b16 %v210
      %v490 = vunpack.c.h.b16 %v210
      %v491 = vunpack.c.l.b16 %v211
      %v492 = vunpack.c.h.b16 %v211
      %v493 = vunpack.c.l.b16 %v212
      %v494 = vunpack.c.h.b16 %v212
      %v495 = vunpack.c.l.b16 %v213
      %v496 = vunpack.c.h.b16 %v213
      %v497 = vunpack.c.l.b16 %v214
      %v498 = vunpack.c.h.b16 %v214
      %v499 = vunpack.c.l.b16 %v215
      %v500 = vunpack.c.h.b16 %v215
      %v501 = vunpack.c.l.b16 %v216
      %v502 = vunpack.c.h.b16 %v216
      %v503 = vunpack.c.l.b16 %v217
      %v504 = vunpack.c.h.b16 %v217
      %v505 = vpack.c.b16 %v435, %v425
      %v506 = vpack.c.b16 %v436, %v426
      %v507 = vpack.c.b16 %v437, %v427
      %v508 = vpack.c.b16 %v438, %v428
      %v509 = vpack.c.b16 %v439, %v429
      %v510 = vpack.c.b16 %v440, %v430
      %v511 = vpack.c.b16 %v441, %v431
      %v512 = vpack.c.b16 %v442, %v432
      %v513 = vpack.c.b16 %v443, %v433
      %v514 = vpack.c.b16 %v444, %v434
      %v515 = vpack.c.b16 %v455, %v445
      %v516 = vpack.c.b16 %v456, %v446
      %v517 = vpack.c.b16 %v457, %v447
      %v518 = vpack.c.b16 %v458, %v448
      %v519 = vpack.c.b16 %v459, %v449
      %v520 = vpack.c.b16 %v460, %v450
      %v521 = vpack.c.b16 %v461, %v451
      %v522 = vpack.c.b16 %v462, %v452
      %v523 = vpack.c.b16 %v463, %v453
      %v524 = vpack.c.b16 %v464, %v454
      %v525 = vpack.c.b16 %v475, %v465
      %v526 = vpack.c.b16 %v476, %v466
      %v527 = vpack.c.b16 %v477, %v467
      %v528 = vpack.c.b16 %v478, %v468
      %v529 = vpack.c.b16 %v479, %v469
      %v530 = vpack.c.b16 %v480, %v470
      %v531 = vpack.c.b16 %v481, %v471
      %v532 = vpack.c.b16 %v482, %v472
      %v533 = vpack.c.b16 %v483, %v473
      %v534 = vpack.c.b16 %v484, %v474
      %v535 = vpack.c.b16 %v495, %v485
      %v536 = vpack.c.b16 %v496, %v486
      %v537 = vpack.c.b16 %v497, %v487
      %v538 = vpack.c.b16 %v498, %v488
      %v539 = vpack.c.b16 %v499, %v489
      %v540 = vpack.c.b16 %v500, %v490
      %v541 = vpack.c.b16 %v501, %v491
      %v542 = vpack.c.b16 %v502, %v492
      %v543 = vpack.c.b16 %v503, %v493
      %v544 = vpack.c.b16 %v504, %v494
      %v745 = vunpack.c.l.b16 %v218
      %v746 = vunpack.c.l.b16 %v219
      %v747 = vunpack.c.l.b16 %v220
      %v748 = vunpack.c.l.b16 %v221
      %v749 = vunpack.c.l.b16 %v222
      %v750 = vunpack.c.l.b16 %v223
      %v751 = vunpack.c.l.b16 %v224
      %v752 = vunpack.c.l.b16 %v225
      %v753 = vunpack.c.l.b16 %v226
      %v754 = vunpack.c.l.b16 %v227
      %v755 = vunpack.c.l.b16 %v228
      %v756 = vunpack.c.l.b16 %v229
      %v757 = vunpack.c.l.b16 %v230
      %v758 = vunpack.c.l.b16 %v231
      %v759 = vunpack.c.l.b16 %v232
      %v760 = vunpack.c.l.b16 %v233
      %v761 = vunpack.c.l.b16 %v234
      %v762 = vunpack.c.l.b16 %v235
      %v763 = vunpack.c.l.b16 %v236
      %v764 = vunpack.c.l.b16 %v237
      %v765 = vunpack.c.l.b16 %v238
      %v766 = vunpack.c.l.b16 %v239
      %v767 = vunpack.c.l.b16 %v240
      %v768 = vunpack.c.l.b16 %v241
      %v769 = vunpack.c.l.b16 %v242
      %v770 = vunpack.c.l.b16 %v243
      %v771 = vunpack.c.l.b16 %v244
      %v772 = vunpack.c.l.b16 %v245
      %v773 = vunpack.c.l.b16 %v246
      %v774 = vunpack.c.l.b16 %v247
      %v775 = vunpack.c.l.b16 %v248
      %v776 = vunpack.c.l.b16 %v249
      %v777 = vunpack.c.l.b16 %v250
      %v778 = vunpack.c.l.b16 %v251
      %v779 = vunpack.c.l.b16 %v252
      %v780 = vunpack.c.l.b16 %v253
      %v781 = vunpack.c.l.b16 %v254
      %v782 = vunpack.c.l.b16 %v255
      %v783 = vunpack.c.l.b16 %v256
      %v784 = vunpack.c.l.b16 %v257
      %v785 = vunpack.c.l.b16 %v258
      %v786 = vunpack.c.l.b16 %v259
      %v787 = vunpack.c.l.b16 %v260
      %v788 = vunpack.c.l.b16 %v261
      %v789 = vunpack.c.l.b16 %v262
      %v790 = vunpack.c.l.b16 %v263
      %v791 = vunpack.c.l.b16 %v264
      %v792 = vunpack.c.l.b16 %v265
      %v793 = vunpack.c.l.b16 %v266
      %v794 = vunpack.c.l.b16 %v267
      %v795 = vunpack.c.l.b16 %v268
      %v796 = vunpack.c.l.b16 %v269
      %v797 = vunpack.c.l.b16 %v270
      %v798 = vunpack.c.l.b16 %v271
      %v799 = vunpack.c.l.b16 %v272
      %v800 = vunpack.c.l.b16 %v273
      %v801 = vunpack.c.l.b16 %v274
      %v802 = vunpack.c.l.b16 %v275
      %v803 = vunpack.c.l.b16 %v276
      %v804 = vunpack.c.l.b16 %v277
      %v805 = vunpack.c.l.b16 %v278
      %v806 = vunpack.c.l.b16 %v279
      %v807 = vunpack.c.l.b16 %v280
      %v808 = vunpack.c.l.b16 %v281
      %v809 = vunpack.c.l.b16 %v282
      %v810 = vunpack.c.l.b16 %v283
      %v811 = vunpack.c.l.b16 %v284
      %v812 = vunpack.c.l.b16 %v285
      %v813 = vunpack.c.l.b16 %v286
      %v814 = vunpack.c.l.b16 %v287
      %v815 = vunpack.c.l.b16 %v288
      %v816 = vunpack.c.l.b16 %v289
      %v817 = vunpack.c.l.b16 %v290
      %v818 = vunpack.c.l.b16 %v291
      %v819 = vunpack.c.l.b16 %v292
      %v820 = vunpack.c.l.b16 %v293
      %v821 = vunpack.c.l.b16 %v294
      %v822 = vunpack.c.l.b16 %v295
      %v823 = vunpack.c.l.b16 %v296
      %v824 = vunpack.c.l.b16 %v297
      %v825 = vunpack.c.l.b16 %v298
      %v826 = vunpack.c.l.b16 %v299
      %v827 = vunpack.c.l.b16 %v300
      %v828 = vunpack.c.l.b16 %v301
      %v829 = vunpack.c.l.b16 %v302
      %v830 = vunpack.c.l.b16 %v303
      %v831 = vunpack.c.l.b16 %v304
      %v832 = vunpack.c.l.b16 %v305
      %v833 = vunpack.c.l.b16 %v306
      %v834 = vunpack.c.l.b16 %v307
      %v835 = vunpack.c.l.b16 %v308
      %v836 = vunpack.c.l.b16 %v309
      %v837 = vunpack.c.l.b16 %v310
      %v838 = vunpack.c.l.b16 %v311
      %v839 = vunpack.c.l.b16 %v312
      %v840 = vunpack.c.l.b16 %v313
      %v841 = vunpack.c.l.b16 %v314
      %v842 = vunpack.c.l.b16 %v315
      %v843 = vunpack.c.l.b16 %v316
      %v844 = vunpack.c.l.b16 %v317
      %v845 = vunpack.c.l.b16 %v318
      %v846 = vunpack.c.l.b16 %v319
      %v847 = vunpack.c.l.b16 %v320
      %v848 = vunpack.c.l.b16 %v321
      %v849 = vunpack.c.l.b16 %v322
      %v850 = vunpack.c.l.b16 %v323
      %v851 = vunpack.c.l.b16 %v324
      %v852 = vunpack.c.l.b16 %v325
      %v853 = vunpack.c.l.b16 %v326
      %v854 = vunpack.c.l.b16 %v327
      %v855 = vunpack.c.l.b16 %v328
      %v856 = vunpack.c.l.b16 %v329
      %v857 = vunpack.c.l.b16 %v330
      %v858 = vunpack.c.l.b16 %v331
      %v859 = vunpack.c.l.b16 %v332
      %v860 = vunpack.c.l.b16 %v333
      %v861 = vunpack.c.l.b16 %v334
      %v862 = vunpack.c.l.b16 %v335
      %v863 = vunpack.c.l.b16 %v336
      %v864 = vunpack.c.l.b16 %v337
      %v865 = vunpack.c.l.b16 %v338
      %v866 = vunpack.c.l.b16 %v339
      %v867 = vunpack.c.l.b16 %v340
      %v868 = vunpack.c.l.b16 %v341
      %v869 = vunpack.c.l.b16 %v342
      %v870 = vunpack.c.l.b16 %v343
      %v871 = vunpack.c.l.b16 %v344
      %v872 = vunpack.c.l.b16 %v345
      %v873 = vunpack.c.l.b16 %v346
      %v874 = vunpack.c.l.b16 %v347
      %v875 = vunpack.c.l.b16 %v348
      %v876 = vunpack.c.l.b16 %v349
      %v877 = vunpack.c.l.b16 %v350
      %v878 = vunpack.c.l.b16 %v351
      %v879 = vunpack.c.l.b16 %v352
      %v880 = vunpack.c.l.b16 %v353
      %v881 = vunpack.c.l.b16 %v354
      %v882 = vunpack.c.l.b16 %v355
      %v883 = vunpack.c.l.b16 %v356
      %v884 = vunpack.c.l.b16 %v357
      %v885 = vunpack.c.l.b16 %v358
      %v886 = vunpack.c.l.b16 %v359
      %v887 = vunpack.c.l.b16 %v360
      %v888 = vunpack.c.l.b16 %v361
      %v889 = vunpack.c.l.b16 %v362
      %v890 = vunpack.c.l.b16 %v363
      %v891 = vunpack.c.l.b16 %v364
      %v892 = vunpack.c.l.b16 %v365
      %v893 = vunpack.c.l.b16 %v366
      %v894 = vunpack.c.l.b16 %v367
      %v895 = vunpack.c.l.b16 %v368
      %v896 = vunpack.c.l.b16 %v369
      %v897 = vunpack.c.l.b16 %v370
      %v898 = vunpack.c.l.b16 %v371
      %v899 = vunpack.c.l.b16 %v372
      %v900 = vunpack.c.l.b16 %v373
      %v901 = vunpack.c.l.b16 %v374
      %v902 = vunpack.c.l.b16 %v375
      %v903 = vunpack.c.l.b16 %v376
      %v904 = vunpack.c.l.b16 %v377
      %v905 = vpack.c.b16 %v746, %v745
      %v906 = vpack.c.b16 %v748, %v747
      %v907 = vpack.c.b16 %v750, %v749
      %v908 = vpack.c.b16 %v752, %v751
      %v909 = vpack.c.b16 %v754, %v753
      %v910 = vpack.c.b16 %v756, %v755
      %v911 = vpack.c.b16 %v758, %v757
      %v912 = vpack.c.b16 %v760, %v759
      %v913 = vpack.c.b16 %v762, %v761
      %v914 = vpack.c.b16 %v764, %v763
      %v915 = vpack.c.b16 %v766, %v765
      %v916 = vpack.c.b16 %v768, %v767
      %v917 = vpack.c.b16 %v770, %v769
      %v918 = vpack.c.b16 %v772, %v771
      %v919 = vpack.c.b16 %v774, %v773
      %v920 = vpack.c.b16 %v776, %v775
      %v921 = vpack.c.b16 %v778, %v777
      %v922 = vpack.c.b16 %v780, %v779
      %v923 = vpack.c.b16 %v782, %v781
      %v924 = vpack.c.b16 %v784, %v783
      %v925 = vpack.c.b16 %v786, %v785
      %v926 = vpack.c.b16 %v788, %v787
      %v927 = vpack.c.b16 %v790, %v789
      %v928 = vpack.c.b16 %v792, %v791
      %v929 = vpack.c.b16 %v794, %v793
      %v930 = vpack.c.b16 %v796, %v795
      %v931 = vpack.c.b16 %v798, %v797
      %v932 = vpack.c.b16 %v800, %v799
      %v933 = vpack.c.b16 %v802, %v801
      %v934 = vpack.c.b16 %v804, %v803
      %v935 = vpack.c.b16 %v806, %v805
      %v936 = vpack.c.b16 %v808, %v807
      %v937 = vpack.c.b16 %v810, %v809
      %v938 = vpack.c.b16 %v812, %v811
      %v939 = vpack.c.b16 %v814, %v813
      %v940 = vpack.c.b16 %v816, %v815
      %v941 = vpack.c.b16 %v818, %v817
      %v942 = vpack.c.b16 %v820, %v819
      %v943 = vpack.c.b16 %v822, %v821
      %v944 = vpack.c.b16 %v824, %v823
      %v945 = vpack.c.b16 %v826, %v825
      %v946 = vpack.c.b16 %v828, %v827
      %v947 = vpack.c.b16 %v830, %v829
      %v948 = vpack.c.b16 %v832, %v831
      %v949 = vpack.c.b16 %v834, %v833
      %v950 = vpack.c.b16 %v836, %v835
      %v951 = vpack.c.b16 %v838, %v837
      %v952 = vpack.c.b16 %v840, %v839
      %v953 = vpack.c.b16 %v842, %v841
      %v954 = vpack.c.b16 %v844, %v843
      %v955 = vpack.c.b16 %v846, %v845
      %v956 = vpack.c.b16 %v848, %v847
      %v957 = vpack.c.b16 %v850, %v849
      %v958 = vpack.c.b16 %v852, %v851
      %v959 = vpack.c.b16 %v854, %v853
      %v960 = vpack.c.b16 %v856, %v855
      %v961 = vpack.c.b16 %v858, %v857
      %v962 = vpack.c.b16 %v860, %v859
      %v963 = vpack.c.b16 %v862, %v861
      %v964 = vpack.c.b16 %v864, %v863
      %v965 = vpack.c.b16 %v866, %v865
      %v966 = vpack.c.b16 %v868, %v867
      %v967 = vpack.c.b16 %v870, %v869
      %v968 = vpack.c.b16 %v872, %v871
      %v969 = vpack.c.b16 %v874, %v873
      %v970 = vpack.c.b16 %v876, %v875
      %v971 = vpack.c.b16 %v878, %v877
      %v972 = vpack.c.b16 %v880, %v879
      %v973 = vpack.c.b16 %v882, %v881
      %v974 = vpack.c.b16 %v884, %v883
      %v975 = vpack.c.b16 %v886, %v885
      %v976 = vpack.c.b16 %v888, %v887
      %v977 = vpack.c.b16 %v890, %v889
      %v978 = vpack.c.b16 %v892, %v891
      %v979 = vpack.c.b16 %v894, %v893
      %v980 = vpack.c.b16 %v896, %v895
      %v981 = vpack.c.b16 %v898, %v897
      %v982 = vpack.c.b16 %v900, %v899
      %v983 = vpack.c.b16 %v902, %v901
      %v984 = vpack.c.b16 %v904, %v903
      %1065 = vmatprep.subr.bf16.mxu0 0
      %1066 = vmatpush1.bf16.msra.mxu0 %v912
      %1067 = vmatprep.subr.bf16.mxu0 0
      %1068 = vmatpush1.bf16.msra.mxu0 %v911
      %1069 = vmatprep.subr.bf16.mxu0 0
      %1070 = vmatpush1.bf16.msra.mxu0 %v910
      %1071 = vmatprep.subr.bf16.mxu0 0
      %1072 = vmatpush1.bf16.msra.mxu0 %v909
      %1073 = vmatprep.subr.bf16.mxu0 0
      %1074 = vmatpush1.bf16.msra.mxu0 %v908
      %1075 = vmatprep.subr.bf16.mxu0 0
      %1076 = vmatpush1.bf16.msra.mxu0 %v907
      %1077 = vmatprep.subr.bf16.mxu0 0
      %1078 = vmatpush1.bf16.msra.mxu0 %v906
      %1079 = vmatprep.subr.bf16.mxu0 0
      %1080 = vmatpush1.bf16.msra.mxu0 %v905
      %1081 = vmatprep.subr.bf16.mxu0 0
      %1082 = vmatpush2.bf16.msra.mxu0 %v920
      %1083 = vmatprep.subr.bf16.mxu0 0
      %1084 = vmatpush2.bf16.msra.mxu0 %v919
      %1085 = vmatprep.subr.bf16.mxu0 0
      %1086 = vmatpush2.bf16.msra.mxu0 %v918
      %1087 = vmatprep.subr.bf16.mxu0 0
      %1088 = vmatpush2.bf16.msra.mxu0 %v917
      %1089 = vmatprep.subr.bf16.mxu0 0
      %1090 = vmatpush2.bf16.msra.mxu0 %v916
      %1091 = vmatprep.subr.bf16.mxu0 0
      %1092 = vmatpush2.bf16.msra.mxu0 %v915
      %1093 = vmatprep.subr.bf16.mxu0 0
      %1094 = vmatpush2.bf16.msra.mxu0 %v914
      %1095 = vmatprep.subr.bf16.mxu0 0
      %1096 = vmatpush2.bf16.msra.mxu0 %v913
      %1097 = vmatprep.mubr.bf16.mxu0 %v506
      %1098 = vmatmul.mubr.bf16.gmra.mxu0 %v505
      %v1099 = vpop.f32.mrf.mxu0
      %v1100 = vadd.f32 %v383, %v1099
      %v1101 = vpop.f32.mrf.mxu0
      %v1102 = vpop.f32.mrf.mxu0
      %v1103 = vadd.f32 %v383, %v1102
      %v1104 = vpop.f32.mrf.mxu0
      %1105 = vmatprep.mubr.bf16.mxu0 %v516
      %1106 = vmatmul.mubr.bf16.gmra.mxu0 %v515
      %v1107 = vpop.f32.mrf.mxu0
      %v1108 = vadd.f32 %v383, %v1107
      %v1109 = vpop.f32.mrf.mxu0
      %v1110 = vpop.f32.mrf.mxu0
      %v1111 = vadd.f32 %v383, %v1110
      %v1112 = vpop.f32.mrf.mxu0
      %1113 = vmatprep.mubr.bf16.mxu0 %v526
      %1114 = vmatmul.mubr.bf16.gmra.mxu0 %v525
      %v1115 = vpop.f32.mrf.mxu0
      %v1116 = vadd.f32 %v383, %v1115
      %v1117 = vpop.f32.mrf.mxu0
      %v1118 = vpop.f32.mrf.mxu0
      %v1119 = vadd.f32 %v383, %v1118
      %v1120 = vpop.f32.mrf.mxu0
      %1121 = vmatprep.mubr.bf16.mxu0 %v536
      %1122 = vmatmul.mubr.bf16.gmra.mxu0 %v535
      %v1123 = vpop.f32.mrf.mxu0
      %v1124 = vadd.f32 %v383, %v1123
      %v1125 = vpop.f32.mrf.mxu0
      %v1126 = vpop.f32.mrf.mxu0
      %v1127 = vadd.f32 %v383, %v1126
      %v1128 = vpop.f32.mrf.mxu0
      %1129 = vdwg.mxu0
      %1130 = vmatprep.subr.bf16.mxu0 0
      %1131 = vmatpush1.bf16.msra.mxu0 %v928
      %1132 = vmatprep.subr.bf16.mxu0 0
      %1133 = vmatpush1.bf16.msra.mxu0 %v927
      %1134 = vmatprep.subr.bf16.mxu0 0
      %1135 = vmatpush1.bf16.msra.mxu0 %v926
      %1136 = vmatprep.subr.bf16.mxu0 0
      %1137 = vmatpush1.bf16.msra.mxu0 %v925
      %1138 = vmatprep.subr.bf16.mxu0 0
      %1139 = vmatpush1.bf16.msra.mxu0 %v924
      %1140 = vmatprep.subr.bf16.mxu0 0
      %1141 = vmatpush1.bf16.msra.mxu0 %v923
      %1142 = vmatprep.subr.bf16.mxu0 0
      %1143 = vmatpush1.bf16.msra.mxu0 %v922
      %1144 = vmatprep.subr.bf16.mxu0 0
      %1145 = vmatpush1.bf16.msra.mxu0 %v921
      %1146 = vmatprep.subr.bf16.mxu0 0
      %1147 = vmatpush2.bf16.msra.mxu0 %v936
      %1148 = vmatprep.subr.bf16.mxu0 0
      %1149 = vmatpush2.bf16.msra.mxu0 %v935
      %1150 = vmatprep.subr.bf16.mxu0 0
      %1151 = vmatpush2.bf16.msra.mxu0 %v934
      %1152 = vmatprep.subr.bf16.mxu0 0
      %1153 = vmatpush2.bf16.msra.mxu0 %v933
      %1154 = vmatprep.subr.bf16.mxu0 0
      %1155 = vmatpush2.bf16.msra.mxu0 %v932
      %1156 = vmatprep.subr.bf16.mxu0 0
      %1157 = vmatpush2.bf16.msra.mxu0 %v931
      %1158 = vmatprep.subr.bf16.mxu0 0
      %1159 = vmatpush2.bf16.msra.mxu0 %v930
      %1160 = vmatprep.subr.bf16.mxu0 0
      %1161 = vmatpush2.bf16.msra.mxu0 %v929
      %1162 = vmatprep.mubr.bf16.mxu0 %v508
      %1163 = vmatmul.mubr.bf16.gmra.mxu0 %v507
      %v1164 = vpop.f32.mrf.mxu0
      %v1165 = vadd.f32 %v1100, %v1164
      %v1166 = vpop.f32.mrf.mxu0
      %v1167 = vpop.f32.mrf.mxu0
      %v1168 = vadd.f32 %v1103, %v1167
      %v1169 = vpop.f32.mrf.mxu0
      %1170 = vmatprep.mubr.bf16.mxu0 %v518
      %1171 = vmatmul.mubr.bf16.gmra.mxu0 %v517
      %v1172 = vpop.f32.mrf.mxu0
      %v1173 = vadd.f32 %v1108, %v1172
      %v1174 = vpop.f32.mrf.mxu0
      %v1175 = vpop.f32.mrf.mxu0
      %v1176 = vadd.f32 %v1111, %v1175
      %v1177 = vpop.f32.mrf.mxu0
      %1178 = vmatprep.mubr.bf16.mxu0 %v528
      %1179 = vmatmul.mubr.bf16.gmra.mxu0 %v527
      %v1180 = vpop.f32.mrf.mxu0
      %v1181 = vadd.f32 %v1116, %v1180
      %v1182 = vpop.f32.mrf.mxu0
      %v1183 = vpop.f32.mrf.mxu0
      %v1184 = vadd.f32 %v1119, %v1183
      %v1185 = vpop.f32.mrf.mxu0
      %1186 = vmatprep.mubr.bf16.mxu0 %v538
      %1187 = vmatmul.mubr.bf16.gmra.mxu0 %v537
      %v1188 = vpop.f32.mrf.mxu0
      %v1189 = vadd.f32 %v1124, %v1188
      %v1190 = vpop.f32.mrf.mxu0
      %v1191 = vpop.f32.mrf.mxu0
      %v1192 = vadd.f32 %v1127, %v1191
      %v1193 = vpop.f32.mrf.mxu0
      %1194 = vdwg.mxu0
      %1195 = vmatprep.subr.bf16.mxu0 0
      %1196 = vmatpush1.bf16.msra.mxu0 %v944
      %1197 = vmatprep.subr.bf16.mxu0 0
      %1198 = vmatpush1.bf16.msra.mxu0 %v943
      %1199 = vmatprep.subr.bf16.mxu0 0
      %1200 = vmatpush1.bf16.msra.mxu0 %v942
      %1201 = vmatprep.subr.bf16.mxu0 0
      %1202 = vmatpush1.bf16.msra.mxu0 %v941
      %1203 = vmatprep.subr.bf16.mxu0 0
      %1204 = vmatpush1.bf16.msra.mxu0 %v940
      %1205 = vmatprep.subr.bf16.mxu0 0
      %1206 = vmatpush1.bf16.msra.mxu0 %v939
      %1207 = vmatprep.subr.bf16.mxu0 0
      %1208 = vmatpush1.bf16.msra.mxu0 %v938
      %1209 = vmatprep.subr.bf16.mxu0 0
      %1210 = vmatpush1.bf16.msra.mxu0 %v937
      %1211 = vmatprep.subr.bf16.mxu0 0
      %1212 = vmatpush2.bf16.msra.mxu0 %v952
      %1213 = vmatprep.subr.bf16.mxu0 0
      %1214 = vmatpush2.bf16.msra.mxu0 %v951
      %1215 = vmatprep.subr.bf16.mxu0 0
      %1216 = vmatpush2.bf16.msra.mxu0 %v950
      %1217 = vmatprep.subr.bf16.mxu0 0
      %1218 = vmatpush2.bf16.msra.mxu0 %v949
      %1219 = vmatprep.subr.bf16.mxu0 0
      %1220 = vmatpush2.bf16.msra.mxu0 %v948
      %1221 = vmatprep.subr.bf16.mxu0 0
      %1222 = vmatpush2.bf16.msra.mxu0 %v947
      %1223 = vmatprep.subr.bf16.mxu0 0
      %1224 = vmatpush2.bf16.msra.mxu0 %v946
      %1225 = vmatprep.subr.bf16.mxu0 0
      %1226 = vmatpush2.bf16.msra.mxu0 %v945
      %1227 = vmatprep.mubr.bf16.mxu0 %v510
      %1228 = vmatmul.mubr.bf16.gmra.mxu0 %v509
      %v1229 = vpop.f32.mrf.mxu0
      %v1230 = vadd.f32 %v1165, %v1229
      %v1231 = vpop.f32.mrf.mxu0
      %v1232 = vpop.f32.mrf.mxu0
      %v1233 = vadd.f32 %v1168, %v1232
      %v1234 = vpop.f32.mrf.mxu0
      %1235 = vmatprep.mubr.bf16.mxu0 %v520
      %1236 = vmatmul.mubr.bf16.gmra.mxu0 %v519
      %v1237 = vpop.f32.mrf.mxu0
      %v1238 = vadd.f32 %v1173, %v1237
      %v1239 = vpop.f32.mrf.mxu0
      %v1240 = vpop.f32.mrf.mxu0
      %v1241 = vadd.f32 %v1176, %v1240
      %v1242 = vpop.f32.mrf.mxu0
      %1243 = vmatprep.mubr.bf16.mxu0 %v530
      %1244 = vmatmul.mubr.bf16.gmra.mxu0 %v529
      %v1245 = vpop.f32.mrf.mxu0
      %v1246 = vadd.f32 %v1181, %v1245
      %v1247 = vpop.f32.mrf.mxu0
      %v1248 = vpop.f32.mrf.mxu0
      %v1249 = vadd.f32 %v1184, %v1248
      %v1250 = vpop.f32.mrf.mxu0
      %1251 = vmatprep.mubr.bf16.mxu0 %v540
      %1252 = vmatmul.mubr.bf16.gmra.mxu0 %v539
      %v1253 = vpop.f32.mrf.mxu0
      %v1254 = vadd.f32 %v1189, %v1253
      %v1255 = vpop.f32.mrf.mxu0
      %v1256 = vpop.f32.mrf.mxu0
      %v1257 = vadd.f32 %v1192, %v1256
      %v1258 = vpop.f32.mrf.mxu0
      %1259 = vdwg.mxu0
      %1260 = vmatprep.subr.bf16.mxu0 0
      %1261 = vmatpush1.bf16.msra.mxu0 %v960
      %1262 = vmatprep.subr.bf16.mxu0 0
      %1263 = vmatpush1.bf16.msra.mxu0 %v959
      %1264 = vmatprep.subr.bf16.mxu0 0
      %1265 = vmatpush1.bf16.msra.mxu0 %v958
      %1266 = vmatprep.subr.bf16.mxu0 0
      %1267 = vmatpush1.bf16.msra.mxu0 %v957
      %1268 = vmatprep.subr.bf16.mxu0 0
      %1269 = vmatpush1.bf16.msra.mxu0 %v956
      %1270 = vmatprep.subr.bf16.mxu0 0
      %1271 = vmatpush1.bf16.msra.mxu0 %v955
      %1272 = vmatprep.subr.bf16.mxu0 0
      %1273 = vmatpush1.bf16.msra.mxu0 %v954
      %1274 = vmatprep.subr.bf16.mxu0 0
      %1275 = vmatpush1.bf16.msra.mxu0 %v953
      %1276 = vmatprep.subr.bf16.mxu0 0
      %1277 = vmatpush2.bf16.msra.mxu0 %v968
      %1278 = vmatprep.subr.bf16.mxu0 0
      %1279 = vmatpush2.bf16.msra.mxu0 %v967
      %1280 = vmatprep.subr.bf16.mxu0 0
      %1281 = vmatpush2.bf16.msra.mxu0 %v966
      %1282 = vmatprep.subr.bf16.mxu0 0
      %1283 = vmatpush2.bf16.msra.mxu0 %v965
      %1284 = vmatprep.subr.bf16.mxu0 0
      %1285 = vmatpush2.bf16.msra.mxu0 %v964
      %1286 = vmatprep.subr.bf16.mxu0 0
      %1287 = vmatpush2.bf16.msra.mxu0 %v963
      %1288 = vmatprep.subr.bf16.mxu0 0
      %1289 = vmatpush2.bf16.msra.mxu0 %v962
      %1290 = vmatprep.subr.bf16.mxu0 0
      %1291 = vmatpush2.bf16.msra.mxu0 %v961
      %1292 = vmatprep.mubr.bf16.mxu0 %v512
      %1293 = vmatmul.mubr.bf16.gmra.mxu0 %v511
      %v1294 = vpop.f32.mrf.mxu0
      %v1295 = vadd.f32 %v1230, %v1294
      %v1296 = vpop.f32.mrf.mxu0
      %v1297 = vpop.f32.mrf.mxu0
      %v1298 = vadd.f32 %v1233, %v1297
      %v1299 = vpop.f32.mrf.mxu0
      %1300 = vmatprep.mubr.bf16.mxu0 %v522
      %1301 = vmatmul.mubr.bf16.gmra.mxu0 %v521
      %v1302 = vpop.f32.mrf.mxu0
      %v1303 = vadd.f32 %v1238, %v1302
      %v1304 = vpop.f32.mrf.mxu0
      %v1305 = vpop.f32.mrf.mxu0
      %v1306 = vadd.f32 %v1241, %v1305
      %v1307 = vpop.f32.mrf.mxu0
      %1308 = vmatprep.mubr.bf16.mxu0 %v532
      %1309 = vmatmul.mubr.bf16.gmra.mxu0 %v531
      %v1310 = vpop.f32.mrf.mxu0
      %v1311 = vadd.f32 %v1246, %v1310
      %v1312 = vpop.f32.mrf.mxu0
      %v1313 = vpop.f32.mrf.mxu0
      %v1314 = vadd.f32 %v1249, %v1313
      %v1315 = vpop.f32.mrf.mxu0
      %1316 = vmatprep.mubr.bf16.mxu0 %v542
      %1317 = vmatmul.mubr.bf16.gmra.mxu0 %v541
      %v1318 = vpop.f32.mrf.mxu0
      %v1319 = vadd.f32 %v1254, %v1318
      %v1320 = vpop.f32.mrf.mxu0
      %v1321 = vpop.f32.mrf.mxu0
      %v1322 = vadd.f32 %v1257, %v1321
      %v1323 = vpop.f32.mrf.mxu0
      %1324 = vdwg.mxu0
      %1325 = vmatprep.subr.bf16.mxu0 0
      %1326 = vmatpush1.bf16.msra.mxu0 %v976
      %1327 = vmatprep.subr.bf16.mxu0 0
      %1328 = vmatpush1.bf16.msra.mxu0 %v975
      %1329 = vmatprep.subr.bf16.mxu0 0
      %1330 = vmatpush1.bf16.msra.mxu0 %v974
      %1331 = vmatprep.subr.bf16.mxu0 0
      %1332 = vmatpush1.bf16.msra.mxu0 %v973
      %1333 = vmatprep.subr.bf16.mxu0 0
      %1334 = vmatpush1.bf16.msra.mxu0 %v972
      %1335 = vmatprep.subr.bf16.mxu0 0
      %1336 = vmatpush1.bf16.msra.mxu0 %v971
      %1337 = vmatprep.subr.bf16.mxu0 0
      %1338 = vmatpush1.bf16.msra.mxu0 %v970
      %1339 = vmatprep.subr.bf16.mxu0 0
      %1340 = vmatpush1.bf16.msra.mxu0 %v969
      %1341 = vmatprep.subr.bf16.mxu0 0
      %1342 = vmatpush2.bf16.msra.mxu0 %v984
      %1343 = vmatprep.subr.bf16.mxu0 0
      %1344 = vmatpush2.bf16.msra.mxu0 %v983
      %1345 = vmatprep.subr.bf16.mxu0 0
      %1346 = vmatpush2.bf16.msra.mxu0 %v982
      %1347 = vmatprep.subr.bf16.mxu0 0
      %1348 = vmatpush2.bf16.msra.mxu0 %v981
      %1349 = vmatprep.subr.bf16.mxu0 0
      %1350 = vmatpush2.bf16.msra.mxu0 %v980
      %1351 = vmatprep.subr.bf16.mxu0 0
      %1352 = vmatpush2.bf16.msra.mxu0 %v979
      %1353 = vmatprep.subr.bf16.mxu0 0
      %1354 = vmatpush2.bf16.msra.mxu0 %v978
      %1355 = vmatprep.subr.bf16.mxu0 0
      %1356 = vmatpush2.bf16.msra.mxu0 %v977
      %1357 = vmatprep.mubr.bf16.mxu0 %v514
      %1358 = vmatmul.mubr.bf16.gmra.mxu0 %v513
      %v1359 = vpop.f32.mrf.mxu0
      %v1360 = vadd.f32 %v1295, %v1359
      %v1361 = vpop.f32.mrf.mxu0
      %v1362 = vpop.f32.mrf.mxu0
      %v1363 = vadd.f32 %v1298, %v1362
      %v1364 = vpop.f32.mrf.mxu0
      %1365 = vmatprep.mubr.bf16.mxu0 %v524
      %1366 = vmatmul.mubr.bf16.gmra.mxu0 %v523
      %v1367 = vpop.f32.mrf.mxu0
      %v1368 = vadd.f32 %v1303, %v1367
      %v1369 = vpop.f32.mrf.mxu0
      %v1370 = vpop.f32.mrf.mxu0
      %v1371 = vadd.f32 %v1306, %v1370
      %v1372 = vpop.f32.mrf.mxu0
      %1373 = vmatprep.mubr.bf16.mxu0 %v534
      %1374 = vmatmul.mubr.bf16.gmra.mxu0 %v533
      %v1375 = vpop.f32.mrf.mxu0
      %v1376 = vadd.f32 %v1311, %v1375
      %v1377 = vpop.f32.mrf.mxu0
      %v1378 = vpop.f32.mrf.mxu0
      %v1379 = vadd.f32 %v1314, %v1378
      %v1380 = vpop.f32.mrf.mxu0
      %1381 = vmatprep.mubr.bf16.mxu0 %v544
      %1382 = vmatmul.mubr.bf16.gmra.mxu0 %v543
      %v1383 = vpop.f32.mrf.mxu0
      %v1384 = vadd.f32 %v1319, %v1383
      %v1385 = vpop.f32.mrf.mxu0
      %v1386 = vpop.f32.mrf.mxu0
      %v1387 = vadd.f32 %v1322, %v1386
      %v1388 = vpop.f32.mrf.mxu0
      %1389 = vdwg.mxu0
      %v1390 = vmax.f32 %v1360, 0.0
      %v1391 = vmax.f32 %v1363, 0.0
      %v1392 = vmax.f32 %v1368, 0.0
      %v1393 = vmax.f32 %v1371, 0.0
      %v1394 = vmax.f32 %v1376, 0.0
      %v1395 = vmax.f32 %v1379, 0.0
      %v1396 = vmax.f32 %v1384, 0.0
      %v1397 = vmax.f32 %v1387, 0.0
      %v1398 = vpack.c.bf16 %v1391, %v1390
      %v1399 = vpack.c.bf16 %v1393, %v1392
      %v1400 = vpack.c.bf16 %v1395, %v1394
      %v1401 = vpack.c.bf16 %v1397, %v1396
      %v1406 = vunpack.c.l.b16 %v1398
      %v1407 = vunpack.c.h.b16 %v1398
      %v1408 = vunpack.c.l.b16 %v1399
      %v1409 = vunpack.c.h.b16 %v1399
      %v1410 = vunpack.c.l.b16 %v1400
      %v1411 = vunpack.c.h.b16 %v1400
      %v1412 = vunpack.c.l.b16 %v1401
      %v1413 = vunpack.c.h.b16 %v1401
      %v1414 = vpack.c.b16 %v1406, %v1406
      %v1415 = vpack.c.b16 %v1407, %v1407
      %v1416 = vpack.c.b16 %v1408, %v1408
      %v1417 = vpack.c.b16 %v1409, %v1409
      %v1418 = vpack.c.b16 %v1410, %v1410
      %v1419 = vpack.c.b16 %v1411, %v1411
      %v1420 = vpack.c.b16 %v1412, %v1412
      %v1421 = vpack.c.b16 %v1413, %v1413
      %1430 = vst [vmem:[%s175] sm:$0xf] %v1414
      %1431 = vst [vmem:[%s175 + $0x4] sm:$0xf] %v1415
      %1432 = vst [vmem:[%s175 + $0x8] sm:$0xf] %v1416
      %1433 = vst [vmem:[%s175 + $0xc] sm:$0xf] %v1417
      %1434 = vst [vmem:[%s175 + $0x10] sm:$0xf] %v1418
      %1435 = vst [vmem:[%s175 + $0x14] sm:$0xf] %v1419
      %1436 = vst [vmem:[%s175 + $0x18] sm:$0xf] %v1420
      %1437 = vst [vmem:[%s175 + $0x1c] sm:$0xf] %v1421
      %s1438 = smul.u32 8, %s14
      %p1439 = scmp.lt.s32.totalorder %s1438, 15
      %s1440 = scalar_select %p1439, %s1438, 15
      %s1441 = smul.addr %s1440, 4
      %s1442 = scalar_lea.vmem %s3, %s1441
      // Predicated region
      $region33: #{facebox_forward.22} parent=31 // pred_check
        %p1443 = pneg %p100
      $region34: #{facebox_forward.22} parent=31 // pred_check_branch
        %1445 = sbr.rel (%p1443) target = $region36
      $region35: #{facebox_forward.22} parent=31 // pred_region
        %s1446 = smul.u32 8, %s14
      $region36: #{facebox_forward.22} parent=31 // pred_fallthru
        _
    $region32: #{facebox_forward.22} parent=5 // pred_fallthru
      _
    %p1447 = scmp.le.s32.totalorder 2, %s9
    // Predicated region
    $region37: #{facebox_forward.22} parent=5 // pred_check
      %p1448 = pneg %p1447
    $region38: #{facebox_forward.22} parent=5 // pred_check_branch
      %1450 = sbr.rel (%p1448) target = $region40
    $region39: #{facebox_forward.22} parent=5 // pred_region
      %s1451 = ssub.s32 %s9, 2
      // Predicated region
      $region41: #{facebox_forward.22} parent=39 // pred_check
        %p1452 = pneg %p106
      $region42: #{facebox_forward.22} parent=39 // pred_check_branch
        %1454 = sbr.rel (%p1452) target = $region44
      $region43: #{facebox_forward.22} parent=39 // pred_region
        %s1455 = smul.u32 8, %s15
        %p1456 = scmp.lt.s32.totalorder %s1455, 15
        %s1457 = scalar_select %p1456, %s1455, 15
        %s1458 = smul.addr %s1457, 4
        %s1459 = scalar_lea.vmem %s3, %s1458
      $region44: #{facebox_forward.22} parent=39 // pred_fallthru
        _
    $region40: #{facebox_forward.22} parent=5 // pred_fallthru
      _
  $region6: #{facebox_forward.22} parent=0 // loop_footer
    %s13 = sadd.s32 1, %s9
  $region7: #{facebox_forward.22} parent=0 // loop_footer_branch
    %8 = sbr.rel target = $region3
  $region8: #{facebox_forward.22} parent=0 // loop_exit
    _

// kernel: facebox_forward.23
$region0: #{facebox_forward.23}
  #allocation0 [shape = 'u32[]', space=smem, size = 0x4, offset = 0x4, fixed_abs, tag = 'smem constant byte address 0x4 - core index']
  #allocation1 [shape = 'u32[144,128]{1,0:T(1,128)}', space=vmem, size = 0x12000, scoped, tag = 'internal scratch']
  %s0 = inlined_call_operand.vmem [shape: bf16[9,32,128], index: 0, kind: input, shape index: {}]
  %s1 = inlined_call_operand.vmem [shape: bf16[32,128], index: 1, kind: output, shape index: {}]
  %s2 = sld [smem:[#allocation0]]
  $region78: #{facebox_forward.23} parent=0
    _
  %s4 = ssub.s32 1, %s2
  %s5 = scalar_select 0, %s4, %s2
  $region1: #{facebox_forward.23} parent=0
    #allocation2 [shape = 'u8[73728]{0}', space=vmem, size = 0x12000, scoped, tag = 'input window, operand 0']
    loop: start=0, step=1, limit=4
    $region2: #{facebox_forward.23} parent=1 // loop_pre_header
      _
    $region3: #{facebox_forward.23} parent=1 // loop_header
      %s7 = sphi 0, %s11
      %p8 = scmp.ge.s32.totalorder %s7, 4
      %s17 = sphi 0, %s19
      %s20 = sphi 0, %s17
      %s21 = sphi 0, %s20
      %s37 = sphi 0, %s21
      %s43 = sphi 0, %s45
      %s46 = sphi 0, %s43
      %s47 = sphi 0, %s46
      %s63 = sphi 0, %s47
    $region4: #{facebox_forward.23} parent=1 // loop_header_branch
      %10 = sbr.rel (%p8) target = $region8
    $region5: #{facebox_forward.23} parent=1 // loop_body
      %s12 = ssub.s32 %s7, 1
      %s13 = ssub.s32 %s7, 2
      %s14 = sadd.s32 %s7, 1
      %s15 = ssub.s32 %s7, %s14
      %p16 = scmp.eq.s32.totalorder %s15, 0
      %s18 = sadd.s32 %s17, 1
      %s19 = scalar_select %p16, %s17, %s18
      %p22 = pneg %p16
      %p23 = scmp.eq.s32.totalorder %s7, 1
      %p24 = por %p22, %p23
      %p25 = scmp.ne.s32.totalorder %s17, %s20
      %p26 = scmp.eq.s32.totalorder %s7, 0
      %p27 = por %p25, %p26
      %p28 = scmp.ne.s32.totalorder %s17, %s20
      %p29 = scmp.eq.s32.totalorder %s12, 1
      %p30 = por %p28, %p29
      %p31 = scmp.ne.s32.totalorder %s20, %s21
      %p32 = scmp.eq.s32.totalorder %s12, 0
      %p33 = por %p31, %p32
      %p34 = scmp.ne.s32.totalorder %s20, %s21
      %p35 = scmp.eq.s32.totalorder %s13, 1
      %p36 = por %p34, %p35
      %p38 = scmp.ne.s32.totalorder %s21, %s37
      %p39 = scmp.eq.s32.totalorder %s13, 0
      %p40 = por %p38, %p39
      %s41 = ssub.s32 %s7, %s14
      %p42 = scmp.eq.s32.totalorder %s41, 0
      %s44 = sadd.s32 %s43, 1
      %s45 = scalar_select %p42, %s43, %s44
      %p48 = pneg %p42
      %p49 = scmp.eq.s32.totalorder %s7, 1
      %p50 = por %p48, %p49
      %p51 = scmp.ne.s32.totalorder %s43, %s46
      %p52 = scmp.eq.s32.totalorder %s7, 0
      %p53 = por %p51, %p52
      %p54 = scmp.ne.s32.totalorder %s43, %s46
      %p55 = scmp.eq.s32.totalorder %s12, 1
      %p56 = por %p54, %p55
      %p57 = scmp.ne.s32.totalorder %s46, %s47
      %p58 = scmp.eq.s32.totalorder %s12, 0
      %p59 = por %p57, %p58
      %p60 = scmp.ne.s32.totalorder %s46, %s47
      %p61 = scmp.eq.s32.totalorder %s13, 1
      %p62 = por %p60, %p61
      %p64 = scmp.ne.s32.totalorder %s47, %s63
      %p65 = scmp.eq.s32.totalorder %s13, 0
      %p66 = por %p64, %p65
      %p67 = scmp.le.s32.totalorder 1, %s7
      %p68 = scmp.lt.s32.totalorder %s7, 3
      %p69 = pnand %p67, %p68
      %p70 = pneg %p69
      // Predicated region
      $region9: #{facebox_forward.23} parent=5 // pred_check
        _
      $region10: #{facebox_forward.23} parent=5 // pred_check_branch
        %72 = sbr.rel (%p69) target = $region12
      $region11: #{facebox_forward.23} parent=5 // pred_region
        %s73 = ssub.s32 %s7, 1
      $region12: #{facebox_forward.23} parent=5 // pred_fallthru
        _
      %p74 = scmp.lt.s32.totalorder %s7, 2
      // Predicated region
      $region13: #{facebox_forward.23} parent=5 // pred_check
        %p75 = pneg %p74
      $region14: #{facebox_forward.23} parent=5 // pred_check_branch
        %77 = sbr.rel (%p75) target = $region16
      $region15: #{facebox_forward.23} parent=5 // pred_region
        // Predicated region
        $region17: #{facebox_forward.23} parent=15 // pred_check
          %p78 = pneg %p27
        $region18: #{facebox_forward.23} parent=15 // pred_check_branch
          %80 = sbr.rel (%p78) target = $region20
        $region19: #{facebox_forward.23} parent=15 // pred_region
          %s81 = sand.u32 %s17, 1
          %s82 = sand.u32 %s17, 1
          %s83 = smul.addr %s82, 72
          %s84 = scalar_lea.vmem [#allocation2], %s83
          %s85 = smul.u32 2, %s7
          %s86 = smul.addr %s85, 4
          %s87 = scalar_lea.vmem %s0, %s86
          // Predicated region
          $region21: #{facebox_forward.23} parent=19 // pred_check
            _
          $region22: #{facebox_forward.23} parent=19 // pred_check_branch
            %89 = sbr.rel (0) target = $region24
          $region23: #{facebox_forward.23} parent=19 // pred_region
            // Predicated region
            $region25: #{facebox_forward.23} parent=23 // pred_check
              _
            $region26: #{facebox_forward.23} parent=23 // pred_check_branch
              %91 = sbr.rel target = $region28
            $region27: #{facebox_forward.23} parent=23 // pred_region
              // Predicated region
              $region40: #{facebox_forward.23} parent=27 // pred_check
                _
              $region41: #{facebox_forward.23} parent=27 // pred_check_branch
                %141 = sbr.rel (0) target = $region43
              $region42: #{facebox_forward.23} parent=27 // pred_region
                loop: start=0, step=1, limit=1
                $region44: #{facebox_forward.23} parent=42 // loop_pre_header
                  _
                $region45: #{facebox_forward.23} parent=42 // loop_header
                  %s143 = sphi 0, %s147
                  %p144 = scmp.ge.s32.totalorder %s143, 1
                  %s148 = sphi %s87, %s87
                  %s149 = sphi %s84, %s84
                $region46: #{facebox_forward.23} parent=42 // loop_header_branch
                  %146 = sbr.rel (%p144) target = $region50
                $region47: #{facebox_forward.23} parent=42 // loop_body
                  _
                $region48: #{facebox_forward.23} parent=42 // loop_footer
                  %s147 = sadd.s32 1, %s143
                $region49: #{facebox_forward.23} parent=42 // loop_footer_branch
                  %142 = sbr.rel target = $region45
                $region50: #{facebox_forward.23} parent=42 // loop_exit
                  _
                %s151 = ssub.s32 16, 1
                loop: start=0, step=1, limit=1
                $region51: #{facebox_forward.23} parent=42 // loop_pre_header
                  _
                $region52: #{facebox_forward.23} parent=42 // loop_header
                  %s153 = sphi 0, %s157
                  %p154 = scmp.ge.s32.totalorder %s153, 1
                  %s158 = sphi %s87, %s87
                  %s159 = sphi %s84, %s84
                $region53: #{facebox_forward.23} parent=42 // loop_header_branch
                  %156 = sbr.rel (%p154) target = $region57
                $region54: #{facebox_forward.23} parent=42 // loop_body
                  %v160 = vld [vmem:[%s158] sm:%s151]
                  %161 = vst [vmem:[%s159] sm:%s151] %v160
                  %v162 = vld [vmem:[%s158 + $0x4] sm:%s151]
                  %163 = vst [vmem:[%s159 + $0x4] sm:%s151] %v162
                  %v164 = vld [vmem:[%s158 + $0x10] sm:%s151]
                  %165 = vst [vmem:[%s159 + $0x8] sm:%s151] %v164
                  %v166 = vld [vmem:[%s158 + $0x14] sm:%s151]
                  %167 = vst [vmem:[%s159 + $0xc] sm:%s151] %v166
                  %v168 = vld [vmem:[%s158 + $0x20] sm:%s151]
                  %169 = vst [vmem:[%s159 + $0x10] sm:%s151] %v168
                  %v170 = vld [vmem:[%s158 + $0x24] sm:%s151]
                  %171 = vst [vmem:[%s159 + $0x14] sm:%s151] %v170
                  %v172 = vld [vmem:[%s158 + $0x30] sm:%s151]
                  %173 = vst [vmem:[%s159 + $0x18] sm:%s151] %v172
                  %v174 = vld [vmem:[%s158 + $0x34] sm:%s151]
                  %175 = vst [vmem:[%s159 + $0x1c] sm:%s151] %v174
                  %v176 = vld [vmem:[%s158 + $0x40] sm:%s151]
                  %177 = vst [vmem:[%s159 + $0x20] sm:%s151] %v176
                  %v178 = vld [vmem:[%s158 + $0x44] sm:%s151]
                  %179 = vst [vmem:[%s159 + $0x24] sm:%s151] %v178
                  %v180 = vld [vmem:[%s158 + $0x50] sm:%s151]
                  %181 = vst [vmem:[%s159 + $0x28] sm:%s151] %v180
                  %v182 = vld [vmem:[%s158 + $0x54] sm:%s151]
                  %183 = vst [vmem:[%s159 + $0x2c] sm:%s151] %v182
                  %v184 = vld [vmem:[%s158 + $0x60] sm:%s151]
                  %185 = vst [vmem:[%s159 + $0x30] sm:%s151] %v184
                  %v186 = vld [vmem:[%s158 + $0x64] sm:%s151]
                  %187 = vst [vmem:[%s159 + $0x34] sm:%s151] %v186
                  %v188 = vld [vmem:[%s158 + $0x70] sm:%s151]
                  %189 = vst [vmem:[%s159 + $0x38] sm:%s151] %v188
                  %v190 = vld [vmem:[%s158 + $0x74] sm:%s151]
                  %191 = vst [vmem:[%s159 + $0x3c] sm:%s151] %v190
                  %v192 = vld [vmem:[%s158 + $0x80] sm:%s151]
                  %193 = vst [vmem:[%s159 + $0x40] sm:%s151] %v192
                  %v194 = vld [vmem:[%s158 + $0x84] sm:%s151]
                  %195 = vst [vmem:[%s159 + $0x44] sm:%s151] %v194
                $region55: #{facebox_forward.23} parent=42 // loop_footer
                  %s157 = sadd.s32 1, %s153
                $region56: #{facebox_forward.23} parent=42 // loop_footer_branch
                  %152 = sbr.rel target = $region52
                $region57: #{facebox_forward.23} parent=42 // loop_exit
                  _
              $region43: #{facebox_forward.23} parent=27 // pred_fallthru
                _
            $region28: #{facebox_forward.23} parent=23 // pred_fallthru
              _
            // Predicated region
            $region29: #{facebox_forward.23} parent=23 // pred_check
              _
            $region30: #{facebox_forward.23} parent=23 // pred_check_branch
              %93 = sbr.rel (0) target = $region32
            $region31: #{facebox_forward.23} parent=23 // pred_region
              %s95 = ssub.s32 16, 1
              loop: start=0, step=1, limit=1
              $region33: #{facebox_forward.23} parent=31 // loop_pre_header
                _
              $region34: #{facebox_forward.23} parent=31 // loop_header
                %s97 = sphi 0, %s101
                %p98 = scmp.ge.s32.totalorder %s97, 1
                %s102 = sphi %s87, %s87
                %s103 = sphi %s84, %s84
              $region35: #{facebox_forward.23} parent=31 // loop_header_branch
                %100 = sbr.rel (%p98) target = $region39
              $region36: #{facebox_forward.23} parent=31 // loop_body
                %v104 = vld [vmem:[%s102] sm:%s95]
                %105 = vst [vmem:[%s103] sm:%s95] %v104
                %v106 = vld [vmem:[%s102 + $0x4] sm:%s95]
                %107 = vst [vmem:[%s103 + $0x4] sm:%s95] %v106
                %v108 = vld [vmem:[%s102 + $0x10] sm:%s95]
                %109 = vst [vmem:[%s103 + $0x8] sm:%s95] %v108
                %v110 = vld [vmem:[%s102 + $0x14] sm:%s95]
                %111 = vst [vmem:[%s103 + $0xc] sm:%s95] %v110
                %v112 = vld [vmem:[%s102 + $0x20] sm:%s95]
                %113 = vst [vmem:[%s103 + $0x10] sm:%s95] %v112
                %v114 = vld [vmem:[%s102 + $0x24] sm:%s95]
                %115 = vst [vmem:[%s103 + $0x14] sm:%s95] %v114
                %v116 = vld [vmem:[%s102 + $0x30] sm:%s95]
                %117 = vst [vmem:[%s103 + $0x18] sm:%s95] %v116
                %v118 = vld [vmem:[%s102 + $0x34] sm:%s95]
                %119 = vst [vmem:[%s103 + $0x1c] sm:%s95] %v118
                %v120 = vld [vmem:[%s102 + $0x40] sm:%s95]
                %121 = vst [vmem:[%s103 + $0x20] sm:%s95] %v120
                %v122 = vld [vmem:[%s102 + $0x44] sm:%s95]
                %123 = vst [vmem:[%s103 + $0x24] sm:%s95] %v122
                %v124 = vld [vmem:[%s102 + $0x50] sm:%s95]
                %125 = vst [vmem:[%s103 + $0x28] sm:%s95] %v124
                %v126 = vld [vmem:[%s102 + $0x54] sm:%s95]
                %127 = vst [vmem:[%s103 + $0x2c] sm:%s95] %v126
                %v128 = vld [vmem:[%s102 + $0x60] sm:%s95]
                %129 = vst [vmem:[%s103 + $0x30] sm:%s95] %v128
                %v130 = vld [vmem:[%s102 + $0x64] sm:%s95]
                %131 = vst [vmem:[%s103 + $0x34] sm:%s95] %v130
                %v132 = vld [vmem:[%s102 + $0x70] sm:%s95]
                %133 = vst [vmem:[%s103 + $0x38] sm:%s95] %v132
                %v134 = vld [vmem:[%s102 + $0x74] sm:%s95]
                %135 = vst [vmem:[%s103 + $0x3c] sm:%s95] %v134
                %v136 = vld [vmem:[%s102 + $0x80] sm:%s95]
                %137 = vst [vmem:[%s103 + $0x40] sm:%s95] %v136
                %v138 = vld [vmem:[%s102 + $0x84] sm:%s95]
                %139 = vst [vmem:[%s103 + $0x44] sm:%s95] %v138
              $region37: #{facebox_forward.23} parent=31 // loop_footer
                %s101 = sadd.s32 1, %s97
              $region38: #{facebox_forward.23} parent=31 // loop_footer_branch
                %96 = sbr.rel target = $region34
              $region39: #{facebox_forward.23} parent=31 // loop_exit
                _
            $region32: #{facebox_forward.23} parent=23 // pred_fallthru
              _
          $region24: #{facebox_forward.23} parent=19 // pred_fallthru
            _
          %196 = vnop
        $region20: #{facebox_forward.23} parent=15 // pred_fallthru
          _
      $region16: #{facebox_forward.23} parent=5 // pred_fallthru
        _
      %p197 = scmp.le.s32.totalorder 1, %s7
      %p198 = scmp.lt.s32.totalorder %s7, 3
      %p199 = pnand %p197, %p198
      %p200 = pneg %p199
      // Predicated region
      $region58: #{facebox_forward.23} parent=5 // pred_check
        _
      $region59: #{facebox_forward.23} parent=5 // pred_check_branch
        %202 = sbr.rel (%p199) target = $region61
      $region60: #{facebox_forward.23} parent=5 // pred_region
        %s203 = ssub.s32 %s7, 1
        %s204 = sand.u32 %s20, 1
        %s205 = sand.u32 %s20, 1
        %s206 = smul.addr %s205, 72
        %s207 = scalar_lea.vmem [#allocation2], %s206
        // Predicated region
        $region62: #{facebox_forward.23} parent=60 // pred_check
          %p208 = pneg %p33
        $region63: #{facebox_forward.23} parent=60 // pred_check_branch
          %210 = sbr.rel (%p208) target = $region65
        $region64: #{facebox_forward.23} parent=60 // pred_region
          _
        $region65: #{facebox_forward.23} parent=60 // pred_fallthru
          _
        %s211 = sand.u32 %s20, 1
        %s212 = sand.u32 %s20, 1
        %s213 = smul.addr %s212, 72
        %s214 = scalar_lea.vmem [#allocation2], %s213
        %p215 = pneg %p33
        %p216 = pneg %p30
        %p217 = pneg %p59
        %p218 = pneg %p56
        %s219 = smul.u32 2, %s12
        %p220 = scmp.lt.s32.totalorder %s219, 3
        %s221 = scalar_select %p220, %s219, 3
        %s222 = smul.addr %s221, 4
        %s223 = scalar_lea.vmem %s1, %s222
        %s224 = smul.u32 2, %s12
        %s225 = smul.u32 2, %s12
        %p226 = scmp.lt.s32.totalorder %s225, 3
        %s227 = scalar_select %p226, %s225, 3
        %s228 = smul.addr %s227, 4
        %s229 = scalar_lea.vmem %s1, %s228
        %s230 = smul.u32 2, %s12
        %v231 = vld [vmem:[%s207] sm:$0xf]
        %v232 = vld [vmem:[%s207 + $0x4] sm:$0xf]
        %s233 = scalar_lea.vmem %s207, 8 [#allocation2]
        %v234 = vld [vmem:[%s233] sm:$0xf]
        %v235 = vld [vmem:[%s233 + $0x4] sm:$0xf]
        %s236 = scalar_lea.vmem %s207, 16 [#allocation2]
        %v237 = vld [vmem:[%s236] sm:$0xf]
        %v238 = vld [vmem:[%s236 + $0x4] sm:$0xf]
        %s239 = scalar_lea.vmem %s207, 24 [#allocation2]
        %v240 = vld [vmem:[%s239] sm:$0xf]
        %v241 = vld [vmem:[%s239 + $0x4] sm:$0xf]
        %s242 = scalar_lea.vmem %s207, 32 [#allocation2]
        %v243 = vld [vmem:[%s242] sm:$0xf]
        %v244 = vld [vmem:[%s242 + $0x4] sm:$0xf]
        %s245 = scalar_lea.vmem %s207, 40 [#allocation2]
        %v246 = vld [vmem:[%s245] sm:$0xf]
        %v247 = vld [vmem:[%s245 + $0x4] sm:$0xf]
        %s248 = scalar_lea.vmem %s207, 48 [#allocation2]
        %v249 = vld [vmem:[%s248] sm:$0xf]
        %v250 = vld [vmem:[%s248 + $0x4] sm:$0xf]
        %s251 = scalar_lea.vmem %s207, 56 [#allocation2]
        %v252 = vld [vmem:[%s251] sm:$0xf]
        %v253 = vld [vmem:[%s251 + $0x4] sm:$0xf]
        %s254 = scalar_lea.vmem %s207, 64 [#allocation2]
        %v255 = vld [vmem:[%s254] sm:$0xf]
        %v256 = vld [vmem:[%s254 + $0x4] sm:$0xf]
        %v257 = vmax.bf16 %v231, %v234
        %v258 = vmax.bf16 %v232, %v235
        %v259 = vmax.bf16 %v237, %v240
        %v260 = vmax.bf16 %v238, %v241
        %v261 = vmax.bf16 %v243, %v246
        %v262 = vmax.bf16 %v244, %v247
        %v263 = vmax.bf16 %v249, %v252
        %v264 = vmax.bf16 %v250, %v253
        %v265 = vmax.bf16 %v257, %v259
        %v266 = vmax.bf16 %v258, %v260
        %v267 = vmax.bf16 %v261, %v263
        %v268 = vmax.bf16 %v262, %v264
        %v269 = vmax.bf16 %v265, %v267
        %v270 = vmax.bf16 %v266, %v268
        %v271 = vmax.bf16 %v269, %v255
        %v272 = vmax.bf16 %v270, %v256
        %273 = vst [vmem:[%s229] sm:$0xf] %v271
        %274 = vst [vmem:[%s229 + $0x4] sm:$0xf] %v272
        %s275 = smul.u32 2, %s12
        %p276 = scmp.lt.s32.totalorder %s275, 3
        %s277 = scalar_select %p276, %s275, 3
        %s278 = smul.addr %s277, 4
        %s279 = scalar_lea.vmem %s1, %s278
        // Predicated region
        $region66: #{facebox_forward.23} parent=60 // pred_check
          %p280 = pneg %p56
        $region67: #{facebox_forward.23} parent=60 // pred_check_branch
          %282 = sbr.rel (%p280) target = $region69
        $region68: #{facebox_forward.23} parent=60 // pred_region
          %s283 = smul.u32 2, %s12
        $region69: #{facebox_forward.23} parent=60 // pred_fallthru
          _
      $region61: #{facebox_forward.23} parent=5 // pred_fallthru
        _
      %p284 = scmp.le.s32.totalorder 2, %s7
      // Predicated region
      $region70: #{facebox_forward.23} parent=5 // pred_check
        %p285 = pneg %p284
      $region71: #{facebox_forward.23} parent=5 // pred_check_branch
        %287 = sbr.rel (%p285) target = $region73
      $region72: #{facebox_forward.23} parent=5 // pred_region
        %s288 = ssub.s32 %s7, 2
        // Predicated region
        $region74: #{facebox_forward.23} parent=72 // pred_check
          %p289 = pneg %p62
        $region75: #{facebox_forward.23} parent=72 // pred_check_branch
          %291 = sbr.rel (%p289) target = $region77
        $region76: #{facebox_forward.23} parent=72 // pred_region
          %s292 = smul.u32 2, %s13
          %p293 = scmp.lt.s32.totalorder %s292, 3
          %s294 = scalar_select %p293, %s292, 3
          %s295 = smul.addr %s294, 4
          %s296 = scalar_lea.vmem %s1, %s295
        $region77: #{facebox_forward.23} parent=72 // pred_fallthru
          _
      $region73: #{facebox_forward.23} parent=5 // pred_fallthru
        _
    $region6: #{facebox_forward.23} parent=1 // loop_footer
      %s11 = sadd.s32 1, %s7
    $region7: #{facebox_forward.23} parent=1 // loop_footer_branch
      %6 = sbr.rel target = $region3
    $region8: #{facebox_forward.23} parent=1 // loop_exit
      _

// kernel: facebox_forward.25
$region0: #{facebox_forward.25}
  #allocation0 [shape = 'u32[]', space=smem, size = 0x4, offset = 0x4, fixed_abs, tag = 'smem constant byte address 0x4 - core index']
  #allocation1 [shape = 'u32[144,128]{1,0:T(1,128)}', space=vmem, size = 0x12000, scoped, tag = 'internal scratch']
  %s0 = inlined_call_operand.vmem [shape: bf16[9,32,128], index: 0, kind: input, shape index: {}]
  %s1 = inlined_call_operand.vmem [shape: bf16[128,32], index: 1, kind: input, shape index: {}]
  %s2 = inlined_call_operand.vmem [shape: f32[1,32], index: 2, kind: input, shape index: {}]
  %s3 = inlined_call_operand.vmem [shape: bf16[32,32], index: 3, kind: output, shape index: {}]
  %s4 = sld [smem:[#allocation0]]
  $region86: #{facebox_forward.25} parent=0
    _
  %s6 = ssub.s32 1, %s4
  %s7 = scalar_select 0, %s6, %s4
  $region1: #{facebox_forward.25} parent=0
    #allocation2 [shape = 'u8[73728]{0}', space=vmem, size = 0x12000, scoped, tag = 'input window, operand 0']
    loop: start=0, step=1, limit=4
    $region2: #{facebox_forward.25} parent=1 // loop_pre_header
      _
    $region3: #{facebox_forward.25} parent=1 // loop_header
      %s9 = sphi 0, %s13
      %p10 = scmp.ge.s32.totalorder %s9, 4
      %s19 = sphi 0, %s21
      %s22 = sphi 0, %s19
      %s23 = sphi 0, %s22
      %s39 = sphi 0, %s23
      %s43 = sphi 0, %s43
      %s45 = sphi 0, %s43
      %s46 = sphi 0, %s45
      %s60 = sphi 0, %s46
      %s64 = sphi 0, %s64
      %s66 = sphi 0, %s64
      %s67 = sphi 0, %s66
      %s81 = sphi 0, %s67
      %s87 = sphi 0, %s89
      %s90 = sphi 0, %s87
      %s91 = sphi 0, %s90
      %s107 = sphi 0, %s91
    $region4: #{facebox_forward.25} parent=1 // loop_header_branch
      %12 = sbr.rel (%p10) target = $region8
    $region5: #{facebox_forward.25} parent=1 // loop_body
      %s14 = ssub.s32 %s9, 1
      %s15 = ssub.s32 %s9, 2
      %s16 = sadd.s32 %s9, 1
      %s17 = ssub.s32 %s9, %s16
      %p18 = scmp.eq.s32.totalorder %s17, 0
      %s20 = sadd.s32 %s19, 1
      %s21 = scalar_select %p18, %s19, %s20
      %p24 = pneg %p18
      %p25 = scmp.eq.s32.totalorder %s9, 1
      %p26 = por %p24, %p25
      %p27 = scmp.ne.s32.totalorder %s19, %s22
      %p28 = scmp.eq.s32.totalorder %s9, 0
      %p29 = por %p27, %p28
      %p30 = scmp.ne.s32.totalorder %s19, %s22
      %p31 = scmp.eq.s32.totalorder %s14, 1
      %p32 = por %p30, %p31
      %p33 = scmp.ne.s32.totalorder %s22, %s23
      %p34 = scmp.eq.s32.totalorder %s14, 0
      %p35 = por %p33, %p34
      %p36 = scmp.ne.s32.totalorder %s22, %s23
      %p37 = scmp.eq.s32.totalorder %s15, 1
      %p38 = por %p36, %p37
      %p40 = scmp.ne.s32.totalorder %s23, %s39
      %p41 = scmp.eq.s32.totalorder %s15, 0
      %p42 = por %p40, %p41
      %s44 = sadd.s32 %s43, 1
      %p47 = scmp.eq.s32.totalorder %s9, 1
      %p48 = scmp.ne.s32.totalorder %s43, %s45
      %p49 = scmp.eq.s32.totalorder %s9, 0
      %p50 = por %p48, %p49
      %p51 = scmp.ne.s32.totalorder %s43, %s45
      %p52 = scmp.eq.s32.totalorder %s14, 1
      %p53 = por %p51, %p52
      %p54 = scmp.ne.s32.totalorder %s45, %s46
      %p55 = scmp.eq.s32.totalorder %s14, 0
      %p56 = por %p54, %p55
      %p57 = scmp.ne.s32.totalorder %s45, %s46
      %p58 = scmp.eq.s32.totalorder %s15, 1
      %p59 = por %p57, %p58
      %p61 = scmp.ne.s32.totalorder %s46, %s60
      %p62 = scmp.eq.s32.totalorder %s15, 0
      %p63 = por %p61, %p62
      %s65 = sadd.s32 %s64, 1
      %p68 = scmp.eq.s32.totalorder %s9, 1
      %p69 = scmp.ne.s32.totalorder %s64, %s66
      %p70 = scmp.eq.s32.totalorder %s9, 0
      %p71 = por %p69, %p70
      %p72 = scmp.ne.s32.totalorder %s64, %s66
      %p73 = scmp.eq.s32.totalorder %s14, 1
      %p74 = por %p72, %p73
      %p75 = scmp.ne.s32.totalorder %s66, %s67
      %p76 = scmp.eq.s32.totalorder %s14, 0
      %p77 = por %p75, %p76
      %p78 = scmp.ne.s32.totalorder %s66, %s67
      %p79 = scmp.eq.s32.totalorder %s15, 1
      %p80 = por %p78, %p79
      %p82 = scmp.ne.s32.totalorder %s67, %s81
      %p83 = scmp.eq.s32.totalorder %s15, 0
      %p84 = por %p82, %p83
      %s85 = ssub.s32 %s9, %s16
      %p86 = scmp.eq.s32.totalorder %s85, 0
      %s88 = sadd.s32 %s87, 1
      %s89 = scalar_select %p86, %s87, %s88
      %p92 = pneg %p86
      %p93 = scmp.eq.s32.totalorder %s9, 1
      %p94 = por %p92, %p93
      %p95 = scmp.ne.s32.totalorder %s87, %s90
      %p96 = scmp.eq.s32.totalorder %s9, 0
      %p97 = por %p95, %p96
      %p98 = scmp.ne.s32.totalorder %s87, %s90
      %p99 = scmp.eq.s32.totalorder %s14, 1
      %p100 = por %p98, %p99
      %p101 = scmp.ne.s32.totalorder %s90, %s91
      %p102 = scmp.eq.s32.totalorder %s14, 0
      %p103 = por %p101, %p102
      %p104 = scmp.ne.s32.totalorder %s90, %s91
      %p105 = scmp.eq.s32.totalorder %s15, 1
      %p106 = por %p104, %p105
      %p108 = scmp.ne.s32.totalorder %s91, %s107
      %p109 = scmp.eq.s32.totalorder %s15, 0
      %p110 = por %p108, %p109
      %p111 = scmp.le.s32.totalorder 1, %s9
      %p112 = scmp.lt.s32.totalorder %s9, 3
      %p113 = pnand %p111, %p112
      %p114 = pneg %p113
      // Predicated region
      $region9: #{facebox_forward.25} parent=5 // pred_check
        _
      $region10: #{facebox_forward.25} parent=5 // pred_check_branch
        %116 = sbr.rel (%p113) target = $region12
      $region11: #{facebox_forward.25} parent=5 // pred_region
        %s117 = ssub.s32 %s9, 1
        // Predicated region
        $region13: #{facebox_forward.25} parent=11 // pred_check
          %p118 = pneg %p56
        $region14: #{facebox_forward.25} parent=11 // pred_check_branch
          %120 = sbr.rel (%p118) target = $region16
        $region15: #{facebox_forward.25} parent=11 // pred_region
          _
        $region16: #{facebox_forward.25} parent=11 // pred_fallthru
          _
        // Predicated region
        $region17: #{facebox_forward.25} parent=11 // pred_check
          %p121 = pneg %p77
        $region18: #{facebox_forward.25} parent=11 // pred_check_branch
          %123 = sbr.rel (%p121) target = $region20
        $region19: #{facebox_forward.25} parent=11 // pred_region
          _
        $region20: #{facebox_forward.25} parent=11 // pred_fallthru
          _
      $region12: #{facebox_forward.25} parent=5 // pred_fallthru
        _
      %p124 = scmp.lt.s32.totalorder %s9, 2
      // Predicated region
      $region21: #{facebox_forward.25} parent=5 // pred_check
        %p125 = pneg %p124
      $region22: #{facebox_forward.25} parent=5 // pred_check_branch
        %127 = sbr.rel (%p125) target = $region24
      $region23: #{facebox_forward.25} parent=5 // pred_region
        // Predicated region
        $region25: #{facebox_forward.25} parent=23 // pred_check
          %p128 = pneg %p29
        $region26: #{facebox_forward.25} parent=23 // pred_check_branch
          %130 = sbr.rel (%p128) target = $region28
        $region27: #{facebox_forward.25} parent=23 // pred_region
          %s131 = sand.u32 %s19, 1
          %s132 = sand.u32 %s19, 1
          %s133 = smul.addr %s132, 72
          %s134 = scalar_lea.vmem [#allocation2], %s133
          %s135 = smul.u32 2, %s9
          %s136 = smul.addr %s135, 4
          %s137 = scalar_lea.vmem %s0, %s136
          // Predicated region
          $region29: #{facebox_forward.25} parent=27 // pred_check
            _
          $region30: #{facebox_forward.25} parent=27 // pred_check_branch
            %139 = sbr.rel (0) target = $region32
          $region31: #{facebox_forward.25} parent=27 // pred_region
            // Predicated region
            $region33: #{facebox_forward.25} parent=31 // pred_check
              _
            $region34: #{facebox_forward.25} parent=31 // pred_check_branch
              %141 = sbr.rel target = $region36
            $region35: #{facebox_forward.25} parent=31 // pred_region
              // Predicated region
              $region48: #{facebox_forward.25} parent=35 // pred_check
                _
              $region49: #{facebox_forward.25} parent=35 // pred_check_branch
                %191 = sbr.rel (0) target = $region51
              $region50: #{facebox_forward.25} parent=35 // pred_region
                loop: start=0, step=1, limit=1
                $region52: #{facebox_forward.25} parent=50 // loop_pre_header
                  _
                $region53: #{facebox_forward.25} parent=50 // loop_header
                  %s193 = sphi 0, %s197
                  %p194 = scmp.ge.s32.totalorder %s193, 1
                  %s198 = sphi %s137, %s137
                  %s199 = sphi %s134, %s134
                $region54: #{facebox_forward.25} parent=50 // loop_header_branch
                  %196 = sbr.rel (%p194) target = $region58
                $region55: #{facebox_forward.25} parent=50 // loop_body
                  _
                $region56: #{facebox_forward.25} parent=50 // loop_footer
                  %s197 = sadd.s32 1, %s193
                $region57: #{facebox_forward.25} parent=50 // loop_footer_branch
                  %192 = sbr.rel target = $region53
                $region58: #{facebox_forward.25} parent=50 // loop_exit
                  _
                %s201 = ssub.s32 16, 1
                loop: start=0, step=1, limit=1
                $region59: #{facebox_forward.25} parent=50 // loop_pre_header
                  _
                $region60: #{facebox_forward.25} parent=50 // loop_header
                  %s203 = sphi 0, %s207
                  %p204 = scmp.ge.s32.totalorder %s203, 1
                  %s208 = sphi %s137, %s137
                  %s209 = sphi %s134, %s134
                $region61: #{facebox_forward.25} parent=50 // loop_header_branch
                  %206 = sbr.rel (%p204) target = $region65
                $region62: #{facebox_forward.25} parent=50 // loop_body
                  %v210 = vld [vmem:[%s208] sm:%s201]
                  %211 = vst [vmem:[%s209] sm:%s201] %v210
                  %v212 = vld [vmem:[%s208 + $0x4] sm:%s201]
                  %213 = vst [vmem:[%s209 + $0x4] sm:%s201] %v212
                  %v214 = vld [vmem:[%s208 + $0x10] sm:%s201]
                  %215 = vst [vmem:[%s209 + $0x8] sm:%s201] %v214
                  %v216 = vld [vmem:[%s208 + $0x14] sm:%s201]
                  %217 = vst [vmem:[%s209 + $0xc] sm:%s201] %v216
                  %v218 = vld [vmem:[%s208 + $0x20] sm:%s201]
                  %219 = vst [vmem:[%s209 + $0x10] sm:%s201] %v218
                  %v220 = vld [vmem:[%s208 + $0x24] sm:%s201]
                  %221 = vst [vmem:[%s209 + $0x14] sm:%s201] %v220
                  %v222 = vld [vmem:[%s208 + $0x30] sm:%s201]
                  %223 = vst [vmem:[%s209 + $0x18] sm:%s201] %v222
                  %v224 = vld [vmem:[%s208 + $0x34] sm:%s201]
                  %225 = vst [vmem:[%s209 + $0x1c] sm:%s201] %v224
                  %v226 = vld [vmem:[%s208 + $0x40] sm:%s201]
                  %227 = vst [vmem:[%s209 + $0x20] sm:%s201] %v226
                  %v228 = vld [vmem:[%s208 + $0x44] sm:%s201]
                  %229 = vst [vmem:[%s209 + $0x24] sm:%s201] %v228
                  %v230 = vld [vmem:[%s208 + $0x50] sm:%s201]
                  %231 = vst [vmem:[%s209 + $0x28] sm:%s201] %v230
                  %v232 = vld [vmem:[%s208 + $0x54] sm:%s201]
                  %233 = vst [vmem:[%s209 + $0x2c] sm:%s201] %v232
                  %v234 = vld [vmem:[%s208 + $0x60] sm:%s201]
                  %235 = vst [vmem:[%s209 + $0x30] sm:%s201] %v234
                  %v236 = vld [vmem:[%s208 + $0x64] sm:%s201]
                  %237 = vst [vmem:[%s209 + $0x34] sm:%s201] %v236
                  %v238 = vld [vmem:[%s208 + $0x70] sm:%s201]
                  %239 = vst [vmem:[%s209 + $0x38] sm:%s201] %v238
                  %v240 = vld [vmem:[%s208 + $0x74] sm:%s201]
                  %241 = vst [vmem:[%s209 + $0x3c] sm:%s201] %v240
                  %v242 = vld [vmem:[%s208 + $0x80] sm:%s201]
                  %243 = vst [vmem:[%s209 + $0x40] sm:%s201] %v242
                  %v244 = vld [vmem:[%s208 + $0x84] sm:%s201]
                  %245 = vst [vmem:[%s209 + $0x44] sm:%s201] %v244
                $region63: #{facebox_forward.25} parent=50 // loop_footer
                  %s207 = sadd.s32 1, %s203
                $region64: #{facebox_forward.25} parent=50 // loop_footer_branch
                  %202 = sbr.rel target = $region60
                $region65: #{facebox_forward.25} parent=50 // loop_exit
                  _
              $region51: #{facebox_forward.25} parent=35 // pred_fallthru
                _
            $region36: #{facebox_forward.25} parent=31 // pred_fallthru
              _
            // Predicated region
            $region37: #{facebox_forward.25} parent=31 // pred_check
              _
            $region38: #{facebox_forward.25} parent=31 // pred_check_branch
              %143 = sbr.rel (0) target = $region40
            $region39: #{facebox_forward.25} parent=31 // pred_region
              %s145 = ssub.s32 16, 1
              loop: start=0, step=1, limit=1
              $region41: #{facebox_forward.25} parent=39 // loop_pre_header
                _
              $region42: #{facebox_forward.25} parent=39 // loop_header
                %s147 = sphi 0, %s151
                %p148 = scmp.ge.s32.totalorder %s147, 1
                %s152 = sphi %s137, %s137
                %s153 = sphi %s134, %s134
              $region43: #{facebox_forward.25} parent=39 // loop_header_branch
                %150 = sbr.rel (%p148) target = $region47
              $region44: #{facebox_forward.25} parent=39 // loop_body
                %v154 = vld [vmem:[%s152] sm:%s145]
                %155 = vst [vmem:[%s153] sm:%s145] %v154
                %v156 = vld [vmem:[%s152 + $0x4] sm:%s145]
                %157 = vst [vmem:[%s153 + $0x4] sm:%s145] %v156
                %v158 = vld [vmem:[%s152 + $0x10] sm:%s145]
                %159 = vst [vmem:[%s153 + $0x8] sm:%s145] %v158
                %v160 = vld [vmem:[%s152 + $0x14] sm:%s145]
                %161 = vst [vmem:[%s153 + $0xc] sm:%s145] %v160
                %v162 = vld [vmem:[%s152 + $0x20] sm:%s145]
                %163 = vst [vmem:[%s153 + $0x10] sm:%s145] %v162
                %v164 = vld [vmem:[%s152 + $0x24] sm:%s145]
                %165 = vst [vmem:[%s153 + $0x14] sm:%s145] %v164
                %v166 = vld [vmem:[%s152 + $0x30] sm:%s145]
                %167 = vst [vmem:[%s153 + $0x18] sm:%s145] %v166
                %v168 = vld [vmem:[%s152 + $0x34] sm:%s145]
                %169 = vst [vmem:[%s153 + $0x1c] sm:%s145] %v168
                %v170 = vld [vmem:[%s152 + $0x40] sm:%s145]
                %171 = vst [vmem:[%s153 + $0x20] sm:%s145] %v170
                %v172 = vld [vmem:[%s152 + $0x44] sm:%s145]
                %173 = vst [vmem:[%s153 + $0x24] sm:%s145] %v172
                %v174 = vld [vmem:[%s152 + $0x50] sm:%s145]
                %175 = vst [vmem:[%s153 + $0x28] sm:%s145] %v174
                %v176 = vld [vmem:[%s152 + $0x54] sm:%s145]
                %177 = vst [vmem:[%s153 + $0x2c] sm:%s145] %v176
                %v178 = vld [vmem:[%s152 + $0x60] sm:%s145]
                %179 = vst [vmem:[%s153 + $0x30] sm:%s145] %v178
                %v180 = vld [vmem:[%s152 + $0x64] sm:%s145]
                %181 = vst [vmem:[%s153 + $0x34] sm:%s145] %v180
                %v182 = vld [vmem:[%s152 + $0x70] sm:%s145]
                %183 = vst [vmem:[%s153 + $0x38] sm:%s145] %v182
                %v184 = vld [vmem:[%s152 + $0x74] sm:%s145]
                %185 = vst [vmem:[%s153 + $0x3c] sm:%s145] %v184
                %v186 = vld [vmem:[%s152 + $0x80] sm:%s145]
                %187 = vst [vmem:[%s153 + $0x40] sm:%s145] %v186
                %v188 = vld [vmem:[%s152 + $0x84] sm:%s145]
                %189 = vst [vmem:[%s153 + $0x44] sm:%s145] %v188
              $region45: #{facebox_forward.25} parent=39 // loop_footer
                %s151 = sadd.s32 1, %s147
              $region46: #{facebox_forward.25} parent=39 // loop_footer_branch
                %146 = sbr.rel target = $region42
              $region47: #{facebox_forward.25} parent=39 // loop_exit
                _
            $region40: #{facebox_forward.25} parent=31 // pred_fallthru
              _
          $region32: #{facebox_forward.25} parent=27 // pred_fallthru
            _
          %246 = vnop
        $region28: #{facebox_forward.25} parent=23 // pred_fallthru
          _
      $region24: #{facebox_forward.25} parent=5 // pred_fallthru
        _
      %p247 = scmp.le.s32.totalorder 1, %s9
      %p248 = scmp.lt.s32.totalorder %s9, 3
      %p249 = pnand %p247, %p248
      %p250 = pneg %p249
      // Predicated region
      $region66: #{facebox_forward.25} parent=5 // pred_check
        _
      $region67: #{facebox_forward.25} parent=5 // pred_check_branch
        %252 = sbr.rel (%p249) target = $region69
      $region68: #{facebox_forward.25} parent=5 // pred_region
        %s253 = ssub.s32 %s9, 1
        %s254 = sand.u32 %s22, 1
        %s255 = sand.u32 %s22, 1
        %s256 = smul.addr %s255, 72
        %s257 = scalar_lea.vmem [#allocation2], %s256
        // Predicated region
        $region70: #{facebox_forward.25} parent=68 // pred_check
          %p258 = pneg %p35
        $region71: #{facebox_forward.25} parent=68 // pred_check_branch
          %260 = sbr.rel (%p258) target = $region73
        $region72: #{facebox_forward.25} parent=68 // pred_region
          _
        $region73: #{facebox_forward.25} parent=68 // pred_fallthru
          _
        %s261 = sand.u32 %s22, 1
        %s262 = sand.u32 %s22, 1
        %s263 = smul.addr %s262, 72
        %s264 = scalar_lea.vmem [#allocation2], %s263
        %p265 = pneg %p35
        %p266 = pneg %p32
        %p267 = pneg %p56
        %p268 = pneg %p53
        %p269 = pneg %p77
        %p270 = pneg %p74
        %p271 = pneg %p103
        %p272 = pneg %p100
        %s273 = smul.u32 2, %s14
        %p274 = scmp.lt.s32.totalorder %s273, 3
        %s275 = scalar_select %p274, %s273, 3
        %s276 = smul.addr %s275, 4
        %s277 = scalar_lea.vmem %s3, %s276
        %s278 = smul.u32 2, %s14
        %s279 = smul.u32 2, %s14
        %p280 = scmp.lt.s32.totalorder %s279, 3
        %s281 = scalar_select %p280, %s279, 3
        %s282 = smul.addr %s281, 4
        %s283 = scalar_lea.vmem %s3, %s282
        %s284 = smul.u32 2, %s14
        %v286 = vld [vmem:[%s257] sm:$0xf]
        %v287 = vld [vmem:[%s257 + $0x4] sm:$0xf]
        %s288 = scalar_lea.vmem %s257, 8 [#allocation2]
        %v289 = vld [vmem:[%s288] sm:$0xf]
        %v290 = vld [vmem:[%s288 + $0x4] sm:$0xf]
        %s291 = scalar_lea.vmem %s257, 16 [#allocation2]
        %v292 = vld [vmem:[%s291] sm:$0xf]
        %v293 = vld [vmem:[%s291 + $0x4] sm:$0xf]
        %s294 = scalar_lea.vmem %s257, 24 [#allocation2]
        %v295 = vld [vmem:[%s294] sm:$0xf]
        %v296 = vld [vmem:[%s294 + $0x4] sm:$0xf]
        %s297 = scalar_lea.vmem %s257, 32 [#allocation2]
        %v298 = vld [vmem:[%s297] sm:$0xf]
        %v299 = vld [vmem:[%s297 + $0x4] sm:$0xf]
        %s300 = scalar_lea.vmem %s257, 40 [#allocation2]
        %v301 = vld [vmem:[%s300] sm:$0xf]
        %v302 = vld [vmem:[%s300 + $0x4] sm:$0xf]
        %s303 = scalar_lea.vmem %s257, 48 [#allocation2]
        %v304 = vld [vmem:[%s303] sm:$0xf]
        %v305 = vld [vmem:[%s303 + $0x4] sm:$0xf]
        %s306 = scalar_lea.vmem %s257, 56 [#allocation2]
        %v307 = vld [vmem:[%s306] sm:$0xf]
        %v308 = vld [vmem:[%s306 + $0x4] sm:$0xf]
        %s309 = scalar_lea.vmem %s257, 64 [#allocation2]
        %v310 = vld [vmem:[%s309] sm:$0xf]
        %v311 = vld [vmem:[%s309 + $0x4] sm:$0xf]
        %v312 = vmax.bf16 %v286, %v289
        %v313 = vmax.bf16 %v287, %v290
        %v314 = vmax.bf16 %v292, %v295
        %v315 = vmax.bf16 %v293, %v296
        %v316 = vmax.bf16 %v298, %v301
        %v317 = vmax.bf16 %v299, %v302
        %v318 = vmax.bf16 %v304, %v307
        %v319 = vmax.bf16 %v305, %v308
        %v320 = vmax.bf16 %v312, %v314
        %v321 = vmax.bf16 %v313, %v315
        %v322 = vmax.bf16 %v316, %v318
        %v323 = vmax.bf16 %v317, %v319
        %v324 = vmax.bf16 %v320, %v322
        %v325 = vmax.bf16 %v321, %v323
        %v326 = vmax.bf16 %v324, %v310
        %v327 = vmax.bf16 %v325, %v311
        %v328 = vld [vmem:[%s1] sm:$0xf]
        %v329 = vld [vmem:[%s1 + $0x4] sm:$0xf]
        %v330 = vld [vmem:[%s1 + $0x8] sm:$0xf]
        %v331 = vld [vmem:[%s1 + $0xc] sm:$0xf]
        %v332 = vld [vmem:[%s1 + $0x10] sm:$0xf]
        %v333 = vld [vmem:[%s1 + $0x14] sm:$0xf]
        %v334 = vld [vmem:[%s1 + $0x18] sm:$0xf]
        %v335 = vld [vmem:[%s1 + $0x1c] sm:$0xf]
        %v336 = vld [vmem:[%s1 + $0x20] sm:$0xf]
        %v337 = vld [vmem:[%s1 + $0x24] sm:$0xf]
        %v338 = vld [vmem:[%s1 + $0x28] sm:$0xf]
        %v339 = vld [vmem:[%s1 + $0x2c] sm:$0xf]
        %v340 = vld [vmem:[%s1 + $0x30] sm:$0xf]
        %v341 = vld [vmem:[%s1 + $0x34] sm:$0xf]
        %v342 = vld [vmem:[%s1 + $0x38] sm:$0xf]
        %v343 = vld [vmem:[%s1 + $0x3c] sm:$0xf]
        %v344 = vld [vmem:[%s2] sm:$0x1]
        %v346 = vlaneseq
        %v347 = vshrl.u32 %v346, 7
        %v348 = vsub.s32 0, %v347
        %v349 = vrot.slane %v344, %v348
        %v353 = vunpack.c.l.b16 %v326
        %v354 = vunpack.c.l.b16 %v327
        %v355 = vpack.c.b16 %v354, %v353
        %v373 = vunpack.c.l.b16 %v328
        %v374 = vunpack.c.l.b16 %v329
        %v375 = vunpack.c.l.b16 %v330
        %v376 = vunpack.c.l.b16 %v331
        %v377 = vunpack.c.l.b16 %v332
        %v378 = vunpack.c.l.b16 %v333
        %v379 = vunpack.c.l.b16 %v334
        %v380 = vunpack.c.l.b16 %v335
        %v381 = vunpack.c.l.b16 %v336
        %v382 = vunpack.c.l.b16 %v337
        %v383 = vunpack.c.l.b16 %v338
        %v384 = vunpack.c.l.b16 %v339
        %v385 = vunpack.c.l.b16 %v340
        %v386 = vunpack.c.l.b16 %v341
        %v387 = vunpack.c.l.b16 %v342
        %v388 = vunpack.c.l.b16 %v343
        %v389 = vpack.c.b16 %v374, %v373
        %v390 = vpack.c.b16 %v376, %v375
        %v391 = vpack.c.b16 %v378, %v377
        %v392 = vpack.c.b16 %v380, %v379
        %v393 = vpack.c.b16 %v382, %v381
        %v394 = vpack.c.b16 %v384, %v383
        %v395 = vpack.c.b16 %v386, %v385
        %v396 = vpack.c.b16 %v388, %v387
        %405 = vmatprep.subr.bf16.mxu0 0
        %406 = vmatpush1.bf16.msra.mxu0 %v396
        %407 = vmatprep.subr.bf16.mxu0 0
        %408 = vmatpush1.bf16.msra.mxu0 %v395
        %409 = vmatprep.subr.bf16.mxu0 0
        %410 = vmatpush1.bf16.msra.mxu0 %v394
        %411 = vmatprep.subr.bf16.mxu0 0
        %412 = vmatpush1.bf16.msra.mxu0 %v393
        %413 = vmatprep.subr.bf16.mxu0 0
        %414 = vmatpush1.bf16.msra.mxu0 %v392
        %415 = vmatprep.subr.bf16.mxu0 0
        %416 = vmatpush1.bf16.msra.mxu0 %v391
        %417 = vmatprep.subr.bf16.mxu0 0
        %418 = vmatpush1.bf16.msra.mxu0 %v390
        %419 = vmatprep.subr.bf16.mxu0 0
        %420 = vmatpush1.bf16.msra.mxu0 %v389
        %421 = vmatprep.subr.bf16.mxu0 0
        %422 = vmatpush2.bf16.msra.mxu0 0
        %423 = vmatprep.subr.bf16.mxu0 0
        %424 = vmatpush2.bf16.msra.mxu0 0
        %425 = vmatprep.subr.bf16.mxu0 0
        %426 = vmatpush2.bf16.msra.mxu0 0
        %427 = vmatprep.subr.bf16.mxu0 0
        %428 = vmatpush2.bf16.msra.mxu0 0
        %429 = vmatprep.subr.bf16.mxu0 0
        %430 = vmatpush2.bf16.msra.mxu0 0
        %431 = vmatprep.subr.bf16.mxu0 0
        %432 = vmatpush2.bf16.msra.mxu0 0
        %433 = vmatprep.subr.bf16.mxu0 0
        %434 = vmatpush2.bf16.msra.mxu0 0
        %435 = vmatprep.subr.bf16.mxu0 0
        %436 = vmatpush2.bf16.msra.mxu0 0
        %437 = vmatprep.mubr.bf16.mxu0 0
        %438 = vmatmul.mubr.bf16.gmra.mxu0 %v355
        %v439 = vpop.f32.mrf.mxu0
        %v440 = vadd.f32 %v349, %v439
        %v441 = vpop.f32.mrf.mxu0
        %v442 = vpop.f32.mrf.mxu0
        %v443 = vadd.f32 %v349, %v442
        %v444 = vpop.f32.mrf.mxu0
        %445 = vdwg.mxu0
        %v446 = vpack.c.bf16 %v443, %v440
        %v448 = vunpack.c.l.b16 %v446
        %v449 = vunpack.c.h.b16 %v446
        %v450 = vpack.c.b16 %v448, %v448
        %v451 = vpack.c.b16 %v449, %v449
        %vm454 = vcmask 257024
        %455 = vst.msk [vmem:[%s283] sm:$0xf] %vm454, %v450
        %456 = vst.msk [vmem:[%s283 + $0x4] sm:$0xf] %vm454, %v451
        %s457 = smul.u32 2, %s14
        %p458 = scmp.lt.s32.totalorder %s457, 3
        %s459 = scalar_select %p458, %s457, 3
        %s460 = smul.addr %s459, 4
        %s461 = scalar_lea.vmem %s3, %s460
        // Predicated region
        $region74: #{facebox_forward.25} parent=68 // pred_check
          %p462 = pneg %p100
        $region75: #{facebox_forward.25} parent=68 // pred_check_branch
          %464 = sbr.rel (%p462) target = $region77
        $region76: #{facebox_forward.25} parent=68 // pred_region
          %s465 = smul.u32 2, %s14
        $region77: #{facebox_forward.25} parent=68 // pred_fallthru
          _
      $region69: #{facebox_forward.25} parent=5 // pred_fallthru
        _
      %p466 = scmp.le.s32.totalorder 2, %s9
      // Predicated region
      $region78: #{facebox_forward.25} parent=5 // pred_check
        %p467 = pneg %p466
      $region79: #{facebox_forward.25} parent=5 // pred_check_branch
        %469 = sbr.rel (%p467) target = $region81
      $region80: #{facebox_forward.25} parent=5 // pred_region
        %s470 = ssub.s32 %s9, 2
        // Predicated region
        $region82: #{facebox_forward.25} parent=80 // pred_check
          %p471 = pneg %p106
        $region83: #{facebox_forward.25} parent=80 // pred_check_branch
          %473 = sbr.rel (%p471) target = $region85
        $region84: #{facebox_forward.25} parent=80 // pred_region
          %s474 = smul.u32 2, %s15
          %p475 = scmp.lt.s32.totalorder %s474, 3
          %s476 = scalar_select %p475, %s474, 3
          %s477 = smul.addr %s476, 4
          %s478 = scalar_lea.vmem %s3, %s477
        $region85: #{facebox_forward.25} parent=80 // pred_fallthru
          _
      $region81: #{facebox_forward.25} parent=5 // pred_fallthru
        _
    $region6: #{facebox_forward.25} parent=1 // loop_footer
      %s13 = sadd.s32 1, %s9
    $region7: #{facebox_forward.25} parent=1 // loop_footer_branch
      %8 = sbr.rel target = $region3
    $region8: #{facebox_forward.25} parent=1 // loop_exit
      _

// kernel: facebox_forward.24
$region0: #{facebox_forward.24}
  #allocation0 [shape = 'u32[]', space=smem, size = 0x4, offset = 0x4, fixed_abs, tag = 'smem constant byte address 0x4 - core index']
  #allocation1 [shape = 'u32[144,128]{1,0:T(1,128)}', space=vmem, size = 0x12000, scoped, tag = 'internal scratch']
  %s0 = inlined_call_operand.vmem [shape: bf16[32,128], index: 0, kind: input, shape index: {}]
  %s1 = inlined_call_operand.vmem [shape: bf16[128,80], index: 1, kind: input, shape index: {}]
  %s2 = inlined_call_operand.vmem [shape: f32[1,80], index: 2, kind: input, shape index: {}]
  %s3 = inlined_call_operand.vmem [shape: bf16[32,80], index: 3, kind: output, shape index: {}]
  %s4 = sld [smem:[#allocation0]]
  $region45: #{facebox_forward.24} parent=0
    _
  %s6 = ssub.s32 1, %s4
  %s7 = scalar_select 0, %s6, %s4
  loop: start=0, step=1, limit=4
  $region2: #{facebox_forward.24} parent=0 // loop_pre_header
    _
  $region3: #{facebox_forward.24} parent=0 // loop_header
    %s9 = sphi 0, %s13
    %p10 = scmp.ge.s32.totalorder %s9, 4
    %s19 = sphi 0, %s21
    %s22 = sphi 0, %s19
    %s23 = sphi 0, %s22
    %s39 = sphi 0, %s23
    %s43 = sphi 0, %s43
    %s45 = sphi 0, %s43
    %s46 = sphi 0, %s45
    %s60 = sphi 0, %s46
    %s64 = sphi 0, %s64
    %s66 = sphi 0, %s64
    %s67 = sphi 0, %s66
    %s81 = sphi 0, %s67
    %s87 = sphi 0, %s89
    %s90 = sphi 0, %s87
    %s91 = sphi 0, %s90
    %s107 = sphi 0, %s91
  $region4: #{facebox_forward.24} parent=0 // loop_header_branch
    %12 = sbr.rel (%p10) target = $region8
  $region5: #{facebox_forward.24} parent=0 // loop_body
    %s14 = ssub.s32 %s9, 1
    %s15 = ssub.s32 %s9, 2
    %s16 = sadd.s32 %s9, 1
    %s17 = ssub.s32 %s9, %s16
    %p18 = scmp.eq.s32.totalorder %s17, 0
    %s20 = sadd.s32 %s19, 1
    %s21 = scalar_select %p18, %s19, %s20
    %p24 = pneg %p18
    %p25 = scmp.eq.s32.totalorder %s9, 1
    %p26 = por %p24, %p25
    %p27 = scmp.ne.s32.totalorder %s19, %s22
    %p28 = scmp.eq.s32.totalorder %s9, 0
    %p29 = por %p27, %p28
    %p30 = scmp.ne.s32.totalorder %s19, %s22
    %p31 = scmp.eq.s32.totalorder %s14, 1
    %p32 = por %p30, %p31
    %p33 = scmp.ne.s32.totalorder %s22, %s23
    %p34 = scmp.eq.s32.totalorder %s14, 0
    %p35 = por %p33, %p34
    %p36 = scmp.ne.s32.totalorder %s22, %s23
    %p37 = scmp.eq.s32.totalorder %s15, 1
    %p38 = por %p36, %p37
    %p40 = scmp.ne.s32.totalorder %s23, %s39
    %p41 = scmp.eq.s32.totalorder %s15, 0
    %p42 = por %p40, %p41
    %s44 = sadd.s32 %s43, 1
    %p47 = scmp.eq.s32.totalorder %s9, 1
    %p48 = scmp.ne.s32.totalorder %s43, %s45
    %p49 = scmp.eq.s32.totalorder %s9, 0
    %p50 = por %p48, %p49
    %p51 = scmp.ne.s32.totalorder %s43, %s45
    %p52 = scmp.eq.s32.totalorder %s14, 1
    %p53 = por %p51, %p52
    %p54 = scmp.ne.s32.totalorder %s45, %s46
    %p55 = scmp.eq.s32.totalorder %s14, 0
    %p56 = por %p54, %p55
    %p57 = scmp.ne.s32.totalorder %s45, %s46
    %p58 = scmp.eq.s32.totalorder %s15, 1
    %p59 = por %p57, %p58
    %p61 = scmp.ne.s32.totalorder %s46, %s60
    %p62 = scmp.eq.s32.totalorder %s15, 0
    %p63 = por %p61, %p62
    %s65 = sadd.s32 %s64, 1
    %p68 = scmp.eq.s32.totalorder %s9, 1
    %p69 = scmp.ne.s32.totalorder %s64, %s66
    %p70 = scmp.eq.s32.totalorder %s9, 0
    %p71 = por %p69, %p70
    %p72 = scmp.ne.s32.totalorder %s64, %s66
    %p73 = scmp.eq.s32.totalorder %s14, 1
    %p74 = por %p72, %p73
    %p75 = scmp.ne.s32.totalorder %s66, %s67
    %p76 = scmp.eq.s32.totalorder %s14, 0
    %p77 = por %p75, %p76
    %p78 = scmp.ne.s32.totalorder %s66, %s67
    %p79 = scmp.eq.s32.totalorder %s15, 1
    %p80 = por %p78, %p79
    %p82 = scmp.ne.s32.totalorder %s67, %s81
    %p83 = scmp.eq.s32.totalorder %s15, 0
    %p84 = por %p82, %p83
    %s85 = ssub.s32 %s9, %s16
    %p86 = scmp.eq.s32.totalorder %s85, 0
    %s88 = sadd.s32 %s87, 1
    %s89 = scalar_select %p86, %s87, %s88
    %p92 = pneg %p86
    %p93 = scmp.eq.s32.totalorder %s9, 1
    %p94 = por %p92, %p93
    %p95 = scmp.ne.s32.totalorder %s87, %s90
    %p96 = scmp.eq.s32.totalorder %s9, 0
    %p97 = por %p95, %p96
    %p98 = scmp.ne.s32.totalorder %s87, %s90
    %p99 = scmp.eq.s32.totalorder %s14, 1
    %p100 = por %p98, %p99
    %p101 = scmp.ne.s32.totalorder %s90, %s91
    %p102 = scmp.eq.s32.totalorder %s14, 0
    %p103 = por %p101, %p102
    %p104 = scmp.ne.s32.totalorder %s90, %s91
    %p105 = scmp.eq.s32.totalorder %s15, 1
    %p106 = por %p104, %p105
    %p108 = scmp.ne.s32.totalorder %s91, %s107
    %p109 = scmp.eq.s32.totalorder %s15, 0
    %p110 = por %p108, %p109
    %p111 = scmp.le.s32.totalorder 1, %s9
    %p112 = scmp.lt.s32.totalorder %s9, 3
    %p113 = pnand %p111, %p112
    %p114 = pneg %p113
    // Predicated region
    $region9: #{facebox_forward.24} parent=5 // pred_check
      _
    $region10: #{facebox_forward.24} parent=5 // pred_check_branch
      %116 = sbr.rel (%p113) target = $region12
    $region11: #{facebox_forward.24} parent=5 // pred_region
      %s117 = ssub.s32 %s9, 1
      // Predicated region
      $region13: #{facebox_forward.24} parent=11 // pred_check
        %p118 = pneg %p56
      $region14: #{facebox_forward.24} parent=11 // pred_check_branch
        %120 = sbr.rel (%p118) target = $region16
      $region15: #{facebox_forward.24} parent=11 // pred_region
        _
      $region16: #{facebox_forward.24} parent=11 // pred_fallthru
        _
      // Predicated region
      $region17: #{facebox_forward.24} parent=11 // pred_check
        %p121 = pneg %p77
      $region18: #{facebox_forward.24} parent=11 // pred_check_branch
        %123 = sbr.rel (%p121) target = $region20
      $region19: #{facebox_forward.24} parent=11 // pred_region
        _
      $region20: #{facebox_forward.24} parent=11 // pred_fallthru
        _
    $region12: #{facebox_forward.24} parent=5 // pred_fallthru
      _
    %p124 = scmp.lt.s32.totalorder %s9, 2
    // Predicated region
    $region21: #{facebox_forward.24} parent=5 // pred_check
      %p125 = pneg %p124
    $region22: #{facebox_forward.24} parent=5 // pred_check_branch
      %127 = sbr.rel (%p125) target = $region24
    $region23: #{facebox_forward.24} parent=5 // pred_region
      // Predicated region
      $region25: #{facebox_forward.24} parent=23 // pred_check
        %p128 = pneg %p29
      $region26: #{facebox_forward.24} parent=23 // pred_check_branch
        %130 = sbr.rel (%p128) target = $region28
      $region27: #{facebox_forward.24} parent=23 // pred_region
        %s131 = smul.u32 2, %s9
        %p132 = scmp.lt.s32.totalorder %s131, 3
        %s133 = scalar_select %p132, %s131, 3
        %s134 = smul.addr %s133, 4
        %s135 = scalar_lea.vmem %s0, %s134
        %s136 = smul.u32 2, %s9
      $region28: #{facebox_forward.24} parent=23 // pred_fallthru
        _
    $region24: #{facebox_forward.24} parent=5 // pred_fallthru
      _
    %p137 = scmp.le.s32.totalorder 1, %s9
    %p138 = scmp.lt.s32.totalorder %s9, 3
    %p139 = pnand %p137, %p138
    %p140 = pneg %p139
    // Predicated region
    $region29: #{facebox_forward.24} parent=5 // pred_check
      _
    $region30: #{facebox_forward.24} parent=5 // pred_check_branch
      %142 = sbr.rel (%p139) target = $region32
    $region31: #{facebox_forward.24} parent=5 // pred_region
      %s143 = ssub.s32 %s9, 1
      %s144 = smul.u32 2, %s14
      %p145 = scmp.lt.s32.totalorder %s144, 3
      %s146 = scalar_select %p145, %s144, 3
      %s147 = smul.addr %s146, 4
      %s148 = scalar_lea.vmem %s0, %s147
      %p149 = pneg %p35
      %p150 = pneg %p32
      %p151 = pneg %p56
      %p152 = pneg %p53
      %p153 = pneg %p77
      %p154 = pneg %p74
      %p155 = pneg %p103
      %p156 = pneg %p100
      %s157 = smul.u32 2, %s14
      %p158 = scmp.lt.s32.totalorder %s157, 3
      %s159 = scalar_select %p158, %s157, 3
      %s160 = smul.addr %s159, 4
      %s161 = scalar_lea.vmem %s3, %s160
      %s162 = smul.u32 2, %s14
      %p163 = scmp.lt.s32.totalorder %s162, 3
      %s164 = scalar_select %p163, %s162, 3
      %s165 = smul.addr %s164, 4
      %s166 = scalar_lea.vmem %s0, %s165
      %s167 = smul.u32 2, %s14
      %s168 = smul.u32 2, %s14
      %p169 = scmp.lt.s32.totalorder %s168, 3
      %s170 = scalar_select %p169, %s168, 3
      %s171 = smul.addr %s170, 4
      %s172 = scalar_lea.vmem %s3, %s171
      %s173 = smul.u32 2, %s14
      %v175 = vld [vmem:[%s166] sm:$0xf]
      %v176 = vld [vmem:[%s166 + $0x4] sm:$0xf]
      %v177 = vld [vmem:[%s1] sm:$0xf]
      %v178 = vld [vmem:[%s1 + $0x4] sm:$0xf]
      %v179 = vld [vmem:[%s1 + $0x8] sm:$0xf]
      %v180 = vld [vmem:[%s1 + $0xc] sm:$0xf]
      %v181 = vld [vmem:[%s1 + $0x10] sm:$0xf]
      %v182 = vld [vmem:[%s1 + $0x14] sm:$0xf]
      %v183 = vld [vmem:[%s1 + $0x18] sm:$0xf]
      %v184 = vld [vmem:[%s1 + $0x1c] sm:$0xf]
      %v185 = vld [vmem:[%s1 + $0x20] sm:$0xf]
      %v186 = vld [vmem:[%s1 + $0x24] sm:$0xf]
      %v187 = vld [vmem:[%s1 + $0x28] sm:$0xf]
      %v188 = vld [vmem:[%s1 + $0x2c] sm:$0xf]
      %v189 = vld [vmem:[%s1 + $0x30] sm:$0xf]
      %v190 = vld [vmem:[%s1 + $0x34] sm:$0xf]
      %v191 = vld [vmem:[%s1 + $0x38] sm:$0xf]
      %v192 = vld [vmem:[%s1 + $0x3c] sm:$0xf]
      %v193 = vld [vmem:[%s2] sm:$0x1]
      %v195 = vlaneseq
      %v196 = vshrl.u32 %v195, 7
      %v197 = vsub.s32 0, %v196
      %v198 = vrot.slane %v193, %v197
      %v202 = vunpack.c.l.b16 %v175
      %v203 = vunpack.c.l.b16 %v176
      %v204 = vpack.c.b16 %v203, %v202
      %v222 = vunpack.c.l.b16 %v177
      %v223 = vunpack.c.l.b16 %v178
      %v224 = vunpack.c.l.b16 %v179
      %v225 = vunpack.c.l.b16 %v180
      %v226 = vunpack.c.l.b16 %v181
      %v227 = vunpack.c.l.b16 %v182
      %v228 = vunpack.c.l.b16 %v183
      %v229 = vunpack.c.l.b16 %v184
      %v230 = vunpack.c.l.b16 %v185
      %v231 = vunpack.c.l.b16 %v186
      %v232 = vunpack.c.l.b16 %v187
      %v233 = vunpack.c.l.b16 %v188
      %v234 = vunpack.c.l.b16 %v189
      %v235 = vunpack.c.l.b16 %v190
      %v236 = vunpack.c.l.b16 %v191
      %v237 = vunpack.c.l.b16 %v192
      %v238 = vpack.c.b16 %v223, %v222
      %v239 = vpack.c.b16 %v225, %v224
      %v240 = vpack.c.b16 %v227, %v226
      %v241 = vpack.c.b16 %v229, %v228
      %v242 = vpack.c.b16 %v231, %v230
      %v243 = vpack.c.b16 %v233, %v232
      %v244 = vpack.c.b16 %v235, %v234
      %v245 = vpack.c.b16 %v237, %v236
      %254 = vmatprep.subr.bf16.mxu0 0
      %255 = vmatpush1.bf16.msra.mxu0 %v245
      %256 = vmatprep.subr.bf16.mxu0 0
      %257 = vmatpush1.bf16.msra.mxu0 %v244
      %258 = vmatprep.subr.bf16.mxu0 0
      %259 = vmatpush1.bf16.msra.mxu0 %v243
      %260 = vmatprep.subr.bf16.mxu0 0
      %261 = vmatpush1.bf16.msra.mxu0 %v242
      %262 = vmatprep.subr.bf16.mxu0 0
      %263 = vmatpush1.bf16.msra.mxu0 %v241
      %264 = vmatprep.subr.bf16.mxu0 0
      %265 = vmatpush1.bf16.msra.mxu0 %v240
      %266 = vmatprep.subr.bf16.mxu0 0
      %267 = vmatpush1.bf16.msra.mxu0 %v239
      %268 = vmatprep.subr.bf16.mxu0 0
      %269 = vmatpush1.bf16.msra.mxu0 %v238
      %270 = vmatprep.subr.bf16.mxu0 0
      %271 = vmatpush2.bf16.msra.mxu0 0
      %272 = vmatprep.subr.bf16.mxu0 0
      %273 = vmatpush2.bf16.msra.mxu0 0
      %274 = vmatprep.subr.bf16.mxu0 0
      %275 = vmatpush2.bf16.msra.mxu0 0
      %276 = vmatprep.subr.bf16.mxu0 0
      %277 = vmatpush2.bf16.msra.mxu0 0
      %278 = vmatprep.subr.bf16.mxu0 0
      %279 = vmatpush2.bf16.msra.mxu0 0
      %280 = vmatprep.subr.bf16.mxu0 0
      %281 = vmatpush2.bf16.msra.mxu0 0
      %282 = vmatprep.subr.bf16.mxu0 0
      %283 = vmatpush2.bf16.msra.mxu0 0
      %284 = vmatprep.subr.bf16.mxu0 0
      %285 = vmatpush2.bf16.msra.mxu0 0
      %286 = vmatprep.mubr.bf16.mxu0 0
      %287 = vmatmul.mubr.bf16.gmra.mxu0 %v204
      %v288 = vpop.f32.mrf.mxu0
      %v289 = vadd.f32 %v198, %v288
      %v290 = vpop.f32.mrf.mxu0
      %v291 = vpop.f32.mrf.mxu0
      %v292 = vadd.f32 %v198, %v291
      %v293 = vpop.f32.mrf.mxu0
      %294 = vdwg.mxu0
      %v295 = vpack.c.bf16 %v292, %v289
      %v297 = vunpack.c.l.b16 %v295
      %v298 = vunpack.c.h.b16 %v295
      %v299 = vpack.c.b16 %v297, %v297
      %v300 = vpack.c.b16 %v298, %v298
      %vm303 = vcmask 650240
      %304 = vst.msk [vmem:[%s172] sm:$0xf] %vm303, %v299
      %305 = vst.msk [vmem:[%s172 + $0x4] sm:$0xf] %vm303, %v300
      %s306 = smul.u32 2, %s14
      %p307 = scmp.lt.s32.totalorder %s306, 3
      %s308 = scalar_select %p307, %s306, 3
      %s309 = smul.addr %s308, 4
      %s310 = scalar_lea.vmem %s3, %s309
      // Predicated region
      $region33: #{facebox_forward.24} parent=31 // pred_check
        %p311 = pneg %p100
      $region34: #{facebox_forward.24} parent=31 // pred_check_branch
        %313 = sbr.rel (%p311) target = $region36
      $region35: #{facebox_forward.24} parent=31 // pred_region
        %s314 = smul.u32 2, %s14
      $region36: #{facebox_forward.24} parent=31 // pred_fallthru
        _
    $region32: #{facebox_forward.24} parent=5 // pred_fallthru
      _
    %p315 = scmp.le.s32.totalorder 2, %s9
    // Predicated region
    $region37: #{facebox_forward.24} parent=5 // pred_check
      %p316 = pneg %p315
    $region38: #{facebox_forward.24} parent=5 // pred_check_branch
      %318 = sbr.rel (%p316) target = $region40
    $region39: #{facebox_forward.24} parent=5 // pred_region
      %s319 = ssub.s32 %s9, 2
      // Predicated region
      $region41: #{facebox_forward.24} parent=39 // pred_check
        %p320 = pneg %p106
      $region42: #{facebox_forward.24} parent=39 // pred_check_branch
        %322 = sbr.rel (%p320) target = $region44
      $region43: #{facebox_forward.24} parent=39 // pred_region
        %s323 = smul.u32 2, %s15
        %p324 = scmp.lt.s32.totalorder %s323, 3
        %s325 = scalar_select %p324, %s323, 3
        %s326 = smul.addr %s325, 4
        %s327 = scalar_lea.vmem %s3, %s326
      $region44: #{facebox_forward.24} parent=39 // pred_fallthru
        _
    $region40: #{facebox_forward.24} parent=5 // pred_fallthru
      _
  $region6: #{facebox_forward.24} parent=0 // loop_footer
    %s13 = sadd.s32 1, %s9
  $region7: #{facebox_forward.24} parent=0 // loop_footer_branch
    %8 = sbr.rel target = $region3
  $region8: #{facebox_forward.24} parent=0 // loop_exit
    _

// kernel: facebox_forward.26
$region0: #{facebox_forward.26}
  #allocation0 [shape = 'u32[]', space=smem, size = 0x4, offset = 0x4, fixed_abs, tag = 'smem constant byte address 0x4 - core index']
  #allocation1 [shape = 'u32[144,128]{1,0:T(1,128)}', space=vmem, size = 0x12000, scoped, tag = 'internal scratch']
  %s0 = inlined_call_operand.vmem [shape: bf16[32,512], index: 0, kind: input, shape index: {}]
  %s1 = inlined_call_operand.vmem [shape: bf16[512,64], index: 1, kind: input, shape index: {}]
  %s2 = inlined_call_operand.vmem [shape: f32[1,64], index: 2, kind: input, shape index: {}]
  %s3 = inlined_call_operand.vmem [shape: bf16[32,64], index: 3, kind: output, shape index: {}]
  %s4 = sld [smem:[#allocation0]]
  $region45: #{facebox_forward.26} parent=0
    _
  %s6 = ssub.s32 1, %s4
  %s7 = scalar_select 0, %s6, %s4
  loop: start=0, step=1, limit=4
  $region2: #{facebox_forward.26} parent=0 // loop_pre_header
    _
  $region3: #{facebox_forward.26} parent=0 // loop_header
    %s9 = sphi 0, %s13
    %p10 = scmp.ge.s32.totalorder %s9, 4
    %s19 = sphi 0, %s21
    %s22 = sphi 0, %s19
    %s23 = sphi 0, %s22
    %s39 = sphi 0, %s23
    %s43 = sphi 0, %s43
    %s45 = sphi 0, %s43
    %s46 = sphi 0, %s45
    %s60 = sphi 0, %s46
    %s64 = sphi 0, %s64
    %s66 = sphi 0, %s64
    %s67 = sphi 0, %s66
    %s81 = sphi 0, %s67
    %s87 = sphi 0, %s89
    %s90 = sphi 0, %s87
    %s91 = sphi 0, %s90
    %s107 = sphi 0, %s91
  $region4: #{facebox_forward.26} parent=0 // loop_header_branch
    %12 = sbr.rel (%p10) target = $region8
  $region5: #{facebox_forward.26} parent=0 // loop_body
    %s14 = ssub.s32 %s9, 1
    %s15 = ssub.s32 %s9, 2
    %s16 = sadd.s32 %s9, 1
    %s17 = ssub.s32 %s9, %s16
    %p18 = scmp.eq.s32.totalorder %s17, 0
    %s20 = sadd.s32 %s19, 1
    %s21 = scalar_select %p18, %s19, %s20
    %p24 = pneg %p18
    %p25 = scmp.eq.s32.totalorder %s9, 1
    %p26 = por %p24, %p25
    %p27 = scmp.ne.s32.totalorder %s19, %s22
    %p28 = scmp.eq.s32.totalorder %s9, 0
    %p29 = por %p27, %p28
    %p30 = scmp.ne.s32.totalorder %s19, %s22
    %p31 = scmp.eq.s32.totalorder %s14, 1
    %p32 = por %p30, %p31
    %p33 = scmp.ne.s32.totalorder %s22, %s23
    %p34 = scmp.eq.s32.totalorder %s14, 0
    %p35 = por %p33, %p34
    %p36 = scmp.ne.s32.totalorder %s22, %s23
    %p37 = scmp.eq.s32.totalorder %s15, 1
    %p38 = por %p36, %p37
    %p40 = scmp.ne.s32.totalorder %s23, %s39
    %p41 = scmp.eq.s32.totalorder %s15, 0
    %p42 = por %p40, %p41
    %s44 = sadd.s32 %s43, 1
    %p47 = scmp.eq.s32.totalorder %s9, 1
    %p48 = scmp.ne.s32.totalorder %s43, %s45
    %p49 = scmp.eq.s32.totalorder %s9, 0
    %p50 = por %p48, %p49
    %p51 = scmp.ne.s32.totalorder %s43, %s45
    %p52 = scmp.eq.s32.totalorder %s14, 1
    %p53 = por %p51, %p52
    %p54 = scmp.ne.s32.totalorder %s45, %s46
    %p55 = scmp.eq.s32.totalorder %s14, 0
    %p56 = por %p54, %p55
    %p57 = scmp.ne.s32.totalorder %s45, %s46
    %p58 = scmp.eq.s32.totalorder %s15, 1
    %p59 = por %p57, %p58
    %p61 = scmp.ne.s32.totalorder %s46, %s60
    %p62 = scmp.eq.s32.totalorder %s15, 0
    %p63 = por %p61, %p62
    %s65 = sadd.s32 %s64, 1
    %p68 = scmp.eq.s32.totalorder %s9, 1
    %p69 = scmp.ne.s32.totalorder %s64, %s66
    %p70 = scmp.eq.s32.totalorder %s9, 0
    %p71 = por %p69, %p70
    %p72 = scmp.ne.s32.totalorder %s64, %s66
    %p73 = scmp.eq.s32.totalorder %s14, 1
    %p74 = por %p72, %p73
    %p75 = scmp.ne.s32.totalorder %s66, %s67
    %p76 = scmp.eq.s32.totalorder %s14, 0
    %p77 = por %p75, %p76
    %p78 = scmp.ne.s32.totalorder %s66, %s67
    %p79 = scmp.eq.s32.totalorder %s15, 1
    %p80 = por %p78, %p79
    %p82 = scmp.ne.s32.totalorder %s67, %s81
    %p83 = scmp.eq.s32.totalorder %s15, 0
    %p84 = por %p82, %p83
    %s85 = ssub.s32 %s9, %s16
    %p86 = scmp.eq.s32.totalorder %s85, 0
    %s88 = sadd.s32 %s87, 1
    %s89 = scalar_select %p86, %s87, %s88
    %p92 = pneg %p86
    %p93 = scmp.eq.s32.totalorder %s9, 1
    %p94 = por %p92, %p93
    %p95 = scmp.ne.s32.totalorder %s87, %s90
    %p96 = scmp.eq.s32.totalorder %s9, 0
    %p97 = por %p95, %p96
    %p98 = scmp.ne.s32.totalorder %s87, %s90
    %p99 = scmp.eq.s32.totalorder %s14, 1
    %p100 = por %p98, %p99
    %p101 = scmp.ne.s32.totalorder %s90, %s91
    %p102 = scmp.eq.s32.totalorder %s14, 0
    %p103 = por %p101, %p102
    %p104 = scmp.ne.s32.totalorder %s90, %s91
    %p105 = scmp.eq.s32.totalorder %s15, 1
    %p106 = por %p104, %p105
    %p108 = scmp.ne.s32.totalorder %s91, %s107
    %p109 = scmp.eq.s32.totalorder %s15, 0
    %p110 = por %p108, %p109
    %p111 = scmp.le.s32.totalorder 1, %s9
    %p112 = scmp.lt.s32.totalorder %s9, 3
    %p113 = pnand %p111, %p112
    %p114 = pneg %p113
    // Predicated region
    $region9: #{facebox_forward.26} parent=5 // pred_check
      _
    $region10: #{facebox_forward.26} parent=5 // pred_check_branch
      %116 = sbr.rel (%p113) target = $region12
    $region11: #{facebox_forward.26} parent=5 // pred_region
      %s117 = ssub.s32 %s9, 1
      // Predicated region
      $region13: #{facebox_forward.26} parent=11 // pred_check
        %p118 = pneg %p56
      $region14: #{facebox_forward.26} parent=11 // pred_check_branch
        %120 = sbr.rel (%p118) target = $region16
      $region15: #{facebox_forward.26} parent=11 // pred_region
        _
      $region16: #{facebox_forward.26} parent=11 // pred_fallthru
        _
      // Predicated region
      $region17: #{facebox_forward.26} parent=11 // pred_check
        %p121 = pneg %p77
      $region18: #{facebox_forward.26} parent=11 // pred_check_branch
        %123 = sbr.rel (%p121) target = $region20
      $region19: #{facebox_forward.26} parent=11 // pred_region
        _
      $region20: #{facebox_forward.26} parent=11 // pred_fallthru
        _
    $region12: #{facebox_forward.26} parent=5 // pred_fallthru
      _
    %p124 = scmp.lt.s32.totalorder %s9, 2
    // Predicated region
    $region21: #{facebox_forward.26} parent=5 // pred_check
      %p125 = pneg %p124
    $region22: #{facebox_forward.26} parent=5 // pred_check_branch
      %127 = sbr.rel (%p125) target = $region24
    $region23: #{facebox_forward.26} parent=5 // pred_region
      // Predicated region
      $region25: #{facebox_forward.26} parent=23 // pred_check
        %p128 = pneg %p29
      $region26: #{facebox_forward.26} parent=23 // pred_check_branch
        %130 = sbr.rel (%p128) target = $region28
      $region27: #{facebox_forward.26} parent=23 // pred_region
        %s131 = smul.u32 2, %s9
        %p132 = scmp.lt.s32.totalorder %s131, 3
        %s133 = scalar_select %p132, %s131, 3
        %s134 = smul.addr %s133, 4
        %s135 = smul.addr %s134, 4
        %s136 = scalar_lea.vmem %s0, %s135
        %s137 = smul.u32 2, %s9
      $region28: #{facebox_forward.26} parent=23 // pred_fallthru
        _
    $region24: #{facebox_forward.26} parent=5 // pred_fallthru
      _
    %p138 = scmp.le.s32.totalorder 1, %s9
    %p139 = scmp.lt.s32.totalorder %s9, 3
    %p140 = pnand %p138, %p139
    %p141 = pneg %p140
    // Predicated region
    $region29: #{facebox_forward.26} parent=5 // pred_check
      _
    $region30: #{facebox_forward.26} parent=5 // pred_check_branch
      %143 = sbr.rel (%p140) target = $region32
    $region31: #{facebox_forward.26} parent=5 // pred_region
      %s144 = ssub.s32 %s9, 1
      %s145 = smul.u32 2, %s14
      %p146 = scmp.lt.s32.totalorder %s145, 3
      %s147 = scalar_select %p146, %s145, 3
      %s148 = smul.addr %s147, 4
      %s149 = smul.addr %s148, 4
      %s150 = scalar_lea.vmem %s0, %s149
      %p151 = pneg %p35
      %p152 = pneg %p32
      %p153 = pneg %p56
      %p154 = pneg %p53
      %p155 = pneg %p77
      %p156 = pneg %p74
      %p157 = pneg %p103
      %p158 = pneg %p100
      %s159 = smul.u32 2, %s14
      %p160 = scmp.lt.s32.totalorder %s159, 3
      %s161 = scalar_select %p160, %s159, 3
      %s162 = smul.addr %s161, 4
      %s163 = scalar_lea.vmem %s3, %s162
      %s164 = smul.u32 2, %s14
      %p165 = scmp.lt.s32.totalorder %s164, 3
      %s166 = scalar_select %p165, %s164, 3
      %s167 = smul.addr %s166, 4
      %s168 = smul.addr %s167, 4
      %s169 = scalar_lea.vmem %s0, %s168
      %s170 = smul.u32 2, %s14
      %s171 = smul.u32 2, %s14
      %p172 = scmp.lt.s32.totalorder %s171, 3
      %s173 = scalar_select %p172, %s171, 3
      %s174 = smul.addr %s173, 4
      %s175 = scalar_lea.vmem %s3, %s174
      %s176 = smul.u32 2, %s14
      %v178 = vld [vmem:[%s169] sm:$0xff]
      %v179 = vld [vmem:[%s169 + $0x8] sm:$0xff]
      %v180 = vld [vmem:[%s169 + $0x10] sm:$0xff]
      %v181 = vld [vmem:[%s169 + $0x18] sm:$0xff]
      %v182 = vld [vmem:[%s1] sm:$0xf]
      %v183 = vld [vmem:[%s1 + $0x4] sm:$0xf]
      %v184 = vld [vmem:[%s1 + $0x8] sm:$0xf]
      %v185 = vld [vmem:[%s1 + $0xc] sm:$0xf]
      %v186 = vld [vmem:[%s1 + $0x10] sm:$0xf]
      %v187 = vld [vmem:[%s1 + $0x14] sm:$0xf]
      %v188 = vld [vmem:[%s1 + $0x18] sm:$0xf]
      %v189 = vld [vmem:[%s1 + $0x1c] sm:$0xf]
      %v190 = vld [vmem:[%s1 + $0x20] sm:$0xf]
      %v191 = vld [vmem:[%s1 + $0x24] sm:$0xf]
      %v192 = vld [vmem:[%s1 + $0x28] sm:$0xf]
      %v193 = vld [vmem:[%s1 + $0x2c] sm:$0xf]
      %v194 = vld [vmem:[%s1 + $0x30] sm:$0xf]
      %v195 = vld [vmem:[%s1 + $0x34] sm:$0xf]
      %v196 = vld [vmem:[%s1 + $0x38] sm:$0xf]
      %v197 = vld [vmem:[%s1 + $0x3c] sm:$0xf]
      %v198 = vld [vmem:[%s1 + $0x40] sm:$0xf]
      %v199 = vld [vmem:[%s1 + $0x44] sm:$0xf]
      %v200 = vld [vmem:[%s1 + $0x48] sm:$0xf]
      %v201 = vld [vmem:[%s1 + $0x4c] sm:$0xf]
      %v202 = vld [vmem:[%s1 + $0x50] sm:$0xf]
      %v203 = vld [vmem:[%s1 + $0x54] sm:$0xf]
      %v204 = vld [vmem:[%s1 + $0x58] sm:$0xf]
      %v205 = vld [vmem:[%s1 + $0x5c] sm:$0xf]
      %v206 = vld [vmem:[%s1 + $0x60] sm:$0xf]
      %v207 = vld [vmem:[%s1 + $0x64] sm:$0xf]
      %v208 = vld [vmem:[%s1 + $0x68] sm:$0xf]
      %v209 = vld [vmem:[%s1 + $0x6c] sm:$0xf]
      %v210 = vld [vmem:[%s1 + $0x70] sm:$0xf]
      %v211 = vld [vmem:[%s1 + $0x74] sm:$0xf]
      %v212 = vld [vmem:[%s1 + $0x78] sm:$0xf]
      %v213 = vld [vmem:[%s1 + $0x7c] sm:$0xf]
      %v214 = vld [vmem:[%s1 + $0x80] sm:$0xf]
      %v215 = vld [vmem:[%s1 + $0x84] sm:$0xf]
      %v216 = vld [vmem:[%s1 + $0x88] sm:$0xf]
      %v217 = vld [vmem:[%s1 + $0x8c] sm:$0xf]
      %v218 = vld [vmem:[%s1 + $0x90] sm:$0xf]
      %v219 = vld [vmem:[%s1 + $0x94] sm:$0xf]
      %v220 = vld [vmem:[%s1 + $0x98] sm:$0xf]
      %v221 = vld [vmem:[%s1 + $0x9c] sm:$0xf]
      %v222 = vld [vmem:[%s1 + $0xa0] sm:$0xf]
      %v223 = vld [vmem:[%s1 + $0xa4] sm:$0xf]
      %v224 = vld [vmem:[%s1 + $0xa8] sm:$0xf]
      %v225 = vld [vmem:[%s1 + $0xac] sm:$0xf]
      %v226 = vld [vmem:[%s1 + $0xb0] sm:$0xf]
      %v227 = vld [vmem:[%s1 + $0xb4] sm:$0xf]
      %v228 = vld [vmem:[%s1 + $0xb8] sm:$0xf]
      %v229 = vld [vmem:[%s1 + $0xbc] sm:$0xf]
      %v230 = vld [vmem:[%s1 + $0xc0] sm:$0xf]
      %v231 = vld [vmem:[%s1 + $0xc4] sm:$0xf]
      %v232 = vld [vmem:[%s1 + $0xc8] sm:$0xf]
      %v233 = vld [vmem:[%s1 + $0xcc] sm:$0xf]
      %v234 = vld [vmem:[%s1 + $0xd0] sm:$0xf]
      %v235 = vld [vmem:[%s1 + $0xd4] sm:$0xf]
      %v236 = vld [vmem:[%s1 + $0xd8] sm:$0xf]
      %v237 = vld [vmem:[%s1 + $0xdc] sm:$0xf]
      %v238 = vld [vmem:[%s1 + $0xe0] sm:$0xf]
      %v239 = vld [vmem:[%s1 + $0xe4] sm:$0xf]
      %v240 = vld [vmem:[%s1 + $0xe8] sm:$0xf]
      %v241 = vld [vmem:[%s1 + $0xec] sm:$0xf]
      %v242 = vld [vmem:[%s1 + $0xf0] sm:$0xf]
      %v243 = vld [vmem:[%s1 + $0xf4] sm:$0xf]
      %v244 = vld [vmem:[%s1 + $0xf8] sm:$0xf]
      %v245 = vld [vmem:[%s1 + $0xfc] sm:$0xf]
      %v246 = vld [vmem:[%s2] sm:$0x1]
      %v248 = vlaneseq
      %v249 = vshrl.u32 %v248, 7
      %v250 = vsub.s32 0, %v249
      %v251 = vrot.slane %v246, %v250
      %v257 = vunpack.c.l.b16 %v178
      %v258 = vunpack.c.h.b16 %v178
      %v259 = vunpack.c.l.b16 %v179
      %v260 = vunpack.c.h.b16 %v179
      %v261 = vunpack.c.l.b16 %v180
      %v262 = vunpack.c.h.b16 %v180
      %v263 = vunpack.c.l.b16 %v181
      %v264 = vunpack.c.h.b16 %v181
      %v265 = vpack.c.b16 %v261, %v257
      %v266 = vpack.c.b16 %v262, %v258
      %v267 = vpack.c.b16 %v263, %v259
      %v268 = vpack.c.b16 %v264, %v260
      %v337 = vunpack.c.l.b16 %v182
      %v338 = vunpack.c.l.b16 %v183
      %v339 = vunpack.c.l.b16 %v184
      %v340 = vunpack.c.l.b16 %v185
      %v341 = vunpack.c.l.b16 %v186
      %v342 = vunpack.c.l.b16 %v187
      %v343 = vunpack.c.l.b16 %v188
      %v344 = vunpack.c.l.b16 %v189
      %v345 = vunpack.c.l.b16 %v190
      %v346 = vunpack.c.l.b16 %v191
      %v347 = vunpack.c.l.b16 %v192
      %v348 = vunpack.c.l.b16 %v193
      %v349 = vunpack.c.l.b16 %v194
      %v350 = vunpack.c.l.b16 %v195
      %v351 = vunpack.c.l.b16 %v196
      %v352 = vunpack.c.l.b16 %v197
      %v353 = vunpack.c.l.b16 %v198
      %v354 = vunpack.c.l.b16 %v199
      %v355 = vunpack.c.l.b16 %v200
      %v356 = vunpack.c.l.b16 %v201
      %v357 = vunpack.c.l.b16 %v202
      %v358 = vunpack.c.l.b16 %v203
      %v359 = vunpack.c.l.b16 %v204
      %v360 = vunpack.c.l.b16 %v205
      %v361 = vunpack.c.l.b16 %v206
      %v362 = vunpack.c.l.b16 %v207
      %v363 = vunpack.c.l.b16 %v208
      %v364 = vunpack.c.l.b16 %v209
      %v365 = vunpack.c.l.b16 %v210
      %v366 = vunpack.c.l.b16 %v211
      %v367 = vunpack.c.l.b16 %v212
      %v368 = vunpack.c.l.b16 %v213
      %v369 = vunpack.c.l.b16 %v214
      %v370 = vunpack.c.l.b16 %v215
      %v371 = vunpack.c.l.b16 %v216
      %v372 = vunpack.c.l.b16 %v217
      %v373 = vunpack.c.l.b16 %v218
      %v374 = vunpack.c.l.b16 %v219
      %v375 = vunpack.c.l.b16 %v220
      %v376 = vunpack.c.l.b16 %v221
      %v377 = vunpack.c.l.b16 %v222
      %v378 = vunpack.c.l.b16 %v223
      %v379 = vunpack.c.l.b16 %v224
      %v380 = vunpack.c.l.b16 %v225
      %v381 = vunpack.c.l.b16 %v226
      %v382 = vunpack.c.l.b16 %v227
      %v383 = vunpack.c.l.b16 %v228
      %v384 = vunpack.c.l.b16 %v229
      %v385 = vunpack.c.l.b16 %v230
      %v386 = vunpack.c.l.b16 %v231
      %v387 = vunpack.c.l.b16 %v232
      %v388 = vunpack.c.l.b16 %v233
      %v389 = vunpack.c.l.b16 %v234
      %v390 = vunpack.c.l.b16 %v235
      %v391 = vunpack.c.l.b16 %v236
      %v392 = vunpack.c.l.b16 %v237
      %v393 = vunpack.c.l.b16 %v238
      %v394 = vunpack.c.l.b16 %v239
      %v395 = vunpack.c.l.b16 %v240
      %v396 = vunpack.c.l.b16 %v241
      %v397 = vunpack.c.l.b16 %v242
      %v398 = vunpack.c.l.b16 %v243
      %v399 = vunpack.c.l.b16 %v244
      %v400 = vunpack.c.l.b16 %v245
      %v401 = vpack.c.b16 %v338, %v337
      %v402 = vpack.c.b16 %v340, %v339
      %v403 = vpack.c.b16 %v342, %v341
      %v404 = vpack.c.b16 %v344, %v343
      %v405 = vpack.c.b16 %v346, %v345
      %v406 = vpack.c.b16 %v348, %v347
      %v407 = vpack.c.b16 %v350, %v349
      %v408 = vpack.c.b16 %v352, %v351
      %v409 = vpack.c.b16 %v354, %v353
      %v410 = vpack.c.b16 %v356, %v355
      %v411 = vpack.c.b16 %v358, %v357
      %v412 = vpack.c.b16 %v360, %v359
      %v413 = vpack.c.b16 %v362, %v361
      %v414 = vpack.c.b16 %v364, %v363
      %v415 = vpack.c.b16 %v366, %v365
      %v416 = vpack.c.b16 %v368, %v367
      %v417 = vpack.c.b16 %v370, %v369
      %v418 = vpack.c.b16 %v372, %v371
      %v419 = vpack.c.b16 %v374, %v373
      %v420 = vpack.c.b16 %v376, %v375
      %v421 = vpack.c.b16 %v378, %v377
      %v422 = vpack.c.b16 %v380, %v379
      %v423 = vpack.c.b16 %v382, %v381
      %v424 = vpack.c.b16 %v384, %v383
      %v425 = vpack.c.b16 %v386, %v385
      %v426 = vpack.c.b16 %v388, %v387
      %v427 = vpack.c.b16 %v390, %v389
      %v428 = vpack.c.b16 %v392, %v391
      %v429 = vpack.c.b16 %v394, %v393
      %v430 = vpack.c.b16 %v396, %v395
      %v431 = vpack.c.b16 %v398, %v397
      %v432 = vpack.c.b16 %v400, %v399
      %465 = vmatprep.subr.bf16.mxu0 0
      %466 = vmatpush1.bf16.msra.mxu0 %v408
      %467 = vmatprep.subr.bf16.mxu0 0
      %468 = vmatpush1.bf16.msra.mxu0 %v407
      %469 = vmatprep.subr.bf16.mxu0 0
      %470 = vmatpush1.bf16.msra.mxu0 %v406
      %471 = vmatprep.subr.bf16.mxu0 0
      %472 = vmatpush1.bf16.msra.mxu0 %v405
      %473 = vmatprep.subr.bf16.mxu0 0
      %474 = vmatpush1.bf16.msra.mxu0 %v404
      %475 = vmatprep.subr.bf16.mxu0 0
      %476 = vmatpush1.bf16.msra.mxu0 %v403
      %477 = vmatprep.subr.bf16.mxu0 0
      %478 = vmatpush1.bf16.msra.mxu0 %v402
      %479 = vmatprep.subr.bf16.mxu0 0
      %480 = vmatpush1.bf16.msra.mxu0 %v401
      %481 = vmatprep.subr.bf16.mxu0 0
      %482 = vmatpush2.bf16.msra.mxu0 %v416
      %483 = vmatprep.subr.bf16.mxu0 0
      %484 = vmatpush2.bf16.msra.mxu0 %v415
      %485 = vmatprep.subr.bf16.mxu0 0
      %486 = vmatpush2.bf16.msra.mxu0 %v414
      %487 = vmatprep.subr.bf16.mxu0 0
      %488 = vmatpush2.bf16.msra.mxu0 %v413
      %489 = vmatprep.subr.bf16.mxu0 0
      %490 = vmatpush2.bf16.msra.mxu0 %v412
      %491 = vmatprep.subr.bf16.mxu0 0
      %492 = vmatpush2.bf16.msra.mxu0 %v411
      %493 = vmatprep.subr.bf16.mxu0 0
      %494 = vmatpush2.bf16.msra.mxu0 %v410
      %495 = vmatprep.subr.bf16.mxu0 0
      %496 = vmatpush2.bf16.msra.mxu0 %v409
      %497 = vmatprep.mubr.bf16.mxu0 %v266
      %498 = vmatmul.mubr.bf16.gmra.mxu0 %v265
      %v499 = vpop.f32.mrf.mxu0
      %v500 = vadd.f32 %v251, %v499
      %v501 = vpop.f32.mrf.mxu0
      %v502 = vpop.f32.mrf.mxu0
      %v503 = vadd.f32 %v251, %v502
      %v504 = vpop.f32.mrf.mxu0
      %505 = vdwg.mxu0
      %506 = vmatprep.subr.bf16.mxu0 0
      %507 = vmatpush1.bf16.msra.mxu0 %v424
      %508 = vmatprep.subr.bf16.mxu0 0
      %509 = vmatpush1.bf16.msra.mxu0 %v423
      %510 = vmatprep.subr.bf16.mxu0 0
      %511 = vmatpush1.bf16.msra.mxu0 %v422
      %512 = vmatprep.subr.bf16.mxu0 0
      %513 = vmatpush1.bf16.msra.mxu0 %v421
      %514 = vmatprep.subr.bf16.mxu0 0
      %515 = vmatpush1.bf16.msra.mxu0 %v420
      %516 = vmatprep.subr.bf16.mxu0 0
      %517 = vmatpush1.bf16.msra.mxu0 %v419
      %518 = vmatprep.subr.bf16.mxu0 0
      %519 = vmatpush1.bf16.msra.mxu0 %v418
      %520 = vmatprep.subr.bf16.mxu0 0
      %521 = vmatpush1.bf16.msra.mxu0 %v417
      %522 = vmatprep.subr.bf16.mxu0 0
      %523 = vmatpush2.bf16.msra.mxu0 %v432
      %524 = vmatprep.subr.bf16.mxu0 0
      %525 = vmatpush2.bf16.msra.mxu0 %v431
      %526 = vmatprep.subr.bf16.mxu0 0
      %527 = vmatpush2.bf16.msra.mxu0 %v430
      %528 = vmatprep.subr.bf16.mxu0 0
      %529 = vmatpush2.bf16.msra.mxu0 %v429
      %530 = vmatprep.subr.bf16.mxu0 0
      %531 = vmatpush2.bf16.msra.mxu0 %v428
      %532 = vmatprep.subr.bf16.mxu0 0
      %533 = vmatpush2.bf16.msra.mxu0 %v427
      %534 = vmatprep.subr.bf16.mxu0 0
      %535 = vmatpush2.bf16.msra.mxu0 %v426
      %536 = vmatprep.subr.bf16.mxu0 0
      %537 = vmatpush2.bf16.msra.mxu0 %v425
      %538 = vmatprep.mubr.bf16.mxu0 %v268
      %539 = vmatmul.mubr.bf16.gmra.mxu0 %v267
      %v540 = vpop.f32.mrf.mxu0
      %v541 = vadd.f32 %v500, %v540
      %v542 = vpop.f32.mrf.mxu0
      %v543 = vpop.f32.mrf.mxu0
      %v544 = vadd.f32 %v503, %v543
      %v545 = vpop.f32.mrf.mxu0
      %546 = vdwg.mxu0
      %v547 = vpack.c.bf16 %v544, %v541
      %v549 = vunpack.c.l.b16 %v547
      %v550 = vunpack.c.h.b16 %v547
      %v551 = vpack.c.b16 %v549, %v549
      %v552 = vpack.c.b16 %v550, %v550
      %vm555 = vcmask 519168
      %556 = vst.msk [vmem:[%s175] sm:$0xf] %vm555, %v551
      %557 = vst.msk [vmem:[%s175 + $0x4] sm:$0xf] %vm555, %v552
      %s558 = smul.u32 2, %s14
      %p559 = scmp.lt.s32.totalorder %s558, 3
      %s560 = scalar_select %p559, %s558, 3
      %s561 = smul.addr %s560, 4
      %s562 = scalar_lea.vmem %s3, %s561
      // Predicated region
      $region33: #{facebox_forward.26} parent=31 // pred_check
        %p563 = pneg %p100
      $region34: #{facebox_forward.26} parent=31 // pred_check_branch
        %565 = sbr.rel (%p563) target = $region36
      $region35: #{facebox_forward.26} parent=31 // pred_region
        %s566 = smul.u32 2, %s14
      $region36: #{facebox_forward.26} parent=31 // pred_fallthru
        _
    $region32: #{facebox_forward.26} parent=5 // pred_fallthru
      _
    %p567 = scmp.le.s32.totalorder 2, %s9
    // Predicated region
    $region37: #{facebox_forward.26} parent=5 // pred_check
      %p568 = pneg %p567
    $region38: #{facebox_forward.26} parent=5 // pred_check_branch
      %570 = sbr.rel (%p568) target = $region40
    $region39: #{facebox_forward.26} parent=5 // pred_region
      %s571 = ssub.s32 %s9, 2
      // Predicated region
      $region41: #{facebox_forward.26} parent=39 // pred_check
        %p572 = pneg %p106
      $region42: #{facebox_forward.26} parent=39 // pred_check_branch
        %574 = sbr.rel (%p572) target = $region44
      $region43: #{facebox_forward.26} parent=39 // pred_region
        %s575 = smul.u32 2, %s15
        %p576 = scmp.lt.s32.totalorder %s575, 3
        %s577 = scalar_select %p576, %s575, 3
        %s578 = smul.addr %s577, 4
        %s579 = scalar_lea.vmem %s3, %s578
      $region44: #{facebox_forward.26} parent=39 // pred_fallthru
        _
    $region40: #{facebox_forward.26} parent=5 // pred_fallthru
      _
  $region6: #{facebox_forward.26} parent=0 // loop_footer
    %s13 = sadd.s32 1, %s9
  $region7: #{facebox_forward.26} parent=0 // loop_footer_branch
    %8 = sbr.rel target = $region3
  $region8: #{facebox_forward.26} parent=0 // loop_exit
    _

// kernel: facebox_forward.27
$region0: #{facebox_forward.27}
  #allocation0 [shape = 'u32[]', space=smem, size = 0x4, offset = 0x4, fixed_abs, tag = 'smem constant byte address 0x4 - core index']
  #allocation1 [shape = 'u32[144,128]{1,0:T(1,128)}', space=vmem, size = 0x12000, scoped, tag = 'internal scratch']
  %s0 = inlined_call_operand.vmem [shape: bf16[32,384], index: 0, kind: input, shape index: {}]
  %s1 = inlined_call_operand.vmem [shape: bf16[384,32], index: 1, kind: input, shape index: {}]
  %s2 = inlined_call_operand.vmem [shape: f32[1,32], index: 2, kind: input, shape index: {}]
  %s3 = inlined_call_operand.vmem [shape: bf16[32,32], index: 3, kind: output, shape index: {}]
  %s4 = sld [smem:[#allocation0]]
  $region45: #{facebox_forward.27} parent=0
    _
  %s6 = ssub.s32 1, %s4
  %s7 = scalar_select 0, %s6, %s4
  loop: start=0, step=1, limit=4
  $region2: #{facebox_forward.27} parent=0 // loop_pre_header
    _
  $region3: #{facebox_forward.27} parent=0 // loop_header
    %s9 = sphi 0, %s13
    %p10 = scmp.ge.s32.totalorder %s9, 4
    %s19 = sphi 0, %s21
    %s22 = sphi 0, %s19
    %s23 = sphi 0, %s22
    %s39 = sphi 0, %s23
    %s43 = sphi 0, %s43
    %s45 = sphi 0, %s43
    %s46 = sphi 0, %s45
    %s60 = sphi 0, %s46
    %s64 = sphi 0, %s64
    %s66 = sphi 0, %s64
    %s67 = sphi 0, %s66
    %s81 = sphi 0, %s67
    %s87 = sphi 0, %s89
    %s90 = sphi 0, %s87
    %s91 = sphi 0, %s90
    %s107 = sphi 0, %s91
  $region4: #{facebox_forward.27} parent=0 // loop_header_branch
    %12 = sbr.rel (%p10) target = $region8
  $region5: #{facebox_forward.27} parent=0 // loop_body
    %s14 = ssub.s32 %s9, 1
    %s15 = ssub.s32 %s9, 2
    %s16 = sadd.s32 %s9, 1
    %s17 = ssub.s32 %s9, %s16
    %p18 = scmp.eq.s32.totalorder %s17, 0
    %s20 = sadd.s32 %s19, 1
    %s21 = scalar_select %p18, %s19, %s20
    %p24 = pneg %p18
    %p25 = scmp.eq.s32.totalorder %s9, 1
    %p26 = por %p24, %p25
    %p27 = scmp.ne.s32.totalorder %s19, %s22
    %p28 = scmp.eq.s32.totalorder %s9, 0
    %p29 = por %p27, %p28
    %p30 = scmp.ne.s32.totalorder %s19, %s22
    %p31 = scmp.eq.s32.totalorder %s14, 1
    %p32 = por %p30, %p31
    %p33 = scmp.ne.s32.totalorder %s22, %s23
    %p34 = scmp.eq.s32.totalorder %s14, 0
    %p35 = por %p33, %p34
    %p36 = scmp.ne.s32.totalorder %s22, %s23
    %p37 = scmp.eq.s32.totalorder %s15, 1
    %p38 = por %p36, %p37
    %p40 = scmp.ne.s32.totalorder %s23, %s39
    %p41 = scmp.eq.s32.totalorder %s15, 0
    %p42 = por %p40, %p41
    %s44 = sadd.s32 %s43, 1
    %p47 = scmp.eq.s32.totalorder %s9, 1
    %p48 = scmp.ne.s32.totalorder %s43, %s45
    %p49 = scmp.eq.s32.totalorder %s9, 0
    %p50 = por %p48, %p49
    %p51 = scmp.ne.s32.totalorder %s43, %s45
    %p52 = scmp.eq.s32.totalorder %s14, 1
    %p53 = por %p51, %p52
    %p54 = scmp.ne.s32.totalorder %s45, %s46
    %p55 = scmp.eq.s32.totalorder %s14, 0
    %p56 = por %p54, %p55
    %p57 = scmp.ne.s32.totalorder %s45, %s46
    %p58 = scmp.eq.s32.totalorder %s15, 1
    %p59 = por %p57, %p58
    %p61 = scmp.ne.s32.totalorder %s46, %s60
    %p62 = scmp.eq.s32.totalorder %s15, 0
    %p63 = por %p61, %p62
    %s65 = sadd.s32 %s64, 1
    %p68 = scmp.eq.s32.totalorder %s9, 1
    %p69 = scmp.ne.s32.totalorder %s64, %s66
    %p70 = scmp.eq.s32.totalorder %s9, 0
    %p71 = por %p69, %p70
    %p72 = scmp.ne.s32.totalorder %s64, %s66
    %p73 = scmp.eq.s32.totalorder %s14, 1
    %p74 = por %p72, %p73
    %p75 = scmp.ne.s32.totalorder %s66, %s67
    %p76 = scmp.eq.s32.totalorder %s14, 0
    %p77 = por %p75, %p76
    %p78 = scmp.ne.s32.totalorder %s66, %s67
    %p79 = scmp.eq.s32.totalorder %s15, 1
    %p80 = por %p78, %p79
    %p82 = scmp.ne.s32.totalorder %s67, %s81
    %p83 = scmp.eq.s32.totalorder %s15, 0
    %p84 = por %p82, %p83
    %s85 = ssub.s32 %s9, %s16
    %p86 = scmp.eq.s32.totalorder %s85, 0
    %s88 = sadd.s32 %s87, 1
    %s89 = scalar_select %p86, %s87, %s88
    %p92 = pneg %p86
    %p93 = scmp.eq.s32.totalorder %s9, 1
    %p94 = por %p92, %p93
    %p95 = scmp.ne.s32.totalorder %s87, %s90
    %p96 = scmp.eq.s32.totalorder %s9, 0
    %p97 = por %p95, %p96
    %p98 = scmp.ne.s32.totalorder %s87, %s90
    %p99 = scmp.eq.s32.totalorder %s14, 1
    %p100 = por %p98, %p99
    %p101 = scmp.ne.s32.totalorder %s90, %s91
    %p102 = scmp.eq.s32.totalorder %s14, 0
    %p103 = por %p101, %p102
    %p104 = scmp.ne.s32.totalorder %s90, %s91
    %p105 = scmp.eq.s32.totalorder %s15, 1
    %p106 = por %p104, %p105
    %p108 = scmp.ne.s32.totalorder %s91, %s107
    %p109 = scmp.eq.s32.totalorder %s15, 0
    %p110 = por %p108, %p109
    %p111 = scmp.le.s32.totalorder 1, %s9
    %p112 = scmp.lt.s32.totalorder %s9, 3
    %p113 = pnand %p111, %p112
    %p114 = pneg %p113
    // Predicated region
    $region9: #{facebox_forward.27} parent=5 // pred_check
      _
    $region10: #{facebox_forward.27} parent=5 // pred_check_branch
      %116 = sbr.rel (%p113) target = $region12
    $region11: #{facebox_forward.27} parent=5 // pred_region
      %s117 = ssub.s32 %s9, 1
      // Predicated region
      $region13: #{facebox_forward.27} parent=11 // pred_check
        %p118 = pneg %p56
      $region14: #{facebox_forward.27} parent=11 // pred_check_branch
        %120 = sbr.rel (%p118) target = $region16
      $region15: #{facebox_forward.27} parent=11 // pred_region
        _
      $region16: #{facebox_forward.27} parent=11 // pred_fallthru
        _
      // Predicated region
      $region17: #{facebox_forward.27} parent=11 // pred_check
        %p121 = pneg %p77
      $region18: #{facebox_forward.27} parent=11 // pred_check_branch
        %123 = sbr.rel (%p121) target = $region20
      $region19: #{facebox_forward.27} parent=11 // pred_region
        _
      $region20: #{facebox_forward.27} parent=11 // pred_fallthru
        _
    $region12: #{facebox_forward.27} parent=5 // pred_fallthru
      _
    %p124 = scmp.lt.s32.totalorder %s9, 2
    // Predicated region
    $region21: #{facebox_forward.27} parent=5 // pred_check
      %p125 = pneg %p124
    $region22: #{facebox_forward.27} parent=5 // pred_check_branch
      %127 = sbr.rel (%p125) target = $region24
    $region23: #{facebox_forward.27} parent=5 // pred_region
      // Predicated region
      $region25: #{facebox_forward.27} parent=23 // pred_check
        %p128 = pneg %p29
      $region26: #{facebox_forward.27} parent=23 // pred_check_branch
        %130 = sbr.rel (%p128) target = $region28
      $region27: #{facebox_forward.27} parent=23 // pred_region
        %s131 = smul.u32 2, %s9
        %p132 = scmp.lt.s32.totalorder %s131, 3
        %s133 = scalar_select %p132, %s131, 3
        %s134 = smul.addr %s133, 3
        %s135 = smul.addr %s134, 4
        %s136 = scalar_lea.vmem %s0, %s135
        %s137 = smul.u32 2, %s9
      $region28: #{facebox_forward.27} parent=23 // pred_fallthru
        _
    $region24: #{facebox_forward.27} parent=5 // pred_fallthru
      _
    %p138 = scmp.le.s32.totalorder 1, %s9
    %p139 = scmp.lt.s32.totalorder %s9, 3
    %p140 = pnand %p138, %p139
    %p141 = pneg %p140
    // Predicated region
    $region29: #{facebox_forward.27} parent=5 // pred_check
      _
    $region30: #{facebox_forward.27} parent=5 // pred_check_branch
      %143 = sbr.rel (%p140) target = $region32
    $region31: #{facebox_forward.27} parent=5 // pred_region
      %s144 = ssub.s32 %s9, 1
      %s145 = smul.u32 2, %s14
      %p146 = scmp.lt.s32.totalorder %s145, 3
      %s147 = scalar_select %p146, %s145, 3
      %s148 = smul.addr %s147, 3
      %s149 = smul.addr %s148, 4
      %s150 = scalar_lea.vmem %s0, %s149
      %p151 = pneg %p35
      %p152 = pneg %p32
      %p153 = pneg %p56
      %p154 = pneg %p53
      %p155 = pneg %p77
      %p156 = pneg %p74
      %p157 = pneg %p103
      %p158 = pneg %p100
      %s159 = smul.u32 2, %s14
      %p160 = scmp.lt.s32.totalorder %s159, 3
      %s161 = scalar_select %p160, %s159, 3
      %s162 = smul.addr %s161, 4
      %s163 = scalar_lea.vmem %s3, %s162
      %s164 = smul.u32 2, %s14
      %p165 = scmp.lt.s32.totalorder %s164, 3
      %s166 = scalar_select %p165, %s164, 3
      %s167 = smul.addr %s166, 3
      %s168 = smul.addr %s167, 4
      %s169 = scalar_lea.vmem %s0, %s168
      %s170 = smul.u32 2, %s14
      %s171 = smul.u32 2, %s14
      %p172 = scmp.lt.s32.totalorder %s171, 3
      %s173 = scalar_select %p172, %s171, 3
      %s174 = smul.addr %s173, 4
      %s175 = scalar_lea.vmem %s3, %s174
      %s176 = smul.u32 2, %s14
      %v178 = vld [vmem:[%s169] sm:$0xff]
      %v179 = vld [vmem:[%s169 + $0x8] sm:$0xf]
      %v180 = vld [vmem:[%s169 + $0xc] sm:$0xff]
      %v181 = vld [vmem:[%s169 + $0x14] sm:$0xf]
      %v182 = vld [vmem:[%s1] sm:$0xf]
      %v183 = vld [vmem:[%s1 + $0x4] sm:$0xf]
      %v184 = vld [vmem:[%s1 + $0x8] sm:$0xf]
      %v185 = vld [vmem:[%s1 + $0xc] sm:$0xf]
      %v186 = vld [vmem:[%s1 + $0x10] sm:$0xf]
      %v187 = vld [vmem:[%s1 + $0x14] sm:$0xf]
      %v188 = vld [vmem:[%s1 + $0x18] sm:$0xf]
      %v189 = vld [vmem:[%s1 + $0x1c] sm:$0xf]
      %v190 = vld [vmem:[%s1 + $0x20] sm:$0xf]
      %v191 = vld [vmem:[%s1 + $0x24] sm:$0xf]
      %v192 = vld [vmem:[%s1 + $0x28] sm:$0xf]
      %v193 = vld [vmem:[%s1 + $0x2c] sm:$0xf]
      %v194 = vld [vmem:[%s1 + $0x30] sm:$0xf]
      %v195 = vld [vmem:[%s1 + $0x34] sm:$0xf]
      %v196 = vld [vmem:[%s1 + $0x38] sm:$0xf]
      %v197 = vld [vmem:[%s1 + $0x3c] sm:$0xf]
      %v198 = vld [vmem:[%s1 + $0x40] sm:$0xf]
      %v199 = vld [vmem:[%s1 + $0x44] sm:$0xf]
      %v200 = vld [vmem:[%s1 + $0x48] sm:$0xf]
      %v201 = vld [vmem:[%s1 + $0x4c] sm:$0xf]
      %v202 = vld [vmem:[%s1 + $0x50] sm:$0xf]
      %v203 = vld [vmem:[%s1 + $0x54] sm:$0xf]
      %v204 = vld [vmem:[%s1 + $0x58] sm:$0xf]
      %v205 = vld [vmem:[%s1 + $0x5c] sm:$0xf]
      %v206 = vld [vmem:[%s1 + $0x60] sm:$0xf]
      %v207 = vld [vmem:[%s1 + $0x64] sm:$0xf]
      %v208 = vld [vmem:[%s1 + $0x68] sm:$0xf]
      %v209 = vld [vmem:[%s1 + $0x6c] sm:$0xf]
      %v210 = vld [vmem:[%s1 + $0x70] sm:$0xf]
      %v211 = vld [vmem:[%s1 + $0x74] sm:$0xf]
      %v212 = vld [vmem:[%s1 + $0x78] sm:$0xf]
      %v213 = vld [vmem:[%s1 + $0x7c] sm:$0xf]
      %v214 = vld [vmem:[%s1 + $0x80] sm:$0xf]
      %v215 = vld [vmem:[%s1 + $0x84] sm:$0xf]
      %v216 = vld [vmem:[%s1 + $0x88] sm:$0xf]
      %v217 = vld [vmem:[%s1 + $0x8c] sm:$0xf]
      %v218 = vld [vmem:[%s1 + $0x90] sm:$0xf]
      %v219 = vld [vmem:[%s1 + $0x94] sm:$0xf]
      %v220 = vld [vmem:[%s1 + $0x98] sm:$0xf]
      %v221 = vld [vmem:[%s1 + $0x9c] sm:$0xf]
      %v222 = vld [vmem:[%s1 + $0xa0] sm:$0xf]
      %v223 = vld [vmem:[%s1 + $0xa4] sm:$0xf]
      %v224 = vld [vmem:[%s1 + $0xa8] sm:$0xf]
      %v225 = vld [vmem:[%s1 + $0xac] sm:$0xf]
      %v226 = vld [vmem:[%s1 + $0xb0] sm:$0xf]
      %v227 = vld [vmem:[%s1 + $0xb4] sm:$0xf]
      %v228 = vld [vmem:[%s1 + $0xb8] sm:$0xf]
      %v229 = vld [vmem:[%s1 + $0xbc] sm:$0xf]
      %v230 = vld [vmem:[%s2] sm:$0x1]
      %v232 = vlaneseq
      %v233 = vshrl.u32 %v232, 7
      %v234 = vsub.s32 0, %v233
      %v235 = vrot.slane %v230, %v234
      %v241 = vunpack.c.l.b16 %v178
      %v242 = vunpack.c.h.b16 %v178
      %v243 = vunpack.c.l.b16 %v179
      %v244 = vunpack.c.l.b16 %v180
      %v245 = vunpack.c.h.b16 %v180
      %v246 = vunpack.c.l.b16 %v181
      %v247 = vpack.c.b16 %v244, %v241
      %v248 = vpack.c.b16 %v245, %v242
      %v249 = vpack.c.b16 %v246, %v243
      %v301 = vunpack.c.l.b16 %v182
      %v302 = vunpack.c.l.b16 %v183
      %v303 = vunpack.c.l.b16 %v184
      %v304 = vunpack.c.l.b16 %v185
      %v305 = vunpack.c.l.b16 %v186
      %v306 = vunpack.c.l.b16 %v187
      %v307 = vunpack.c.l.b16 %v188
      %v308 = vunpack.c.l.b16 %v189
      %v309 = vunpack.c.l.b16 %v190
      %v310 = vunpack.c.l.b16 %v191
      %v311 = vunpack.c.l.b16 %v192
      %v312 = vunpack.c.l.b16 %v193
      %v313 = vunpack.c.l.b16 %v194
      %v314 = vunpack.c.l.b16 %v195
      %v315 = vunpack.c.l.b16 %v196
      %v316 = vunpack.c.l.b16 %v197
      %v317 = vunpack.c.l.b16 %v198
      %v318 = vunpack.c.l.b16 %v199
      %v319 = vunpack.c.l.b16 %v200
      %v320 = vunpack.c.l.b16 %v201
      %v321 = vunpack.c.l.b16 %v202
      %v322 = vunpack.c.l.b16 %v203
      %v323 = vunpack.c.l.b16 %v204
      %v324 = vunpack.c.l.b16 %v205
      %v325 = vunpack.c.l.b16 %v206
      %v326 = vunpack.c.l.b16 %v207
      %v327 = vunpack.c.l.b16 %v208
      %v328 = vunpack.c.l.b16 %v209
      %v329 = vunpack.c.l.b16 %v210
      %v330 = vunpack.c.l.b16 %v211
      %v331 = vunpack.c.l.b16 %v212
      %v332 = vunpack.c.l.b16 %v213
      %v333 = vunpack.c.l.b16 %v214
      %v334 = vunpack.c.l.b16 %v215
      %v335 = vunpack.c.l.b16 %v216
      %v336 = vunpack.c.l.b16 %v217
      %v337 = vunpack.c.l.b16 %v218
      %v338 = vunpack.c.l.b16 %v219
      %v339 = vunpack.c.l.b16 %v220
      %v340 = vunpack.c.l.b16 %v221
      %v341 = vunpack.c.l.b16 %v222
      %v342 = vunpack.c.l.b16 %v223
      %v343 = vunpack.c.l.b16 %v224
      %v344 = vunpack.c.l.b16 %v225
      %v345 = vunpack.c.l.b16 %v226
      %v346 = vunpack.c.l.b16 %v227
      %v347 = vunpack.c.l.b16 %v228
      %v348 = vunpack.c.l.b16 %v229
      %v349 = vpack.c.b16 %v302, %v301
      %v350 = vpack.c.b16 %v304, %v303
      %v351 = vpack.c.b16 %v306, %v305
      %v352 = vpack.c.b16 %v308, %v307
      %v353 = vpack.c.b16 %v310, %v309
      %v354 = vpack.c.b16 %v312, %v311
      %v355 = vpack.c.b16 %v314, %v313
      %v356 = vpack.c.b16 %v316, %v315
      %v357 = vpack.c.b16 %v318, %v317
      %v358 = vpack.c.b16 %v320, %v319
      %v359 = vpack.c.b16 %v322, %v321
      %v360 = vpack.c.b16 %v324, %v323
      %v361 = vpack.c.b16 %v326, %v325
      %v362 = vpack.c.b16 %v328, %v327
      %v363 = vpack.c.b16 %v330, %v329
      %v364 = vpack.c.b16 %v332, %v331
      %v365 = vpack.c.b16 %v334, %v333
      %v366 = vpack.c.b16 %v336, %v335
      %v367 = vpack.c.b16 %v338, %v337
      %v368 = vpack.c.b16 %v340, %v339
      %v369 = vpack.c.b16 %v342, %v341
      %v370 = vpack.c.b16 %v344, %v343
      %v371 = vpack.c.b16 %v346, %v345
      %v372 = vpack.c.b16 %v348, %v347
      %397 = vmatprep.subr.bf16.mxu0 0
      %398 = vmatpush1.bf16.msra.mxu0 %v356
      %399 = vmatprep.subr.bf16.mxu0 0
      %400 = vmatpush1.bf16.msra.mxu0 %v355
      %401 = vmatprep.subr.bf16.mxu0 0
      %402 = vmatpush1.bf16.msra.mxu0 %v354
      %403 = vmatprep.subr.bf16.mxu0 0
      %404 = vmatpush1.bf16.msra.mxu0 %v353
      %405 = vmatprep.subr.bf16.mxu0 0
      %406 = vmatpush1.bf16.msra.mxu0 %v352
      %407 = vmatprep.subr.bf16.mxu0 0
      %408 = vmatpush1.bf16.msra.mxu0 %v351
      %409 = vmatprep.subr.bf16.mxu0 0
      %410 = vmatpush1.bf16.msra.mxu0 %v350
      %411 = vmatprep.subr.bf16.mxu0 0
      %412 = vmatpush1.bf16.msra.mxu0 %v349
      %413 = vmatprep.subr.bf16.mxu0 0
      %414 = vmatpush2.bf16.msra.mxu0 %v364
      %415 = vmatprep.subr.bf16.mxu0 0
      %416 = vmatpush2.bf16.msra.mxu0 %v363
      %417 = vmatprep.subr.bf16.mxu0 0
      %418 = vmatpush2.bf16.msra.mxu0 %v362
      %419 = vmatprep.subr.bf16.mxu0 0
      %420 = vmatpush2.bf16.msra.mxu0 %v361
      %421 = vmatprep.subr.bf16.mxu0 0
      %422 = vmatpush2.bf16.msra.mxu0 %v360
      %423 = vmatprep.subr.bf16.mxu0 0
      %424 = vmatpush2.bf16.msra.mxu0 %v359
      %425 = vmatprep.subr.bf16.mxu0 0
      %426 = vmatpush2.bf16.msra.mxu0 %v358
      %427 = vmatprep.subr.bf16.mxu0 0
      %428 = vmatpush2.bf16.msra.mxu0 %v357
      %429 = vmatprep.mubr.bf16.mxu0 %v248
      %430 = vmatmul.mubr.bf16.gmra.mxu0 %v247
      %v431 = vpop.f32.mrf.mxu0
      %v432 = vadd.f32 %v235, %v431
      %v433 = vpop.f32.mrf.mxu0
      %v434 = vpop.f32.mrf.mxu0
      %v435 = vadd.f32 %v235, %v434
      %v436 = vpop.f32.mrf.mxu0
      %437 = vdwg.mxu0
      %438 = vmatprep.subr.bf16.mxu0 0
      %439 = vmatpush1.bf16.msra.mxu0 %v372
      %440 = vmatprep.subr.bf16.mxu0 0
      %441 = vmatpush1.bf16.msra.mxu0 %v371
      %442 = vmatprep.subr.bf16.mxu0 0
      %443 = vmatpush1.bf16.msra.mxu0 %v370
      %444 = vmatprep.subr.bf16.mxu0 0
      %445 = vmatpush1.bf16.msra.mxu0 %v369
      %446 = vmatprep.subr.bf16.mxu0 0
      %447 = vmatpush1.bf16.msra.mxu0 %v368
      %448 = vmatprep.subr.bf16.mxu0 0
      %449 = vmatpush1.bf16.msra.mxu0 %v367
      %450 = vmatprep.subr.bf16.mxu0 0
      %451 = vmatpush1.bf16.msra.mxu0 %v366
      %452 = vmatprep.subr.bf16.mxu0 0
      %453 = vmatpush1.bf16.msra.mxu0 %v365
      %454 = vmatprep.subr.bf16.mxu0 0
      %455 = vmatpush2.bf16.msra.mxu0 0
      %456 = vmatprep.subr.bf16.mxu0 0
      %457 = vmatpush2.bf16.msra.mxu0 0
      %458 = vmatprep.subr.bf16.mxu0 0
      %459 = vmatpush2.bf16.msra.mxu0 0
      %460 = vmatprep.subr.bf16.mxu0 0
      %461 = vmatpush2.bf16.msra.mxu0 0
      %462 = vmatprep.subr.bf16.mxu0 0
      %463 = vmatpush2.bf16.msra.mxu0 0
      %464 = vmatprep.subr.bf16.mxu0 0
      %465 = vmatpush2.bf16.msra.mxu0 0
      %466 = vmatprep.subr.bf16.mxu0 0
      %467 = vmatpush2.bf16.msra.mxu0 0
      %468 = vmatprep.subr.bf16.mxu0 0
      %469 = vmatpush2.bf16.msra.mxu0 0
      %470 = vmatprep.mubr.bf16.mxu0 0
      %471 = vmatmul.mubr.bf16.gmra.mxu0 %v249
      %v472 = vpop.f32.mrf.mxu0
      %v473 = vadd.f32 %v432, %v472
      %v474 = vpop.f32.mrf.mxu0
      %v475 = vpop.f32.mrf.mxu0
      %v476 = vadd.f32 %v435, %v475
      %v477 = vpop.f32.mrf.mxu0
      %478 = vdwg.mxu0
      %v479 = vpack.c.bf16 %v476, %v473
      %v481 = vunpack.c.l.b16 %v479
      %v482 = vunpack.c.h.b16 %v479
      %v483 = vpack.c.b16 %v481, %v481
      %v484 = vpack.c.b16 %v482, %v482
      %vm487 = vcmask 257024
      %488 = vst.msk [vmem:[%s175] sm:$0xf] %vm487, %v483
      %489 = vst.msk [vmem:[%s175 + $0x4] sm:$0xf] %vm487, %v484
      %s490 = smul.u32 2, %s14
      %p491 = scmp.lt.s32.totalorder %s490, 3
      %s492 = scalar_select %p491, %s490, 3
      %s493 = smul.addr %s492, 4
      %s494 = scalar_lea.vmem %s3, %s493
      // Predicated region
      $region33: #{facebox_forward.27} parent=31 // pred_check
        %p495 = pneg %p100
      $region34: #{facebox_forward.27} parent=31 // pred_check_branch
        %497 = sbr.rel (%p495) target = $region36
      $region35: #{facebox_forward.27} parent=31 // pred_region
        %s498 = smul.u32 2, %s14
      $region36: #{facebox_forward.27} parent=31 // pred_fallthru
        _
    $region32: #{facebox_forward.27} parent=5 // pred_fallthru
      _
    %p499 = scmp.le.s32.totalorder 2, %s9
    // Predicated region
    $region37: #{facebox_forward.27} parent=5 // pred_check
      %p500 = pneg %p499
    $region38: #{facebox_forward.27} parent=5 // pred_check_branch
      %502 = sbr.rel (%p500) target = $region40
    $region39: #{facebox_forward.27} parent=5 // pred_region
      %s503 = ssub.s32 %s9, 2
      // Predicated region
      $region41: #{facebox_forward.27} parent=39 // pred_check
        %p504 = pneg %p106
      $region42: #{facebox_forward.27} parent=39 // pred_check_branch
        %506 = sbr.rel (%p504) target = $region44
      $region43: #{facebox_forward.27} parent=39 // pred_region
        %s507 = smul.u32 2, %s15
        %p508 = scmp.lt.s32.totalorder %s507, 3
        %s509 = scalar_select %p508, %s507, 3
        %s510 = smul.addr %s509, 4
        %s511 = scalar_lea.vmem %s3, %s510
      $region44: #{facebox_forward.27} parent=39 // pred_fallthru
        _
    $region40: #{facebox_forward.27} parent=5 // pred_fallthru
      _
  $region6: #{facebox_forward.27} parent=0 // loop_footer
    %s13 = sadd.s32 1, %s9
  $region7: #{facebox_forward.27} parent=0 // loop_footer_branch
    %8 = sbr.rel target = $region3
  $region8: #{facebox_forward.27} parent=0 // loop_exit
    _

// kernel: facebox_forward.36
$region0: #{facebox_forward.36}
  #allocation0 [shape = 'u32[]', space=smem, size = 0x4, offset = 0x4, fixed_abs, tag = 'smem constant byte address 0x4 - core index']
  #allocation1 [shape = 'u32[144,128]{1,0:T(1,128)}', space=vmem, size = 0x12000, scoped, tag = 'internal scratch']
  %s0 = inlined_call_operand.vmem [shape: bf16[32,128], index: 0, kind: input, shape index: {}]
  %s1 = inlined_call_operand.vmem [shape: bf16[128,128], index: 1, kind: input, shape index: {}]
  %s2 = inlined_call_operand.vmem [shape: f32[1,128], index: 2, kind: input, shape index: {}]
  %s3 = inlined_call_operand.vmem [shape: bf16[32,128], index: 3, kind: output, shape index: {}]
  %s4 = sld [smem:[#allocation0]]
  $region45: #{facebox_forward.36} parent=0
    _
  %s6 = ssub.s32 1, %s4
  %s7 = scalar_select 0, %s6, %s4
  loop: start=0, step=1, limit=4
  $region2: #{facebox_forward.36} parent=0 // loop_pre_header
    _
  $region3: #{facebox_forward.36} parent=0 // loop_header
    %s9 = sphi 0, %s13
    %p10 = scmp.ge.s32.totalorder %s9, 4
    %s19 = sphi 0, %s21
    %s22 = sphi 0, %s19
    %s23 = sphi 0, %s22
    %s39 = sphi 0, %s23
    %s43 = sphi 0, %s43
    %s45 = sphi 0, %s43
    %s46 = sphi 0, %s45
    %s60 = sphi 0, %s46
    %s64 = sphi 0, %s64
    %s66 = sphi 0, %s64
    %s67 = sphi 0, %s66
    %s81 = sphi 0, %s67
    %s87 = sphi 0, %s89
    %s90 = sphi 0, %s87
    %s91 = sphi 0, %s90
    %s107 = sphi 0, %s91
  $region4: #{facebox_forward.36} parent=0 // loop_header_branch
    %12 = sbr.rel (%p10) target = $region8
  $region5: #{facebox_forward.36} parent=0 // loop_body
    %s14 = ssub.s32 %s9, 1
    %s15 = ssub.s32 %s9, 2
    %s16 = sadd.s32 %s9, 1
    %s17 = ssub.s32 %s9, %s16
    %p18 = scmp.eq.s32.totalorder %s17, 0
    %s20 = sadd.s32 %s19, 1
    %s21 = scalar_select %p18, %s19, %s20
    %p24 = pneg %p18
    %p25 = scmp.eq.s32.totalorder %s9, 1
    %p26 = por %p24, %p25
    %p27 = scmp.ne.s32.totalorder %s19, %s22
    %p28 = scmp.eq.s32.totalorder %s9, 0
    %p29 = por %p27, %p28
    %p30 = scmp.ne.s32.totalorder %s19, %s22
    %p31 = scmp.eq.s32.totalorder %s14, 1
    %p32 = por %p30, %p31
    %p33 = scmp.ne.s32.totalorder %s22, %s23
    %p34 = scmp.eq.s32.totalorder %s14, 0
    %p35 = por %p33, %p34
    %p36 = scmp.ne.s32.totalorder %s22, %s23
    %p37 = scmp.eq.s32.totalorder %s15, 1
    %p38 = por %p36, %p37
    %p40 = scmp.ne.s32.totalorder %s23, %s39
    %p41 = scmp.eq.s32.totalorder %s15, 0
    %p42 = por %p40, %p41
    %s44 = sadd.s32 %s43, 1
    %p47 = scmp.eq.s32.totalorder %s9, 1
    %p48 = scmp.ne.s32.totalorder %s43, %s45
    %p49 = scmp.eq.s32.totalorder %s9, 0
    %p50 = por %p48, %p49
    %p51 = scmp.ne.s32.totalorder %s43, %s45
    %p52 = scmp.eq.s32.totalorder %s14, 1
    %p53 = por %p51, %p52
    %p54 = scmp.ne.s32.totalorder %s45, %s46
    %p55 = scmp.eq.s32.totalorder %s14, 0
    %p56 = por %p54, %p55
    %p57 = scmp.ne.s32.totalorder %s45, %s46
    %p58 = scmp.eq.s32.totalorder %s15, 1
    %p59 = por %p57, %p58
    %p61 = scmp.ne.s32.totalorder %s46, %s60
    %p62 = scmp.eq.s32.totalorder %s15, 0
    %p63 = por %p61, %p62
    %s65 = sadd.s32 %s64, 1
    %p68 = scmp.eq.s32.totalorder %s9, 1
    %p69 = scmp.ne.s32.totalorder %s64, %s66
    %p70 = scmp.eq.s32.totalorder %s9, 0
    %p71 = por %p69, %p70
    %p72 = scmp.ne.s32.totalorder %s64, %s66
    %p73 = scmp.eq.s32.totalorder %s14, 1
    %p74 = por %p72, %p73
    %p75 = scmp.ne.s32.totalorder %s66, %s67
    %p76 = scmp.eq.s32.totalorder %s14, 0
    %p77 = por %p75, %p76
    %p78 = scmp.ne.s32.totalorder %s66, %s67
    %p79 = scmp.eq.s32.totalorder %s15, 1
    %p80 = por %p78, %p79
    %p82 = scmp.ne.s32.totalorder %s67, %s81
    %p83 = scmp.eq.s32.totalorder %s15, 0
    %p84 = por %p82, %p83
    %s85 = ssub.s32 %s9, %s16
    %p86 = scmp.eq.s32.totalorder %s85, 0
    %s88 = sadd.s32 %s87, 1
    %s89 = scalar_select %p86, %s87, %s88
    %p92 = pneg %p86
    %p93 = scmp.eq.s32.totalorder %s9, 1
    %p94 = por %p92, %p93
    %p95 = scmp.ne.s32.totalorder %s87, %s90
    %p96 = scmp.eq.s32.totalorder %s9, 0
    %p97 = por %p95, %p96
    %p98 = scmp.ne.s32.totalorder %s87, %s90
    %p99 = scmp.eq.s32.totalorder %s14, 1
    %p100 = por %p98, %p99
    %p101 = scmp.ne.s32.totalorder %s90, %s91
    %p102 = scmp.eq.s32.totalorder %s14, 0
    %p103 = por %p101, %p102
    %p104 = scmp.ne.s32.totalorder %s90, %s91
    %p105 = scmp.eq.s32.totalorder %s15, 1
    %p106 = por %p104, %p105
    %p108 = scmp.ne.s32.totalorder %s91, %s107
    %p109 = scmp.eq.s32.totalorder %s15, 0
    %p110 = por %p108, %p109
    %p111 = scmp.le.s32.totalorder 1, %s9
    %p112 = scmp.lt.s32.totalorder %s9, 3
    %p113 = pnand %p111, %p112
    %p114 = pneg %p113
    // Predicated region
    $region9: #{facebox_forward.36} parent=5 // pred_check
      _
    $region10: #{facebox_forward.36} parent=5 // pred_check_branch
      %116 = sbr.rel (%p113) target = $region12
    $region11: #{facebox_forward.36} parent=5 // pred_region
      %s117 = ssub.s32 %s9, 1
      // Predicated region
      $region13: #{facebox_forward.36} parent=11 // pred_check
        %p118 = pneg %p56
      $region14: #{facebox_forward.36} parent=11 // pred_check_branch
        %120 = sbr.rel (%p118) target = $region16
      $region15: #{facebox_forward.36} parent=11 // pred_region
        _
      $region16: #{facebox_forward.36} parent=11 // pred_fallthru
        _
      // Predicated region
      $region17: #{facebox_forward.36} parent=11 // pred_check
        %p121 = pneg %p77
      $region18: #{facebox_forward.36} parent=11 // pred_check_branch
        %123 = sbr.rel (%p121) target = $region20
      $region19: #{facebox_forward.36} parent=11 // pred_region
        _
      $region20: #{facebox_forward.36} parent=11 // pred_fallthru
        _
    $region12: #{facebox_forward.36} parent=5 // pred_fallthru
      _
    %p124 = scmp.lt.s32.totalorder %s9, 2
    // Predicated region
    $region21: #{facebox_forward.36} parent=5 // pred_check
      %p125 = pneg %p124
    $region22: #{facebox_forward.36} parent=5 // pred_check_branch
      %127 = sbr.rel (%p125) target = $region24
    $region23: #{facebox_forward.36} parent=5 // pred_region
      // Predicated region
      $region25: #{facebox_forward.36} parent=23 // pred_check
        %p128 = pneg %p29
      $region26: #{facebox_forward.36} parent=23 // pred_check_branch
        %130 = sbr.rel (%p128) target = $region28
      $region27: #{facebox_forward.36} parent=23 // pred_region
        %s131 = smul.u32 2, %s9
        %p132 = scmp.lt.s32.totalorder %s131, 3
        %s133 = scalar_select %p132, %s131, 3
        %s134 = smul.addr %s133, 4
        %s135 = scalar_lea.vmem %s0, %s134
        %s136 = smul.u32 2, %s9
      $region28: #{facebox_forward.36} parent=23 // pred_fallthru
        _
    $region24: #{facebox_forward.36} parent=5 // pred_fallthru
      _
    %p137 = scmp.le.s32.totalorder 1, %s9
    %p138 = scmp.lt.s32.totalorder %s9, 3
    %p139 = pnand %p137, %p138
    %p140 = pneg %p139
    // Predicated region
    $region29: #{facebox_forward.36} parent=5 // pred_check
      _
    $region30: #{facebox_forward.36} parent=5 // pred_check_branch
      %142 = sbr.rel (%p139) target = $region32
    $region31: #{facebox_forward.36} parent=5 // pred_region
      %s143 = ssub.s32 %s9, 1
      %s144 = smul.u32 2, %s14
      %p145 = scmp.lt.s32.totalorder %s144, 3
      %s146 = scalar_select %p145, %s144, 3
      %s147 = smul.addr %s146, 4
      %s148 = scalar_lea.vmem %s0, %s147
      %p149 = pneg %p35
      %p150 = pneg %p32
      %p151 = pneg %p56
      %p152 = pneg %p53
      %p153 = pneg %p77
      %p154 = pneg %p74
      %p155 = pneg %p103
      %p156 = pneg %p100
      %s157 = smul.u32 2, %s14
      %p158 = scmp.lt.s32.totalorder %s157, 3
      %s159 = scalar_select %p158, %s157, 3
      %s160 = smul.addr %s159, 4
      %s161 = scalar_lea.vmem %s3, %s160
      %s162 = smul.u32 2, %s14
      %p163 = scmp.lt.s32.totalorder %s162, 3
      %s164 = scalar_select %p163, %s162, 3
      %s165 = smul.addr %s164, 4
      %s166 = scalar_lea.vmem %s0, %s165
      %s167 = smul.u32 2, %s14
      %s168 = smul.u32 2, %s14
      %p169 = scmp.lt.s32.totalorder %s168, 3
      %s170 = scalar_select %p169, %s168, 3
      %s171 = smul.addr %s170, 4
      %s172 = scalar_lea.vmem %s3, %s171
      %s173 = smul.u32 2, %s14
      %v175 = vld [vmem:[%s166] sm:$0xf]
      %v176 = vld [vmem:[%s166 + $0x4] sm:$0xf]
      %v177 = vld [vmem:[%s1] sm:$0xf]
      %v178 = vld [vmem:[%s1 + $0x4] sm:$0xf]
      %v179 = vld [vmem:[%s1 + $0x8] sm:$0xf]
      %v180 = vld [vmem:[%s1 + $0xc] sm:$0xf]
      %v181 = vld [vmem:[%s1 + $0x10] sm:$0xf]
      %v182 = vld [vmem:[%s1 + $0x14] sm:$0xf]
      %v183 = vld [vmem:[%s1 + $0x18] sm:$0xf]
      %v184 = vld [vmem:[%s1 + $0x1c] sm:$0xf]
      %v185 = vld [vmem:[%s1 + $0x20] sm:$0xf]
      %v186 = vld [vmem:[%s1 + $0x24] sm:$0xf]
      %v187 = vld [vmem:[%s1 + $0x28] sm:$0xf]
      %v188 = vld [vmem:[%s1 + $0x2c] sm:$0xf]
      %v189 = vld [vmem:[%s1 + $0x30] sm:$0xf]
      %v190 = vld [vmem:[%s1 + $0x34] sm:$0xf]
      %v191 = vld [vmem:[%s1 + $0x38] sm:$0xf]
      %v192 = vld [vmem:[%s1 + $0x3c] sm:$0xf]
      %v193 = vld [vmem:[%s2] sm:$0x1]
      %v195 = vlaneseq
      %v196 = vshrl.u32 %v195, 7
      %v197 = vsub.s32 0, %v196
      %v198 = vrot.slane %v193, %v197
      %v202 = vunpack.c.l.b16 %v175
      %v203 = vunpack.c.l.b16 %v176
      %v204 = vpack.c.b16 %v203, %v202
      %v222 = vunpack.c.l.b16 %v177
      %v223 = vunpack.c.l.b16 %v178
      %v224 = vunpack.c.l.b16 %v179
      %v225 = vunpack.c.l.b16 %v180
      %v226 = vunpack.c.l.b16 %v181
      %v227 = vunpack.c.l.b16 %v182
      %v228 = vunpack.c.l.b16 %v183
      %v229 = vunpack.c.l.b16 %v184
      %v230 = vunpack.c.l.b16 %v185
      %v231 = vunpack.c.l.b16 %v186
      %v232 = vunpack.c.l.b16 %v187
      %v233 = vunpack.c.l.b16 %v188
      %v234 = vunpack.c.l.b16 %v189
      %v235 = vunpack.c.l.b16 %v190
      %v236 = vunpack.c.l.b16 %v191
      %v237 = vunpack.c.l.b16 %v192
      %v238 = vpack.c.b16 %v223, %v222
      %v239 = vpack.c.b16 %v225, %v224
      %v240 = vpack.c.b16 %v227, %v226
      %v241 = vpack.c.b16 %v229, %v228
      %v242 = vpack.c.b16 %v231, %v230
      %v243 = vpack.c.b16 %v233, %v232
      %v244 = vpack.c.b16 %v235, %v234
      %v245 = vpack.c.b16 %v237, %v236
      %254 = vmatprep.subr.bf16.mxu0 0
      %255 = vmatpush1.bf16.msra.mxu0 %v245
      %256 = vmatprep.subr.bf16.mxu0 0
      %257 = vmatpush1.bf16.msra.mxu0 %v244
      %258 = vmatprep.subr.bf16.mxu0 0
      %259 = vmatpush1.bf16.msra.mxu0 %v243
      %260 = vmatprep.subr.bf16.mxu0 0
      %261 = vmatpush1.bf16.msra.mxu0 %v242
      %262 = vmatprep.subr.bf16.mxu0 0
      %263 = vmatpush1.bf16.msra.mxu0 %v241
      %264 = vmatprep.subr.bf16.mxu0 0
      %265 = vmatpush1.bf16.msra.mxu0 %v240
      %266 = vmatprep.subr.bf16.mxu0 0
      %267 = vmatpush1.bf16.msra.mxu0 %v239
      %268 = vmatprep.subr.bf16.mxu0 0
      %269 = vmatpush1.bf16.msra.mxu0 %v238
      %270 = vmatprep.subr.bf16.mxu0 0
      %271 = vmatpush2.bf16.msra.mxu0 0
      %272 = vmatprep.subr.bf16.mxu0 0
      %273 = vmatpush2.bf16.msra.mxu0 0
      %274 = vmatprep.subr.bf16.mxu0 0
      %275 = vmatpush2.bf16.msra.mxu0 0
      %276 = vmatprep.subr.bf16.mxu0 0
      %277 = vmatpush2.bf16.msra.mxu0 0
      %278 = vmatprep.subr.bf16.mxu0 0
      %279 = vmatpush2.bf16.msra.mxu0 0
      %280 = vmatprep.subr.bf16.mxu0 0
      %281 = vmatpush2.bf16.msra.mxu0 0
      %282 = vmatprep.subr.bf16.mxu0 0
      %283 = vmatpush2.bf16.msra.mxu0 0
      %284 = vmatprep.subr.bf16.mxu0 0
      %285 = vmatpush2.bf16.msra.mxu0 0
      %286 = vmatprep.mubr.bf16.mxu0 0
      %287 = vmatmul.mubr.bf16.gmra.mxu0 %v204
      %v288 = vpop.f32.mrf.mxu0
      %v289 = vadd.f32 %v198, %v288
      %v290 = vpop.f32.mrf.mxu0
      %v291 = vpop.f32.mrf.mxu0
      %v292 = vadd.f32 %v198, %v291
      %v293 = vpop.f32.mrf.mxu0
      %294 = vdwg.mxu0
      %v295 = vpack.c.bf16 %v292, %v289
      %v297 = vunpack.c.l.b16 %v295
      %v298 = vunpack.c.h.b16 %v295
      %v299 = vpack.c.b16 %v297, %v297
      %v300 = vpack.c.b16 %v298, %v298
      %303 = vst [vmem:[%s172] sm:$0xf] %v299
      %304 = vst [vmem:[%s172 + $0x4] sm:$0xf] %v300
      %s305 = smul.u32 2, %s14
      %p306 = scmp.lt.s32.totalorder %s305, 3
      %s307 = scalar_select %p306, %s305, 3
      %s308 = smul.addr %s307, 4
      %s309 = scalar_lea.vmem %s3, %s308
      // Predicated region
      $region33: #{facebox_forward.36} parent=31 // pred_check
        %p310 = pneg %p100
      $region34: #{facebox_forward.36} parent=31 // pred_check_branch
        %312 = sbr.rel (%p310) target = $region36
      $region35: #{facebox_forward.36} parent=31 // pred_region
        %s313 = smul.u32 2, %s14
      $region36: #{facebox_forward.36} parent=31 // pred_fallthru
        _
    $region32: #{facebox_forward.36} parent=5 // pred_fallthru
      _
    %p314 = scmp.le.s32.totalorder 2, %s9
    // Predicated region
    $region37: #{facebox_forward.36} parent=5 // pred_check
      %p315 = pneg %p314
    $region38: #{facebox_forward.36} parent=5 // pred_check_branch
      %317 = sbr.rel (%p315) target = $region40
    $region39: #{facebox_forward.36} parent=5 // pred_region
      %s318 = ssub.s32 %s9, 2
      // Predicated region
      $region41: #{facebox_forward.36} parent=39 // pred_check
        %p319 = pneg %p106
      $region42: #{facebox_forward.36} parent=39 // pred_check_branch
        %321 = sbr.rel (%p319) target = $region44
      $region43: #{facebox_forward.36} parent=39 // pred_region
        %s322 = smul.u32 2, %s15
        %p323 = scmp.lt.s32.totalorder %s322, 3
        %s324 = scalar_select %p323, %s322, 3
        %s325 = smul.addr %s324, 4
        %s326 = scalar_lea.vmem %s3, %s325
      $region44: #{facebox_forward.36} parent=39 // pred_fallthru
        _
    $region40: #{facebox_forward.36} parent=5 // pred_fallthru
      _
  $region6: #{facebox_forward.36} parent=0 // loop_footer
    %s13 = sadd.s32 1, %s9
  $region7: #{facebox_forward.36} parent=0 // loop_footer_branch
    %8 = sbr.rel target = $region3
  $region8: #{facebox_forward.36} parent=0 // loop_exit
    _

// kernel: facebox_forward.38
$region0: #{facebox_forward.38}
  #allocation0 [shape = 'u32[]', space=smem, size = 0x4, offset = 0x4, fixed_abs, tag = 'smem constant byte address 0x4 - core index']
  #allocation1 [shape = 'u32[144,128]{1,0:T(1,128)}', space=vmem, size = 0x12000, scoped, tag = 'internal scratch']
  %s0 = inlined_call_operand.vmem [shape: bf16[8,256], index: 0, kind: input, shape index: {}]
  %s1 = inlined_call_operand.vmem [shape: bf16[256,128], index: 1, kind: input, shape index: {}]
  %s2 = inlined_call_operand.vmem [shape: f32[1,128], index: 2, kind: input, shape index: {}]
  %s3 = inlined_call_operand.vmem [shape: bf16[8,128], index: 3, kind: output, shape index: {}]
  %s4 = sld [smem:[#allocation0]]
  $region22: #{facebox_forward.38} parent=0
    _
  %s6 = ssub.s32 1, %s4
  %s7 = scalar_select 0, %s6, %s4
  // Predicated region
  $region2: #{facebox_forward.38} parent=0 // pred_check
    _
  $region3: #{facebox_forward.38} parent=0 // pred_check_branch
    %9 = sbr.rel (0) target = $region5
  $region4: #{facebox_forward.38} parent=0 // pred_region
    _
  $region5: #{facebox_forward.38} parent=0 // pred_fallthru
    _
  // Predicated region
  $region6: #{facebox_forward.38} parent=0 // pred_check
    _
  $region7: #{facebox_forward.38} parent=0 // pred_check_branch
    %11 = sbr.rel (0) target = $region9
  $region8: #{facebox_forward.38} parent=0 // pred_region
    _
  $region9: #{facebox_forward.38} parent=0 // pred_fallthru
    _
  // Predicated region
  $region10: #{facebox_forward.38} parent=0 // pred_check
    _
  $region11: #{facebox_forward.38} parent=0 // pred_check_branch
    %13 = sbr.rel (0) target = $region13
  $region12: #{facebox_forward.38} parent=0 // pred_region
    _
  $region13: #{facebox_forward.38} parent=0 // pred_fallthru
    _
  %v15 = vld [vmem:[%s0] sm:$0xff]
  %v16 = vld [vmem:[%s1] sm:$0xf]
  %v17 = vld [vmem:[%s1 + $0x4] sm:$0xf]
  %v18 = vld [vmem:[%s1 + $0x8] sm:$0xf]
  %v19 = vld [vmem:[%s1 + $0xc] sm:$0xf]
  %v20 = vld [vmem:[%s1 + $0x10] sm:$0xf]
  %v21 = vld [vmem:[%s1 + $0x14] sm:$0xf]
  %v22 = vld [vmem:[%s1 + $0x18] sm:$0xf]
  %v23 = vld [vmem:[%s1 + $0x1c] sm:$0xf]
  %v24 = vld [vmem:[%s1 + $0x20] sm:$0xf]
  %v25 = vld [vmem:[%s1 + $0x24] sm:$0xf]
  %v26 = vld [vmem:[%s1 + $0x28] sm:$0xf]
  %v27 = vld [vmem:[%s1 + $0x2c] sm:$0xf]
  %v28 = vld [vmem:[%s1 + $0x30] sm:$0xf]
  %v29 = vld [vmem:[%s1 + $0x34] sm:$0xf]
  %v30 = vld [vmem:[%s1 + $0x38] sm:$0xf]
  %v31 = vld [vmem:[%s1 + $0x3c] sm:$0xf]
  %v32 = vld [vmem:[%s1 + $0x40] sm:$0xf]
  %v33 = vld [vmem:[%s1 + $0x44] sm:$0xf]
  %v34 = vld [vmem:[%s1 + $0x48] sm:$0xf]
  %v35 = vld [vmem:[%s1 + $0x4c] sm:$0xf]
  %v36 = vld [vmem:[%s1 + $0x50] sm:$0xf]
  %v37 = vld [vmem:[%s1 + $0x54] sm:$0xf]
  %v38 = vld [vmem:[%s1 + $0x58] sm:$0xf]
  %v39 = vld [vmem:[%s1 + $0x5c] sm:$0xf]
  %v40 = vld [vmem:[%s1 + $0x60] sm:$0xf]
  %v41 = vld [vmem:[%s1 + $0x64] sm:$0xf]
  %v42 = vld [vmem:[%s1 + $0x68] sm:$0xf]
  %v43 = vld [vmem:[%s1 + $0x6c] sm:$0xf]
  %v44 = vld [vmem:[%s1 + $0x70] sm:$0xf]
  %v45 = vld [vmem:[%s1 + $0x74] sm:$0xf]
  %v46 = vld [vmem:[%s1 + $0x78] sm:$0xf]
  %v47 = vld [vmem:[%s1 + $0x7c] sm:$0xf]
  %v48 = vld [vmem:[%s2] sm:$0x1]
  %v50 = vlaneseq
  %v51 = vshrl.u32 %v50, 7
  %v52 = vsub.s32 0, %v51
  %v53 = vrot.slane %v48, %v52
  %v56 = vunpack.c.l.b16 %v15
  %v57 = vunpack.c.h.b16 %v15
  %v58 = vpack.c.b16 %v56, %v56
  %v59 = vpack.c.b16 %v57, %v57
  %v94 = vunpack.c.l.b16 %v16
  %v95 = vunpack.c.l.b16 %v17
  %v96 = vunpack.c.l.b16 %v18
  %v97 = vunpack.c.l.b16 %v19
  %v98 = vunpack.c.l.b16 %v20
  %v99 = vunpack.c.l.b16 %v21
  %v100 = vunpack.c.l.b16 %v22
  %v101 = vunpack.c.l.b16 %v23
  %v102 = vunpack.c.l.b16 %v24
  %v103 = vunpack.c.l.b16 %v25
  %v104 = vunpack.c.l.b16 %v26
  %v105 = vunpack.c.l.b16 %v27
  %v106 = vunpack.c.l.b16 %v28
  %v107 = vunpack.c.l.b16 %v29
  %v108 = vunpack.c.l.b16 %v30
  %v109 = vunpack.c.l.b16 %v31
  %v110 = vunpack.c.l.b16 %v32
  %v111 = vunpack.c.l.b16 %v33
  %v112 = vunpack.c.l.b16 %v34
  %v113 = vunpack.c.l.b16 %v35
  %v114 = vunpack.c.l.b16 %v36
  %v115 = vunpack.c.l.b16 %v37
  %v116 = vunpack.c.l.b16 %v38
  %v117 = vunpack.c.l.b16 %v39
  %v118 = vunpack.c.l.b16 %v40
  %v119 = vunpack.c.l.b16 %v41
  %v120 = vunpack.c.l.b16 %v42
  %v121 = vunpack.c.l.b16 %v43
  %v122 = vunpack.c.l.b16 %v44
  %v123 = vunpack.c.l.b16 %v45
  %v124 = vunpack.c.l.b16 %v46
  %v125 = vunpack.c.l.b16 %v47
  %v126 = vpack.c.b16 %v95, %v94
  %v127 = vpack.c.b16 %v97, %v96
  %v128 = vpack.c.b16 %v99, %v98
  %v129 = vpack.c.b16 %v101, %v100
  %v130 = vpack.c.b16 %v103, %v102
  %v131 = vpack.c.b16 %v105, %v104
  %v132 = vpack.c.b16 %v107, %v106
  %v133 = vpack.c.b16 %v109, %v108
  %v134 = vpack.c.b16 %v111, %v110
  %v135 = vpack.c.b16 %v113, %v112
  %v136 = vpack.c.b16 %v115, %v114
  %v137 = vpack.c.b16 %v117, %v116
  %v138 = vpack.c.b16 %v119, %v118
  %v139 = vpack.c.b16 %v121, %v120
  %v140 = vpack.c.b16 %v123, %v122
  %v141 = vpack.c.b16 %v125, %v124
  %158 = vmatprep.subr.bf16.mxu0 0
  %159 = vmatpush1.bf16.msra.mxu0 %v133
  %160 = vmatprep.subr.bf16.mxu0 0
  %161 = vmatpush1.bf16.msra.mxu0 %v132
  %162 = vmatprep.subr.bf16.mxu0 0
  %163 = vmatpush1.bf16.msra.mxu0 %v131
  %164 = vmatprep.subr.bf16.mxu0 0
  %165 = vmatpush1.bf16.msra.mxu0 %v130
  %166 = vmatprep.subr.bf16.mxu0 0
  %167 = vmatpush1.bf16.msra.mxu0 %v129
  %168 = vmatprep.subr.bf16.mxu0 0
  %169 = vmatpush1.bf16.msra.mxu0 %v128
  %170 = vmatprep.subr.bf16.mxu0 0
  %171 = vmatpush1.bf16.msra.mxu0 %v127
  %172 = vmatprep.subr.bf16.mxu0 0
  %173 = vmatpush1.bf16.msra.mxu0 %v126
  %174 = vmatprep.subr.bf16.mxu0 0
  %175 = vmatpush2.bf16.msra.mxu0 %v141
  %176 = vmatprep.subr.bf16.mxu0 0
  %177 = vmatpush2.bf16.msra.mxu0 %v140
  %178 = vmatprep.subr.bf16.mxu0 0
  %179 = vmatpush2.bf16.msra.mxu0 %v139
  %180 = vmatprep.subr.bf16.mxu0 0
  %181 = vmatpush2.bf16.msra.mxu0 %v138
  %182 = vmatprep.subr.bf16.mxu0 0
  %183 = vmatpush2.bf16.msra.mxu0 %v137
  %184 = vmatprep.subr.bf16.mxu0 0
  %185 = vmatpush2.bf16.msra.mxu0 %v136
  %186 = vmatprep.subr.bf16.mxu0 0
  %187 = vmatpush2.bf16.msra.mxu0 %v135
  %188 = vmatprep.subr.bf16.mxu0 0
  %189 = vmatpush2.bf16.msra.mxu0 %v134
  %190 = vmatprep.mubr.bf16.mxu0 %v59
  %191 = vmatmul.mubr.bf16.gmra.mxu0 %v58
  %v192 = vpop.f32.mrf.mxu0
  %v193 = vadd.f32 %v53, %v192
  %v194 = vpop.f32.mrf.mxu0
  %v195 = vpop.f32.mrf.mxu0
  %v196 = vpop.f32.mrf.mxu0
  %197 = vdwg.mxu0
  %v198 = vpack.c.bf16 %v193, %v193
  %199 = vst [vmem:[%s3] sm:$0xf] %v198
  // Predicated region
  $region14: #{facebox_forward.38} parent=0 // pred_check
    _
  $region15: #{facebox_forward.38} parent=0 // pred_check_branch
    %201 = sbr.rel (0) target = $region17
  $region16: #{facebox_forward.38} parent=0 // pred_region
    _
  $region17: #{facebox_forward.38} parent=0 // pred_fallthru
    _
  // Predicated region
  $region18: #{facebox_forward.38} parent=0 // pred_check
    _
  $region19: #{facebox_forward.38} parent=0 // pred_check_branch
    %203 = sbr.rel (0) target = $region21
  $region20: #{facebox_forward.38} parent=0 // pred_region
    _
  $region21: #{facebox_forward.38} parent=0 // pred_fallthru
    _

// kernel: facebox_forward.37
$region0: #{facebox_forward.37}
  #allocation0 [shape = 'u32[]', space=smem, size = 0x4, offset = 0x4, fixed_abs, tag = 'smem constant byte address 0x4 - core index']
  #allocation1 [shape = 'u32[144,128]{1,0:T(1,128)}', space=vmem, size = 0x12000, scoped, tag = 'internal scratch']
  %s0 = inlined_call_operand.vmem [shape: bf16[8,1152], index: 0, kind: input, shape index: {}]
  %s1 = inlined_call_operand.vmem [shape: bf16[1152,256], index: 1, kind: input, shape index: {}]
  %s2 = inlined_call_operand.vmem [shape: f32[1,256], index: 2, kind: input, shape index: {}]
  %s3 = inlined_call_operand.vmem [shape: bf16[8,256], index: 3, kind: output, shape index: {}]
  %s4 = sld [smem:[#allocation0]]
  $region22: #{facebox_forward.37} parent=0
    _
  %s6 = ssub.s32 1, %s4
  %s7 = scalar_select 0, %s6, %s4
  // Predicated region
  $region2: #{facebox_forward.37} parent=0 // pred_check
    _
  $region3: #{facebox_forward.37} parent=0 // pred_check_branch
    %9 = sbr.rel (0) target = $region5
  $region4: #{facebox_forward.37} parent=0 // pred_region
    _
  $region5: #{facebox_forward.37} parent=0 // pred_fallthru
    _
  // Predicated region
  $region6: #{facebox_forward.37} parent=0 // pred_check
    _
  $region7: #{facebox_forward.37} parent=0 // pred_check_branch
    %11 = sbr.rel (0) target = $region9
  $region8: #{facebox_forward.37} parent=0 // pred_region
    _
  $region9: #{facebox_forward.37} parent=0 // pred_fallthru
    _
  // Predicated region
  $region10: #{facebox_forward.37} parent=0 // pred_check
    _
  $region11: #{facebox_forward.37} parent=0 // pred_check_branch
    %13 = sbr.rel (0) target = $region13
  $region12: #{facebox_forward.37} parent=0 // pred_region
    _
  $region13: #{facebox_forward.37} parent=0 // pred_fallthru
    _
  %v15 = vld [vmem:[%s0] sm:$0xff]
  %v16 = vld [vmem:[%s0 + $0x8] sm:$0xff]
  %v17 = vld [vmem:[%s0 + $0x10] sm:$0xff]
  %v18 = vld [vmem:[%s0 + $0x18] sm:$0xff]
  %v19 = vld [vmem:[%s0 + $0x20] sm:$0xf]
  %v20 = vld [vmem:[%s1] sm:$0xff]
  %v21 = vld [vmem:[%s1 + $0x8] sm:$0xff]
  %v22 = vld [vmem:[%s1 + $0x10] sm:$0xff]
  %v23 = vld [vmem:[%s1 + $0x18] sm:$0xff]
  %v24 = vld [vmem:[%s1 + $0x20] sm:$0xff]
  %v25 = vld [vmem:[%s1 + $0x28] sm:$0xff]
  %v26 = vld [vmem:[%s1 + $0x30] sm:$0xff]
  %v27 = vld [vmem:[%s1 + $0x38] sm:$0xff]
  %v28 = vld [vmem:[%s1 + $0x40] sm:$0xff]
  %v29 = vld [vmem:[%s1 + $0x48] sm:$0xff]
  %v30 = vld [vmem:[%s1 + $0x50] sm:$0xff]
  %v31 = vld [vmem:[%s1 + $0x58] sm:$0xff]
  %v32 = vld [vmem:[%s1 + $0x60] sm:$0xff]
  %v33 = vld [vmem:[%s1 + $0x68] sm:$0xff]
  %v34 = vld [vmem:[%s1 + $0x70] sm:$0xff]
  %v35 = vld [vmem:[%s1 + $0x78] sm:$0xff]
  %v36 = vld [vmem:[%s1 + $0x80] sm:$0xff]
  %v37 = vld [vmem:[%s1 + $0x88] sm:$0xff]
  %v38 = vld [vmem:[%s1 + $0x90] sm:$0xff]
  %v39 = vld [vmem:[%s1 + $0x98] sm:$0xff]
  %v40 = vld [vmem:[%s1 + $0xa0] sm:$0xff]
  %v41 = vld [vmem:[%s1 + $0xa8] sm:$0xff]
  %v42 = vld [vmem:[%s1 + $0xb0] sm:$0xff]
  %v43 = vld [vmem:[%s1 + $0xb8] sm:$0xff]
  %v44 = vld [vmem:[%s1 + $0xc0] sm:$0xff]
  %v45 = vld [vmem:[%s1 + $0xc8] sm:$0xff]
  %v46 = vld [vmem:[%s1 + $0xd0] sm:$0xff]
  %v47 = vld [vmem:[%s1 + $0xd8] sm:$0xff]
  %v48 = vld [vmem:[%s1 + $0xe0] sm:$0xff]
  %v49 = vld [vmem:[%s1 + $0xe8] sm:$0xff]
  %v50 = vld [vmem:[%s1 + $0xf0] sm:$0xff]
  %v51 = vld [vmem:[%s1 + $0xf8] sm:$0xff]
  %v52 = vld [vmem:[%s1 + $0x100] sm:$0xff]
  %v53 = vld [vmem:[%s1 + $0x108] sm:$0xff]
  %v54 = vld [vmem:[%s1 + $0x110] sm:$0xff]
  %v55 = vld [vmem:[%s1 + $0x118] sm:$0xff]
  %v56 = vld [vmem:[%s1 + $0x120] sm:$0xff]
  %v57 = vld [vmem:[%s1 + $0x128] sm:$0xff]
  %v58 = vld [vmem:[%s1 + $0x130] sm:$0xff]
  %v59 = vld [vmem:[%s1 + $0x138] sm:$0xff]
  %v60 = vld [vmem:[%s1 + $0x140] sm:$0xff]
  %v61 = vld [vmem:[%s1 + $0x148] sm:$0xff]
  %v62 = vld [vmem:[%s1 + $0x150] sm:$0xff]
  %v63 = vld [vmem:[%s1 + $0x158] sm:$0xff]
  %v64 = vld [vmem:[%s1 + $0x160] sm:$0xff]
  %v65 = vld [vmem:[%s1 + $0x168] sm:$0xff]
  %v66 = vld [vmem:[%s1 + $0x170] sm:$0xff]
  %v67 = vld [vmem:[%s1 + $0x178] sm:$0xff]
  %v68 = vld [vmem:[%s1 + $0x180] sm:$0xff]
  %v69 = vld [vmem:[%s1 + $0x188] sm:$0xff]
  %v70 = vld [vmem:[%s1 + $0x190] sm:$0xff]
  %v71 = vld [vmem:[%s1 + $0x198] sm:$0xff]
  %v72 = vld [vmem:[%s1 + $0x1a0] sm:$0xff]
  %v73 = vld [vmem:[%s1 + $0x1a8] sm:$0xff]
  %v74 = vld [vmem:[%s1 + $0x1b0] sm:$0xff]
  %v75 = vld [vmem:[%s1 + $0x1b8] sm:$0xff]
  %v76 = vld [vmem:[%s1 + $0x1c0] sm:$0xff]
  %v77 = vld [vmem:[%s1 + $0x1c8] sm:$0xff]
  %v78 = vld [vmem:[%s1 + $0x1d0] sm:$0xff]
  %v79 = vld [vmem:[%s1 + $0x1d8] sm:$0xff]
  %v80 = vld [vmem:[%s1 + $0x1e0] sm:$0xff]
  %v81 = vld [vmem:[%s1 + $0x1e8] sm:$0xff]
  %v82 = vld [vmem:[%s1 + $0x1f0] sm:$0xff]
  %v83 = vld [vmem:[%s1 + $0x1f8] sm:$0xff]
  %v84 = vld [vmem:[%s1 + $0x200] sm:$0xff]
  %v85 = vld [vmem:[%s1 + $0x208] sm:$0xff]
  %v86 = vld [vmem:[%s1 + $0x210] sm:$0xff]
  %v87 = vld [vmem:[%s1 + $0x218] sm:$0xff]
  %v88 = vld [vmem:[%s1 + $0x220] sm:$0xff]
  %v89 = vld [vmem:[%s1 + $0x228] sm:$0xff]
  %v90 = vld [vmem:[%s1 + $0x230] sm:$0xff]
  %v91 = vld [vmem:[%s1 + $0x238] sm:$0xff]
  %v92 = vld [vmem:[%s1 + $0x240] sm:$0xff]
  %v93 = vld [vmem:[%s1 + $0x248] sm:$0xff]
  %v94 = vld [vmem:[%s1 + $0x250] sm:$0xff]
  %v95 = vld [vmem:[%s1 + $0x258] sm:$0xff]
  %v96 = vld [vmem:[%s1 + $0x260] sm:$0xff]
  %v97 = vld [vmem:[%s1 + $0x268] sm:$0xff]
  %v98 = vld [vmem:[%s1 + $0x270] sm:$0xff]
  %v99 = vld [vmem:[%s1 + $0x278] sm:$0xff]
  %v100 = vld [vmem:[%s1 + $0x280] sm:$0xff]
  %v101 = vld [vmem:[%s1 + $0x288] sm:$0xff]
  %v102 = vld [vmem:[%s1 + $0x290] sm:$0xff]
  %v103 = vld [vmem:[%s1 + $0x298] sm:$0xff]
  %v104 = vld [vmem:[%s1 + $0x2a0] sm:$0xff]
  %v105 = vld [vmem:[%s1 + $0x2a8] sm:$0xff]
  %v106 = vld [vmem:[%s1 + $0x2b0] sm:$0xff]
  %v107 = vld [vmem:[%s1 + $0x2b8] sm:$0xff]
  %v108 = vld [vmem:[%s1 + $0x2c0] sm:$0xff]
  %v109 = vld [vmem:[%s1 + $0x2c8] sm:$0xff]
  %v110 = vld [vmem:[%s1 + $0x2d0] sm:$0xff]
  %v111 = vld [vmem:[%s1 + $0x2d8] sm:$0xff]
  %v112 = vld [vmem:[%s1 + $0x2e0] sm:$0xff]
  %v113 = vld [vmem:[%s1 + $0x2e8] sm:$0xff]
  %v114 = vld [vmem:[%s1 + $0x2f0] sm:$0xff]
  %v115 = vld [vmem:[%s1 + $0x2f8] sm:$0xff]
  %v116 = vld [vmem:[%s1 + $0x300] sm:$0xff]
  %v117 = vld [vmem:[%s1 + $0x308] sm:$0xff]
  %v118 = vld [vmem:[%s1 + $0x310] sm:$0xff]
  %v119 = vld [vmem:[%s1 + $0x318] sm:$0xff]
  %v120 = vld [vmem:[%s1 + $0x320] sm:$0xff]
  %v121 = vld [vmem:[%s1 + $0x328] sm:$0xff]
  %v122 = vld [vmem:[%s1 + $0x330] sm:$0xff]
  %v123 = vld [vmem:[%s1 + $0x338] sm:$0xff]
  %v124 = vld [vmem:[%s1 + $0x340] sm:$0xff]
  %v125 = vld [vmem:[%s1 + $0x348] sm:$0xff]
  %v126 = vld [vmem:[%s1 + $0x350] sm:$0xff]
  %v127 = vld [vmem:[%s1 + $0x358] sm:$0xff]
  %v128 = vld [vmem:[%s1 + $0x360] sm:$0xff]
  %v129 = vld [vmem:[%s1 + $0x368] sm:$0xff]
  %v130 = vld [vmem:[%s1 + $0x370] sm:$0xff]
  %v131 = vld [vmem:[%s1 + $0x378] sm:$0xff]
  %v132 = vld [vmem:[%s1 + $0x380] sm:$0xff]
  %v133 = vld [vmem:[%s1 + $0x388] sm:$0xff]
  %v134 = vld [vmem:[%s1 + $0x390] sm:$0xff]
  %v135 = vld [vmem:[%s1 + $0x398] sm:$0xff]
  %v136 = vld [vmem:[%s1 + $0x3a0] sm:$0xff]
  %v137 = vld [vmem:[%s1 + $0x3a8] sm:$0xff]
  %v138 = vld [vmem:[%s1 + $0x3b0] sm:$0xff]
  %v139 = vld [vmem:[%s1 + $0x3b8] sm:$0xff]
  %v140 = vld [vmem:[%s1 + $0x3c0] sm:$0xff]
  %v141 = vld [vmem:[%s1 + $0x3c8] sm:$0xff]
  %v142 = vld [vmem:[%s1 + $0x3d0] sm:$0xff]
  %v143 = vld [vmem:[%s1 + $0x3d8] sm:$0xff]
  %v144 = vld [vmem:[%s1 + $0x3e0] sm:$0xff]
  %v145 = vld [vmem:[%s1 + $0x3e8] sm:$0xff]
  %v146 = vld [vmem:[%s1 + $0x3f0] sm:$0xff]
  %v147 = vld [vmem:[%s1 + $0x3f8] sm:$0xff]
  %v148 = vld [vmem:[%s1 + $0x400] sm:$0xff]
  %v149 = vld [vmem:[%s1 + $0x408] sm:$0xff]
  %v150 = vld [vmem:[%s1 + $0x410] sm:$0xff]
  %v151 = vld [vmem:[%s1 + $0x418] sm:$0xff]
  %v152 = vld [vmem:[%s1 + $0x420] sm:$0xff]
  %v153 = vld [vmem:[%s1 + $0x428] sm:$0xff]
  %v154 = vld [vmem:[%s1 + $0x430] sm:$0xff]
  %v155 = vld [vmem:[%s1 + $0x438] sm:$0xff]
  %v156 = vld [vmem:[%s1 + $0x440] sm:$0xff]
  %v157 = vld [vmem:[%s1 + $0x448] sm:$0xff]
  %v158 = vld [vmem:[%s1 + $0x450] sm:$0xff]
  %v159 = vld [vmem:[%s1 + $0x458] sm:$0xff]
  %v160 = vld [vmem:[%s1 + $0x460] sm:$0xff]
  %v161 = vld [vmem:[%s1 + $0x468] sm:$0xff]
  %v162 = vld [vmem:[%s1 + $0x470] sm:$0xff]
  %v163 = vld [vmem:[%s1 + $0x478] sm:$0xff]
  %v164 = vld [vmem:[%s2] sm:$0x3]
  %v166 = vlaneseq
  %v167 = vshrl.u32 %v166, 7
  %v168 = vsub.s32 0, %v167
  %v169 = vrot.slane %v164, %v168
  %v170 = vlaneseq
  %v171 = vshrl.u32 %v170, 7
  %v172 = vsub.s32 1, %v171
  %v173 = vrot.slane %v164, %v172
  %v181 = vunpack.c.l.b16 %v15
  %v182 = vunpack.c.h.b16 %v15
  %v183 = vunpack.c.l.b16 %v16
  %v184 = vunpack.c.h.b16 %v16
  %v185 = vunpack.c.l.b16 %v17
  %v186 = vunpack.c.h.b16 %v17
  %v187 = vunpack.c.l.b16 %v18
  %v188 = vunpack.c.h.b16 %v18
  %v189 = vunpack.c.l.b16 %v19
  %v190 = vpack.c.b16 %v181, %v181
  %v191 = vpack.c.b16 %v182, %v182
  %v192 = vpack.c.b16 %v183, %v183
  %v193 = vpack.c.b16 %v184, %v184
  %v194 = vpack.c.b16 %v185, %v185
  %v195 = vpack.c.b16 %v186, %v186
  %v196 = vpack.c.b16 %v187, %v187
  %v197 = vpack.c.b16 %v188, %v188
  %v198 = vpack.c.b16 %v189, %v189
  %v352 = vunpack.c.l.b16 %v20
  %v353 = vunpack.c.h.b16 %v20
  %v354 = vunpack.c.l.b16 %v21
  %v355 = vunpack.c.h.b16 %v21
  %v356 = vunpack.c.l.b16 %v22
  %v357 = vunpack.c.h.b16 %v22
  %v358 = vunpack.c.l.b16 %v23
  %v359 = vunpack.c.h.b16 %v23
  %v360 = vunpack.c.l.b16 %v24
  %v361 = vunpack.c.h.b16 %v24
  %v362 = vunpack.c.l.b16 %v25
  %v363 = vunpack.c.h.b16 %v25
  %v364 = vunpack.c.l.b16 %v26
  %v365 = vunpack.c.h.b16 %v26
  %v366 = vunpack.c.l.b16 %v27
  %v367 = vunpack.c.h.b16 %v27
  %v368 = vunpack.c.l.b16 %v28
  %v369 = vunpack.c.h.b16 %v28
  %v370 = vunpack.c.l.b16 %v29
  %v371 = vunpack.c.h.b16 %v29
  %v372 = vunpack.c.l.b16 %v30
  %v373 = vunpack.c.h.b16 %v30
  %v374 = vunpack.c.l.b16 %v31
  %v375 = vunpack.c.h.b16 %v31
  %v376 = vunpack.c.l.b16 %v32
  %v377 = vunpack.c.h.b16 %v32
  %v378 = vunpack.c.l.b16 %v33
  %v379 = vunpack.c.h.b16 %v33
  %v380 = vunpack.c.l.b16 %v34
  %v381 = vunpack.c.h.b16 %v34
  %v382 = vunpack.c.l.b16 %v35
  %v383 = vunpack.c.h.b16 %v35
  %v384 = vunpack.c.l.b16 %v36
  %v385 = vunpack.c.h.b16 %v36
  %v386 = vunpack.c.l.b16 %v37
  %v387 = vunpack.c.h.b16 %v37
  %v388 = vunpack.c.l.b16 %v38
  %v389 = vunpack.c.h.b16 %v38
  %v390 = vunpack.c.l.b16 %v39
  %v391 = vunpack.c.h.b16 %v39
  %v392 = vunpack.c.l.b16 %v40
  %v393 = vunpack.c.h.b16 %v40
  %v394 = vunpack.c.l.b16 %v41
  %v395 = vunpack.c.h.b16 %v41
  %v396 = vunpack.c.l.b16 %v42
  %v397 = vunpack.c.h.b16 %v42
  %v398 = vunpack.c.l.b16 %v43
  %v399 = vunpack.c.h.b16 %v43
  %v400 = vunpack.c.l.b16 %v44
  %v401 = vunpack.c.h.b16 %v44
  %v402 = vunpack.c.l.b16 %v45
  %v403 = vunpack.c.h.b16 %v45
  %v404 = vunpack.c.l.b16 %v46
  %v405 = vunpack.c.h.b16 %v46
  %v406 = vunpack.c.l.b16 %v47
  %v407 = vunpack.c.h.b16 %v47
  %v408 = vunpack.c.l.b16 %v48
  %v409 = vunpack.c.h.b16 %v48
  %v410 = vunpack.c.l.b16 %v49
  %v411 = vunpack.c.h.b16 %v49
  %v412 = vunpack.c.l.b16 %v50
  %v413 = vunpack.c.h.b16 %v50
  %v414 = vunpack.c.l.b16 %v51
  %v415 = vunpack.c.h.b16 %v51
  %v416 = vunpack.c.l.b16 %v52
  %v417 = vunpack.c.h.b16 %v52
  %v418 = vunpack.c.l.b16 %v53
  %v419 = vunpack.c.h.b16 %v53
  %v420 = vunpack.c.l.b16 %v54
  %v421 = vunpack.c.h.b16 %v54
  %v422 = vunpack.c.l.b16 %v55
  %v423 = vunpack.c.h.b16 %v55
  %v424 = vunpack.c.l.b16 %v56
  %v425 = vunpack.c.h.b16 %v56
  %v426 = vunpack.c.l.b16 %v57
  %v427 = vunpack.c.h.b16 %v57
  %v428 = vunpack.c.l.b16 %v58
  %v429 = vunpack.c.h.b16 %v58
  %v430 = vunpack.c.l.b16 %v59
  %v431 = vunpack.c.h.b16 %v59
  %v432 = vunpack.c.l.b16 %v60
  %v433 = vunpack.c.h.b16 %v60
  %v434 = vunpack.c.l.b16 %v61
  %v435 = vunpack.c.h.b16 %v61
  %v436 = vunpack.c.l.b16 %v62
  %v437 = vunpack.c.h.b16 %v62
  %v438 = vunpack.c.l.b16 %v63
  %v439 = vunpack.c.h.b16 %v63
  %v440 = vunpack.c.l.b16 %v64
  %v441 = vunpack.c.h.b16 %v64
  %v442 = vunpack.c.l.b16 %v65
  %v443 = vunpack.c.h.b16 %v65
  %v444 = vunpack.c.l.b16 %v66
  %v445 = vunpack.c.h.b16 %v66
  %v446 = vunpack.c.l.b16 %v67
  %v447 = vunpack.c.h.b16 %v67
  %v448 = vunpack.c.l.b16 %v68
  %v449 = vunpack.c.h.b16 %v68
  %v450 = vunpack.c.l.b16 %v69
  %v451 = vunpack.c.h.b16 %v69
  %v452 = vunpack.c.l.b16 %v70
  %v453 = vunpack.c.h.b16 %v70
  %v454 = vunpack.c.l.b16 %v71
  %v455 = vunpack.c.h.b16 %v71
  %v456 = vunpack.c.l.b16 %v72
  %v457 = vunpack.c.h.b16 %v72
  %v458 = vunpack.c.l.b16 %v73
  %v459 = vunpack.c.h.b16 %v73
  %v460 = vunpack.c.l.b16 %v74
  %v461 = vunpack.c.h.b16 %v74
  %v462 = vunpack.c.l.b16 %v75
  %v463 = vunpack.c.h.b16 %v75
  %v464 = vunpack.c.l.b16 %v76
  %v465 = vunpack.c.h.b16 %v76
  %v466 = vunpack.c.l.b16 %v77
  %v467 = vunpack.c.h.b16 %v77
  %v468 = vunpack.c.l.b16 %v78
  %v469 = vunpack.c.h.b16 %v78
  %v470 = vunpack.c.l.b16 %v79
  %v471 = vunpack.c.h.b16 %v79
  %v472 = vunpack.c.l.b16 %v80
  %v473 = vunpack.c.h.b16 %v80
  %v474 = vunpack.c.l.b16 %v81
  %v475 = vunpack.c.h.b16 %v81
  %v476 = vunpack.c.l.b16 %v82
  %v477 = vunpack.c.h.b16 %v82
  %v478 = vunpack.c.l.b16 %v83
  %v479 = vunpack.c.h.b16 %v83
  %v480 = vunpack.c.l.b16 %v84
  %v481 = vunpack.c.h.b16 %v84
  %v482 = vunpack.c.l.b16 %v85
  %v483 = vunpack.c.h.b16 %v85
  %v484 = vunpack.c.l.b16 %v86
  %v485 = vunpack.c.h.b16 %v86
  %v486 = vunpack.c.l.b16 %v87
  %v487 = vunpack.c.h.b16 %v87
  %v488 = vunpack.c.l.b16 %v88
  %v489 = vunpack.c.h.b16 %v88
  %v490 = vunpack.c.l.b16 %v89
  %v491 = vunpack.c.h.b16 %v89
  %v492 = vunpack.c.l.b16 %v90
  %v493 = vunpack.c.h.b16 %v90
  %v494 = vunpack.c.l.b16 %v91
  %v495 = vunpack.c.h.b16 %v91
  %v496 = vunpack.c.l.b16 %v92
  %v497 = vunpack.c.h.b16 %v92
  %v498 = vunpack.c.l.b16 %v93
  %v499 = vunpack.c.h.b16 %v93
  %v500 = vunpack.c.l.b16 %v94
  %v501 = vunpack.c.h.b16 %v94
  %v502 = vunpack.c.l.b16 %v95
  %v503 = vunpack.c.h.b16 %v95
  %v504 = vunpack.c.l.b16 %v96
  %v505 = vunpack.c.h.b16 %v96
  %v506 = vunpack.c.l.b16 %v97
  %v507 = vunpack.c.h.b16 %v97
  %v508 = vunpack.c.l.b16 %v98
  %v509 = vunpack.c.h.b16 %v98
  %v510 = vunpack.c.l.b16 %v99
  %v511 = vunpack.c.h.b16 %v99
  %v512 = vunpack.c.l.b16 %v100
  %v513 = vunpack.c.h.b16 %v100
  %v514 = vunpack.c.l.b16 %v101
  %v515 = vunpack.c.h.b16 %v101
  %v516 = vunpack.c.l.b16 %v102
  %v517 = vunpack.c.h.b16 %v102
  %v518 = vunpack.c.l.b16 %v103
  %v519 = vunpack.c.h.b16 %v103
  %v520 = vunpack.c.l.b16 %v104
  %v521 = vunpack.c.h.b16 %v104
  %v522 = vunpack.c.l.b16 %v105
  %v523 = vunpack.c.h.b16 %v105
  %v524 = vunpack.c.l.b16 %v106
  %v525 = vunpack.c.h.b16 %v106
  %v526 = vunpack.c.l.b16 %v107
  %v527 = vunpack.c.h.b16 %v107
  %v528 = vunpack.c.l.b16 %v108
  %v529 = vunpack.c.h.b16 %v108
  %v530 = vunpack.c.l.b16 %v109
  %v531 = vunpack.c.h.b16 %v109
  %v532 = vunpack.c.l.b16 %v110
  %v533 = vunpack.c.h.b16 %v110
  %v534 = vunpack.c.l.b16 %v111
  %v535 = vunpack.c.h.b16 %v111
  %v536 = vunpack.c.l.b16 %v112
  %v537 = vunpack.c.h.b16 %v112
  %v538 = vunpack.c.l.b16 %v113
  %v539 = vunpack.c.h.b16 %v113
  %v540 = vunpack.c.l.b16 %v114
  %v541 = vunpack.c.h.b16 %v114
  %v542 = vunpack.c.l.b16 %v115
  %v543 = vunpack.c.h.b16 %v115
  %v544 = vunpack.c.l.b16 %v116
  %v545 = vunpack.c.h.b16 %v116
  %v546 = vunpack.c.l.b16 %v117
  %v547 = vunpack.c.h.b16 %v117
  %v548 = vunpack.c.l.b16 %v118
  %v549 = vunpack.c.h.b16 %v118
  %v550 = vunpack.c.l.b16 %v119
  %v551 = vunpack.c.h.b16 %v119
  %v552 = vunpack.c.l.b16 %v120
  %v553 = vunpack.c.h.b16 %v120
  %v554 = vunpack.c.l.b16 %v121
  %v555 = vunpack.c.h.b16 %v121
  %v556 = vunpack.c.l.b16 %v122
  %v557 = vunpack.c.h.b16 %v122
  %v558 = vunpack.c.l.b16 %v123
  %v559 = vunpack.c.h.b16 %v123
  %v560 = vunpack.c.l.b16 %v124
  %v561 = vunpack.c.h.b16 %v124
  %v562 = vunpack.c.l.b16 %v125
  %v563 = vunpack.c.h.b16 %v125
  %v564 = vunpack.c.l.b16 %v126
  %v565 = vunpack.c.h.b16 %v126
  %v566 = vunpack.c.l.b16 %v127
  %v567 = vunpack.c.h.b16 %v127
  %v568 = vunpack.c.l.b16 %v128
  %v569 = vunpack.c.h.b16 %v128
  %v570 = vunpack.c.l.b16 %v129
  %v571 = vunpack.c.h.b16 %v129
  %v572 = vunpack.c.l.b16 %v130
  %v573 = vunpack.c.h.b16 %v130
  %v574 = vunpack.c.l.b16 %v131
  %v575 = vunpack.c.h.b16 %v131
  %v576 = vunpack.c.l.b16 %v132
  %v577 = vunpack.c.h.b16 %v132
  %v578 = vunpack.c.l.b16 %v133
  %v579 = vunpack.c.h.b16 %v133
  %v580 = vunpack.c.l.b16 %v134
  %v581 = vunpack.c.h.b16 %v134
  %v582 = vunpack.c.l.b16 %v135
  %v583 = vunpack.c.h.b16 %v135
  %v584 = vunpack.c.l.b16 %v136
  %v585 = vunpack.c.h.b16 %v136
  %v586 = vunpack.c.l.b16 %v137
  %v587 = vunpack.c.h.b16 %v137
  %v588 = vunpack.c.l.b16 %v138
  %v589 = vunpack.c.h.b16 %v138
  %v590 = vunpack.c.l.b16 %v139
  %v591 = vunpack.c.h.b16 %v139
  %v592 = vunpack.c.l.b16 %v140
  %v593 = vunpack.c.h.b16 %v140
  %v594 = vunpack.c.l.b16 %v141
  %v595 = vunpack.c.h.b16 %v141
  %v596 = vunpack.c.l.b16 %v142
  %v597 = vunpack.c.h.b16 %v142
  %v598 = vunpack.c.l.b16 %v143
  %v599 = vunpack.c.h.b16 %v143
  %v600 = vunpack.c.l.b16 %v144
  %v601 = vunpack.c.h.b16 %v144
  %v602 = vunpack.c.l.b16 %v145
  %v603 = vunpack.c.h.b16 %v145
  %v604 = vunpack.c.l.b16 %v146
  %v605 = vunpack.c.h.b16 %v146
  %v606 = vunpack.c.l.b16 %v147
  %v607 = vunpack.c.h.b16 %v147
  %v608 = vunpack.c.l.b16 %v148
  %v609 = vunpack.c.h.b16 %v148
  %v610 = vunpack.c.l.b16 %v149
  %v611 = vunpack.c.h.b16 %v149
  %v612 = vunpack.c.l.b16 %v150
  %v613 = vunpack.c.h.b16 %v150
  %v614 = vunpack.c.l.b16 %v151
  %v615 = vunpack.c.h.b16 %v151
  %v616 = vunpack.c.l.b16 %v152
  %v617 = vunpack.c.h.b16 %v152
  %v618 = vunpack.c.l.b16 %v153
  %v619 = vunpack.c.h.b16 %v153
  %v620 = vunpack.c.l.b16 %v154
  %v621 = vunpack.c.h.b16 %v154
  %v622 = vunpack.c.l.b16 %v155
  %v623 = vunpack.c.h.b16 %v155
  %v624 = vunpack.c.l.b16 %v156
  %v625 = vunpack.c.h.b16 %v156
  %v626 = vunpack.c.l.b16 %v157
  %v627 = vunpack.c.h.b16 %v157
  %v628 = vunpack.c.l.b16 %v158
  %v629 = vunpack.c.h.b16 %v158
  %v630 = vunpack.c.l.b16 %v159
  %v631 = vunpack.c.h.b16 %v159
  %v632 = vunpack.c.l.b16 %v160
  %v633 = vunpack.c.h.b16 %v160
  %v634 = vunpack.c.l.b16 %v161
  %v635 = vunpack.c.h.b16 %v161
  %v636 = vunpack.c.l.b16 %v162
  %v637 = vunpack.c.h.b16 %v162
  %v638 = vunpack.c.l.b16 %v163
  %v639 = vunpack.c.h.b16 %v163
  %v640 = vpack.c.b16 %v354, %v352
  %v641 = vpack.c.b16 %v355, %v353
  %v642 = vpack.c.b16 %v358, %v356
  %v643 = vpack.c.b16 %v359, %v357
  %v644 = vpack.c.b16 %v362, %v360
  %v645 = vpack.c.b16 %v363, %v361
  %v646 = vpack.c.b16 %v366, %v364
  %v647 = vpack.c.b16 %v367, %v365
  %v648 = vpack.c.b16 %v370, %v368
  %v649 = vpack.c.b16 %v371, %v369
  %v650 = vpack.c.b16 %v374, %v372
  %v651 = vpack.c.b16 %v375, %v373
  %v652 = vpack.c.b16 %v378, %v376
  %v653 = vpack.c.b16 %v379, %v377
  %v654 = vpack.c.b16 %v382, %v380
  %v655 = vpack.c.b16 %v383, %v381
  %v656 = vpack.c.b16 %v386, %v384
  %v657 = vpack.c.b16 %v387, %v385
  %v658 = vpack.c.b16 %v390, %v388
  %v659 = vpack.c.b16 %v391, %v389
  %v660 = vpack.c.b16 %v394, %v392
  %v661 = vpack.c.b16 %v395, %v393
  %v662 = vpack.c.b16 %v398, %v396
  %v663 = vpack.c.b16 %v399, %v397
  %v664 = vpack.c.b16 %v402, %v400
  %v665 = vpack.c.b16 %v403, %v401
  %v666 = vpack.c.b16 %v406, %v404
  %v667 = vpack.c.b16 %v407, %v405
  %v668 = vpack.c.b16 %v410, %v408
  %v669 = vpack.c.b16 %v411, %v409
  %v670 = vpack.c.b16 %v414, %v412
  %v671 = vpack.c.b16 %v415, %v413
  %v672 = vpack.c.b16 %v418, %v416
  %v673 = vpack.c.b16 %v419, %v417
  %v674 = vpack.c.b16 %v422, %v420
  %v675 = vpack.c.b16 %v423, %v421
  %v676 = vpack.c.b16 %v426, %v424
  %v677 = vpack.c.b16 %v427, %v425
  %v678 = vpack.c.b16 %v430, %v428
  %v679 = vpack.c.b16 %v431, %v429
  %v680 = vpack.c.b16 %v434, %v432
  %v681 = vpack.c.b16 %v435, %v433
  %v682 = vpack.c.b16 %v438, %v436
  %v683 = vpack.c.b16 %v439, %v437
  %v684 = vpack.c.b16 %v442, %v440
  %v685 = vpack.c.b16 %v443, %v441
  %v686 = vpack.c.b16 %v446, %v444
  %v687 = vpack.c.b16 %v447, %v445
  %v688 = vpack.c.b16 %v450, %v448
  %v689 = vpack.c.b16 %v451, %v449
  %v690 = vpack.c.b16 %v454, %v452
  %v691 = vpack.c.b16 %v455, %v453
  %v692 = vpack.c.b16 %v458, %v456
  %v693 = vpack.c.b16 %v459, %v457
  %v694 = vpack.c.b16 %v462, %v460
  %v695 = vpack.c.b16 %v463, %v461
  %v696 = vpack.c.b16 %v466, %v464
  %v697 = vpack.c.b16 %v467, %v465
  %v698 = vpack.c.b16 %v470, %v468
  %v699 = vpack.c.b16 %v471, %v469
  %v700 = vpack.c.b16 %v474, %v472
  %v701 = vpack.c.b16 %v475, %v473
  %v702 = vpack.c.b16 %v478, %v476
  %v703 = vpack.c.b16 %v479, %v477
  %v704 = vpack.c.b16 %v482, %v480
  %v705 = vpack.c.b16 %v483, %v481
  %v706 = vpack.c.b16 %v486, %v484
  %v707 = vpack.c.b16 %v487, %v485
  %v708 = vpack.c.b16 %v490, %v488
  %v709 = vpack.c.b16 %v491, %v489
  %v710 = vpack.c.b16 %v494, %v492
  %v711 = vpack.c.b16 %v495, %v493
  %v712 = vpack.c.b16 %v498, %v496
  %v713 = vpack.c.b16 %v499, %v497
  %v714 = vpack.c.b16 %v502, %v500
  %v715 = vpack.c.b16 %v503, %v501
  %v716 = vpack.c.b16 %v506, %v504
  %v717 = vpack.c.b16 %v507, %v505
  %v718 = vpack.c.b16 %v510, %v508
  %v719 = vpack.c.b16 %v511, %v509
  %v720 = vpack.c.b16 %v514, %v512
  %v721 = vpack.c.b16 %v515, %v513
  %v722 = vpack.c.b16 %v518, %v516
  %v723 = vpack.c.b16 %v519, %v517
  %v724 = vpack.c.b16 %v522, %v520
  %v725 = vpack.c.b16 %v523, %v521
  %v726 = vpack.c.b16 %v526, %v524
  %v727 = vpack.c.b16 %v527, %v525
  %v728 = vpack.c.b16 %v530, %v528
  %v729 = vpack.c.b16 %v531, %v529
  %v730 = vpack.c.b16 %v534, %v532
  %v731 = vpack.c.b16 %v535, %v533
  %v732 = vpack.c.b16 %v538, %v536
  %v733 = vpack.c.b16 %v539, %v537
  %v734 = vpack.c.b16 %v542, %v540
  %v735 = vpack.c.b16 %v543, %v541
  %v736 = vpack.c.b16 %v546, %v544
  %v737 = vpack.c.b16 %v547, %v545
  %v738 = vpack.c.b16 %v550, %v548
  %v739 = vpack.c.b16 %v551, %v549
  %v740 = vpack.c.b16 %v554, %v552
  %v741 = vpack.c.b16 %v555, %v553
  %v742 = vpack.c.b16 %v558, %v556
  %v743 = vpack.c.b16 %v559, %v557
  %v744 = vpack.c.b16 %v562, %v560
  %v745 = vpack.c.b16 %v563, %v561
  %v746 = vpack.c.b16 %v566, %v564
  %v747 = vpack.c.b16 %v567, %v565
  %v748 = vpack.c.b16 %v570, %v568
  %v749 = vpack.c.b16 %v571, %v569
  %v750 = vpack.c.b16 %v574, %v572
  %v751 = vpack.c.b16 %v575, %v573
  %v752 = vpack.c.b16 %v578, %v576
  %v753 = vpack.c.b16 %v579, %v577
  %v754 = vpack.c.b16 %v582, %v580
  %v755 = vpack.c.b16 %v583, %v581
  %v756 = vpack.c.b16 %v586, %v584
  %v757 = vpack.c.b16 %v587, %v585
  %v758 = vpack.c.b16 %v590, %v588
  %v759 = vpack.c.b16 %v591, %v589
  %v760 = vpack.c.b16 %v594, %v592
  %v761 = vpack.c.b16 %v595, %v593
  %v762 = vpack.c.b16 %v598, %v596
  %v763 = vpack.c.b16 %v599, %v597
  %v764 = vpack.c.b16 %v602, %v600
  %v765 = vpack.c.b16 %v603, %v601
  %v766 = vpack.c.b16 %v606, %v604
  %v767 = vpack.c.b16 %v607, %v605
  %v768 = vpack.c.b16 %v610, %v608
  %v769 = vpack.c.b16 %v611, %v609
  %v770 = vpack.c.b16 %v614, %v612
  %v771 = vpack.c.b16 %v615, %v613
  %v772 = vpack.c.b16 %v618, %v616
  %v773 = vpack.c.b16 %v619, %v617
  %v774 = vpack.c.b16 %v622, %v620
  %v775 = vpack.c.b16 %v623, %v621
  %v776 = vpack.c.b16 %v626, %v624
  %v777 = vpack.c.b16 %v627, %v625
  %v778 = vpack.c.b16 %v630, %v628
  %v779 = vpack.c.b16 %v631, %v629
  %v780 = vpack.c.b16 %v634, %v632
  %v781 = vpack.c.b16 %v635, %v633
  %v782 = vpack.c.b16 %v638, %v636
  %v783 = vpack.c.b16 %v639, %v637
  %928 = vmatprep.subr.bf16.mxu0 %v655
  %929 = vmatpush1.bf16.msra.mxu0 %v654
  %930 = vmatprep.subr.bf16.mxu0 %v653
  %931 = vmatpush1.bf16.msra.mxu0 %v652
  %932 = vmatprep.subr.bf16.mxu0 %v651
  %933 = vmatpush1.bf16.msra.mxu0 %v650
  %934 = vmatprep.subr.bf16.mxu0 %v649
  %935 = vmatpush1.bf16.msra.mxu0 %v648
  %936 = vmatprep.subr.bf16.mxu0 %v647
  %937 = vmatpush1.bf16.msra.mxu0 %v646
  %938 = vmatprep.subr.bf16.mxu0 %v645
  %939 = vmatpush1.bf16.msra.mxu0 %v644
  %940 = vmatprep.subr.bf16.mxu0 %v643
  %941 = vmatpush1.bf16.msra.mxu0 %v642
  %942 = vmatprep.subr.bf16.mxu0 %v641
  %943 = vmatpush1.bf16.msra.mxu0 %v640
  %944 = vmatprep.subr.bf16.mxu0 %v671
  %945 = vmatpush2.bf16.msra.mxu0 %v670
  %946 = vmatprep.subr.bf16.mxu0 %v669
  %947 = vmatpush2.bf16.msra.mxu0 %v668
  %948 = vmatprep.subr.bf16.mxu0 %v667
  %949 = vmatpush2.bf16.msra.mxu0 %v666
  %950 = vmatprep.subr.bf16.mxu0 %v665
  %951 = vmatpush2.bf16.msra.mxu0 %v664
  %952 = vmatprep.subr.bf16.mxu0 %v663
  %953 = vmatpush2.bf16.msra.mxu0 %v662
  %954 = vmatprep.subr.bf16.mxu0 %v661
  %955 = vmatpush2.bf16.msra.mxu0 %v660
  %956 = vmatprep.subr.bf16.mxu0 %v659
  %957 = vmatpush2.bf16.msra.mxu0 %v658
  %958 = vmatprep.subr.bf16.mxu0 %v657
  %959 = vmatpush2.bf16.msra.mxu0 %v656
  %960 = vmatprep.mubr.bf16.mxu0 %v191
  %961 = vmatmul.mubr.bf16.gmra.mxu0 %v190
  %v962 = vpop.f32.mrf.mxu0
  %v963 = vadd.f32 %v169, %v962
  %v964 = vpop.f32.mrf.mxu0
  %v965 = vadd.f32 %v173, %v964
  %v966 = vpop.f32.mrf.mxu0
  %v967 = vpop.f32.mrf.mxu0
  %968 = vdwg.mxu0
  %969 = vmatprep.subr.bf16.mxu0 %v687
  %970 = vmatpush1.bf16.msra.mxu0 %v686
  %971 = vmatprep.subr.bf16.mxu0 %v685
  %972 = vmatpush1.bf16.msra.mxu0 %v684
  %973 = vmatprep.subr.bf16.mxu0 %v683
  %974 = vmatpush1.bf16.msra.mxu0 %v682
  %975 = vmatprep.subr.bf16.mxu0 %v681
  %976 = vmatpush1.bf16.msra.mxu0 %v680
  %977 = vmatprep.subr.bf16.mxu0 %v679
  %978 = vmatpush1.bf16.msra.mxu0 %v678
  %979 = vmatprep.subr.bf16.mxu0 %v677
  %980 = vmatpush1.bf16.msra.mxu0 %v676
  %981 = vmatprep.subr.bf16.mxu0 %v675
  %982 = vmatpush1.bf16.msra.mxu0 %v674
  %983 = vmatprep.subr.bf16.mxu0 %v673
  %984 = vmatpush1.bf16.msra.mxu0 %v672
  %985 = vmatprep.subr.bf16.mxu0 %v703
  %986 = vmatpush2.bf16.msra.mxu0 %v702
  %987 = vmatprep.subr.bf16.mxu0 %v701
  %988 = vmatpush2.bf16.msra.mxu0 %v700
  %989 = vmatprep.subr.bf16.mxu0 %v699
  %990 = vmatpush2.bf16.msra.mxu0 %v698
  %991 = vmatprep.subr.bf16.mxu0 %v697
  %992 = vmatpush2.bf16.msra.mxu0 %v696
  %993 = vmatprep.subr.bf16.mxu0 %v695
  %994 = vmatpush2.bf16.msra.mxu0 %v694
  %995 = vmatprep.subr.bf16.mxu0 %v693
  %996 = vmatpush2.bf16.msra.mxu0 %v692
  %997 = vmatprep.subr.bf16.mxu0 %v691
  %998 = vmatpush2.bf16.msra.mxu0 %v690
  %999 = vmatprep.subr.bf16.mxu0 %v689
  %1000 = vmatpush2.bf16.msra.mxu0 %v688
  %1001 = vmatprep.mubr.bf16.mxu0 %v193
  %1002 = vmatmul.mubr.bf16.gmra.mxu0 %v192
  %v1003 = vpop.f32.mrf.mxu0
  %v1004 = vadd.f32 %v963, %v1003
  %v1005 = vpop.f32.mrf.mxu0
  %v1006 = vadd.f32 %v965, %v1005
  %v1007 = vpop.f32.mrf.mxu0
  %v1008 = vpop.f32.mrf.mxu0
  %1009 = vdwg.mxu0
  %1010 = vmatprep.subr.bf16.mxu0 %v719
  %1011 = vmatpush1.bf16.msra.mxu0 %v718
  %1012 = vmatprep.subr.bf16.mxu0 %v717
  %1013 = vmatpush1.bf16.msra.mxu0 %v716
  %1014 = vmatprep.subr.bf16.mxu0 %v715
  %1015 = vmatpush1.bf16.msra.mxu0 %v714
  %1016 = vmatprep.subr.bf16.mxu0 %v713
  %1017 = vmatpush1.bf16.msra.mxu0 %v712
  %1018 = vmatprep.subr.bf16.mxu0 %v711
  %1019 = vmatpush1.bf16.msra.mxu0 %v710
  %1020 = vmatprep.subr.bf16.mxu0 %v709
  %1021 = vmatpush1.bf16.msra.mxu0 %v708
  %1022 = vmatprep.subr.bf16.mxu0 %v707
  %1023 = vmatpush1.bf16.msra.mxu0 %v706
  %1024 = vmatprep.subr.bf16.mxu0 %v705
  %1025 = vmatpush1.bf16.msra.mxu0 %v704
  %1026 = vmatprep.subr.bf16.mxu0 %v735
  %1027 = vmatpush2.bf16.msra.mxu0 %v734
  %1028 = vmatprep.subr.bf16.mxu0 %v733
  %1029 = vmatpush2.bf16.msra.mxu0 %v732
  %1030 = vmatprep.subr.bf16.mxu0 %v731
  %1031 = vmatpush2.bf16.msra.mxu0 %v730
  %1032 = vmatprep.subr.bf16.mxu0 %v729
  %1033 = vmatpush2.bf16.msra.mxu0 %v728
  %1034 = vmatprep.subr.bf16.mxu0 %v727
  %1035 = vmatpush2.bf16.msra.mxu0 %v726
  %1036 = vmatprep.subr.bf16.mxu0 %v725
  %1037 = vmatpush2.bf16.msra.mxu0 %v724
  %1038 = vmatprep.subr.bf16.mxu0 %v723
  %1039 = vmatpush2.bf16.msra.mxu0 %v722
  %1040 = vmatprep.subr.bf16.mxu0 %v721
  %1041 = vmatpush2.bf16.msra.mxu0 %v720
  %1042 = vmatprep.mubr.bf16.mxu0 %v195
  %1043 = vmatmul.mubr.bf16.gmra.mxu0 %v194
  %v1044 = vpop.f32.mrf.mxu0
  %v1045 = vadd.f32 %v1004, %v1044
  %v1046 = vpop.f32.mrf.mxu0
  %v1047 = vadd.f32 %v1006, %v1046
  %v1048 = vpop.f32.mrf.mxu0
  %v1049 = vpop.f32.mrf.mxu0
  %1050 = vdwg.mxu0
  %1051 = vmatprep.subr.bf16.mxu0 %v751
  %1052 = vmatpush1.bf16.msra.mxu0 %v750
  %1053 = vmatprep.subr.bf16.mxu0 %v749
  %1054 = vmatpush1.bf16.msra.mxu0 %v748
  %1055 = vmatprep.subr.bf16.mxu0 %v747
  %1056 = vmatpush1.bf16.msra.mxu0 %v746
  %1057 = vmatprep.subr.bf16.mxu0 %v745
  %1058 = vmatpush1.bf16.msra.mxu0 %v744
  %1059 = vmatprep.subr.bf16.mxu0 %v743
  %1060 = vmatpush1.bf16.msra.mxu0 %v742
  %1061 = vmatprep.subr.bf16.mxu0 %v741
  %1062 = vmatpush1.bf16.msra.mxu0 %v740
  %1063 = vmatprep.subr.bf16.mxu0 %v739
  %1064 = vmatpush1.bf16.msra.mxu0 %v738
  %1065 = vmatprep.subr.bf16.mxu0 %v737
  %1066 = vmatpush1.bf16.msra.mxu0 %v736
  %1067 = vmatprep.subr.bf16.mxu0 %v767
  %1068 = vmatpush2.bf16.msra.mxu0 %v766
  %1069 = vmatprep.subr.bf16.mxu0 %v765
  %1070 = vmatpush2.bf16.msra.mxu0 %v764
  %1071 = vmatprep.subr.bf16.mxu0 %v763
  %1072 = vmatpush2.bf16.msra.mxu0 %v762
  %1073 = vmatprep.subr.bf16.mxu0 %v761
  %1074 = vmatpush2.bf16.msra.mxu0 %v760
  %1075 = vmatprep.subr.bf16.mxu0 %v759
  %1076 = vmatpush2.bf16.msra.mxu0 %v758
  %1077 = vmatprep.subr.bf16.mxu0 %v757
  %1078 = vmatpush2.bf16.msra.mxu0 %v756
  %1079 = vmatprep.subr.bf16.mxu0 %v755
  %1080 = vmatpush2.bf16.msra.mxu0 %v754
  %1081 = vmatprep.subr.bf16.mxu0 %v753
  %1082 = vmatpush2.bf16.msra.mxu0 %v752
  %1083 = vmatprep.mubr.bf16.mxu0 %v197
  %1084 = vmatmul.mubr.bf16.gmra.mxu0 %v196
  %v1085 = vpop.f32.mrf.mxu0
  %v1086 = vadd.f32 %v1045, %v1085
  %v1087 = vpop.f32.mrf.mxu0
  %v1088 = vadd.f32 %v1047, %v1087
  %v1089 = vpop.f32.mrf.mxu0
  %v1090 = vpop.f32.mrf.mxu0
  %1091 = vdwg.mxu0
  %1092 = vmatprep.subr.bf16.mxu0 %v783
  %1093 = vmatpush1.bf16.msra.mxu0 %v782
  %1094 = vmatprep.subr.bf16.mxu0 %v781
  %1095 = vmatpush1.bf16.msra.mxu0 %v780
  %1096 = vmatprep.subr.bf16.mxu0 %v779
  %1097 = vmatpush1.bf16.msra.mxu0 %v778
  %1098 = vmatprep.subr.bf16.mxu0 %v777
  %1099 = vmatpush1.bf16.msra.mxu0 %v776
  %1100 = vmatprep.subr.bf16.mxu0 %v775
  %1101 = vmatpush1.bf16.msra.mxu0 %v774
  %1102 = vmatprep.subr.bf16.mxu0 %v773
  %1103 = vmatpush1.bf16.msra.mxu0 %v772
  %1104 = vmatprep.subr.bf16.mxu0 %v771
  %1105 = vmatpush1.bf16.msra.mxu0 %v770
  %1106 = vmatprep.subr.bf16.mxu0 %v769
  %1107 = vmatpush1.bf16.msra.mxu0 %v768
  %1108 = vmatprep.subr.bf16.mxu0 0
  %1109 = vmatpush2.bf16.msra.mxu0 0
  %1110 = vmatprep.subr.bf16.mxu0 0
  %1111 = vmatpush2.bf16.msra.mxu0 0
  %1112 = vmatprep.subr.bf16.mxu0 0
  %1113 = vmatpush2.bf16.msra.mxu0 0
  %1114 = vmatprep.subr.bf16.mxu0 0
  %1115 = vmatpush2.bf16.msra.mxu0 0
  %1116 = vmatprep.subr.bf16.mxu0 0
  %1117 = vmatpush2.bf16.msra.mxu0 0
  %1118 = vmatprep.subr.bf16.mxu0 0
  %1119 = vmatpush2.bf16.msra.mxu0 0
  %1120 = vmatprep.subr.bf16.mxu0 0
  %1121 = vmatpush2.bf16.msra.mxu0 0
  %1122 = vmatprep.subr.bf16.mxu0 0
  %1123 = vmatpush2.bf16.msra.mxu0 0
  %1124 = vmatprep.mubr.bf16.mxu0 0
  %1125 = vmatmul.mubr.bf16.gmra.mxu0 %v198
  %v1126 = vpop.f32.mrf.mxu0
  %v1127 = vadd.f32 %v1086, %v1126
  %v1128 = vpop.f32.mrf.mxu0
  %v1129 = vadd.f32 %v1088, %v1128
  %v1130 = vpop.f32.mrf.mxu0
  %v1131 = vpop.f32.mrf.mxu0
  %1132 = vdwg.mxu0
  %v1133 = vpack.c.bf16 %v1127, %v1127
  %v1134 = vpack.c.bf16 %v1129, %v1129
  %v1137 = vunpack.c.l.b16 %v1133
  %v1138 = vunpack.c.l.b16 %v1134
  %v1139 = vpack.c.b16 %v1138, %v1137
  %1141 = vst [vmem:[%s3] sm:$0xff] %v1139
  // Predicated region
  $region14: #{facebox_forward.37} parent=0 // pred_check
    _
  $region15: #{facebox_forward.37} parent=0 // pred_check_branch
    %1143 = sbr.rel (0) target = $region17
  $region16: #{facebox_forward.37} parent=0 // pred_region
    _
  $region17: #{facebox_forward.37} parent=0 // pred_fallthru
    _
  // Predicated region
  $region18: #{facebox_forward.37} parent=0 // pred_check
    _
  $region19: #{facebox_forward.37} parent=0 // pred_check_branch
    %1145 = sbr.rel (0) target = $region21
  $region20: #{facebox_forward.37} parent=0 // pred_region
    _
  $region21: #{facebox_forward.37} parent=0 // pred_fallthru
    _

</llo_original>
